<compile_context>
chip_gen: v5e
topology: v5e:2x2
jax: 0.10.0
libtpu: 0.0.40
codegen_flags: <defaults>
</compile_context>

<pallas_src>
import functools

import jax
import jax.numpy as jnp
from jax.experimental import pallas as pl
from jax.experimental.pallas import tpu as pltpu


def _round_up(x, m):
    return (x + m - 1) // m * m


# ---------------------------------------------------------------------------
# Pallas kernel 1: fused (patches @ folded_weights) + shift, optional ReLU
# ---------------------------------------------------------------------------
def _conv_mm_kernel(p_ref, w_ref, b_ref, o_ref, *, apply_relu):
    acc = jnp.dot(p_ref[...], w_ref[...], preferred_element_type=jnp.float32)
    acc = acc + b_ref[...]            # folded BatchNorm shift / conv bias (f32)
    if apply_relu:
        acc = jnp.maximum(acc, 0.0)
    o_ref[...] = acc.astype(o_ref.dtype)


# Layer-1: M=9826 -> Mp=10240 -> 2 grid steps.  Even step count keeps both v7x
# TensorCores busy; large tile amortizes per-step grid/DMA overhead on v5e/v6e.
_BIG_TM = 5120


def fused_matmul_shift(patches, w_pad, shift_pad, apply_relu, out_dtype):
    """patches (M,Kp) bf16 (K pre-padded)  @  w_pad (Kp,Np) bf16  + shift (1,Np) f32."""
    M, Kp = patches.shape
    Kp2, Np = w_pad.shape
    assert Kp == Kp2
    if M <= 4096:
        # Single full-size block (block == full array dims, so any size is legal).
        tm = _round_up(max(M, 16), 16)
        Mp = tm
    else:
        tm = _BIG_TM
        Mp = _round_up(M, tm)
    p_pad = patches if Mp == M else jnp.pad(patches, ((0, Mp - M), (0, 0)))

    out = pl.pallas_call(
        functools.partial(_conv_mm_kernel, apply_relu=apply_relu),
        out_shape=jax.ShapeDtypeStruct((Mp, Np), out_dtype),
        grid_spec=pltpu.PrefetchScalarGridSpec(
            num_scalar_prefetch=0,
            grid=(Mp // tm,),
            in_specs=[
                pl.BlockSpec((tm, Kp), lambda i: (i, 0)),   # patch stream
                pl.BlockSpec((Kp, Np), lambda i: (0, 0)),   # resident weights
                pl.BlockSpec((1, Np), lambda i: (0, 0)),    # resident shift
            ],
            out_specs=pl.BlockSpec((tm, Np), lambda i: (i, 0)),
        ),
        compiler_params=pltpu.CompilerParams(
            dimension_semantics=("parallel",)),
    )(p_pad, w_pad, shift_pad)
    return out[:M, :]


# ---------------------------------------------------------------------------
# Pallas kernel 2 (fallback only): argmax over channel dim
# ---------------------------------------------------------------------------
def _argmax_kernel(x_ref, o_ref):
    x = x_ref[...]
    m = jnp.max(x, axis=1, keepdims=True)
    idx = jax.lax.broadcasted_iota(jnp.int32, x.shape, 1)
    cand = jnp.where(x == m, idx, jnp.int32(x.shape[1]))
    o_ref[...] = jnp.min(cand, axis=1, keepdims=True)   # first-max index == torch.max


def pallas_argmax_rows(logits2d):
    """logits (M, Nc) f32 -> (M, 1) int32 argmax along axis 1."""
    M, Nc = logits2d.shape
    Mp, Ncp = _round_up(M, 8), _round_up(Nc, 128)
    x = jnp.pad(logits2d.astype(jnp.float32), ((0, Mp - M), (0, Ncp - Nc)),
                constant_values=-jnp.inf)
    out = pl.pallas_call(
        _argmax_kernel,
        out_shape=jax.ShapeDtypeStruct((Mp, 1), jnp.int32),
        grid=(1,),
        in_specs=[pl.BlockSpec((Mp, Ncp), lambda i: (0, 0))],
        out_specs=pl.BlockSpec((Mp, 1), lambda i: (0, 0)),
    )(x)
    return out[:M, :]


# ---------------------------------------------------------------------------
# Pallas kernel 3: fused tail = conv3 + conv4 + conv5(1x1) + channel argmax
#   Valid only for the canonical geometry: layer-3 output spatial == 2x2x2,
#   layer-4 = 3x3x3/s3/p1 (-> 1x1x1, only 8 non-padding taps), layer-5 = 1x1 conv.
#   Layer-3 patch rows are ordered spatial-major, batch-minor padded to bpad
#   (multiple of 8), so every per-tap slice is an aligned 8-row block.
# ---------------------------------------------------------------------------
def _tail_kernel(p3_ref, w3_ref, s3_ref, w4t_ref, s4_ref, w5_ref, s5_ref, o_ref,
                 *, batch, bpad, n_classes):
    # Layer 3: (8*bpad, Kp3) @ (Kp3, Np3) -> ReLU
    y3 = jnp.dot(p3_ref[...], w3_ref[...], preferred_element_type=jnp.float32)
    y3 = jnp.maximum(y3 + s3_ref[...], 0.0)

    # Layer 4: 3x3x3 window on the 2x2x2 output -> 8 valid taps, one per spatial
    # block of y3.  Padded-batch rows only pollute discarded output rows.
    acc = jnp.zeros((bpad, w4t_ref.shape[2]), jnp.float32)
    for j in range(w4t_ref.shape[0]):
        rows = y3[j * bpad:(j + 1) * bpad, :].astype(jnp.bfloat16)
        acc = acc + jnp.dot(rows, w4t_ref[j], preferred_element_type=jnp.float32)
    y4 = jnp.maximum(acc + s4_ref[...], 0.0)

    # Layer 5 (1x1 conv) -> logits kept in f32 for the argmax.
    logits = jnp.dot(y4.astype(jnp.bfloat16), w5_ref[...],
                     preferred_element_type=jnp.float32) + s5_ref[...]

    # Channel argmax over the first n_classes lanes (padded lanes masked to -inf).
    col = jax.lax.broadcasted_iota(jnp.int32, logits.shape, 1)
    vals = jnp.where(col < n_classes, logits, -jnp.inf)
    m = jnp.max(vals, axis=1, keepdims=True)
    cand = jnp.where(vals == m, col, jnp.int32(logits.shape[1]))
    o_ref[...] = jnp.min(cand, axis=1, keepdims=True)[:batch, :]


def fused_tail_classify(p3, tail_params, *, batch, bpad, n_classes):
    w3, s3, w4t, s4, w5, s5 = tail_params
    return pl.pallas_call(
        functools.partial(_tail_kernel, batch=batch, bpad=bpad, n_classes=n_classes),
        out_shape=jax.ShapeDtypeStruct((batch, 1), jnp.int32),
        grid=(1,),
        in_specs=[
            pl.BlockSpec(p3.shape, lambda i: (0, 0)),
            pl.BlockSpec(w3.shape, lambda i: (0, 0)),
            pl.BlockSpec(s3.shape, lambda i: (0, 0)),
            pl.BlockSpec(w4t.shape, lambda i: (0, 0, 0)),
            pl.BlockSpec(s4.shape, lambda i: (0, 0)),
            pl.BlockSpec(w5.shape, lambda i: (0, 0)),
            pl.BlockSpec(s5.shape, lambda i: (0, 0)),
        ],
        out_specs=pl.BlockSpec((batch, 1), lambda i: (0, 0)),
    )(p3, w3, s3, w4t, s4, w5, s5)


# ---------------------------------------------------------------------------
# Plain-JAX glue: channel-last (NDHWC) im2col, emitting bf16 patches pre-padded to Kp
# ---------------------------------------------------------------------------
def _im2col_3d_ndhwc(x, ksize, stride, pad, kp=None):
    # TODO(synk): fusing this window gather into the Pallas matmul (VMEM-resident
    # input cube + strided pl.ds slices) would remove the remaining patch HBM pass.
    x = x.astype(jnp.bfloat16)
    B, D, H, W, C = x.shape
    if pad:
        x = jnp.pad(x, ((0, 0), (pad, pad), (pad, pad), (pad, pad), (0, 0)))
    Do = (D + 2 * pad - ksize) // stride + 1
    Ho = (H + 2 * pad - ksize) // stride + 1
    Wo = (W + 2 * pad - ksize) // stride + 1
    cols = []
    for kd in range(ksize):
        for kh in range(ksize):
            for kw in range(ksize):
                cols.append(x[:,
                              kd:kd + (Do - 1) * stride + 1:stride,
                              kh:kh + (Ho - 1) * stride + 1:stride,
                              kw:kw + (Wo - 1) * stride + 1:stride, :])
    K = ksize ** 3 * C
    kp = K if kp is None else kp
    if kp > K:
        cols.append(jnp.zeros((B, Do, Ho, Wo, kp - K), jnp.bfloat16))
    patches = jnp.concatenate(cols, axis=-1)      # (B,Do,Ho,Wo,Kp) bf16, one fused pass
    return patches, (B, Do, Ho, Wo)


def conv3d_layer_ndhwc(x, w_pad, shift_pad, k, stride, pad, cout, apply_relu,
                       out_dtype=jnp.bfloat16, use_pallas=True):
    """x NDHWC; w_pad (Kp, Np) bf16 BN-folded weights; returns NDHWC channel-last."""
    Kp, Np = w_pad.shape
    p5d, (B, Do, Ho, Wo) = _im2col_3d_ndhwc(x, k, stride, pad, kp=Kp)
    patches = p5d.reshape(B * Do * Ho * Wo, Kp)
    if use_pallas:
        y = fused_matmul_shift(patches, w_pad, shift_pad, apply_relu, out_dtype)
    else:  # pure-jnp reference of the identical (bf16 x bf16 -> f32) math
        y = jnp.dot(patches, w_pad, preferred_element_type=jnp.float32) + shift_pad
        if apply_relu:
            y = jnp.maximum(y, 0.0)
        y = y.astype(out_dtype)
    return y[:, :cout].reshape(B, Do, Ho, Wo, cout)


# ---------------------------------------------------------------------------
# TextureNet parameters (host-side BN folding / flattening / padding) + forward
# ---------------------------------------------------------------------------
def init_texture_net(key, n_classes=2, n_filters=50):
    eps = 1e-5
    # Static hyper-params stay OUTSIDE the jitted pytree (only jnp arrays are traced).
    cfg = [
        dict(cin=1,         cout=n_filters, k=5, stride=4, pad=2, bias=True,  bn=True),
        dict(cin=n_filters, cout=n_filters, k=3, stride=3, pad=1, bias=False, bn=True),
        dict(cin=n_filters, cout=n_filters, k=3, stride=3, pad=1, bias=False, bn=True),
        dict(cin=n_filters, cout=n_filters, k=3, stride=3, pad=1, bias=False, bn=True),
        dict(cin=n_filters, cout=n_classes, k=1, stride=1, pad=0, bias=True,  bn=False),
    ]
    params = []
    for li, c in enumerate(cfg):
        wkey = jax.random.fold_in(key, li)
        w = 0.02 * jax.random.normal(
            wkey, (c["cout"], c["cin"], c["k"], c["k"], c["k"]), jnp.float32)
        b = (0.01 * jax.random.normal(jax.random.fold_in(wkey, 7), (c["cout"],),
                                      jnp.float32)
             if c["bias"] else jnp.zeros((c["cout"],), jnp.float32))
        # TODO(synk): BatchNorm uses eval-mode running stats folded into scale/shift;
        # training-mode batch statistics are not implemented (classify() = inference).
        if c["bn"]:
            gamma = jnp.ones((c["cout"],), jnp.float32)
            beta = jnp.zeros((c["cout"],), jnp.float32)
            r_mean = jnp.zeros((c["cout"],), jnp.float32)
            r_var = jnp.ones((c["cout"],), jnp.float32)
            scale = gamma / jnp.sqrt(r_var + eps)
            shift = beta - r_mean * scale + b * scale
        else:
            scale = jnp.ones((c["cout"],), jnp.float32)
            shift = b
        # Fold BN scale into weights; flatten in channel-last patch order (kd,kh,kw,cin);
        # pad K/N to 128 lanes and cast weights to bf16 once, on host.
        K = c["cin"] * c["k"] ** 3
        Kp, Np = _round_up(K, 128), _round_up(c["cout"], 128)
        w_flat = w.transpose(2, 3, 4, 1, 0).reshape(K, c["cout"]) * scale[None, :]
        w_pad = jnp.pad(w_flat, ((0, Kp - K), (0, Np - c["cout"]))).astype(jnp.bfloat16)
        shift_pad = jnp.pad(shift, (0, Np - c["cout"]))[None, :].astype(jnp.float32)
        params.append(dict(w=w_pad, shift=shift_pad))
    return cfg, params


def make_tail_params(cfg, params):
    """Per-tap layer-4 weights + remaining tail weights for the fused tail kernel."""
    c4 = cfg[3]
    w4 = params[3]["w"]                       # (Kp4, Np4) bf16, rows ordered (kd,kh,kw,cin)
    np3 = params[2]["w"].shape[1]             # padded channel width of the layer-3 output
    cin, k = c4["cin"], c4["k"]
    taps = []
    for d in range(2):
        for h in range(2):
            for w in range(2):
                t = (d + 1) * k * k + (h + 1) * k + (w + 1)   # non-padding tap index
                blk = w4[t * cin:(t + 1) * cin, :]            # (cin, Np4)
                taps.append(jnp.pad(blk, ((0, np3 - cin), (0, 0))))
    w4t = jnp.stack(taps, axis=0)             # (8, Np3, Np4) bf16, tap order = d*4+h*2+w
    return (params[2]["w"], params[2]["shift"], w4t, params[3]["shift"],
            params[4]["w"], params[4]["shift"])


def _tail_geometry_ok(cfg, x2_shape):
    if len(cfg) != 5:
        return False
    _, D, H, W, _ = x2_shape
    c3, c4, c5 = cfg[2], cfg[3], cfg[4]
    o = lambda n, c: (n + 2 * c["pad"] - c["k"]) // c["stride"] + 1
    return ((o(D, c3), o(H, c3), o(W, c3)) == (2, 2, 2)
            and (c4["k"], c4["stride"], c4["pad"]) == (3, 3, 1)
            and (c5["k"], c5["stride"], c5["pad"]) == (1, 1, 0))


def texture_net_forward(cfg, params, x_ndhwc, use_pallas=True):
    x = x_ndhwc
    last = len(cfg) - 1
    for li, (c, p) in enumerate(zip(cfg, params)):
        out_dtype = jnp.float32 if li == last else jnp.bfloat16   # bf16 hidden, f32 logits
        x = conv3d_layer_ndhwc(x, p["w"], p["shift"], c["k"], c["stride"], c["pad"],
                               c["cout"], apply_relu=c["bn"], out_dtype=out_dtype,
                               use_pallas=use_pallas)
    return x  # (B, D', H', W', n_classes) channel-last, f32


def model_wrapper_forward(cfg, params, tail_params, x_ncdhw):
    """== ModelWrapper.forward == texture_model.classify(input)."""
    x = jnp.transpose(x_ncdhw, (0, 2, 3, 4, 1))            # NCDHW -> NDHWC, once
    # Layers 1-2: im2col + fused Pallas matmul, bf16 activations.
    for c, p in zip(cfg[:2], params[:2]):
        x = conv3d_layer_ndhwc(x, p["w"], p["shift"], c["k"], c["stride"], c["pad"],
                               c["cout"], apply_relu=c["bn"], out_dtype=jnp.bfloat16)

    if tail_params is not None and _tail_geometry_ok(cfg, x.shape):
        # Fused tail: layers 3-5 + channel argmax in one Pallas kernel.
        c3 = cfg[2]
        kp3 = params[2]["w"].shape[0]
        p5d, (B, Do, Ho, Wo) = _im2col_3d_ndhwc(x, c3["k"], c3["stride"], c3["pad"], kp=kp3)
        bpad = _round_up(B, 8)
        p5d = p5d.transpose(1, 2, 3, 0, 4)                 # spatial-major, batch-minor
        if bpad != B:
            p5d = jnp.pad(p5d, ((0, 0), (0, 0), (0, 0), (0, bpad - B), (0, 0)))
        p3 = p5d.reshape(Do * Ho * Wo * bpad, kp3)
        cls = fused_tail_classify(p3, tail_params, batch=B, bpad=bpad,
                                  n_classes=cfg[4]["cout"])        # (B, 1) int32
        return cls.reshape(B, 1, 1, 1, 1)                  # (B, 1, D'=1, H'=1, W'=1)

    # Fallback: generic per-layer path + standalone argmax kernel.
    last = len(cfg) - 1
    for li, (c, p) in enumerate(zip(cfg[2:], params[2:]), start=2):
        out_dtype = jnp.float32 if li == last else jnp.bfloat16
        x = conv3d_layer_ndhwc(x, p["w"], p["shift"], c["k"], c["stride"], c["pad"],
                               c["cout"], apply_relu=c["bn"], out_dtype=out_dtype)
    B, D, H, W, Nc = x.shape
    cls = pallas_argmax_rows(x.reshape(B * D * H * W, Nc))
    return cls.reshape(B, D, H, W, 1).transpose(0, 4, 1, 2, 3)


if __name__ == "__main__":
    key = jax.random.PRNGKey(0)
    cfg, params = init_texture_net(key, n_classes=2, n_filters=50)
    tail_params = make_tail_params(cfg, params)

    # Canonical TextureNet cube input: (B, C, D, H, W) = (2, 1, 65, 65, 65)
    x = jax.random.normal(jax.random.fold_in(key, 999),
                          (2, 1, 65, 65, 65), jnp.float32)

    to_ndhwc = lambda a: jnp.transpose(a, (0, 2, 3, 4, 1))
    fwd_pallas = jax.jit(
        lambda prm, a: texture_net_forward(cfg, prm, to_ndhwc(a), use_pallas=True))
    fwd_ref = jax.jit(
        lambda prm, a: texture_net_forward(cfg, prm, to_ndhwc(a), use_pallas=False))

    logits_p = fwd_pallas(params, x)
    logits_r = fwd_ref(params, x)
    jax.block_until_ready((logits_p, logits_r))
    assert logits_p.shape == (2, 1, 1, 1, 2)
    assert jnp.allclose(logits_p, logits_r, atol=2e-3, rtol=2e-3), (
        float(jnp.max(jnp.abs(logits_p - logits_r))))

    ref_cls = jnp.argmax(logits_r, axis=-1).astype(jnp.int32)[:, None, :, :, :]

    # Full ModelWrapper.forward (classify): layers 1-2 matmul kernels + fused tail kernel.
    classify = jax.jit(lambda prm, tp, a: model_wrapper_forward(cfg, prm, tp, a))
    y = jax.block_until_ready(classify(params, tail_params, x))
    assert y.shape == (2, 1, 1, 1, 1) and y.dtype == jnp.int32
    assert jnp.array_equal(y, ref_cls)

    # Fallback path (generic per-layer + standalone argmax kernel) also exercised.
    classify_fb = jax.jit(lambda prm, a: model_wrapper_forward(cfg, prm, None, a))
    y_fb = jax.block_until_ready(classify_fb(params, x))
    assert y_fb.shape == (2, 1, 1, 1, 1)
    assert jnp.array_equal(y_fb, ref_cls)

    print("KERNEL_OK")
</pallas_src>

<mosaic_0001>
module attributes {stable_mosaic.version = 11 : i64} {
  func.func @_conv_mm_kernel(%arg0: i32, %arg1: memref<5120x128xbf16, #tpu.memory_space<vmem>>, %arg2: memref<128x128xbf16, #tpu.memory_space<vmem>>, %arg3: memref<1x128xf32, #tpu.memory_space<vmem>>, %arg4: memref<5120x128xbf16, #tpu.memory_space<vmem>>) attributes {dimension_semantics = [#tpu.dimension_semantics<parallel>], iteration_bounds = array<i64: 2>, scalar_prefetch = 0 : i64, scratch_operands = 0 : i64, tpu.core_type = #tpu.core_type<tc>, window_params = [{transform_indices = @transform_0, window_bounds = array<i64: 5120, 128>}, {pipeline_mode = #tpu.pipeline_mode<synchronous>, transform_indices = @transform_1, window_bounds = array<i64: 128, 128>}, {pipeline_mode = #tpu.pipeline_mode<synchronous>, transform_indices = @transform_2, window_bounds = array<i64: 1, 128>}, {transform_indices = @transform_3, window_bounds = array<i64: 5120, 128>}]} {
    %c0 = arith.constant 0 : index
    %c0_0 = arith.constant 0 : index
    %0 = vector.load %arg1[%c0, %c0_0] : memref<5120x128xbf16, #tpu.memory_space<vmem>>, vector<5120x128xbf16>
    %c0_1 = arith.constant 0 : index
    %c0_2 = arith.constant 0 : index
    %1 = vector.load %arg2[%c0_1, %c0_2] : memref<128x128xbf16, #tpu.memory_space<vmem>>, vector<128x128xbf16>
    %cst = arith.constant dense<0.000000e+00> : vector<5120x128xf32>
    %2 = tpu.matmul %0, %1, %cst {dimension_numbers = #tpu.dot_dimension_numbers<[1], [0], [0], [1], [0, 0, 1, 1], [], []>} : vector<5120x128xbf16>, vector<128x128xbf16>, vector<5120x128xf32> -> vector<5120x128xf32>
    %c0_3 = arith.constant 0 : index
    %c0_4 = arith.constant 0 : index
    %3 = vector.load %arg3[%c0_3, %c0_4] : memref<1x128xf32, #tpu.memory_space<vmem>>, vector<1x128xf32>
    %4 = vector.broadcast %3 : vector<1x128xf32> to vector<5120x128xf32>
    %5 = arith.addf %2, %4 : vector<5120x128xf32>
    %cst_5 = arith.constant 0.000000e+00 : f32
    %6 = vector.broadcast %cst_5 : f32 to vector<5120x128xf32>
    %7 = arith.maximumf %5, %6 : vector<5120x128xf32>
    %8 = arith.truncf %7 : vector<5120x128xf32> to vector<5120x128xbf16>
    %c0_6 = arith.constant 0 : index
    %c0_7 = arith.constant 0 : index
    %9 = vector.load %arg4[%c0_6, %c0_7] : memref<5120x128xbf16, #tpu.memory_space<vmem>>, vector<5120x128xbf16>
    tpu.vector_store %arg4[%c0_6, %c0_7], %8 {strides = array<i32>} : memref<5120x128xbf16, #tpu.memory_space<vmem>>, vector<5120x128xbf16>,
    return
  }
  func.func @transform_0(%arg0: i32) -> (i32, i32) {
    %c0_i32 = arith.constant 0 : i32
    %c0_i32_0 = arith.constant 0 : i32
    return %arg0, %c0_i32 : i32, i32
  }
  func.func @transform_1(%arg0: i32) -> (i32, i32) {
    %c0_i32 = arith.constant 0 : i32
    %c0_i32_0 = arith.constant 0 : i32
    %c0_i32_1 = arith.constant 0 : i32
    return %c0_i32, %c0_i32_0 : i32, i32
  }
  func.func @transform_2(%arg0: i32) -> (i32, i32) {
    %c0_i32 = arith.constant 0 : i32
    %c0_i32_0 = arith.constant 0 : i32
    %c0_i32_1 = arith.constant 0 : i32
    return %c0_i32, %c0_i32_0 : i32, i32
  }
  func.func @transform_3(%arg0: i32) -> (i32, i32) {
    %c0_i32 = arith.constant 0 : i32
    %c0_i32_0 = arith.constant 0 : i32
    return %arg0, %c0_i32 : i32, i32
  }
}

module attributes {stable_mosaic.version = 11 : i64} {
  func.func @_conv_mm_kernel(%arg0: i32, %arg1: memref<432x1408xbf16, #tpu.memory_space<vmem>>, %arg2: memref<1408x128xbf16, #tpu.memory_space<vmem>>, %arg3: memref<1x128xf32, #tpu.memory_space<vmem>>, %arg4: memref<432x128xbf16, #tpu.memory_space<vmem>>) attributes {dimension_semantics = [#tpu.dimension_semantics<parallel>], iteration_bounds = array<i64: 1>, scalar_prefetch = 0 : i64, scratch_operands = 0 : i64, tpu.core_type = #tpu.core_type<tc>, window_params = [{transform_indices = @transform_0, window_bounds = array<i64: 432, 1408>}, {pipeline_mode = #tpu.pipeline_mode<synchronous>, transform_indices = @transform_1, window_bounds = array<i64: 1408, 128>}, {pipeline_mode = #tpu.pipeline_mode<synchronous>, transform_indices = @transform_2, window_bounds = array<i64: 1, 128>}, {transform_indices = @transform_3, window_bounds = array<i64: 432, 128>}]} {
    %c0 = arith.constant 0 : index
    %c0_0 = arith.constant 0 : index
    %0 = vector.load %arg1[%c0, %c0_0] : memref<432x1408xbf16, #tpu.memory_space<vmem>>, vector<432x1408xbf16>
    %c0_1 = arith.constant 0 : index
    %c0_2 = arith.constant 0 : index
    %1 = vector.load %arg2[%c0_1, %c0_2] : memref<1408x128xbf16, #tpu.memory_space<vmem>>, vector<1408x128xbf16>
    %cst = arith.constant dense<0.000000e+00> : vector<432x128xf32>
    %2 = tpu.matmul %0, %1, %cst {dimension_numbers = #tpu.dot_dimension_numbers<[1], [0], [0], [1], [0, 0, 1, 1], [], []>} : vector<432x1408xbf16>, vector<1408x128xbf16>, vector<432x128xf32> -> vector<432x128xf32>
    %c0_3 = arith.constant 0 : index
    %c0_4 = arith.constant 0 : index
    %3 = vector.load %arg3[%c0_3, %c0_4] : memref<1x128xf32, #tpu.memory_space<vmem>>, vector<1x128xf32>
    %4 = vector.broadcast %3 : vector<1x128xf32> to vector<432x128xf32>
    %5 = arith.addf %2, %4 : vector<432x128xf32>
    %cst_5 = arith.constant 0.000000e+00 : f32
    %6 = vector.broadcast %cst_5 : f32 to vector<432x128xf32>
    %7 = arith.maximumf %5, %6 : vector<432x128xf32>
    %8 = arith.truncf %7 : vector<432x128xf32> to vector<432x128xbf16>
    %c0_6 = arith.constant 0 : index
    %c0_7 = arith.constant 0 : index
    %9 = vector.load %arg4[%c0_6, %c0_7] : memref<432x128xbf16, #tpu.memory_space<vmem>>, vector<432x128xbf16>
    tpu.vector_store %arg4[%c0_6, %c0_7], %8 {strides = array<i32>} : memref<432x128xbf16, #tpu.memory_space<vmem>>, vector<432x128xbf16>,
    return
  }
  func.func @transform_0(%arg0: i32) -> (i32, i32) {
    %c0_i32 = arith.constant 0 : i32
    %c0_i32_0 = arith.constant 0 : i32
    return %arg0, %c0_i32 : i32, i32
  }
  func.func @transform_1(%arg0: i32) -> (i32, i32) {
    %c0_i32 = arith.constant 0 : i32
    %c0_i32_0 = arith.constant 0 : i32
    %c0_i32_1 = arith.constant 0 : i32
    return %c0_i32, %c0_i32_0 : i32, i32
  }
  func.func @transform_2(%arg0: i32) -> (i32, i32) {
    %c0_i32 = arith.constant 0 : i32
    %c0_i32_0 = arith.constant 0 : i32
    %c0_i32_1 = arith.constant 0 : i32
    return %c0_i32, %c0_i32_0 : i32, i32
  }
  func.func @transform_3(%arg0: i32) -> (i32, i32) {
    %c0_i32 = arith.constant 0 : i32
    %c0_i32_0 = arith.constant 0 : i32
    return %arg0, %c0_i32 : i32, i32
  }
}

module attributes {stable_mosaic.version = 11 : i64} {
  func.func @_conv_mm_kernel(%arg0: i32, %arg1: memref<16x1408xbf16, #tpu.memory_space<vmem>>, %arg2: memref<1408x128xbf16, #tpu.memory_space<vmem>>, %arg3: memref<1x128xf32, #tpu.memory_space<vmem>>, %arg4: memref<16x128xbf16, #tpu.memory_space<vmem>>) attributes {dimension_semantics = [#tpu.dimension_semantics<parallel>], iteration_bounds = array<i64: 1>, scalar_prefetch = 0 : i64, scratch_operands = 0 : i64, tpu.core_type = #tpu.core_type<tc>, window_params = [{transform_indices = @transform_0, window_bounds = array<i64: 16, 1408>}, {pipeline_mode = #tpu.pipeline_mode<synchronous>, transform_indices = @transform_1, window_bounds = array<i64: 1408, 128>}, {pipeline_mode = #tpu.pipeline_mode<synchronous>, transform_indices = @transform_2, window_bounds = array<i64: 1, 128>}, {transform_indices = @transform_3, window_bounds = array<i64: 16, 128>}]} {
    %c0 = arith.constant 0 : index
    %c0_0 = arith.constant 0 : index
    %0 = vector.load %arg1[%c0, %c0_0] : memref<16x1408xbf16, #tpu.memory_space<vmem>>, vector<16x1408xbf16>
    %c0_1 = arith.constant 0 : index
    %c0_2 = arith.constant 0 : index
    %1 = vector.load %arg2[%c0_1, %c0_2] : memref<1408x128xbf16, #tpu.memory_space<vmem>>, vector<1408x128xbf16>
    %cst = arith.constant dense<0.000000e+00> : vector<16x128xf32>
    %2 = tpu.matmul %0, %1, %cst {dimension_numbers = #tpu.dot_dimension_numbers<[1], [0], [0], [1], [0, 0, 1, 1], [], []>} : vector<16x1408xbf16>, vector<1408x128xbf16>, vector<16x128xf32> -> vector<16x128xf32>
    %c0_3 = arith.constant 0 : index
    %c0_4 = arith.constant 0 : index
    %3 = vector.load %arg3[%c0_3, %c0_4] : memref<1x128xf32, #tpu.memory_space<vmem>>, vector<1x128xf32>
    %4 = vector.broadcast %3 : vector<1x128xf32> to vector<16x128xf32>
    %5 = arith.addf %2, %4 : vector<16x128xf32>
    %cst_5 = arith.constant 0.000000e+00 : f32
    %6 = vector.broadcast %cst_5 : f32 to vector<16x128xf32>
    %7 = arith.maximumf %5, %6 : vector<16x128xf32>
    %8 = arith.truncf %7 : vector<16x128xf32> to vector<16x128xbf16>
    %c0_6 = arith.constant 0 : index
    %c0_7 = arith.constant 0 : index
    %9 = vector.load %arg4[%c0_6, %c0_7] : memref<16x128xbf16, #tpu.memory_space<vmem>>, vector<16x128xbf16>
    tpu.vector_store %arg4[%c0_6, %c0_7], %8 {strides = array<i32>} : memref<16x128xbf16, #tpu.memory_space<vmem>>, vector<16x128xbf16>,
    return
  }
  func.func @transform_0(%arg0: i32) -> (i32, i32) {
    %c0_i32 = arith.constant 0 : i32
    %c0_i32_0 = arith.constant 0 : i32
    return %arg0, %c0_i32 : i32, i32
  }
  func.func @transform_1(%arg0: i32) -> (i32, i32) {
    %c0_i32 = arith.constant 0 : i32
    %c0_i32_0 = arith.constant 0 : i32
    %c0_i32_1 = arith.constant 0 : i32
    return %c0_i32, %c0_i32_0 : i32, i32
  }
  func.func @transform_2(%arg0: i32) -> (i32, i32) {
    %c0_i32 = arith.constant 0 : i32
    %c0_i32_0 = arith.constant 0 : i32
    %c0_i32_1 = arith.constant 0 : i32
    return %c0_i32, %c0_i32_0 : i32, i32
  }
  func.func @transform_3(%arg0: i32) -> (i32, i32) {
    %c0_i32 = arith.constant 0 : i32
    %c0_i32_0 = arith.constant 0 : i32
    return %arg0, %c0_i32 : i32, i32
  }
}

module attributes {stable_mosaic.version = 11 : i64} {
  func.func @_conv_mm_kernel(%arg0: i32, %arg1: memref<16x128xbf16, #tpu.memory_space<vmem>>, %arg2: memref<128x128xbf16, #tpu.memory_space<vmem>>, %arg3: memref<1x128xf32, #tpu.memory_space<vmem>>, %arg4: memref<16x128xf32, #tpu.memory_space<vmem>>) attributes {dimension_semantics = [#tpu.dimension_semantics<parallel>], iteration_bounds = array<i64: 1>, scalar_prefetch = 0 : i64, scratch_operands = 0 : i64, tpu.core_type = #tpu.core_type<tc>, window_params = [{transform_indices = @transform_0, window_bounds = array<i64: 16, 128>}, {pipeline_mode = #tpu.pipeline_mode<synchronous>, transform_indices = @transform_1, window_bounds = array<i64: 128, 128>}, {pipeline_mode = #tpu.pipeline_mode<synchronous>, transform_indices = @transform_2, window_bounds = array<i64: 1, 128>}, {transform_indices = @transform_3, window_bounds = array<i64: 16, 128>}]} {
    %c0 = arith.constant 0 : index
    %c0_0 = arith.constant 0 : index
    %0 = vector.load %arg1[%c0, %c0_0] : memref<16x128xbf16, #tpu.memory_space<vmem>>, vector<16x128xbf16>
    %c0_1 = arith.constant 0 : index
    %c0_2 = arith.constant 0 : index
    %1 = vector.load %arg2[%c0_1, %c0_2] : memref<128x128xbf16, #tpu.memory_space<vmem>>, vector<128x128xbf16>
    %cst = arith.constant dense<0.000000e+00> : vector<16x128xf32>
    %2 = tpu.matmul %0, %1, %cst {dimension_numbers = #tpu.dot_dimension_numbers<[1], [0], [0], [1], [0, 0, 1, 1], [], []>} : vector<16x128xbf16>, vector<128x128xbf16>, vector<16x128xf32> -> vector<16x128xf32>
    %c0_3 = arith.constant 0 : index
    %c0_4 = arith.constant 0 : index
    %3 = vector.load %arg3[%c0_3, %c0_4] : memref<1x128xf32, #tpu.memory_space<vmem>>, vector<1x128xf32>
    %4 = vector.broadcast %3 : vector<1x128xf32> to vector<16x128xf32>
    %5 = arith.addf %2, %4 : vector<16x128xf32>
    %c0_5 = arith.constant 0 : index
    %c0_6 = arith.constant 0 : index
    %6 = vector.load %arg4[%c0_5, %c0_6] : memref<16x128xf32, #tpu.memory_space<vmem>>, vector<16x128xf32>
    tpu.vector_store %arg4[%c0_5, %c0_6], %5 {strides = array<i32>} : memref<16x128xf32, #tpu.memory_space<vmem>>, vector<16x128xf32>,
    return
  }
  func.func @transform_0(%arg0: i32) -> (i32, i32) {
    %c0_i32 = arith.constant 0 : i32
    %c0_i32_0 = arith.constant 0 : i32
    return %arg0, %c0_i32 : i32, i32
  }
  func.func @transform_1(%arg0: i32) -> (i32, i32) {
    %c0_i32 = arith.constant 0 : i32
    %c0_i32_0 = arith.constant 0 : i32
    %c0_i32_1 = arith.constant 0 : i32
    return %c0_i32, %c0_i32_0 : i32, i32
  }
  func.func @transform_2(%arg0: i32) -> (i32, i32) {
    %c0_i32 = arith.constant 0 : i32
    %c0_i32_0 = arith.constant 0 : i32
    %c0_i32_1 = arith.constant 0 : i32
    return %c0_i32, %c0_i32_0 : i32, i32
  }
  func.func @transform_3(%arg0: i32) -> (i32, i32) {
    %c0_i32 = arith.constant 0 : i32
    %c0_i32_0 = arith.constant 0 : i32
    return %arg0, %c0_i32 : i32, i32
  }
}

</mosaic_0001>

<llo_original>
// kernel: _lambda_.5
$region0: #{_lambda_.5}
  #allocation0 [shape = 'u32[]', space=smem, size = 0x4, offset = 0x4, fixed_abs, tag = 'smem constant byte address 0x4 - core index']
  #allocation1 [shape = 'u32[72,128]{1,0:T(1,128)}', space=vmem, size = 0x9000, scoped, tag = 'internal scratch']
  %s0 = inlined_call_operand.vmem [shape: bf16[10240,128], index: 0, kind: input, shape index: {}]
  %s1 = inlined_call_operand.vmem [shape: bf16[128,128], index: 1, kind: input, shape index: {}]
  %s2 = inlined_call_operand.vmem [shape: f32[1,128], index: 2, kind: input, shape index: {}]
  %s3 = inlined_call_operand.vmem [shape: bf16[10240,128], index: 3, kind: output, shape index: {}]
  %s4 = sld [smem:[#allocation0]]
  $region45: #{_lambda_.5} parent=0
    _
  %s6 = ssub.s32 1, %s4
  %s7 = scalar_select 0, %s6, %s4
  loop: start=0, step=1, limit=4
  $region2: #{_lambda_.5} parent=0 // loop_pre_header
    _
  $region3: #{_lambda_.5} parent=0 // loop_header
    %s9 = sphi 0, %s13
    %p10 = scmp.ge.s32.totalorder %s9, 4
    %s19 = sphi 0, %s21
    %s22 = sphi 0, %s19
    %s23 = sphi 0, %s22
    %s39 = sphi 0, %s23
    %s43 = sphi 0, %s43
    %s45 = sphi 0, %s43
    %s46 = sphi 0, %s45
    %s60 = sphi 0, %s46
    %s64 = sphi 0, %s64
    %s66 = sphi 0, %s64
    %s67 = sphi 0, %s66
    %s81 = sphi 0, %s67
    %s87 = sphi 0, %s89
    %s90 = sphi 0, %s87
    %s91 = sphi 0, %s90
    %s107 = sphi 0, %s91
  $region4: #{_lambda_.5} parent=0 // loop_header_branch
    %12 = sbr.rel (%p10) target = $region8
  $region5: #{_lambda_.5} parent=0 // loop_body
    %s14 = ssub.s32 %s9, 1
    %s15 = ssub.s32 %s9, 2
    %s16 = sadd.s32 %s9, 1
    %s17 = ssub.s32 %s9, %s16
    %p18 = scmp.eq.s32.totalorder %s17, 0
    %s20 = sadd.s32 %s19, 1
    %s21 = scalar_select %p18, %s19, %s20
    %p24 = pneg %p18
    %p25 = scmp.eq.s32.totalorder %s9, 1
    %p26 = por %p24, %p25
    %p27 = scmp.ne.s32.totalorder %s19, %s22
    %p28 = scmp.eq.s32.totalorder %s9, 0
    %p29 = por %p27, %p28
    %p30 = scmp.ne.s32.totalorder %s19, %s22
    %p31 = scmp.eq.s32.totalorder %s14, 1
    %p32 = por %p30, %p31
    %p33 = scmp.ne.s32.totalorder %s22, %s23
    %p34 = scmp.eq.s32.totalorder %s14, 0
    %p35 = por %p33, %p34
    %p36 = scmp.ne.s32.totalorder %s22, %s23
    %p37 = scmp.eq.s32.totalorder %s15, 1
    %p38 = por %p36, %p37
    %p40 = scmp.ne.s32.totalorder %s23, %s39
    %p41 = scmp.eq.s32.totalorder %s15, 0
    %p42 = por %p40, %p41
    %s44 = sadd.s32 %s43, 1
    %p47 = scmp.eq.s32.totalorder %s9, 1
    %p48 = scmp.ne.s32.totalorder %s43, %s45
    %p49 = scmp.eq.s32.totalorder %s9, 0
    %p50 = por %p48, %p49
    %p51 = scmp.ne.s32.totalorder %s43, %s45
    %p52 = scmp.eq.s32.totalorder %s14, 1
    %p53 = por %p51, %p52
    %p54 = scmp.ne.s32.totalorder %s45, %s46
    %p55 = scmp.eq.s32.totalorder %s14, 0
    %p56 = por %p54, %p55
    %p57 = scmp.ne.s32.totalorder %s45, %s46
    %p58 = scmp.eq.s32.totalorder %s15, 1
    %p59 = por %p57, %p58
    %p61 = scmp.ne.s32.totalorder %s46, %s60
    %p62 = scmp.eq.s32.totalorder %s15, 0
    %p63 = por %p61, %p62
    %s65 = sadd.s32 %s64, 1
    %p68 = scmp.eq.s32.totalorder %s9, 1
    %p69 = scmp.ne.s32.totalorder %s64, %s66
    %p70 = scmp.eq.s32.totalorder %s9, 0
    %p71 = por %p69, %p70
    %p72 = scmp.ne.s32.totalorder %s64, %s66
    %p73 = scmp.eq.s32.totalorder %s14, 1
    %p74 = por %p72, %p73
    %p75 = scmp.ne.s32.totalorder %s66, %s67
    %p76 = scmp.eq.s32.totalorder %s14, 0
    %p77 = por %p75, %p76
    %p78 = scmp.ne.s32.totalorder %s66, %s67
    %p79 = scmp.eq.s32.totalorder %s15, 1
    %p80 = por %p78, %p79
    %p82 = scmp.ne.s32.totalorder %s67, %s81
    %p83 = scmp.eq.s32.totalorder %s15, 0
    %p84 = por %p82, %p83
    %s85 = ssub.s32 %s9, %s16
    %p86 = scmp.eq.s32.totalorder %s85, 0
    %s88 = sadd.s32 %s87, 1
    %s89 = scalar_select %p86, %s87, %s88
    %p92 = pneg %p86
    %p93 = scmp.eq.s32.totalorder %s9, 1
    %p94 = por %p92, %p93
    %p95 = scmp.ne.s32.totalorder %s87, %s90
    %p96 = scmp.eq.s32.totalorder %s9, 0
    %p97 = por %p95, %p96
    %p98 = scmp.ne.s32.totalorder %s87, %s90
    %p99 = scmp.eq.s32.totalorder %s14, 1
    %p100 = por %p98, %p99
    %p101 = scmp.ne.s32.totalorder %s90, %s91
    %p102 = scmp.eq.s32.totalorder %s14, 0
    %p103 = por %p101, %p102
    %p104 = scmp.ne.s32.totalorder %s90, %s91
    %p105 = scmp.eq.s32.totalorder %s15, 1
    %p106 = por %p104, %p105
    %p108 = scmp.ne.s32.totalorder %s91, %s107
    %p109 = scmp.eq.s32.totalorder %s15, 0
    %p110 = por %p108, %p109
    %p111 = scmp.le.s32.totalorder 1, %s9
    %p112 = scmp.lt.s32.totalorder %s9, 3
    %p113 = pnand %p111, %p112
    %p114 = pneg %p113
    // Predicated region
    $region9: #{_lambda_.5} parent=5 // pred_check
      _
    $region10: #{_lambda_.5} parent=5 // pred_check_branch
      %116 = sbr.rel (%p113) target = $region12
    $region11: #{_lambda_.5} parent=5 // pred_region
      %s117 = ssub.s32 %s9, 1
      // Predicated region
      $region13: #{_lambda_.5} parent=11 // pred_check
        %p118 = pneg %p56
      $region14: #{_lambda_.5} parent=11 // pred_check_branch
        %120 = sbr.rel (%p118) target = $region16
      $region15: #{_lambda_.5} parent=11 // pred_region
        _
      $region16: #{_lambda_.5} parent=11 // pred_fallthru
        _
      // Predicated region
      $region17: #{_lambda_.5} parent=11 // pred_check
        %p121 = pneg %p77
      $region18: #{_lambda_.5} parent=11 // pred_check_branch
        %123 = sbr.rel (%p121) target = $region20
      $region19: #{_lambda_.5} parent=11 // pred_region
        _
      $region20: #{_lambda_.5} parent=11 // pred_fallthru
        _
    $region12: #{_lambda_.5} parent=5 // pred_fallthru
      _
    %p124 = scmp.lt.s32.totalorder %s9, 2
    // Predicated region
    $region21: #{_lambda_.5} parent=5 // pred_check
      %p125 = pneg %p124
    $region22: #{_lambda_.5} parent=5 // pred_check_branch
      %127 = sbr.rel (%p125) target = $region24
    $region23: #{_lambda_.5} parent=5 // pred_region
      // Predicated region
      $region25: #{_lambda_.5} parent=23 // pred_check
        %p128 = pneg %p29
      $region26: #{_lambda_.5} parent=23 // pred_check_branch
        %130 = sbr.rel (%p128) target = $region28
      $region27: #{_lambda_.5} parent=23 // pred_region
        %s131 = smul.u32 640, %s9
        %p132 = scmp.lt.s32.totalorder %s131, 1279
        %s133 = scalar_select %p132, %s131, 1279
        %s134 = smul.addr %s133, 4
        %s135 = scalar_lea.vmem %s0, %s134
        %s136 = smul.u32 640, %s9
      $region28: #{_lambda_.5} parent=23 // pred_fallthru
        _
    $region24: #{_lambda_.5} parent=5 // pred_fallthru
      _
    %p137 = scmp.le.s32.totalorder 1, %s9
    %p138 = scmp.lt.s32.totalorder %s9, 3
    %p139 = pnand %p137, %p138
    %p140 = pneg %p139
    // Predicated region
    $region29: #{_lambda_.5} parent=5 // pred_check
      _
    $region30: #{_lambda_.5} parent=5 // pred_check_branch
      %142 = sbr.rel (%p139) target = $region32
    $region31: #{_lambda_.5} parent=5 // pred_region
      %s143 = ssub.s32 %s9, 1
      %s144 = smul.u32 640, %s14
      %p145 = scmp.lt.s32.totalorder %s144, 1279
      %s146 = scalar_select %p145, %s144, 1279
      %s147 = smul.addr %s146, 4
      %s148 = scalar_lea.vmem %s0, %s147
      %p149 = pneg %p35
      %p150 = pneg %p32
      %p151 = pneg %p56
      %p152 = pneg %p53
      %p153 = pneg %p77
      %p154 = pneg %p74
      %p155 = pneg %p103
      %p156 = pneg %p100
      %s157 = smul.u32 640, %s14
      %p158 = scmp.lt.s32.totalorder %s157, 1279
      %s159 = scalar_select %p158, %s157, 1279
      %s160 = smul.addr %s159, 4
      %s161 = scalar_lea.vmem %s3, %s160
      %s162 = smul.u32 640, %s14
      %p163 = scmp.lt.s32.totalorder %s162, 1279
      %s164 = scalar_select %p163, %s162, 1279
      %s165 = smul.addr %s164, 4
      %s166 = scalar_lea.vmem %s0, %s165
      %s167 = smul.u32 640, %s14
      %s168 = smul.u32 640, %s14
      %p169 = scmp.lt.s32.totalorder %s168, 1279
      %s170 = scalar_select %p169, %s168, 1279
      %s171 = smul.addr %s170, 4
      %s172 = scalar_lea.vmem %s3, %s171
      %s173 = smul.u32 640, %s14
      %v174 = vld [vmem:[%s166] sm:$0xf]
      %v175 = vld [vmem:[%s166 + $0x4] sm:$0xf]
      %v176 = vld [vmem:[%s166 + $0x8] sm:$0xf]
      %v177 = vld [vmem:[%s166 + $0xc] sm:$0xf]
      %v178 = vld [vmem:[%s166 + $0x10] sm:$0xf]
      %v179 = vld [vmem:[%s166 + $0x14] sm:$0xf]
      %v180 = vld [vmem:[%s166 + $0x18] sm:$0xf]
      %v181 = vld [vmem:[%s166 + $0x1c] sm:$0xf]
      %v182 = vld [vmem:[%s166 + $0x20] sm:$0xf]
      %v183 = vld [vmem:[%s166 + $0x24] sm:$0xf]
      %v184 = vld [vmem:[%s166 + $0x28] sm:$0xf]
      %v185 = vld [vmem:[%s166 + $0x2c] sm:$0xf]
      %v186 = vld [vmem:[%s166 + $0x30] sm:$0xf]
      %v187 = vld [vmem:[%s166 + $0x34] sm:$0xf]
      %v188 = vld [vmem:[%s166 + $0x38] sm:$0xf]
      %v189 = vld [vmem:[%s166 + $0x3c] sm:$0xf]
      %v190 = vld [vmem:[%s166 + $0x40] sm:$0xf]
      %v191 = vld [vmem:[%s166 + $0x44] sm:$0xf]
      %v192 = vld [vmem:[%s166 + $0x48] sm:$0xf]
      %v193 = vld [vmem:[%s166 + $0x4c] sm:$0xf]
      %v194 = vld [vmem:[%s166 + $0x50] sm:$0xf]
      %v195 = vld [vmem:[%s166 + $0x54] sm:$0xf]
      %v196 = vld [vmem:[%s166 + $0x58] sm:$0xf]
      %v197 = vld [vmem:[%s166 + $0x5c] sm:$0xf]
      %v198 = vld [vmem:[%s166 + $0x60] sm:$0xf]
      %v199 = vld [vmem:[%s166 + $0x64] sm:$0xf]
      %v200 = vld [vmem:[%s166 + $0x68] sm:$0xf]
      %v201 = vld [vmem:[%s166 + $0x6c] sm:$0xf]
      %v202 = vld [vmem:[%s166 + $0x70] sm:$0xf]
      %v203 = vld [vmem:[%s166 + $0x74] sm:$0xf]
      %v204 = vld [vmem:[%s166 + $0x78] sm:$0xf]
      %v205 = vld [vmem:[%s166 + $0x7c] sm:$0xf]
      %v206 = vld [vmem:[%s166 + $0x80] sm:$0xf]
      %v207 = vld [vmem:[%s166 + $0x84] sm:$0xf]
      %v208 = vld [vmem:[%s166 + $0x88] sm:$0xf]
      %v209 = vld [vmem:[%s166 + $0x8c] sm:$0xf]
      %v210 = vld [vmem:[%s166 + $0x90] sm:$0xf]
      %v211 = vld [vmem:[%s166 + $0x94] sm:$0xf]
      %v212 = vld [vmem:[%s166 + $0x98] sm:$0xf]
      %v213 = vld [vmem:[%s166 + $0x9c] sm:$0xf]
      %v214 = vld [vmem:[%s166 + $0xa0] sm:$0xf]
      %v215 = vld [vmem:[%s166 + $0xa4] sm:$0xf]
      %v216 = vld [vmem:[%s166 + $0xa8] sm:$0xf]
      %v217 = vld [vmem:[%s166 + $0xac] sm:$0xf]
      %v218 = vld [vmem:[%s166 + $0xb0] sm:$0xf]
      %v219 = vld [vmem:[%s166 + $0xb4] sm:$0xf]
      %v220 = vld [vmem:[%s166 + $0xb8] sm:$0xf]
      %v221 = vld [vmem:[%s166 + $0xbc] sm:$0xf]
      %v222 = vld [vmem:[%s166 + $0xc0] sm:$0xf]
      %v223 = vld [vmem:[%s166 + $0xc4] sm:$0xf]
      %v224 = vld [vmem:[%s166 + $0xc8] sm:$0xf]
      %v225 = vld [vmem:[%s166 + $0xcc] sm:$0xf]
      %v226 = vld [vmem:[%s166 + $0xd0] sm:$0xf]
      %v227 = vld [vmem:[%s166 + $0xd4] sm:$0xf]
      %v228 = vld [vmem:[%s166 + $0xd8] sm:$0xf]
      %v229 = vld [vmem:[%s166 + $0xdc] sm:$0xf]
      %v230 = vld [vmem:[%s166 + $0xe0] sm:$0xf]
      %v231 = vld [vmem:[%s166 + $0xe4] sm:$0xf]
      %v232 = vld [vmem:[%s166 + $0xe8] sm:$0xf]
      %v233 = vld [vmem:[%s166 + $0xec] sm:$0xf]
      %v234 = vld [vmem:[%s166 + $0xf0] sm:$0xf]
      %v235 = vld [vmem:[%s166 + $0xf4] sm:$0xf]
      %v236 = vld [vmem:[%s166 + $0xf8] sm:$0xf]
      %v237 = vld [vmem:[%s166 + $0xfc] sm:$0xf]
      %v238 = vld [vmem:[%s166 + $0x100] sm:$0xf]
      %v239 = vld [vmem:[%s166 + $0x104] sm:$0xf]
      %v240 = vld [vmem:[%s166 + $0x108] sm:$0xf]
      %v241 = vld [vmem:[%s166 + $0x10c] sm:$0xf]
      %v242 = vld [vmem:[%s166 + $0x110] sm:$0xf]
      %v243 = vld [vmem:[%s166 + $0x114] sm:$0xf]
      %v244 = vld [vmem:[%s166 + $0x118] sm:$0xf]
      %v245 = vld [vmem:[%s166 + $0x11c] sm:$0xf]
      %v246 = vld [vmem:[%s166 + $0x120] sm:$0xf]
      %v247 = vld [vmem:[%s166 + $0x124] sm:$0xf]
      %v248 = vld [vmem:[%s166 + $0x128] sm:$0xf]
      %v249 = vld [vmem:[%s166 + $0x12c] sm:$0xf]
      %v250 = vld [vmem:[%s166 + $0x130] sm:$0xf]
      %v251 = vld [vmem:[%s166 + $0x134] sm:$0xf]
      %v252 = vld [vmem:[%s166 + $0x138] sm:$0xf]
      %v253 = vld [vmem:[%s166 + $0x13c] sm:$0xf]
      %v254 = vld [vmem:[%s166 + $0x140] sm:$0xf]
      %v255 = vld [vmem:[%s166 + $0x144] sm:$0xf]
      %v256 = vld [vmem:[%s166 + $0x148] sm:$0xf]
      %v257 = vld [vmem:[%s166 + $0x14c] sm:$0xf]
      %v258 = vld [vmem:[%s166 + $0x150] sm:$0xf]
      %v259 = vld [vmem:[%s166 + $0x154] sm:$0xf]
      %v260 = vld [vmem:[%s166 + $0x158] sm:$0xf]
      %v261 = vld [vmem:[%s166 + $0x15c] sm:$0xf]
      %v262 = vld [vmem:[%s166 + $0x160] sm:$0xf]
      %v263 = vld [vmem:[%s166 + $0x164] sm:$0xf]
      %v264 = vld [vmem:[%s166 + $0x168] sm:$0xf]
      %v265 = vld [vmem:[%s166 + $0x16c] sm:$0xf]
      %v266 = vld [vmem:[%s166 + $0x170] sm:$0xf]
      %v267 = vld [vmem:[%s166 + $0x174] sm:$0xf]
      %v268 = vld [vmem:[%s166 + $0x178] sm:$0xf]
      %v269 = vld [vmem:[%s166 + $0x17c] sm:$0xf]
      %v270 = vld [vmem:[%s166 + $0x180] sm:$0xf]
      %v271 = vld [vmem:[%s166 + $0x184] sm:$0xf]
      %v272 = vld [vmem:[%s166 + $0x188] sm:$0xf]
      %v273 = vld [vmem:[%s166 + $0x18c] sm:$0xf]
      %v274 = vld [vmem:[%s166 + $0x190] sm:$0xf]
      %v275 = vld [vmem:[%s166 + $0x194] sm:$0xf]
      %v276 = vld [vmem:[%s166 + $0x198] sm:$0xf]
      %v277 = vld [vmem:[%s166 + $0x19c] sm:$0xf]
      %v278 = vld [vmem:[%s166 + $0x1a0] sm:$0xf]
      %v279 = vld [vmem:[%s166 + $0x1a4] sm:$0xf]
      %v280 = vld [vmem:[%s166 + $0x1a8] sm:$0xf]
      %v281 = vld [vmem:[%s166 + $0x1ac] sm:$0xf]
      %v282 = vld [vmem:[%s166 + $0x1b0] sm:$0xf]
      %v283 = vld [vmem:[%s166 + $0x1b4] sm:$0xf]
      %v284 = vld [vmem:[%s166 + $0x1b8] sm:$0xf]
      %v285 = vld [vmem:[%s166 + $0x1bc] sm:$0xf]
      %v286 = vld [vmem:[%s166 + $0x1c0] sm:$0xf]
      %v287 = vld [vmem:[%s166 + $0x1c4] sm:$0xf]
      %v288 = vld [vmem:[%s166 + $0x1c8] sm:$0xf]
      %v289 = vld [vmem:[%s166 + $0x1cc] sm:$0xf]
      %v290 = vld [vmem:[%s166 + $0x1d0] sm:$0xf]
      %v291 = vld [vmem:[%s166 + $0x1d4] sm:$0xf]
      %v292 = vld [vmem:[%s166 + $0x1d8] sm:$0xf]
      %v293 = vld [vmem:[%s166 + $0x1dc] sm:$0xf]
      %v294 = vld [vmem:[%s166 + $0x1e0] sm:$0xf]
      %v295 = vld [vmem:[%s166 + $0x1e4] sm:$0xf]
      %v296 = vld [vmem:[%s166 + $0x1e8] sm:$0xf]
      %v297 = vld [vmem:[%s166 + $0x1ec] sm:$0xf]
      %v298 = vld [vmem:[%s166 + $0x1f0] sm:$0xf]
      %v299 = vld [vmem:[%s166 + $0x1f4] sm:$0xf]
      %v300 = vld [vmem:[%s166 + $0x1f8] sm:$0xf]
      %v301 = vld [vmem:[%s166 + $0x1fc] sm:$0xf]
      %v302 = vld [vmem:[%s166 + $0x200] sm:$0xf]
      %v303 = vld [vmem:[%s166 + $0x204] sm:$0xf]
      %v304 = vld [vmem:[%s166 + $0x208] sm:$0xf]
      %v305 = vld [vmem:[%s166 + $0x20c] sm:$0xf]
      %v306 = vld [vmem:[%s166 + $0x210] sm:$0xf]
      %v307 = vld [vmem:[%s166 + $0x214] sm:$0xf]
      %v308 = vld [vmem:[%s166 + $0x218] sm:$0xf]
      %v309 = vld [vmem:[%s166 + $0x21c] sm:$0xf]
      %v310 = vld [vmem:[%s166 + $0x220] sm:$0xf]
      %v311 = vld [vmem:[%s166 + $0x224] sm:$0xf]
      %v312 = vld [vmem:[%s166 + $0x228] sm:$0xf]
      %v313 = vld [vmem:[%s166 + $0x22c] sm:$0xf]
      %v314 = vld [vmem:[%s166 + $0x230] sm:$0xf]
      %v315 = vld [vmem:[%s166 + $0x234] sm:$0xf]
      %v316 = vld [vmem:[%s166 + $0x238] sm:$0xf]
      %v317 = vld [vmem:[%s166 + $0x23c] sm:$0xf]
      %v318 = vld [vmem:[%s166 + $0x240] sm:$0xf]
      %v319 = vld [vmem:[%s166 + $0x244] sm:$0xf]
      %v320 = vld [vmem:[%s166 + $0x248] sm:$0xf]
      %v321 = vld [vmem:[%s166 + $0x24c] sm:$0xf]
      %v322 = vld [vmem:[%s166 + $0x250] sm:$0xf]
      %v323 = vld [vmem:[%s166 + $0x254] sm:$0xf]
      %v324 = vld [vmem:[%s166 + $0x258] sm:$0xf]
      %v325 = vld [vmem:[%s166 + $0x25c] sm:$0xf]
      %v326 = vld [vmem:[%s166 + $0x260] sm:$0xf]
      %v327 = vld [vmem:[%s166 + $0x264] sm:$0xf]
      %v328 = vld [vmem:[%s166 + $0x268] sm:$0xf]
      %v329 = vld [vmem:[%s166 + $0x26c] sm:$0xf]
      %v330 = vld [vmem:[%s166 + $0x270] sm:$0xf]
      %v331 = vld [vmem:[%s166 + $0x274] sm:$0xf]
      %v332 = vld [vmem:[%s166 + $0x278] sm:$0xf]
      %v333 = vld [vmem:[%s166 + $0x27c] sm:$0xf]
      %v334 = vld [vmem:[%s166 + $0x280] sm:$0xf]
      %v335 = vld [vmem:[%s166 + $0x284] sm:$0xf]
      %v336 = vld [vmem:[%s166 + $0x288] sm:$0xf]
      %v337 = vld [vmem:[%s166 + $0x28c] sm:$0xf]
      %v338 = vld [vmem:[%s166 + $0x290] sm:$0xf]
      %v339 = vld [vmem:[%s166 + $0x294] sm:$0xf]
      %v340 = vld [vmem:[%s166 + $0x298] sm:$0xf]
      %v341 = vld [vmem:[%s166 + $0x29c] sm:$0xf]
      %v342 = vld [vmem:[%s166 + $0x2a0] sm:$0xf]
      %v343 = vld [vmem:[%s166 + $0x2a4] sm:$0xf]
      %v344 = vld [vmem:[%s166 + $0x2a8] sm:$0xf]
      %v345 = vld [vmem:[%s166 + $0x2ac] sm:$0xf]
      %v346 = vld [vmem:[%s166 + $0x2b0] sm:$0xf]
      %v347 = vld [vmem:[%s166 + $0x2b4] sm:$0xf]
      %v348 = vld [vmem:[%s166 + $0x2b8] sm:$0xf]
      %v349 = vld [vmem:[%s166 + $0x2bc] sm:$0xf]
      %v350 = vld [vmem:[%s166 + $0x2c0] sm:$0xf]
      %v351 = vld [vmem:[%s166 + $0x2c4] sm:$0xf]
      %v352 = vld [vmem:[%s166 + $0x2c8] sm:$0xf]
      %v353 = vld [vmem:[%s166 + $0x2cc] sm:$0xf]
      %v354 = vld [vmem:[%s166 + $0x2d0] sm:$0xf]
      %v355 = vld [vmem:[%s166 + $0x2d4] sm:$0xf]
      %v356 = vld [vmem:[%s166 + $0x2d8] sm:$0xf]
      %v357 = vld [vmem:[%s166 + $0x2dc] sm:$0xf]
      %v358 = vld [vmem:[%s166 + $0x2e0] sm:$0xf]
      %v359 = vld [vmem:[%s166 + $0x2e4] sm:$0xf]
      %v360 = vld [vmem:[%s166 + $0x2e8] sm:$0xf]
      %v361 = vld [vmem:[%s166 + $0x2ec] sm:$0xf]
      %v362 = vld [vmem:[%s166 + $0x2f0] sm:$0xf]
      %v363 = vld [vmem:[%s166 + $0x2f4] sm:$0xf]
      %v364 = vld [vmem:[%s166 + $0x2f8] sm:$0xf]
      %v365 = vld [vmem:[%s166 + $0x2fc] sm:$0xf]
      %v366 = vld [vmem:[%s166 + $0x300] sm:$0xf]
      %v367 = vld [vmem:[%s166 + $0x304] sm:$0xf]
      %v368 = vld [vmem:[%s166 + $0x308] sm:$0xf]
      %v369 = vld [vmem:[%s166 + $0x30c] sm:$0xf]
      %v370 = vld [vmem:[%s166 + $0x310] sm:$0xf]
      %v371 = vld [vmem:[%s166 + $0x314] sm:$0xf]
      %v372 = vld [vmem:[%s166 + $0x318] sm:$0xf]
      %v373 = vld [vmem:[%s166 + $0x31c] sm:$0xf]
      %v374 = vld [vmem:[%s166 + $0x320] sm:$0xf]
      %v375 = vld [vmem:[%s166 + $0x324] sm:$0xf]
      %v376 = vld [vmem:[%s166 + $0x328] sm:$0xf]
      %v377 = vld [vmem:[%s166 + $0x32c] sm:$0xf]
      %v378 = vld [vmem:[%s166 + $0x330] sm:$0xf]
      %v379 = vld [vmem:[%s166 + $0x334] sm:$0xf]
      %v380 = vld [vmem:[%s166 + $0x338] sm:$0xf]
      %v381 = vld [vmem:[%s166 + $0x33c] sm:$0xf]
      %v382 = vld [vmem:[%s166 + $0x340] sm:$0xf]
      %v383 = vld [vmem:[%s166 + $0x344] sm:$0xf]
      %v384 = vld [vmem:[%s166 + $0x348] sm:$0xf]
      %v385 = vld [vmem:[%s166 + $0x34c] sm:$0xf]
      %v386 = vld [vmem:[%s166 + $0x350] sm:$0xf]
      %v387 = vld [vmem:[%s166 + $0x354] sm:$0xf]
      %v388 = vld [vmem:[%s166 + $0x358] sm:$0xf]
      %v389 = vld [vmem:[%s166 + $0x35c] sm:$0xf]
      %v390 = vld [vmem:[%s166 + $0x360] sm:$0xf]
      %v391 = vld [vmem:[%s166 + $0x364] sm:$0xf]
      %v392 = vld [vmem:[%s166 + $0x368] sm:$0xf]
      %v393 = vld [vmem:[%s166 + $0x36c] sm:$0xf]
      %v394 = vld [vmem:[%s166 + $0x370] sm:$0xf]
      %v395 = vld [vmem:[%s166 + $0x374] sm:$0xf]
      %v396 = vld [vmem:[%s166 + $0x378] sm:$0xf]
      %v397 = vld [vmem:[%s166 + $0x37c] sm:$0xf]
      %v398 = vld [vmem:[%s166 + $0x380] sm:$0xf]
      %v399 = vld [vmem:[%s166 + $0x384] sm:$0xf]
      %v400 = vld [vmem:[%s166 + $0x388] sm:$0xf]
      %v401 = vld [vmem:[%s166 + $0x38c] sm:$0xf]
      %v402 = vld [vmem:[%s166 + $0x390] sm:$0xf]
      %v403 = vld [vmem:[%s166 + $0x394] sm:$0xf]
      %v404 = vld [vmem:[%s166 + $0x398] sm:$0xf]
      %v405 = vld [vmem:[%s166 + $0x39c] sm:$0xf]
      %v406 = vld [vmem:[%s166 + $0x3a0] sm:$0xf]
      %v407 = vld [vmem:[%s166 + $0x3a4] sm:$0xf]
      %v408 = vld [vmem:[%s166 + $0x3a8] sm:$0xf]
      %v409 = vld [vmem:[%s166 + $0x3ac] sm:$0xf]
      %v410 = vld [vmem:[%s166 + $0x3b0] sm:$0xf]
      %v411 = vld [vmem:[%s166 + $0x3b4] sm:$0xf]
      %v412 = vld [vmem:[%s166 + $0x3b8] sm:$0xf]
      %v413 = vld [vmem:[%s166 + $0x3bc] sm:$0xf]
      %v414 = vld [vmem:[%s166 + $0x3c0] sm:$0xf]
      %v415 = vld [vmem:[%s166 + $0x3c4] sm:$0xf]
      %v416 = vld [vmem:[%s166 + $0x3c8] sm:$0xf]
      %v417 = vld [vmem:[%s166 + $0x3cc] sm:$0xf]
      %v418 = vld [vmem:[%s166 + $0x3d0] sm:$0xf]
      %v419 = vld [vmem:[%s166 + $0x3d4] sm:$0xf]
      %v420 = vld [vmem:[%s166 + $0x3d8] sm:$0xf]
      %v421 = vld [vmem:[%s166 + $0x3dc] sm:$0xf]
      %v422 = vld [vmem:[%s166 + $0x3e0] sm:$0xf]
      %v423 = vld [vmem:[%s166 + $0x3e4] sm:$0xf]
      %v424 = vld [vmem:[%s166 + $0x3e8] sm:$0xf]
      %v425 = vld [vmem:[%s166 + $0x3ec] sm:$0xf]
      %v426 = vld [vmem:[%s166 + $0x3f0] sm:$0xf]
      %v427 = vld [vmem:[%s166 + $0x3f4] sm:$0xf]
      %v428 = vld [vmem:[%s166 + $0x3f8] sm:$0xf]
      %v429 = vld [vmem:[%s166 + $0x3fc] sm:$0xf]
      %v430 = vld [vmem:[%s166 + $0x400] sm:$0xf]
      %v431 = vld [vmem:[%s166 + $0x404] sm:$0xf]
      %v432 = vld [vmem:[%s166 + $0x408] sm:$0xf]
      %v433 = vld [vmem:[%s166 + $0x40c] sm:$0xf]
      %v434 = vld [vmem:[%s166 + $0x410] sm:$0xf]
      %v435 = vld [vmem:[%s166 + $0x414] sm:$0xf]
      %v436 = vld [vmem:[%s166 + $0x418] sm:$0xf]
      %v437 = vld [vmem:[%s166 + $0x41c] sm:$0xf]
      %v438 = vld [vmem:[%s166 + $0x420] sm:$0xf]
      %v439 = vld [vmem:[%s166 + $0x424] sm:$0xf]
      %v440 = vld [vmem:[%s166 + $0x428] sm:$0xf]
      %v441 = vld [vmem:[%s166 + $0x42c] sm:$0xf]
      %v442 = vld [vmem:[%s166 + $0x430] sm:$0xf]
      %v443 = vld [vmem:[%s166 + $0x434] sm:$0xf]
      %v444 = vld [vmem:[%s166 + $0x438] sm:$0xf]
      %v445 = vld [vmem:[%s166 + $0x43c] sm:$0xf]
      %v446 = vld [vmem:[%s166 + $0x440] sm:$0xf]
      %v447 = vld [vmem:[%s166 + $0x444] sm:$0xf]
      %v448 = vld [vmem:[%s166 + $0x448] sm:$0xf]
      %v449 = vld [vmem:[%s166 + $0x44c] sm:$0xf]
      %v450 = vld [vmem:[%s166 + $0x450] sm:$0xf]
      %v451 = vld [vmem:[%s166 + $0x454] sm:$0xf]
      %v452 = vld [vmem:[%s166 + $0x458] sm:$0xf]
      %v453 = vld [vmem:[%s166 + $0x45c] sm:$0xf]
      %v454 = vld [vmem:[%s166 + $0x460] sm:$0xf]
      %v455 = vld [vmem:[%s166 + $0x464] sm:$0xf]
      %v456 = vld [vmem:[%s166 + $0x468] sm:$0xf]
      %v457 = vld [vmem:[%s166 + $0x46c] sm:$0xf]
      %v458 = vld [vmem:[%s166 + $0x470] sm:$0xf]
      %v459 = vld [vmem:[%s166 + $0x474] sm:$0xf]
      %v460 = vld [vmem:[%s166 + $0x478] sm:$0xf]
      %v461 = vld [vmem:[%s166 + $0x47c] sm:$0xf]
      %v462 = vld [vmem:[%s166 + $0x480] sm:$0xf]
      %v463 = vld [vmem:[%s166 + $0x484] sm:$0xf]
      %v464 = vld [vmem:[%s166 + $0x488] sm:$0xf]
      %v465 = vld [vmem:[%s166 + $0x48c] sm:$0xf]
      %v466 = vld [vmem:[%s166 + $0x490] sm:$0xf]
      %v467 = vld [vmem:[%s166 + $0x494] sm:$0xf]
      %v468 = vld [vmem:[%s166 + $0x498] sm:$0xf]
      %v469 = vld [vmem:[%s166 + $0x49c] sm:$0xf]
      %v470 = vld [vmem:[%s166 + $0x4a0] sm:$0xf]
      %v471 = vld [vmem:[%s166 + $0x4a4] sm:$0xf]
      %v472 = vld [vmem:[%s166 + $0x4a8] sm:$0xf]
      %v473 = vld [vmem:[%s166 + $0x4ac] sm:$0xf]
      %v474 = vld [vmem:[%s166 + $0x4b0] sm:$0xf]
      %v475 = vld [vmem:[%s166 + $0x4b4] sm:$0xf]
      %v476 = vld [vmem:[%s166 + $0x4b8] sm:$0xf]
      %v477 = vld [vmem:[%s166 + $0x4bc] sm:$0xf]
      %v478 = vld [vmem:[%s166 + $0x4c0] sm:$0xf]
      %v479 = vld [vmem:[%s166 + $0x4c4] sm:$0xf]
      %v480 = vld [vmem:[%s166 + $0x4c8] sm:$0xf]
      %v481 = vld [vmem:[%s166 + $0x4cc] sm:$0xf]
      %v482 = vld [vmem:[%s166 + $0x4d0] sm:$0xf]
      %v483 = vld [vmem:[%s166 + $0x4d4] sm:$0xf]
      %v484 = vld [vmem:[%s166 + $0x4d8] sm:$0xf]
      %v485 = vld [vmem:[%s166 + $0x4dc] sm:$0xf]
      %v486 = vld [vmem:[%s166 + $0x4e0] sm:$0xf]
      %v487 = vld [vmem:[%s166 + $0x4e4] sm:$0xf]
      %v488 = vld [vmem:[%s166 + $0x4e8] sm:$0xf]
      %v489 = vld [vmem:[%s166 + $0x4ec] sm:$0xf]
      %v490 = vld [vmem:[%s166 + $0x4f0] sm:$0xf]
      %v491 = vld [vmem:[%s166 + $0x4f4] sm:$0xf]
      %v492 = vld [vmem:[%s166 + $0x4f8] sm:$0xf]
      %v493 = vld [vmem:[%s166 + $0x4fc] sm:$0xf]
      %v494 = vld [vmem:[%s166 + $0x500] sm:$0xf]
      %v495 = vld [vmem:[%s166 + $0x504] sm:$0xf]
      %v496 = vld [vmem:[%s166 + $0x508] sm:$0xf]
      %v497 = vld [vmem:[%s166 + $0x50c] sm:$0xf]
      %v498 = vld [vmem:[%s166 + $0x510] sm:$0xf]
      %v499 = vld [vmem:[%s166 + $0x514] sm:$0xf]
      %v500 = vld [vmem:[%s166 + $0x518] sm:$0xf]
      %v501 = vld [vmem:[%s166 + $0x51c] sm:$0xf]
      %v502 = vld [vmem:[%s166 + $0x520] sm:$0xf]
      %v503 = vld [vmem:[%s166 + $0x524] sm:$0xf]
      %v504 = vld [vmem:[%s166 + $0x528] sm:$0xf]
      %v505 = vld [vmem:[%s166 + $0x52c] sm:$0xf]
      %v506 = vld [vmem:[%s166 + $0x530] sm:$0xf]
      %v507 = vld [vmem:[%s166 + $0x534] sm:$0xf]
      %v508 = vld [vmem:[%s166 + $0x538] sm:$0xf]
      %v509 = vld [vmem:[%s166 + $0x53c] sm:$0xf]
      %v510 = vld [vmem:[%s166 + $0x540] sm:$0xf]
      %v511 = vld [vmem:[%s166 + $0x544] sm:$0xf]
      %v512 = vld [vmem:[%s166 + $0x548] sm:$0xf]
      %v513 = vld [vmem:[%s166 + $0x54c] sm:$0xf]
      %v514 = vld [vmem:[%s166 + $0x550] sm:$0xf]
      %v515 = vld [vmem:[%s166 + $0x554] sm:$0xf]
      %v516 = vld [vmem:[%s166 + $0x558] sm:$0xf]
      %v517 = vld [vmem:[%s166 + $0x55c] sm:$0xf]
      %v518 = vld [vmem:[%s166 + $0x560] sm:$0xf]
      %v519 = vld [vmem:[%s166 + $0x564] sm:$0xf]
      %v520 = vld [vmem:[%s166 + $0x568] sm:$0xf]
      %v521 = vld [vmem:[%s166 + $0x56c] sm:$0xf]
      %v522 = vld [vmem:[%s166 + $0x570] sm:$0xf]
      %v523 = vld [vmem:[%s166 + $0x574] sm:$0xf]
      %v524 = vld [vmem:[%s166 + $0x578] sm:$0xf]
      %v525 = vld [vmem:[%s166 + $0x57c] sm:$0xf]
      %v526 = vld [vmem:[%s166 + $0x580] sm:$0xf]
      %v527 = vld [vmem:[%s166 + $0x584] sm:$0xf]
      %v528 = vld [vmem:[%s166 + $0x588] sm:$0xf]
      %v529 = vld [vmem:[%s166 + $0x58c] sm:$0xf]
      %v530 = vld [vmem:[%s166 + $0x590] sm:$0xf]
      %v531 = vld [vmem:[%s166 + $0x594] sm:$0xf]
      %v532 = vld [vmem:[%s166 + $0x598] sm:$0xf]
      %v533 = vld [vmem:[%s166 + $0x59c] sm:$0xf]
      %v534 = vld [vmem:[%s166 + $0x5a0] sm:$0xf]
      %v535 = vld [vmem:[%s166 + $0x5a4] sm:$0xf]
      %v536 = vld [vmem:[%s166 + $0x5a8] sm:$0xf]
      %v537 = vld [vmem:[%s166 + $0x5ac] sm:$0xf]
      %v538 = vld [vmem:[%s166 + $0x5b0] sm:$0xf]
      %v539 = vld [vmem:[%s166 + $0x5b4] sm:$0xf]
      %v540 = vld [vmem:[%s166 + $0x5b8] sm:$0xf]
      %v541 = vld [vmem:[%s166 + $0x5bc] sm:$0xf]
      %v542 = vld [vmem:[%s166 + $0x5c0] sm:$0xf]
      %v543 = vld [vmem:[%s166 + $0x5c4] sm:$0xf]
      %v544 = vld [vmem:[%s166 + $0x5c8] sm:$0xf]
      %v545 = vld [vmem:[%s166 + $0x5cc] sm:$0xf]
      %v546 = vld [vmem:[%s166 + $0x5d0] sm:$0xf]
      %v547 = vld [vmem:[%s166 + $0x5d4] sm:$0xf]
      %v548 = vld [vmem:[%s166 + $0x5d8] sm:$0xf]
      %v549 = vld [vmem:[%s166 + $0x5dc] sm:$0xf]
      %v550 = vld [vmem:[%s166 + $0x5e0] sm:$0xf]
      %v551 = vld [vmem:[%s166 + $0x5e4] sm:$0xf]
      %v552 = vld [vmem:[%s166 + $0x5e8] sm:$0xf]
      %v553 = vld [vmem:[%s166 + $0x5ec] sm:$0xf]
      %v554 = vld [vmem:[%s166 + $0x5f0] sm:$0xf]
      %v555 = vld [vmem:[%s166 + $0x5f4] sm:$0xf]
      %v556 = vld [vmem:[%s166 + $0x5f8] sm:$0xf]
      %v557 = vld [vmem:[%s166 + $0x5fc] sm:$0xf]
      %v558 = vld [vmem:[%s166 + $0x600] sm:$0xf]
      %v559 = vld [vmem:[%s166 + $0x604] sm:$0xf]
      %v560 = vld [vmem:[%s166 + $0x608] sm:$0xf]
      %v561 = vld [vmem:[%s166 + $0x60c] sm:$0xf]
      %v562 = vld [vmem:[%s166 + $0x610] sm:$0xf]
      %v563 = vld [vmem:[%s166 + $0x614] sm:$0xf]
      %v564 = vld [vmem:[%s166 + $0x618] sm:$0xf]
      %v565 = vld [vmem:[%s166 + $0x61c] sm:$0xf]
      %v566 = vld [vmem:[%s166 + $0x620] sm:$0xf]
      %v567 = vld [vmem:[%s166 + $0x624] sm:$0xf]
      %v568 = vld [vmem:[%s166 + $0x628] sm:$0xf]
      %v569 = vld [vmem:[%s166 + $0x62c] sm:$0xf]
      %v570 = vld [vmem:[%s166 + $0x630] sm:$0xf]
      %v571 = vld [vmem:[%s166 + $0x634] sm:$0xf]
      %v572 = vld [vmem:[%s166 + $0x638] sm:$0xf]
      %v573 = vld [vmem:[%s166 + $0x63c] sm:$0xf]
      %v574 = vld [vmem:[%s166 + $0x640] sm:$0xf]
      %v575 = vld [vmem:[%s166 + $0x644] sm:$0xf]
      %v576 = vld [vmem:[%s166 + $0x648] sm:$0xf]
      %v577 = vld [vmem:[%s166 + $0x64c] sm:$0xf]
      %v578 = vld [vmem:[%s166 + $0x650] sm:$0xf]
      %v579 = vld [vmem:[%s166 + $0x654] sm:$0xf]
      %v580 = vld [vmem:[%s166 + $0x658] sm:$0xf]
      %v581 = vld [vmem:[%s166 + $0x65c] sm:$0xf]
      %v582 = vld [vmem:[%s166 + $0x660] sm:$0xf]
      %v583 = vld [vmem:[%s166 + $0x664] sm:$0xf]
      %v584 = vld [vmem:[%s166 + $0x668] sm:$0xf]
      %v585 = vld [vmem:[%s166 + $0x66c] sm:$0xf]
      %v586 = vld [vmem:[%s166 + $0x670] sm:$0xf]
      %v587 = vld [vmem:[%s166 + $0x674] sm:$0xf]
      %v588 = vld [vmem:[%s166 + $0x678] sm:$0xf]
      %v589 = vld [vmem:[%s166 + $0x67c] sm:$0xf]
      %v590 = vld [vmem:[%s166 + $0x680] sm:$0xf]
      %v591 = vld [vmem:[%s166 + $0x684] sm:$0xf]
      %v592 = vld [vmem:[%s166 + $0x688] sm:$0xf]
      %v593 = vld [vmem:[%s166 + $0x68c] sm:$0xf]
      %v594 = vld [vmem:[%s166 + $0x690] sm:$0xf]
      %v595 = vld [vmem:[%s166 + $0x694] sm:$0xf]
      %v596 = vld [vmem:[%s166 + $0x698] sm:$0xf]
      %v597 = vld [vmem:[%s166 + $0x69c] sm:$0xf]
      %v598 = vld [vmem:[%s166 + $0x6a0] sm:$0xf]
      %v599 = vld [vmem:[%s166 + $0x6a4] sm:$0xf]
      %v600 = vld [vmem:[%s166 + $0x6a8] sm:$0xf]
      %v601 = vld [vmem:[%s166 + $0x6ac] sm:$0xf]
      %v602 = vld [vmem:[%s166 + $0x6b0] sm:$0xf]
      %v603 = vld [vmem:[%s166 + $0x6b4] sm:$0xf]
      %v604 = vld [vmem:[%s166 + $0x6b8] sm:$0xf]
      %v605 = vld [vmem:[%s166 + $0x6bc] sm:$0xf]
      %v606 = vld [vmem:[%s166 + $0x6c0] sm:$0xf]
      %v607 = vld [vmem:[%s166 + $0x6c4] sm:$0xf]
      %v608 = vld [vmem:[%s166 + $0x6c8] sm:$0xf]
      %v609 = vld [vmem:[%s166 + $0x6cc] sm:$0xf]
      %v610 = vld [vmem:[%s166 + $0x6d0] sm:$0xf]
      %v611 = vld [vmem:[%s166 + $0x6d4] sm:$0xf]
      %v612 = vld [vmem:[%s166 + $0x6d8] sm:$0xf]
      %v613 = vld [vmem:[%s166 + $0x6dc] sm:$0xf]
      %v614 = vld [vmem:[%s166 + $0x6e0] sm:$0xf]
      %v615 = vld [vmem:[%s166 + $0x6e4] sm:$0xf]
      %v616 = vld [vmem:[%s166 + $0x6e8] sm:$0xf]
      %v617 = vld [vmem:[%s166 + $0x6ec] sm:$0xf]
      %v618 = vld [vmem:[%s166 + $0x6f0] sm:$0xf]
      %v619 = vld [vmem:[%s166 + $0x6f4] sm:$0xf]
      %v620 = vld [vmem:[%s166 + $0x6f8] sm:$0xf]
      %v621 = vld [vmem:[%s166 + $0x6fc] sm:$0xf]
      %v622 = vld [vmem:[%s166 + $0x700] sm:$0xf]
      %v623 = vld [vmem:[%s166 + $0x704] sm:$0xf]
      %v624 = vld [vmem:[%s166 + $0x708] sm:$0xf]
      %v625 = vld [vmem:[%s166 + $0x70c] sm:$0xf]
      %v626 = vld [vmem:[%s166 + $0x710] sm:$0xf]
      %v627 = vld [vmem:[%s166 + $0x714] sm:$0xf]
      %v628 = vld [vmem:[%s166 + $0x718] sm:$0xf]
      %v629 = vld [vmem:[%s166 + $0x71c] sm:$0xf]
      %v630 = vld [vmem:[%s166 + $0x720] sm:$0xf]
      %v631 = vld [vmem:[%s166 + $0x724] sm:$0xf]
      %v632 = vld [vmem:[%s166 + $0x728] sm:$0xf]
      %v633 = vld [vmem:[%s166 + $0x72c] sm:$0xf]
      %v634 = vld [vmem:[%s166 + $0x730] sm:$0xf]
      %v635 = vld [vmem:[%s166 + $0x734] sm:$0xf]
      %v636 = vld [vmem:[%s166 + $0x738] sm:$0xf]
      %v637 = vld [vmem:[%s166 + $0x73c] sm:$0xf]
      %v638 = vld [vmem:[%s166 + $0x740] sm:$0xf]
      %v639 = vld [vmem:[%s166 + $0x744] sm:$0xf]
      %v640 = vld [vmem:[%s166 + $0x748] sm:$0xf]
      %v641 = vld [vmem:[%s166 + $0x74c] sm:$0xf]
      %v642 = vld [vmem:[%s166 + $0x750] sm:$0xf]
      %v643 = vld [vmem:[%s166 + $0x754] sm:$0xf]
      %v644 = vld [vmem:[%s166 + $0x758] sm:$0xf]
      %v645 = vld [vmem:[%s166 + $0x75c] sm:$0xf]
      %v646 = vld [vmem:[%s166 + $0x760] sm:$0xf]
      %v647 = vld [vmem:[%s166 + $0x764] sm:$0xf]
      %v648 = vld [vmem:[%s166 + $0x768] sm:$0xf]
      %v649 = vld [vmem:[%s166 + $0x76c] sm:$0xf]
      %v650 = vld [vmem:[%s166 + $0x770] sm:$0xf]
      %v651 = vld [vmem:[%s166 + $0x774] sm:$0xf]
      %v652 = vld [vmem:[%s166 + $0x778] sm:$0xf]
      %v653 = vld [vmem:[%s166 + $0x77c] sm:$0xf]
      %v654 = vld [vmem:[%s166 + $0x780] sm:$0xf]
      %v655 = vld [vmem:[%s166 + $0x784] sm:$0xf]
      %v656 = vld [vmem:[%s166 + $0x788] sm:$0xf]
      %v657 = vld [vmem:[%s166 + $0x78c] sm:$0xf]
      %v658 = vld [vmem:[%s166 + $0x790] sm:$0xf]
      %v659 = vld [vmem:[%s166 + $0x794] sm:$0xf]
      %v660 = vld [vmem:[%s166 + $0x798] sm:$0xf]
      %v661 = vld [vmem:[%s166 + $0x79c] sm:$0xf]
      %v662 = vld [vmem:[%s166 + $0x7a0] sm:$0xf]
      %v663 = vld [vmem:[%s166 + $0x7a4] sm:$0xf]
      %v664 = vld [vmem:[%s166 + $0x7a8] sm:$0xf]
      %v665 = vld [vmem:[%s166 + $0x7ac] sm:$0xf]
      %v666 = vld [vmem:[%s166 + $0x7b0] sm:$0xf]
      %v667 = vld [vmem:[%s166 + $0x7b4] sm:$0xf]
      %v668 = vld [vmem:[%s166 + $0x7b8] sm:$0xf]
      %v669 = vld [vmem:[%s166 + $0x7bc] sm:$0xf]
      %v670 = vld [vmem:[%s166 + $0x7c0] sm:$0xf]
      %v671 = vld [vmem:[%s166 + $0x7c4] sm:$0xf]
      %v672 = vld [vmem:[%s166 + $0x7c8] sm:$0xf]
      %v673 = vld [vmem:[%s166 + $0x7cc] sm:$0xf]
      %v674 = vld [vmem:[%s166 + $0x7d0] sm:$0xf]
      %v675 = vld [vmem:[%s166 + $0x7d4] sm:$0xf]
      %v676 = vld [vmem:[%s166 + $0x7d8] sm:$0xf]
      %v677 = vld [vmem:[%s166 + $0x7dc] sm:$0xf]
      %v678 = vld [vmem:[%s166 + $0x7e0] sm:$0xf]
      %v679 = vld [vmem:[%s166 + $0x7e4] sm:$0xf]
      %v680 = vld [vmem:[%s166 + $0x7e8] sm:$0xf]
      %v681 = vld [vmem:[%s166 + $0x7ec] sm:$0xf]
      %v682 = vld [vmem:[%s166 + $0x7f0] sm:$0xf]
      %v683 = vld [vmem:[%s166 + $0x7f4] sm:$0xf]
      %v684 = vld [vmem:[%s166 + $0x7f8] sm:$0xf]
      %v685 = vld [vmem:[%s166 + $0x7fc] sm:$0xf]
      %v686 = vld [vmem:[%s166 + $0x800] sm:$0xf]
      %v687 = vld [vmem:[%s166 + $0x804] sm:$0xf]
      %v688 = vld [vmem:[%s166 + $0x808] sm:$0xf]
      %v689 = vld [vmem:[%s166 + $0x80c] sm:$0xf]
      %v690 = vld [vmem:[%s166 + $0x810] sm:$0xf]
      %v691 = vld [vmem:[%s166 + $0x814] sm:$0xf]
      %v692 = vld [vmem:[%s166 + $0x818] sm:$0xf]
      %v693 = vld [vmem:[%s166 + $0x81c] sm:$0xf]
      %v694 = vld [vmem:[%s166 + $0x820] sm:$0xf]
      %v695 = vld [vmem:[%s166 + $0x824] sm:$0xf]
      %v696 = vld [vmem:[%s166 + $0x828] sm:$0xf]
      %v697 = vld [vmem:[%s166 + $0x82c] sm:$0xf]
      %v698 = vld [vmem:[%s166 + $0x830] sm:$0xf]
      %v699 = vld [vmem:[%s166 + $0x834] sm:$0xf]
      %v700 = vld [vmem:[%s166 + $0x838] sm:$0xf]
      %v701 = vld [vmem:[%s166 + $0x83c] sm:$0xf]
      %v702 = vld [vmem:[%s166 + $0x840] sm:$0xf]
      %v703 = vld [vmem:[%s166 + $0x844] sm:$0xf]
      %v704 = vld [vmem:[%s166 + $0x848] sm:$0xf]
      %v705 = vld [vmem:[%s166 + $0x84c] sm:$0xf]
      %v706 = vld [vmem:[%s166 + $0x850] sm:$0xf]
      %v707 = vld [vmem:[%s166 + $0x854] sm:$0xf]
      %v708 = vld [vmem:[%s166 + $0x858] sm:$0xf]
      %v709 = vld [vmem:[%s166 + $0x85c] sm:$0xf]
      %v710 = vld [vmem:[%s166 + $0x860] sm:$0xf]
      %v711 = vld [vmem:[%s166 + $0x864] sm:$0xf]
      %v712 = vld [vmem:[%s166 + $0x868] sm:$0xf]
      %v713 = vld [vmem:[%s166 + $0x86c] sm:$0xf]
      %v714 = vld [vmem:[%s166 + $0x870] sm:$0xf]
      %v715 = vld [vmem:[%s166 + $0x874] sm:$0xf]
      %v716 = vld [vmem:[%s166 + $0x878] sm:$0xf]
      %v717 = vld [vmem:[%s166 + $0x87c] sm:$0xf]
      %v718 = vld [vmem:[%s166 + $0x880] sm:$0xf]
      %v719 = vld [vmem:[%s166 + $0x884] sm:$0xf]
      %v720 = vld [vmem:[%s166 + $0x888] sm:$0xf]
      %v721 = vld [vmem:[%s166 + $0x88c] sm:$0xf]
      %v722 = vld [vmem:[%s166 + $0x890] sm:$0xf]
      %v723 = vld [vmem:[%s166 + $0x894] sm:$0xf]
      %v724 = vld [vmem:[%s166 + $0x898] sm:$0xf]
      %v725 = vld [vmem:[%s166 + $0x89c] sm:$0xf]
      %v726 = vld [vmem:[%s166 + $0x8a0] sm:$0xf]
      %v727 = vld [vmem:[%s166 + $0x8a4] sm:$0xf]
      %v728 = vld [vmem:[%s166 + $0x8a8] sm:$0xf]
      %v729 = vld [vmem:[%s166 + $0x8ac] sm:$0xf]
      %v730 = vld [vmem:[%s166 + $0x8b0] sm:$0xf]
      %v731 = vld [vmem:[%s166 + $0x8b4] sm:$0xf]
      %v732 = vld [vmem:[%s166 + $0x8b8] sm:$0xf]
      %v733 = vld [vmem:[%s166 + $0x8bc] sm:$0xf]
      %v734 = vld [vmem:[%s166 + $0x8c0] sm:$0xf]
      %v735 = vld [vmem:[%s166 + $0x8c4] sm:$0xf]
      %v736 = vld [vmem:[%s166 + $0x8c8] sm:$0xf]
      %v737 = vld [vmem:[%s166 + $0x8cc] sm:$0xf]
      %v738 = vld [vmem:[%s166 + $0x8d0] sm:$0xf]
      %v739 = vld [vmem:[%s166 + $0x8d4] sm:$0xf]
      %v740 = vld [vmem:[%s166 + $0x8d8] sm:$0xf]
      %v741 = vld [vmem:[%s166 + $0x8dc] sm:$0xf]
      %v742 = vld [vmem:[%s166 + $0x8e0] sm:$0xf]
      %v743 = vld [vmem:[%s166 + $0x8e4] sm:$0xf]
      %v744 = vld [vmem:[%s166 + $0x8e8] sm:$0xf]
      %v745 = vld [vmem:[%s166 + $0x8ec] sm:$0xf]
      %v746 = vld [vmem:[%s166 + $0x8f0] sm:$0xf]
      %v747 = vld [vmem:[%s166 + $0x8f4] sm:$0xf]
      %v748 = vld [vmem:[%s166 + $0x8f8] sm:$0xf]
      %v749 = vld [vmem:[%s166 + $0x8fc] sm:$0xf]
      %v750 = vld [vmem:[%s166 + $0x900] sm:$0xf]
      %v751 = vld [vmem:[%s166 + $0x904] sm:$0xf]
      %v752 = vld [vmem:[%s166 + $0x908] sm:$0xf]
      %v753 = vld [vmem:[%s166 + $0x90c] sm:$0xf]
      %v754 = vld [vmem:[%s166 + $0x910] sm:$0xf]
      %v755 = vld [vmem:[%s166 + $0x914] sm:$0xf]
      %v756 = vld [vmem:[%s166 + $0x918] sm:$0xf]
      %v757 = vld [vmem:[%s166 + $0x91c] sm:$0xf]
      %v758 = vld [vmem:[%s166 + $0x920] sm:$0xf]
      %v759 = vld [vmem:[%s166 + $0x924] sm:$0xf]
      %v760 = vld [vmem:[%s166 + $0x928] sm:$0xf]
      %v761 = vld [vmem:[%s166 + $0x92c] sm:$0xf]
      %v762 = vld [vmem:[%s166 + $0x930] sm:$0xf]
      %v763 = vld [vmem:[%s166 + $0x934] sm:$0xf]
      %v764 = vld [vmem:[%s166 + $0x938] sm:$0xf]
      %v765 = vld [vmem:[%s166 + $0x93c] sm:$0xf]
      %v766 = vld [vmem:[%s166 + $0x940] sm:$0xf]
      %v767 = vld [vmem:[%s166 + $0x944] sm:$0xf]
      %v768 = vld [vmem:[%s166 + $0x948] sm:$0xf]
      %v769 = vld [vmem:[%s166 + $0x94c] sm:$0xf]
      %v770 = vld [vmem:[%s166 + $0x950] sm:$0xf]
      %v771 = vld [vmem:[%s166 + $0x954] sm:$0xf]
      %v772 = vld [vmem:[%s166 + $0x958] sm:$0xf]
      %v773 = vld [vmem:[%s166 + $0x95c] sm:$0xf]
      %v774 = vld [vmem:[%s166 + $0x960] sm:$0xf]
      %v775 = vld [vmem:[%s166 + $0x964] sm:$0xf]
      %v776 = vld [vmem:[%s166 + $0x968] sm:$0xf]
      %v777 = vld [vmem:[%s166 + $0x96c] sm:$0xf]
      %v778 = vld [vmem:[%s166 + $0x970] sm:$0xf]
      %v779 = vld [vmem:[%s166 + $0x974] sm:$0xf]
      %v780 = vld [vmem:[%s166 + $0x978] sm:$0xf]
      %v781 = vld [vmem:[%s166 + $0x97c] sm:$0xf]
      %v782 = vld [vmem:[%s166 + $0x980] sm:$0xf]
      %v783 = vld [vmem:[%s166 + $0x984] sm:$0xf]
      %v784 = vld [vmem:[%s166 + $0x988] sm:$0xf]
      %v785 = vld [vmem:[%s166 + $0x98c] sm:$0xf]
      %v786 = vld [vmem:[%s166 + $0x990] sm:$0xf]
      %v787 = vld [vmem:[%s166 + $0x994] sm:$0xf]
      %v788 = vld [vmem:[%s166 + $0x998] sm:$0xf]
      %v789 = vld [vmem:[%s166 + $0x99c] sm:$0xf]
      %v790 = vld [vmem:[%s166 + $0x9a0] sm:$0xf]
      %v791 = vld [vmem:[%s166 + $0x9a4] sm:$0xf]
      %v792 = vld [vmem:[%s166 + $0x9a8] sm:$0xf]
      %v793 = vld [vmem:[%s166 + $0x9ac] sm:$0xf]
      %v794 = vld [vmem:[%s166 + $0x9b0] sm:$0xf]
      %v795 = vld [vmem:[%s166 + $0x9b4] sm:$0xf]
      %v796 = vld [vmem:[%s166 + $0x9b8] sm:$0xf]
      %v797 = vld [vmem:[%s166 + $0x9bc] sm:$0xf]
      %v798 = vld [vmem:[%s166 + $0x9c0] sm:$0xf]
      %v799 = vld [vmem:[%s166 + $0x9c4] sm:$0xf]
      %v800 = vld [vmem:[%s166 + $0x9c8] sm:$0xf]
      %v801 = vld [vmem:[%s166 + $0x9cc] sm:$0xf]
      %v802 = vld [vmem:[%s166 + $0x9d0] sm:$0xf]
      %v803 = vld [vmem:[%s166 + $0x9d4] sm:$0xf]
      %v804 = vld [vmem:[%s166 + $0x9d8] sm:$0xf]
      %v805 = vld [vmem:[%s166 + $0x9dc] sm:$0xf]
      %v806 = vld [vmem:[%s166 + $0x9e0] sm:$0xf]
      %v807 = vld [vmem:[%s166 + $0x9e4] sm:$0xf]
      %v808 = vld [vmem:[%s166 + $0x9e8] sm:$0xf]
      %v809 = vld [vmem:[%s166 + $0x9ec] sm:$0xf]
      %v810 = vld [vmem:[%s166 + $0x9f0] sm:$0xf]
      %v811 = vld [vmem:[%s166 + $0x9f4] sm:$0xf]
      %v812 = vld [vmem:[%s166 + $0x9f8] sm:$0xf]
      %v813 = vld [vmem:[%s166 + $0x9fc] sm:$0xf]
      %v814 = vld [vmem:[%s1] sm:$0xf]
      %v815 = vld [vmem:[%s1 + $0x4] sm:$0xf]
      %v816 = vld [vmem:[%s1 + $0x8] sm:$0xf]
      %v817 = vld [vmem:[%s1 + $0xc] sm:$0xf]
      %v818 = vld [vmem:[%s1 + $0x10] sm:$0xf]
      %v819 = vld [vmem:[%s1 + $0x14] sm:$0xf]
      %v820 = vld [vmem:[%s1 + $0x18] sm:$0xf]
      %v821 = vld [vmem:[%s1 + $0x1c] sm:$0xf]
      %v822 = vld [vmem:[%s1 + $0x20] sm:$0xf]
      %v823 = vld [vmem:[%s1 + $0x24] sm:$0xf]
      %v824 = vld [vmem:[%s1 + $0x28] sm:$0xf]
      %v825 = vld [vmem:[%s1 + $0x2c] sm:$0xf]
      %v826 = vld [vmem:[%s1 + $0x30] sm:$0xf]
      %v827 = vld [vmem:[%s1 + $0x34] sm:$0xf]
      %v828 = vld [vmem:[%s1 + $0x38] sm:$0xf]
      %v829 = vld [vmem:[%s1 + $0x3c] sm:$0xf]
      %v830 = vld [vmem:[%s2] sm:$0x1]
      %v832 = vperm.slane %v830, 0
      %v1474 = vunpack.c.l.b16 %v174
      %v1475 = vunpack.c.l.b16 %v175
      %v1476 = vunpack.c.l.b16 %v176
      %v1477 = vunpack.c.l.b16 %v177
      %v1478 = vunpack.c.l.b16 %v178
      %v1479 = vunpack.c.l.b16 %v179
      %v1480 = vunpack.c.l.b16 %v180
      %v1481 = vunpack.c.l.b16 %v181
      %v1482 = vunpack.c.l.b16 %v182
      %v1483 = vunpack.c.l.b16 %v183
      %v1484 = vunpack.c.l.b16 %v184
      %v1485 = vunpack.c.l.b16 %v185
      %v1486 = vunpack.c.l.b16 %v186
      %v1487 = vunpack.c.l.b16 %v187
      %v1488 = vunpack.c.l.b16 %v188
      %v1489 = vunpack.c.l.b16 %v189
      %v1490 = vunpack.c.l.b16 %v190
      %v1491 = vunpack.c.l.b16 %v191
      %v1492 = vunpack.c.l.b16 %v192
      %v1493 = vunpack.c.l.b16 %v193
      %v1494 = vunpack.c.l.b16 %v194
      %v1495 = vunpack.c.l.b16 %v195
      %v1496 = vunpack.c.l.b16 %v196
      %v1497 = vunpack.c.l.b16 %v197
      %v1498 = vunpack.c.l.b16 %v198
      %v1499 = vunpack.c.l.b16 %v199
      %v1500 = vunpack.c.l.b16 %v200
      %v1501 = vunpack.c.l.b16 %v201
      %v1502 = vunpack.c.l.b16 %v202
      %v1503 = vunpack.c.l.b16 %v203
      %v1504 = vunpack.c.l.b16 %v204
      %v1505 = vunpack.c.l.b16 %v205
      %v1506 = vunpack.c.l.b16 %v206
      %v1507 = vunpack.c.l.b16 %v207
      %v1508 = vunpack.c.l.b16 %v208
      %v1509 = vunpack.c.l.b16 %v209
      %v1510 = vunpack.c.l.b16 %v210
      %v1511 = vunpack.c.l.b16 %v211
      %v1512 = vunpack.c.l.b16 %v212
      %v1513 = vunpack.c.l.b16 %v213
      %v1514 = vunpack.c.l.b16 %v214
      %v1515 = vunpack.c.l.b16 %v215
      %v1516 = vunpack.c.l.b16 %v216
      %v1517 = vunpack.c.l.b16 %v217
      %v1518 = vunpack.c.l.b16 %v218
      %v1519 = vunpack.c.l.b16 %v219
      %v1520 = vunpack.c.l.b16 %v220
      %v1521 = vunpack.c.l.b16 %v221
      %v1522 = vunpack.c.l.b16 %v222
      %v1523 = vunpack.c.l.b16 %v223
      %v1524 = vunpack.c.l.b16 %v224
      %v1525 = vunpack.c.l.b16 %v225
      %v1526 = vunpack.c.l.b16 %v226
      %v1527 = vunpack.c.l.b16 %v227
      %v1528 = vunpack.c.l.b16 %v228
      %v1529 = vunpack.c.l.b16 %v229
      %v1530 = vunpack.c.l.b16 %v230
      %v1531 = vunpack.c.l.b16 %v231
      %v1532 = vunpack.c.l.b16 %v232
      %v1533 = vunpack.c.l.b16 %v233
      %v1534 = vunpack.c.l.b16 %v234
      %v1535 = vunpack.c.l.b16 %v235
      %v1536 = vunpack.c.l.b16 %v236
      %v1537 = vunpack.c.l.b16 %v237
      %v1538 = vunpack.c.l.b16 %v238
      %v1539 = vunpack.c.l.b16 %v239
      %v1540 = vunpack.c.l.b16 %v240
      %v1541 = vunpack.c.l.b16 %v241
      %v1542 = vunpack.c.l.b16 %v242
      %v1543 = vunpack.c.l.b16 %v243
      %v1544 = vunpack.c.l.b16 %v244
      %v1545 = vunpack.c.l.b16 %v245
      %v1546 = vunpack.c.l.b16 %v246
      %v1547 = vunpack.c.l.b16 %v247
      %v1548 = vunpack.c.l.b16 %v248
      %v1549 = vunpack.c.l.b16 %v249
      %v1550 = vunpack.c.l.b16 %v250
      %v1551 = vunpack.c.l.b16 %v251
      %v1552 = vunpack.c.l.b16 %v252
      %v1553 = vunpack.c.l.b16 %v253
      %v1554 = vunpack.c.l.b16 %v254
      %v1555 = vunpack.c.l.b16 %v255
      %v1556 = vunpack.c.l.b16 %v256
      %v1557 = vunpack.c.l.b16 %v257
      %v1558 = vunpack.c.l.b16 %v258
      %v1559 = vunpack.c.l.b16 %v259
      %v1560 = vunpack.c.l.b16 %v260
      %v1561 = vunpack.c.l.b16 %v261
      %v1562 = vunpack.c.l.b16 %v262
      %v1563 = vunpack.c.l.b16 %v263
      %v1564 = vunpack.c.l.b16 %v264
      %v1565 = vunpack.c.l.b16 %v265
      %v1566 = vunpack.c.l.b16 %v266
      %v1567 = vunpack.c.l.b16 %v267
      %v1568 = vunpack.c.l.b16 %v268
      %v1569 = vunpack.c.l.b16 %v269
      %v1570 = vunpack.c.l.b16 %v270
      %v1571 = vunpack.c.l.b16 %v271
      %v1572 = vunpack.c.l.b16 %v272
      %v1573 = vunpack.c.l.b16 %v273
      %v1574 = vunpack.c.l.b16 %v274
      %v1575 = vunpack.c.l.b16 %v275
      %v1576 = vunpack.c.l.b16 %v276
      %v1577 = vunpack.c.l.b16 %v277
      %v1578 = vunpack.c.l.b16 %v278
      %v1579 = vunpack.c.l.b16 %v279
      %v1580 = vunpack.c.l.b16 %v280
      %v1581 = vunpack.c.l.b16 %v281
      %v1582 = vunpack.c.l.b16 %v282
      %v1583 = vunpack.c.l.b16 %v283
      %v1584 = vunpack.c.l.b16 %v284
      %v1585 = vunpack.c.l.b16 %v285
      %v1586 = vunpack.c.l.b16 %v286
      %v1587 = vunpack.c.l.b16 %v287
      %v1588 = vunpack.c.l.b16 %v288
      %v1589 = vunpack.c.l.b16 %v289
      %v1590 = vunpack.c.l.b16 %v290
      %v1591 = vunpack.c.l.b16 %v291
      %v1592 = vunpack.c.l.b16 %v292
      %v1593 = vunpack.c.l.b16 %v293
      %v1594 = vunpack.c.l.b16 %v294
      %v1595 = vunpack.c.l.b16 %v295
      %v1596 = vunpack.c.l.b16 %v296
      %v1597 = vunpack.c.l.b16 %v297
      %v1598 = vunpack.c.l.b16 %v298
      %v1599 = vunpack.c.l.b16 %v299
      %v1600 = vunpack.c.l.b16 %v300
      %v1601 = vunpack.c.l.b16 %v301
      %v1602 = vunpack.c.l.b16 %v302
      %v1603 = vunpack.c.l.b16 %v303
      %v1604 = vunpack.c.l.b16 %v304
      %v1605 = vunpack.c.l.b16 %v305
      %v1606 = vunpack.c.l.b16 %v306
      %v1607 = vunpack.c.l.b16 %v307
      %v1608 = vunpack.c.l.b16 %v308
      %v1609 = vunpack.c.l.b16 %v309
      %v1610 = vunpack.c.l.b16 %v310
      %v1611 = vunpack.c.l.b16 %v311
      %v1612 = vunpack.c.l.b16 %v312
      %v1613 = vunpack.c.l.b16 %v313
      %v1614 = vunpack.c.l.b16 %v314
      %v1615 = vunpack.c.l.b16 %v315
      %v1616 = vunpack.c.l.b16 %v316
      %v1617 = vunpack.c.l.b16 %v317
      %v1618 = vunpack.c.l.b16 %v318
      %v1619 = vunpack.c.l.b16 %v319
      %v1620 = vunpack.c.l.b16 %v320
      %v1621 = vunpack.c.l.b16 %v321
      %v1622 = vunpack.c.l.b16 %v322
      %v1623 = vunpack.c.l.b16 %v323
      %v1624 = vunpack.c.l.b16 %v324
      %v1625 = vunpack.c.l.b16 %v325
      %v1626 = vunpack.c.l.b16 %v326
      %v1627 = vunpack.c.l.b16 %v327
      %v1628 = vunpack.c.l.b16 %v328
      %v1629 = vunpack.c.l.b16 %v329
      %v1630 = vunpack.c.l.b16 %v330
      %v1631 = vunpack.c.l.b16 %v331
      %v1632 = vunpack.c.l.b16 %v332
      %v1633 = vunpack.c.l.b16 %v333
      %v1634 = vunpack.c.l.b16 %v334
      %v1635 = vunpack.c.l.b16 %v335
      %v1636 = vunpack.c.l.b16 %v336
      %v1637 = vunpack.c.l.b16 %v337
      %v1638 = vunpack.c.l.b16 %v338
      %v1639 = vunpack.c.l.b16 %v339
      %v1640 = vunpack.c.l.b16 %v340
      %v1641 = vunpack.c.l.b16 %v341
      %v1642 = vunpack.c.l.b16 %v342
      %v1643 = vunpack.c.l.b16 %v343
      %v1644 = vunpack.c.l.b16 %v344
      %v1645 = vunpack.c.l.b16 %v345
      %v1646 = vunpack.c.l.b16 %v346
      %v1647 = vunpack.c.l.b16 %v347
      %v1648 = vunpack.c.l.b16 %v348
      %v1649 = vunpack.c.l.b16 %v349
      %v1650 = vunpack.c.l.b16 %v350
      %v1651 = vunpack.c.l.b16 %v351
      %v1652 = vunpack.c.l.b16 %v352
      %v1653 = vunpack.c.l.b16 %v353
      %v1654 = vunpack.c.l.b16 %v354
      %v1655 = vunpack.c.l.b16 %v355
      %v1656 = vunpack.c.l.b16 %v356
      %v1657 = vunpack.c.l.b16 %v357
      %v1658 = vunpack.c.l.b16 %v358
      %v1659 = vunpack.c.l.b16 %v359
      %v1660 = vunpack.c.l.b16 %v360
      %v1661 = vunpack.c.l.b16 %v361
      %v1662 = vunpack.c.l.b16 %v362
      %v1663 = vunpack.c.l.b16 %v363
      %v1664 = vunpack.c.l.b16 %v364
      %v1665 = vunpack.c.l.b16 %v365
      %v1666 = vunpack.c.l.b16 %v366
      %v1667 = vunpack.c.l.b16 %v367
      %v1668 = vunpack.c.l.b16 %v368
      %v1669 = vunpack.c.l.b16 %v369
      %v1670 = vunpack.c.l.b16 %v370
      %v1671 = vunpack.c.l.b16 %v371
      %v1672 = vunpack.c.l.b16 %v372
      %v1673 = vunpack.c.l.b16 %v373
      %v1674 = vunpack.c.l.b16 %v374
      %v1675 = vunpack.c.l.b16 %v375
      %v1676 = vunpack.c.l.b16 %v376
      %v1677 = vunpack.c.l.b16 %v377
      %v1678 = vunpack.c.l.b16 %v378
      %v1679 = vunpack.c.l.b16 %v379
      %v1680 = vunpack.c.l.b16 %v380
      %v1681 = vunpack.c.l.b16 %v381
      %v1682 = vunpack.c.l.b16 %v382
      %v1683 = vunpack.c.l.b16 %v383
      %v1684 = vunpack.c.l.b16 %v384
      %v1685 = vunpack.c.l.b16 %v385
      %v1686 = vunpack.c.l.b16 %v386
      %v1687 = vunpack.c.l.b16 %v387
      %v1688 = vunpack.c.l.b16 %v388
      %v1689 = vunpack.c.l.b16 %v389
      %v1690 = vunpack.c.l.b16 %v390
      %v1691 = vunpack.c.l.b16 %v391
      %v1692 = vunpack.c.l.b16 %v392
      %v1693 = vunpack.c.l.b16 %v393
      %v1694 = vunpack.c.l.b16 %v394
      %v1695 = vunpack.c.l.b16 %v395
      %v1696 = vunpack.c.l.b16 %v396
      %v1697 = vunpack.c.l.b16 %v397
      %v1698 = vunpack.c.l.b16 %v398
      %v1699 = vunpack.c.l.b16 %v399
      %v1700 = vunpack.c.l.b16 %v400
      %v1701 = vunpack.c.l.b16 %v401
      %v1702 = vunpack.c.l.b16 %v402
      %v1703 = vunpack.c.l.b16 %v403
      %v1704 = vunpack.c.l.b16 %v404
      %v1705 = vunpack.c.l.b16 %v405
      %v1706 = vunpack.c.l.b16 %v406
      %v1707 = vunpack.c.l.b16 %v407
      %v1708 = vunpack.c.l.b16 %v408
      %v1709 = vunpack.c.l.b16 %v409
      %v1710 = vunpack.c.l.b16 %v410
      %v1711 = vunpack.c.l.b16 %v411
      %v1712 = vunpack.c.l.b16 %v412
      %v1713 = vunpack.c.l.b16 %v413
      %v1714 = vunpack.c.l.b16 %v414
      %v1715 = vunpack.c.l.b16 %v415
      %v1716 = vunpack.c.l.b16 %v416
      %v1717 = vunpack.c.l.b16 %v417
      %v1718 = vunpack.c.l.b16 %v418
      %v1719 = vunpack.c.l.b16 %v419
      %v1720 = vunpack.c.l.b16 %v420
      %v1721 = vunpack.c.l.b16 %v421
      %v1722 = vunpack.c.l.b16 %v422
      %v1723 = vunpack.c.l.b16 %v423
      %v1724 = vunpack.c.l.b16 %v424
      %v1725 = vunpack.c.l.b16 %v425
      %v1726 = vunpack.c.l.b16 %v426
      %v1727 = vunpack.c.l.b16 %v427
      %v1728 = vunpack.c.l.b16 %v428
      %v1729 = vunpack.c.l.b16 %v429
      %v1730 = vunpack.c.l.b16 %v430
      %v1731 = vunpack.c.l.b16 %v431
      %v1732 = vunpack.c.l.b16 %v432
      %v1733 = vunpack.c.l.b16 %v433
      %v1734 = vunpack.c.l.b16 %v434
      %v1735 = vunpack.c.l.b16 %v435
      %v1736 = vunpack.c.l.b16 %v436
      %v1737 = vunpack.c.l.b16 %v437
      %v1738 = vunpack.c.l.b16 %v438
      %v1739 = vunpack.c.l.b16 %v439
      %v1740 = vunpack.c.l.b16 %v440
      %v1741 = vunpack.c.l.b16 %v441
      %v1742 = vunpack.c.l.b16 %v442
      %v1743 = vunpack.c.l.b16 %v443
      %v1744 = vunpack.c.l.b16 %v444
      %v1745 = vunpack.c.l.b16 %v445
      %v1746 = vunpack.c.l.b16 %v446
      %v1747 = vunpack.c.l.b16 %v447
      %v1748 = vunpack.c.l.b16 %v448
      %v1749 = vunpack.c.l.b16 %v449
      %v1750 = vunpack.c.l.b16 %v450
      %v1751 = vunpack.c.l.b16 %v451
      %v1752 = vunpack.c.l.b16 %v452
      %v1753 = vunpack.c.l.b16 %v453
      %v1754 = vunpack.c.l.b16 %v454
      %v1755 = vunpack.c.l.b16 %v455
      %v1756 = vunpack.c.l.b16 %v456
      %v1757 = vunpack.c.l.b16 %v457
      %v1758 = vunpack.c.l.b16 %v458
      %v1759 = vunpack.c.l.b16 %v459
      %v1760 = vunpack.c.l.b16 %v460
      %v1761 = vunpack.c.l.b16 %v461
      %v1762 = vunpack.c.l.b16 %v462
      %v1763 = vunpack.c.l.b16 %v463
      %v1764 = vunpack.c.l.b16 %v464
      %v1765 = vunpack.c.l.b16 %v465
      %v1766 = vunpack.c.l.b16 %v466
      %v1767 = vunpack.c.l.b16 %v467
      %v1768 = vunpack.c.l.b16 %v468
      %v1769 = vunpack.c.l.b16 %v469
      %v1770 = vunpack.c.l.b16 %v470
      %v1771 = vunpack.c.l.b16 %v471
      %v1772 = vunpack.c.l.b16 %v472
      %v1773 = vunpack.c.l.b16 %v473
      %v1774 = vunpack.c.l.b16 %v474
      %v1775 = vunpack.c.l.b16 %v475
      %v1776 = vunpack.c.l.b16 %v476
      %v1777 = vunpack.c.l.b16 %v477
      %v1778 = vunpack.c.l.b16 %v478
      %v1779 = vunpack.c.l.b16 %v479
      %v1780 = vunpack.c.l.b16 %v480
      %v1781 = vunpack.c.l.b16 %v481
      %v1782 = vunpack.c.l.b16 %v482
      %v1783 = vunpack.c.l.b16 %v483
      %v1784 = vunpack.c.l.b16 %v484
      %v1785 = vunpack.c.l.b16 %v485
      %v1786 = vunpack.c.l.b16 %v486
      %v1787 = vunpack.c.l.b16 %v487
      %v1788 = vunpack.c.l.b16 %v488
      %v1789 = vunpack.c.l.b16 %v489
      %v1790 = vunpack.c.l.b16 %v490
      %v1791 = vunpack.c.l.b16 %v491
      %v1792 = vunpack.c.l.b16 %v492
      %v1793 = vunpack.c.l.b16 %v493
      %v1794 = vunpack.c.l.b16 %v494
      %v1795 = vunpack.c.l.b16 %v495
      %v1796 = vunpack.c.l.b16 %v496
      %v1797 = vunpack.c.l.b16 %v497
      %v1798 = vunpack.c.l.b16 %v498
      %v1799 = vunpack.c.l.b16 %v499
      %v1800 = vunpack.c.l.b16 %v500
      %v1801 = vunpack.c.l.b16 %v501
      %v1802 = vunpack.c.l.b16 %v502
      %v1803 = vunpack.c.l.b16 %v503
      %v1804 = vunpack.c.l.b16 %v504
      %v1805 = vunpack.c.l.b16 %v505
      %v1806 = vunpack.c.l.b16 %v506
      %v1807 = vunpack.c.l.b16 %v507
      %v1808 = vunpack.c.l.b16 %v508
      %v1809 = vunpack.c.l.b16 %v509
      %v1810 = vunpack.c.l.b16 %v510
      %v1811 = vunpack.c.l.b16 %v511
      %v1812 = vunpack.c.l.b16 %v512
      %v1813 = vunpack.c.l.b16 %v513
      %v1814 = vunpack.c.l.b16 %v514
      %v1815 = vunpack.c.l.b16 %v515
      %v1816 = vunpack.c.l.b16 %v516
      %v1817 = vunpack.c.l.b16 %v517
      %v1818 = vunpack.c.l.b16 %v518
      %v1819 = vunpack.c.l.b16 %v519
      %v1820 = vunpack.c.l.b16 %v520
      %v1821 = vunpack.c.l.b16 %v521
      %v1822 = vunpack.c.l.b16 %v522
      %v1823 = vunpack.c.l.b16 %v523
      %v1824 = vunpack.c.l.b16 %v524
      %v1825 = vunpack.c.l.b16 %v525
      %v1826 = vunpack.c.l.b16 %v526
      %v1827 = vunpack.c.l.b16 %v527
      %v1828 = vunpack.c.l.b16 %v528
      %v1829 = vunpack.c.l.b16 %v529
      %v1830 = vunpack.c.l.b16 %v530
      %v1831 = vunpack.c.l.b16 %v531
      %v1832 = vunpack.c.l.b16 %v532
      %v1833 = vunpack.c.l.b16 %v533
      %v1834 = vunpack.c.l.b16 %v534
      %v1835 = vunpack.c.l.b16 %v535
      %v1836 = vunpack.c.l.b16 %v536
      %v1837 = vunpack.c.l.b16 %v537
      %v1838 = vunpack.c.l.b16 %v538
      %v1839 = vunpack.c.l.b16 %v539
      %v1840 = vunpack.c.l.b16 %v540
      %v1841 = vunpack.c.l.b16 %v541
      %v1842 = vunpack.c.l.b16 %v542
      %v1843 = vunpack.c.l.b16 %v543
      %v1844 = vunpack.c.l.b16 %v544
      %v1845 = vunpack.c.l.b16 %v545
      %v1846 = vunpack.c.l.b16 %v546
      %v1847 = vunpack.c.l.b16 %v547
      %v1848 = vunpack.c.l.b16 %v548
      %v1849 = vunpack.c.l.b16 %v549
      %v1850 = vunpack.c.l.b16 %v550
      %v1851 = vunpack.c.l.b16 %v551
      %v1852 = vunpack.c.l.b16 %v552
      %v1853 = vunpack.c.l.b16 %v553
      %v1854 = vunpack.c.l.b16 %v554
      %v1855 = vunpack.c.l.b16 %v555
      %v1856 = vunpack.c.l.b16 %v556
      %v1857 = vunpack.c.l.b16 %v557
      %v1858 = vunpack.c.l.b16 %v558
      %v1859 = vunpack.c.l.b16 %v559
      %v1860 = vunpack.c.l.b16 %v560
      %v1861 = vunpack.c.l.b16 %v561
      %v1862 = vunpack.c.l.b16 %v562
      %v1863 = vunpack.c.l.b16 %v563
      %v1864 = vunpack.c.l.b16 %v564
      %v1865 = vunpack.c.l.b16 %v565
      %v1866 = vunpack.c.l.b16 %v566
      %v1867 = vunpack.c.l.b16 %v567
      %v1868 = vunpack.c.l.b16 %v568
      %v1869 = vunpack.c.l.b16 %v569
      %v1870 = vunpack.c.l.b16 %v570
      %v1871 = vunpack.c.l.b16 %v571
      %v1872 = vunpack.c.l.b16 %v572
      %v1873 = vunpack.c.l.b16 %v573
      %v1874 = vunpack.c.l.b16 %v574
      %v1875 = vunpack.c.l.b16 %v575
      %v1876 = vunpack.c.l.b16 %v576
      %v1877 = vunpack.c.l.b16 %v577
      %v1878 = vunpack.c.l.b16 %v578
      %v1879 = vunpack.c.l.b16 %v579
      %v1880 = vunpack.c.l.b16 %v580
      %v1881 = vunpack.c.l.b16 %v581
      %v1882 = vunpack.c.l.b16 %v582
      %v1883 = vunpack.c.l.b16 %v583
      %v1884 = vunpack.c.l.b16 %v584
      %v1885 = vunpack.c.l.b16 %v585
      %v1886 = vunpack.c.l.b16 %v586
      %v1887 = vunpack.c.l.b16 %v587
      %v1888 = vunpack.c.l.b16 %v588
      %v1889 = vunpack.c.l.b16 %v589
      %v1890 = vunpack.c.l.b16 %v590
      %v1891 = vunpack.c.l.b16 %v591
      %v1892 = vunpack.c.l.b16 %v592
      %v1893 = vunpack.c.l.b16 %v593
      %v1894 = vunpack.c.l.b16 %v594
      %v1895 = vunpack.c.l.b16 %v595
      %v1896 = vunpack.c.l.b16 %v596
      %v1897 = vunpack.c.l.b16 %v597
      %v1898 = vunpack.c.l.b16 %v598
      %v1899 = vunpack.c.l.b16 %v599
      %v1900 = vunpack.c.l.b16 %v600
      %v1901 = vunpack.c.l.b16 %v601
      %v1902 = vunpack.c.l.b16 %v602
      %v1903 = vunpack.c.l.b16 %v603
      %v1904 = vunpack.c.l.b16 %v604
      %v1905 = vunpack.c.l.b16 %v605
      %v1906 = vunpack.c.l.b16 %v606
      %v1907 = vunpack.c.l.b16 %v607
      %v1908 = vunpack.c.l.b16 %v608
      %v1909 = vunpack.c.l.b16 %v609
      %v1910 = vunpack.c.l.b16 %v610
      %v1911 = vunpack.c.l.b16 %v611
      %v1912 = vunpack.c.l.b16 %v612
      %v1913 = vunpack.c.l.b16 %v613
      %v1914 = vunpack.c.l.b16 %v614
      %v1915 = vunpack.c.l.b16 %v615
      %v1916 = vunpack.c.l.b16 %v616
      %v1917 = vunpack.c.l.b16 %v617
      %v1918 = vunpack.c.l.b16 %v618
      %v1919 = vunpack.c.l.b16 %v619
      %v1920 = vunpack.c.l.b16 %v620
      %v1921 = vunpack.c.l.b16 %v621
      %v1922 = vunpack.c.l.b16 %v622
      %v1923 = vunpack.c.l.b16 %v623
      %v1924 = vunpack.c.l.b16 %v624
      %v1925 = vunpack.c.l.b16 %v625
      %v1926 = vunpack.c.l.b16 %v626
      %v1927 = vunpack.c.l.b16 %v627
      %v1928 = vunpack.c.l.b16 %v628
      %v1929 = vunpack.c.l.b16 %v629
      %v1930 = vunpack.c.l.b16 %v630
      %v1931 = vunpack.c.l.b16 %v631
      %v1932 = vunpack.c.l.b16 %v632
      %v1933 = vunpack.c.l.b16 %v633
      %v1934 = vunpack.c.l.b16 %v634
      %v1935 = vunpack.c.l.b16 %v635
      %v1936 = vunpack.c.l.b16 %v636
      %v1937 = vunpack.c.l.b16 %v637
      %v1938 = vunpack.c.l.b16 %v638
      %v1939 = vunpack.c.l.b16 %v639
      %v1940 = vunpack.c.l.b16 %v640
      %v1941 = vunpack.c.l.b16 %v641
      %v1942 = vunpack.c.l.b16 %v642
      %v1943 = vunpack.c.l.b16 %v643
      %v1944 = vunpack.c.l.b16 %v644
      %v1945 = vunpack.c.l.b16 %v645
      %v1946 = vunpack.c.l.b16 %v646
      %v1947 = vunpack.c.l.b16 %v647
      %v1948 = vunpack.c.l.b16 %v648
      %v1949 = vunpack.c.l.b16 %v649
      %v1950 = vunpack.c.l.b16 %v650
      %v1951 = vunpack.c.l.b16 %v651
      %v1952 = vunpack.c.l.b16 %v652
      %v1953 = vunpack.c.l.b16 %v653
      %v1954 = vunpack.c.l.b16 %v654
      %v1955 = vunpack.c.l.b16 %v655
      %v1956 = vunpack.c.l.b16 %v656
      %v1957 = vunpack.c.l.b16 %v657
      %v1958 = vunpack.c.l.b16 %v658
      %v1959 = vunpack.c.l.b16 %v659
      %v1960 = vunpack.c.l.b16 %v660
      %v1961 = vunpack.c.l.b16 %v661
      %v1962 = vunpack.c.l.b16 %v662
      %v1963 = vunpack.c.l.b16 %v663
      %v1964 = vunpack.c.l.b16 %v664
      %v1965 = vunpack.c.l.b16 %v665
      %v1966 = vunpack.c.l.b16 %v666
      %v1967 = vunpack.c.l.b16 %v667
      %v1968 = vunpack.c.l.b16 %v668
      %v1969 = vunpack.c.l.b16 %v669
      %v1970 = vunpack.c.l.b16 %v670
      %v1971 = vunpack.c.l.b16 %v671
      %v1972 = vunpack.c.l.b16 %v672
      %v1973 = vunpack.c.l.b16 %v673
      %v1974 = vunpack.c.l.b16 %v674
      %v1975 = vunpack.c.l.b16 %v675
      %v1976 = vunpack.c.l.b16 %v676
      %v1977 = vunpack.c.l.b16 %v677
      %v1978 = vunpack.c.l.b16 %v678
      %v1979 = vunpack.c.l.b16 %v679
      %v1980 = vunpack.c.l.b16 %v680
      %v1981 = vunpack.c.l.b16 %v681
      %v1982 = vunpack.c.l.b16 %v682
      %v1983 = vunpack.c.l.b16 %v683
      %v1984 = vunpack.c.l.b16 %v684
      %v1985 = vunpack.c.l.b16 %v685
      %v1986 = vunpack.c.l.b16 %v686
      %v1987 = vunpack.c.l.b16 %v687
      %v1988 = vunpack.c.l.b16 %v688
      %v1989 = vunpack.c.l.b16 %v689
      %v1990 = vunpack.c.l.b16 %v690
      %v1991 = vunpack.c.l.b16 %v691
      %v1992 = vunpack.c.l.b16 %v692
      %v1993 = vunpack.c.l.b16 %v693
      %v1994 = vunpack.c.l.b16 %v694
      %v1995 = vunpack.c.l.b16 %v695
      %v1996 = vunpack.c.l.b16 %v696
      %v1997 = vunpack.c.l.b16 %v697
      %v1998 = vunpack.c.l.b16 %v698
      %v1999 = vunpack.c.l.b16 %v699
      %v2000 = vunpack.c.l.b16 %v700
      %v2001 = vunpack.c.l.b16 %v701
      %v2002 = vunpack.c.l.b16 %v702
      %v2003 = vunpack.c.l.b16 %v703
      %v2004 = vunpack.c.l.b16 %v704
      %v2005 = vunpack.c.l.b16 %v705
      %v2006 = vunpack.c.l.b16 %v706
      %v2007 = vunpack.c.l.b16 %v707
      %v2008 = vunpack.c.l.b16 %v708
      %v2009 = vunpack.c.l.b16 %v709
      %v2010 = vunpack.c.l.b16 %v710
      %v2011 = vunpack.c.l.b16 %v711
      %v2012 = vunpack.c.l.b16 %v712
      %v2013 = vunpack.c.l.b16 %v713
      %v2014 = vunpack.c.l.b16 %v714
      %v2015 = vunpack.c.l.b16 %v715
      %v2016 = vunpack.c.l.b16 %v716
      %v2017 = vunpack.c.l.b16 %v717
      %v2018 = vunpack.c.l.b16 %v718
      %v2019 = vunpack.c.l.b16 %v719
      %v2020 = vunpack.c.l.b16 %v720
      %v2021 = vunpack.c.l.b16 %v721
      %v2022 = vunpack.c.l.b16 %v722
      %v2023 = vunpack.c.l.b16 %v723
      %v2024 = vunpack.c.l.b16 %v724
      %v2025 = vunpack.c.l.b16 %v725
      %v2026 = vunpack.c.l.b16 %v726
      %v2027 = vunpack.c.l.b16 %v727
      %v2028 = vunpack.c.l.b16 %v728
      %v2029 = vunpack.c.l.b16 %v729
      %v2030 = vunpack.c.l.b16 %v730
      %v2031 = vunpack.c.l.b16 %v731
      %v2032 = vunpack.c.l.b16 %v732
      %v2033 = vunpack.c.l.b16 %v733
      %v2034 = vunpack.c.l.b16 %v734
      %v2035 = vunpack.c.l.b16 %v735
      %v2036 = vunpack.c.l.b16 %v736
      %v2037 = vunpack.c.l.b16 %v737
      %v2038 = vunpack.c.l.b16 %v738
      %v2039 = vunpack.c.l.b16 %v739
      %v2040 = vunpack.c.l.b16 %v740
      %v2041 = vunpack.c.l.b16 %v741
      %v2042 = vunpack.c.l.b16 %v742
      %v2043 = vunpack.c.l.b16 %v743
      %v2044 = vunpack.c.l.b16 %v744
      %v2045 = vunpack.c.l.b16 %v745
      %v2046 = vunpack.c.l.b16 %v746
      %v2047 = vunpack.c.l.b16 %v747
      %v2048 = vunpack.c.l.b16 %v748
      %v2049 = vunpack.c.l.b16 %v749
      %v2050 = vunpack.c.l.b16 %v750
      %v2051 = vunpack.c.l.b16 %v751
      %v2052 = vunpack.c.l.b16 %v752
      %v2053 = vunpack.c.l.b16 %v753
      %v2054 = vunpack.c.l.b16 %v754
      %v2055 = vunpack.c.l.b16 %v755
      %v2056 = vunpack.c.l.b16 %v756
      %v2057 = vunpack.c.l.b16 %v757
      %v2058 = vunpack.c.l.b16 %v758
      %v2059 = vunpack.c.l.b16 %v759
      %v2060 = vunpack.c.l.b16 %v760
      %v2061 = vunpack.c.l.b16 %v761
      %v2062 = vunpack.c.l.b16 %v762
      %v2063 = vunpack.c.l.b16 %v763
      %v2064 = vunpack.c.l.b16 %v764
      %v2065 = vunpack.c.l.b16 %v765
      %v2066 = vunpack.c.l.b16 %v766
      %v2067 = vunpack.c.l.b16 %v767
      %v2068 = vunpack.c.l.b16 %v768
      %v2069 = vunpack.c.l.b16 %v769
      %v2070 = vunpack.c.l.b16 %v770
      %v2071 = vunpack.c.l.b16 %v771
      %v2072 = vunpack.c.l.b16 %v772
      %v2073 = vunpack.c.l.b16 %v773
      %v2074 = vunpack.c.l.b16 %v774
      %v2075 = vunpack.c.l.b16 %v775
      %v2076 = vunpack.c.l.b16 %v776
      %v2077 = vunpack.c.l.b16 %v777
      %v2078 = vunpack.c.l.b16 %v778
      %v2079 = vunpack.c.l.b16 %v779
      %v2080 = vunpack.c.l.b16 %v780
      %v2081 = vunpack.c.l.b16 %v781
      %v2082 = vunpack.c.l.b16 %v782
      %v2083 = vunpack.c.l.b16 %v783
      %v2084 = vunpack.c.l.b16 %v784
      %v2085 = vunpack.c.l.b16 %v785
      %v2086 = vunpack.c.l.b16 %v786
      %v2087 = vunpack.c.l.b16 %v787
      %v2088 = vunpack.c.l.b16 %v788
      %v2089 = vunpack.c.l.b16 %v789
      %v2090 = vunpack.c.l.b16 %v790
      %v2091 = vunpack.c.l.b16 %v791
      %v2092 = vunpack.c.l.b16 %v792
      %v2093 = vunpack.c.l.b16 %v793
      %v2094 = vunpack.c.l.b16 %v794
      %v2095 = vunpack.c.l.b16 %v795
      %v2096 = vunpack.c.l.b16 %v796
      %v2097 = vunpack.c.l.b16 %v797
      %v2098 = vunpack.c.l.b16 %v798
      %v2099 = vunpack.c.l.b16 %v799
      %v2100 = vunpack.c.l.b16 %v800
      %v2101 = vunpack.c.l.b16 %v801
      %v2102 = vunpack.c.l.b16 %v802
      %v2103 = vunpack.c.l.b16 %v803
      %v2104 = vunpack.c.l.b16 %v804
      %v2105 = vunpack.c.l.b16 %v805
      %v2106 = vunpack.c.l.b16 %v806
      %v2107 = vunpack.c.l.b16 %v807
      %v2108 = vunpack.c.l.b16 %v808
      %v2109 = vunpack.c.l.b16 %v809
      %v2110 = vunpack.c.l.b16 %v810
      %v2111 = vunpack.c.l.b16 %v811
      %v2112 = vunpack.c.l.b16 %v812
      %v2113 = vunpack.c.l.b16 %v813
      %v2114 = vpack.c.b16 %v1475, %v1474
      %v2115 = vpack.c.b16 %v1477, %v1476
      %v2116 = vpack.c.b16 %v1479, %v1478
      %v2117 = vpack.c.b16 %v1481, %v1480
      %v2118 = vpack.c.b16 %v1483, %v1482
      %v2119 = vpack.c.b16 %v1485, %v1484
      %v2120 = vpack.c.b16 %v1487, %v1486
      %v2121 = vpack.c.b16 %v1489, %v1488
      %v2122 = vpack.c.b16 %v1491, %v1490
      %v2123 = vpack.c.b16 %v1493, %v1492
      %v2124 = vpack.c.b16 %v1495, %v1494
      %v2125 = vpack.c.b16 %v1497, %v1496
      %v2126 = vpack.c.b16 %v1499, %v1498
      %v2127 = vpack.c.b16 %v1501, %v1500
      %v2128 = vpack.c.b16 %v1503, %v1502
      %v2129 = vpack.c.b16 %v1505, %v1504
      %v2130 = vpack.c.b16 %v1507, %v1506
      %v2131 = vpack.c.b16 %v1509, %v1508
      %v2132 = vpack.c.b16 %v1511, %v1510
      %v2133 = vpack.c.b16 %v1513, %v1512
      %v2134 = vpack.c.b16 %v1515, %v1514
      %v2135 = vpack.c.b16 %v1517, %v1516
      %v2136 = vpack.c.b16 %v1519, %v1518
      %v2137 = vpack.c.b16 %v1521, %v1520
      %v2138 = vpack.c.b16 %v1523, %v1522
      %v2139 = vpack.c.b16 %v1525, %v1524
      %v2140 = vpack.c.b16 %v1527, %v1526
      %v2141 = vpack.c.b16 %v1529, %v1528
      %v2142 = vpack.c.b16 %v1531, %v1530
      %v2143 = vpack.c.b16 %v1533, %v1532
      %v2144 = vpack.c.b16 %v1535, %v1534
      %v2145 = vpack.c.b16 %v1537, %v1536
      %v2146 = vpack.c.b16 %v1539, %v1538
      %v2147 = vpack.c.b16 %v1541, %v1540
      %v2148 = vpack.c.b16 %v1543, %v1542
      %v2149 = vpack.c.b16 %v1545, %v1544
      %v2150 = vpack.c.b16 %v1547, %v1546
      %v2151 = vpack.c.b16 %v1549, %v1548
      %v2152 = vpack.c.b16 %v1551, %v1550
      %v2153 = vpack.c.b16 %v1553, %v1552
      %v2154 = vpack.c.b16 %v1555, %v1554
      %v2155 = vpack.c.b16 %v1557, %v1556
      %v2156 = vpack.c.b16 %v1559, %v1558
      %v2157 = vpack.c.b16 %v1561, %v1560
      %v2158 = vpack.c.b16 %v1563, %v1562
      %v2159 = vpack.c.b16 %v1565, %v1564
      %v2160 = vpack.c.b16 %v1567, %v1566
      %v2161 = vpack.c.b16 %v1569, %v1568
      %v2162 = vpack.c.b16 %v1571, %v1570
      %v2163 = vpack.c.b16 %v1573, %v1572
      %v2164 = vpack.c.b16 %v1575, %v1574
      %v2165 = vpack.c.b16 %v1577, %v1576
      %v2166 = vpack.c.b16 %v1579, %v1578
      %v2167 = vpack.c.b16 %v1581, %v1580
      %v2168 = vpack.c.b16 %v1583, %v1582
      %v2169 = vpack.c.b16 %v1585, %v1584
      %v2170 = vpack.c.b16 %v1587, %v1586
      %v2171 = vpack.c.b16 %v1589, %v1588
      %v2172 = vpack.c.b16 %v1591, %v1590
      %v2173 = vpack.c.b16 %v1593, %v1592
      %v2174 = vpack.c.b16 %v1595, %v1594
      %v2175 = vpack.c.b16 %v1597, %v1596
      %v2176 = vpack.c.b16 %v1599, %v1598
      %v2177 = vpack.c.b16 %v1601, %v1600
      %v2178 = vpack.c.b16 %v1603, %v1602
      %v2179 = vpack.c.b16 %v1605, %v1604
      %v2180 = vpack.c.b16 %v1607, %v1606
      %v2181 = vpack.c.b16 %v1609, %v1608
      %v2182 = vpack.c.b16 %v1611, %v1610
      %v2183 = vpack.c.b16 %v1613, %v1612
      %v2184 = vpack.c.b16 %v1615, %v1614
      %v2185 = vpack.c.b16 %v1617, %v1616
      %v2186 = vpack.c.b16 %v1619, %v1618
      %v2187 = vpack.c.b16 %v1621, %v1620
      %v2188 = vpack.c.b16 %v1623, %v1622
      %v2189 = vpack.c.b16 %v1625, %v1624
      %v2190 = vpack.c.b16 %v1627, %v1626
      %v2191 = vpack.c.b16 %v1629, %v1628
      %v2192 = vpack.c.b16 %v1631, %v1630
      %v2193 = vpack.c.b16 %v1633, %v1632
      %v2194 = vpack.c.b16 %v1635, %v1634
      %v2195 = vpack.c.b16 %v1637, %v1636
      %v2196 = vpack.c.b16 %v1639, %v1638
      %v2197 = vpack.c.b16 %v1641, %v1640
      %v2198 = vpack.c.b16 %v1643, %v1642
      %v2199 = vpack.c.b16 %v1645, %v1644
      %v2200 = vpack.c.b16 %v1647, %v1646
      %v2201 = vpack.c.b16 %v1649, %v1648
      %v2202 = vpack.c.b16 %v1651, %v1650
      %v2203 = vpack.c.b16 %v1653, %v1652
      %v2204 = vpack.c.b16 %v1655, %v1654
      %v2205 = vpack.c.b16 %v1657, %v1656
      %v2206 = vpack.c.b16 %v1659, %v1658
      %v2207 = vpack.c.b16 %v1661, %v1660
      %v2208 = vpack.c.b16 %v1663, %v1662
      %v2209 = vpack.c.b16 %v1665, %v1664
      %v2210 = vpack.c.b16 %v1667, %v1666
      %v2211 = vpack.c.b16 %v1669, %v1668
      %v2212 = vpack.c.b16 %v1671, %v1670
      %v2213 = vpack.c.b16 %v1673, %v1672
      %v2214 = vpack.c.b16 %v1675, %v1674
      %v2215 = vpack.c.b16 %v1677, %v1676
      %v2216 = vpack.c.b16 %v1679, %v1678
      %v2217 = vpack.c.b16 %v1681, %v1680
      %v2218 = vpack.c.b16 %v1683, %v1682
      %v2219 = vpack.c.b16 %v1685, %v1684
      %v2220 = vpack.c.b16 %v1687, %v1686
      %v2221 = vpack.c.b16 %v1689, %v1688
      %v2222 = vpack.c.b16 %v1691, %v1690
      %v2223 = vpack.c.b16 %v1693, %v1692
      %v2224 = vpack.c.b16 %v1695, %v1694
      %v2225 = vpack.c.b16 %v1697, %v1696
      %v2226 = vpack.c.b16 %v1699, %v1698
      %v2227 = vpack.c.b16 %v1701, %v1700
      %v2228 = vpack.c.b16 %v1703, %v1702
      %v2229 = vpack.c.b16 %v1705, %v1704
      %v2230 = vpack.c.b16 %v1707, %v1706
      %v2231 = vpack.c.b16 %v1709, %v1708
      %v2232 = vpack.c.b16 %v1711, %v1710
      %v2233 = vpack.c.b16 %v1713, %v1712
      %v2234 = vpack.c.b16 %v1715, %v1714
      %v2235 = vpack.c.b16 %v1717, %v1716
      %v2236 = vpack.c.b16 %v1719, %v1718
      %v2237 = vpack.c.b16 %v1721, %v1720
      %v2238 = vpack.c.b16 %v1723, %v1722
      %v2239 = vpack.c.b16 %v1725, %v1724
      %v2240 = vpack.c.b16 %v1727, %v1726
      %v2241 = vpack.c.b16 %v1729, %v1728
      %v2242 = vpack.c.b16 %v1731, %v1730
      %v2243 = vpack.c.b16 %v1733, %v1732
      %v2244 = vpack.c.b16 %v1735, %v1734
      %v2245 = vpack.c.b16 %v1737, %v1736
      %v2246 = vpack.c.b16 %v1739, %v1738
      %v2247 = vpack.c.b16 %v1741, %v1740
      %v2248 = vpack.c.b16 %v1743, %v1742
      %v2249 = vpack.c.b16 %v1745, %v1744
      %v2250 = vpack.c.b16 %v1747, %v1746
      %v2251 = vpack.c.b16 %v1749, %v1748
      %v2252 = vpack.c.b16 %v1751, %v1750
      %v2253 = vpack.c.b16 %v1753, %v1752
      %v2254 = vpack.c.b16 %v1755, %v1754
      %v2255 = vpack.c.b16 %v1757, %v1756
      %v2256 = vpack.c.b16 %v1759, %v1758
      %v2257 = vpack.c.b16 %v1761, %v1760
      %v2258 = vpack.c.b16 %v1763, %v1762
      %v2259 = vpack.c.b16 %v1765, %v1764
      %v2260 = vpack.c.b16 %v1767, %v1766
      %v2261 = vpack.c.b16 %v1769, %v1768
      %v2262 = vpack.c.b16 %v1771, %v1770
      %v2263 = vpack.c.b16 %v1773, %v1772
      %v2264 = vpack.c.b16 %v1775, %v1774
      %v2265 = vpack.c.b16 %v1777, %v1776
      %v2266 = vpack.c.b16 %v1779, %v1778
      %v2267 = vpack.c.b16 %v1781, %v1780
      %v2268 = vpack.c.b16 %v1783, %v1782
      %v2269 = vpack.c.b16 %v1785, %v1784
      %v2270 = vpack.c.b16 %v1787, %v1786
      %v2271 = vpack.c.b16 %v1789, %v1788
      %v2272 = vpack.c.b16 %v1791, %v1790
      %v2273 = vpack.c.b16 %v1793, %v1792
      %v2274 = vpack.c.b16 %v1795, %v1794
      %v2275 = vpack.c.b16 %v1797, %v1796
      %v2276 = vpack.c.b16 %v1799, %v1798
      %v2277 = vpack.c.b16 %v1801, %v1800
      %v2278 = vpack.c.b16 %v1803, %v1802
      %v2279 = vpack.c.b16 %v1805, %v1804
      %v2280 = vpack.c.b16 %v1807, %v1806
      %v2281 = vpack.c.b16 %v1809, %v1808
      %v2282 = vpack.c.b16 %v1811, %v1810
      %v2283 = vpack.c.b16 %v1813, %v1812
      %v2284 = vpack.c.b16 %v1815, %v1814
      %v2285 = vpack.c.b16 %v1817, %v1816
      %v2286 = vpack.c.b16 %v1819, %v1818
      %v2287 = vpack.c.b16 %v1821, %v1820
      %v2288 = vpack.c.b16 %v1823, %v1822
      %v2289 = vpack.c.b16 %v1825, %v1824
      %v2290 = vpack.c.b16 %v1827, %v1826
      %v2291 = vpack.c.b16 %v1829, %v1828
      %v2292 = vpack.c.b16 %v1831, %v1830
      %v2293 = vpack.c.b16 %v1833, %v1832
      %v2294 = vpack.c.b16 %v1835, %v1834
      %v2295 = vpack.c.b16 %v1837, %v1836
      %v2296 = vpack.c.b16 %v1839, %v1838
      %v2297 = vpack.c.b16 %v1841, %v1840
      %v2298 = vpack.c.b16 %v1843, %v1842
      %v2299 = vpack.c.b16 %v1845, %v1844
      %v2300 = vpack.c.b16 %v1847, %v1846
      %v2301 = vpack.c.b16 %v1849, %v1848
      %v2302 = vpack.c.b16 %v1851, %v1850
      %v2303 = vpack.c.b16 %v1853, %v1852
      %v2304 = vpack.c.b16 %v1855, %v1854
      %v2305 = vpack.c.b16 %v1857, %v1856
      %v2306 = vpack.c.b16 %v1859, %v1858
      %v2307 = vpack.c.b16 %v1861, %v1860
      %v2308 = vpack.c.b16 %v1863, %v1862
      %v2309 = vpack.c.b16 %v1865, %v1864
      %v2310 = vpack.c.b16 %v1867, %v1866
      %v2311 = vpack.c.b16 %v1869, %v1868
      %v2312 = vpack.c.b16 %v1871, %v1870
      %v2313 = vpack.c.b16 %v1873, %v1872
      %v2314 = vpack.c.b16 %v1875, %v1874
      %v2315 = vpack.c.b16 %v1877, %v1876
      %v2316 = vpack.c.b16 %v1879, %v1878
      %v2317 = vpack.c.b16 %v1881, %v1880
      %v2318 = vpack.c.b16 %v1883, %v1882
      %v2319 = vpack.c.b16 %v1885, %v1884
      %v2320 = vpack.c.b16 %v1887, %v1886
      %v2321 = vpack.c.b16 %v1889, %v1888
      %v2322 = vpack.c.b16 %v1891, %v1890
      %v2323 = vpack.c.b16 %v1893, %v1892
      %v2324 = vpack.c.b16 %v1895, %v1894
      %v2325 = vpack.c.b16 %v1897, %v1896
      %v2326 = vpack.c.b16 %v1899, %v1898
      %v2327 = vpack.c.b16 %v1901, %v1900
      %v2328 = vpack.c.b16 %v1903, %v1902
      %v2329 = vpack.c.b16 %v1905, %v1904
      %v2330 = vpack.c.b16 %v1907, %v1906
      %v2331 = vpack.c.b16 %v1909, %v1908
      %v2332 = vpack.c.b16 %v1911, %v1910
      %v2333 = vpack.c.b16 %v1913, %v1912
      %v2334 = vpack.c.b16 %v1915, %v1914
      %v2335 = vpack.c.b16 %v1917, %v1916
      %v2336 = vpack.c.b16 %v1919, %v1918
      %v2337 = vpack.c.b16 %v1921, %v1920
      %v2338 = vpack.c.b16 %v1923, %v1922
      %v2339 = vpack.c.b16 %v1925, %v1924
      %v2340 = vpack.c.b16 %v1927, %v1926
      %v2341 = vpack.c.b16 %v1929, %v1928
      %v2342 = vpack.c.b16 %v1931, %v1930
      %v2343 = vpack.c.b16 %v1933, %v1932
      %v2344 = vpack.c.b16 %v1935, %v1934
      %v2345 = vpack.c.b16 %v1937, %v1936
      %v2346 = vpack.c.b16 %v1939, %v1938
      %v2347 = vpack.c.b16 %v1941, %v1940
      %v2348 = vpack.c.b16 %v1943, %v1942
      %v2349 = vpack.c.b16 %v1945, %v1944
      %v2350 = vpack.c.b16 %v1947, %v1946
      %v2351 = vpack.c.b16 %v1949, %v1948
      %v2352 = vpack.c.b16 %v1951, %v1950
      %v2353 = vpack.c.b16 %v1953, %v1952
      %v2354 = vpack.c.b16 %v1955, %v1954
      %v2355 = vpack.c.b16 %v1957, %v1956
      %v2356 = vpack.c.b16 %v1959, %v1958
      %v2357 = vpack.c.b16 %v1961, %v1960
      %v2358 = vpack.c.b16 %v1963, %v1962
      %v2359 = vpack.c.b16 %v1965, %v1964
      %v2360 = vpack.c.b16 %v1967, %v1966
      %v2361 = vpack.c.b16 %v1969, %v1968
      %v2362 = vpack.c.b16 %v1971, %v1970
      %v2363 = vpack.c.b16 %v1973, %v1972
      %v2364 = vpack.c.b16 %v1975, %v1974
      %v2365 = vpack.c.b16 %v1977, %v1976
      %v2366 = vpack.c.b16 %v1979, %v1978
      %v2367 = vpack.c.b16 %v1981, %v1980
      %v2368 = vpack.c.b16 %v1983, %v1982
      %v2369 = vpack.c.b16 %v1985, %v1984
      %v2370 = vpack.c.b16 %v1987, %v1986
      %v2371 = vpack.c.b16 %v1989, %v1988
      %v2372 = vpack.c.b16 %v1991, %v1990
      %v2373 = vpack.c.b16 %v1993, %v1992
      %v2374 = vpack.c.b16 %v1995, %v1994
      %v2375 = vpack.c.b16 %v1997, %v1996
      %v2376 = vpack.c.b16 %v1999, %v1998
      %v2377 = vpack.c.b16 %v2001, %v2000
      %v2378 = vpack.c.b16 %v2003, %v2002
      %v2379 = vpack.c.b16 %v2005, %v2004
      %v2380 = vpack.c.b16 %v2007, %v2006
      %v2381 = vpack.c.b16 %v2009, %v2008
      %v2382 = vpack.c.b16 %v2011, %v2010
      %v2383 = vpack.c.b16 %v2013, %v2012
      %v2384 = vpack.c.b16 %v2015, %v2014
      %v2385 = vpack.c.b16 %v2017, %v2016
      %v2386 = vpack.c.b16 %v2019, %v2018
      %v2387 = vpack.c.b16 %v2021, %v2020
      %v2388 = vpack.c.b16 %v2023, %v2022
      %v2389 = vpack.c.b16 %v2025, %v2024
      %v2390 = vpack.c.b16 %v2027, %v2026
      %v2391 = vpack.c.b16 %v2029, %v2028
      %v2392 = vpack.c.b16 %v2031, %v2030
      %v2393 = vpack.c.b16 %v2033, %v2032
      %v2394 = vpack.c.b16 %v2035, %v2034
      %v2395 = vpack.c.b16 %v2037, %v2036
      %v2396 = vpack.c.b16 %v2039, %v2038
      %v2397 = vpack.c.b16 %v2041, %v2040
      %v2398 = vpack.c.b16 %v2043, %v2042
      %v2399 = vpack.c.b16 %v2045, %v2044
      %v2400 = vpack.c.b16 %v2047, %v2046
      %v2401 = vpack.c.b16 %v2049, %v2048
      %v2402 = vpack.c.b16 %v2051, %v2050
      %v2403 = vpack.c.b16 %v2053, %v2052
      %v2404 = vpack.c.b16 %v2055, %v2054
      %v2405 = vpack.c.b16 %v2057, %v2056
      %v2406 = vpack.c.b16 %v2059, %v2058
      %v2407 = vpack.c.b16 %v2061, %v2060
      %v2408 = vpack.c.b16 %v2063, %v2062
      %v2409 = vpack.c.b16 %v2065, %v2064
      %v2410 = vpack.c.b16 %v2067, %v2066
      %v2411 = vpack.c.b16 %v2069, %v2068
      %v2412 = vpack.c.b16 %v2071, %v2070
      %v2413 = vpack.c.b16 %v2073, %v2072
      %v2414 = vpack.c.b16 %v2075, %v2074
      %v2415 = vpack.c.b16 %v2077, %v2076
      %v2416 = vpack.c.b16 %v2079, %v2078
      %v2417 = vpack.c.b16 %v2081, %v2080
      %v2418 = vpack.c.b16 %v2083, %v2082
      %v2419 = vpack.c.b16 %v2085, %v2084
      %v2420 = vpack.c.b16 %v2087, %v2086
      %v2421 = vpack.c.b16 %v2089, %v2088
      %v2422 = vpack.c.b16 %v2091, %v2090
      %v2423 = vpack.c.b16 %v2093, %v2092
      %v2424 = vpack.c.b16 %v2095, %v2094
      %v2425 = vpack.c.b16 %v2097, %v2096
      %v2426 = vpack.c.b16 %v2099, %v2098
      %v2427 = vpack.c.b16 %v2101, %v2100
      %v2428 = vpack.c.b16 %v2103, %v2102
      %v2429 = vpack.c.b16 %v2105, %v2104
      %v2430 = vpack.c.b16 %v2107, %v2106
      %v2431 = vpack.c.b16 %v2109, %v2108
      %v2432 = vpack.c.b16 %v2111, %v2110
      %v2433 = vpack.c.b16 %v2113, %v2112
      %v2770 = vunpack.c.l.b16 %v814
      %v2771 = vunpack.c.l.b16 %v815
      %v2772 = vunpack.c.l.b16 %v816
      %v2773 = vunpack.c.l.b16 %v817
      %v2774 = vunpack.c.l.b16 %v818
      %v2775 = vunpack.c.l.b16 %v819
      %v2776 = vunpack.c.l.b16 %v820
      %v2777 = vunpack.c.l.b16 %v821
      %v2778 = vunpack.c.l.b16 %v822
      %v2779 = vunpack.c.l.b16 %v823
      %v2780 = vunpack.c.l.b16 %v824
      %v2781 = vunpack.c.l.b16 %v825
      %v2782 = vunpack.c.l.b16 %v826
      %v2783 = vunpack.c.l.b16 %v827
      %v2784 = vunpack.c.l.b16 %v828
      %v2785 = vunpack.c.l.b16 %v829
      %v2786 = vpack.c.b16 %v2771, %v2770
      %v2787 = vpack.c.b16 %v2773, %v2772
      %v2788 = vpack.c.b16 %v2775, %v2774
      %v2789 = vpack.c.b16 %v2777, %v2776
      %v2790 = vpack.c.b16 %v2779, %v2778
      %v2791 = vpack.c.b16 %v2781, %v2780
      %v2792 = vpack.c.b16 %v2783, %v2782
      %v2793 = vpack.c.b16 %v2785, %v2784
      %2802 = vmatpush.bf16.msra.mxu0 %v2793
      %2803 = vmatpush.bf16.msra.mxu0 %v2792
      %2804 = vmatpush.bf16.msra.mxu0 %v2791
      %2805 = vmatpush.bf16.msra.mxu0 %v2790
      %2806 = vmatpush.bf16.msra.mxu0 %v2789
      %2807 = vmatpush.bf16.msra.mxu0 %v2788
      %2808 = vmatpush.bf16.msra.mxu0 %v2787
      %2809 = vmatpush.bf16.msra.mxu0 %v2786
      %2810 = vmatmul.bf16.gmra.mxu0 %v2114
      %v2811 = vpop.f32.mrf.mxu0
      %v2812 = vadd.f32 %v832, %v2811
      %v2813 = vpop.f32.mrf.mxu0
      %v2814 = vadd.f32 %v832, %v2813
      %2815 = vmatmul.bf16.gmra.mxu0 %v2115
      %v2816 = vpop.f32.mrf.mxu0
      %v2817 = vadd.f32 %v832, %v2816
      %v2818 = vpop.f32.mrf.mxu0
      %v2819 = vadd.f32 %v832, %v2818
      %2820 = vmatmul.bf16.gmra.mxu0 %v2116
      %v2821 = vpop.f32.mrf.mxu0
      %v2822 = vadd.f32 %v832, %v2821
      %v2823 = vpop.f32.mrf.mxu0
      %v2824 = vadd.f32 %v832, %v2823
      %2825 = vmatmul.bf16.gmra.mxu0 %v2117
      %v2826 = vpop.f32.mrf.mxu0
      %v2827 = vadd.f32 %v832, %v2826
      %v2828 = vpop.f32.mrf.mxu0
      %v2829 = vadd.f32 %v832, %v2828
      %2830 = vmatmul.bf16.gmra.mxu0 %v2118
      %v2831 = vpop.f32.mrf.mxu0
      %v2832 = vadd.f32 %v832, %v2831
      %v2833 = vpop.f32.mrf.mxu0
      %v2834 = vadd.f32 %v832, %v2833
      %2835 = vmatmul.bf16.gmra.mxu0 %v2119
      %v2836 = vpop.f32.mrf.mxu0
      %v2837 = vadd.f32 %v832, %v2836
      %v2838 = vpop.f32.mrf.mxu0
      %v2839 = vadd.f32 %v832, %v2838
      %2840 = vmatmul.bf16.gmra.mxu0 %v2120
      %v2841 = vpop.f32.mrf.mxu0
      %v2842 = vadd.f32 %v832, %v2841
      %v2843 = vpop.f32.mrf.mxu0
      %v2844 = vadd.f32 %v832, %v2843
      %2845 = vmatmul.bf16.gmra.mxu0 %v2121
      %v2846 = vpop.f32.mrf.mxu0
      %v2847 = vadd.f32 %v832, %v2846
      %v2848 = vpop.f32.mrf.mxu0
      %v2849 = vadd.f32 %v832, %v2848
      %2850 = vmatmul.bf16.gmra.mxu0 %v2122
      %v2851 = vpop.f32.mrf.mxu0
      %v2852 = vadd.f32 %v832, %v2851
      %v2853 = vpop.f32.mrf.mxu0
      %v2854 = vadd.f32 %v832, %v2853
      %2855 = vmatmul.bf16.gmra.mxu0 %v2123
      %v2856 = vpop.f32.mrf.mxu0
      %v2857 = vadd.f32 %v832, %v2856
      %v2858 = vpop.f32.mrf.mxu0
      %v2859 = vadd.f32 %v832, %v2858
      %2860 = vmatmul.bf16.gmra.mxu0 %v2124
      %v2861 = vpop.f32.mrf.mxu0
      %v2862 = vadd.f32 %v832, %v2861
      %v2863 = vpop.f32.mrf.mxu0
      %v2864 = vadd.f32 %v832, %v2863
      %2865 = vmatmul.bf16.gmra.mxu0 %v2125
      %v2866 = vpop.f32.mrf.mxu0
      %v2867 = vadd.f32 %v832, %v2866
      %v2868 = vpop.f32.mrf.mxu0
      %v2869 = vadd.f32 %v832, %v2868
      %2870 = vmatmul.bf16.gmra.mxu0 %v2126
      %v2871 = vpop.f32.mrf.mxu0
      %v2872 = vadd.f32 %v832, %v2871
      %v2873 = vpop.f32.mrf.mxu0
      %v2874 = vadd.f32 %v832, %v2873
      %2875 = vmatmul.bf16.gmra.mxu0 %v2127
      %v2876 = vpop.f32.mrf.mxu0
      %v2877 = vadd.f32 %v832, %v2876
      %v2878 = vpop.f32.mrf.mxu0
      %v2879 = vadd.f32 %v832, %v2878
      %2880 = vmatmul.bf16.gmra.mxu0 %v2128
      %v2881 = vpop.f32.mrf.mxu0
      %v2882 = vadd.f32 %v832, %v2881
      %v2883 = vpop.f32.mrf.mxu0
      %v2884 = vadd.f32 %v832, %v2883
      %2885 = vmatmul.bf16.gmra.mxu0 %v2129
      %v2886 = vpop.f32.mrf.mxu0
      %v2887 = vadd.f32 %v832, %v2886
      %v2888 = vpop.f32.mrf.mxu0
      %v2889 = vadd.f32 %v832, %v2888
      %2890 = vmatmul.bf16.gmra.mxu0 %v2130
      %v2891 = vpop.f32.mrf.mxu0
      %v2892 = vadd.f32 %v832, %v2891
      %v2893 = vpop.f32.mrf.mxu0
      %v2894 = vadd.f32 %v832, %v2893
      %2895 = vmatmul.bf16.gmra.mxu0 %v2131
      %v2896 = vpop.f32.mrf.mxu0
      %v2897 = vadd.f32 %v832, %v2896
      %v2898 = vpop.f32.mrf.mxu0
      %v2899 = vadd.f32 %v832, %v2898
      %2900 = vmatmul.bf16.gmra.mxu0 %v2132
      %v2901 = vpop.f32.mrf.mxu0
      %v2902 = vadd.f32 %v832, %v2901
      %v2903 = vpop.f32.mrf.mxu0
      %v2904 = vadd.f32 %v832, %v2903
      %2905 = vmatmul.bf16.gmra.mxu0 %v2133
      %v2906 = vpop.f32.mrf.mxu0
      %v2907 = vadd.f32 %v832, %v2906
      %v2908 = vpop.f32.mrf.mxu0
      %v2909 = vadd.f32 %v832, %v2908
      %2910 = vmatmul.bf16.gmra.mxu0 %v2134
      %v2911 = vpop.f32.mrf.mxu0
      %v2912 = vadd.f32 %v832, %v2911
      %v2913 = vpop.f32.mrf.mxu0
      %v2914 = vadd.f32 %v832, %v2913
      %2915 = vmatmul.bf16.gmra.mxu0 %v2135
      %v2916 = vpop.f32.mrf.mxu0
      %v2917 = vadd.f32 %v832, %v2916
      %v2918 = vpop.f32.mrf.mxu0
      %v2919 = vadd.f32 %v832, %v2918
      %2920 = vmatmul.bf16.gmra.mxu0 %v2136
      %v2921 = vpop.f32.mrf.mxu0
      %v2922 = vadd.f32 %v832, %v2921
      %v2923 = vpop.f32.mrf.mxu0
      %v2924 = vadd.f32 %v832, %v2923
      %2925 = vmatmul.bf16.gmra.mxu0 %v2137
      %v2926 = vpop.f32.mrf.mxu0
      %v2927 = vadd.f32 %v832, %v2926
      %v2928 = vpop.f32.mrf.mxu0
      %v2929 = vadd.f32 %v832, %v2928
      %2930 = vmatmul.bf16.gmra.mxu0 %v2138
      %v2931 = vpop.f32.mrf.mxu0
      %v2932 = vadd.f32 %v832, %v2931
      %v2933 = vpop.f32.mrf.mxu0
      %v2934 = vadd.f32 %v832, %v2933
      %2935 = vmatmul.bf16.gmra.mxu0 %v2139
      %v2936 = vpop.f32.mrf.mxu0
      %v2937 = vadd.f32 %v832, %v2936
      %v2938 = vpop.f32.mrf.mxu0
      %v2939 = vadd.f32 %v832, %v2938
      %2940 = vmatmul.bf16.gmra.mxu0 %v2140
      %v2941 = vpop.f32.mrf.mxu0
      %v2942 = vadd.f32 %v832, %v2941
      %v2943 = vpop.f32.mrf.mxu0
      %v2944 = vadd.f32 %v832, %v2943
      %2945 = vmatmul.bf16.gmra.mxu0 %v2141
      %v2946 = vpop.f32.mrf.mxu0
      %v2947 = vadd.f32 %v832, %v2946
      %v2948 = vpop.f32.mrf.mxu0
      %v2949 = vadd.f32 %v832, %v2948
      %2950 = vmatmul.bf16.gmra.mxu0 %v2142
      %v2951 = vpop.f32.mrf.mxu0
      %v2952 = vadd.f32 %v832, %v2951
      %v2953 = vpop.f32.mrf.mxu0
      %v2954 = vadd.f32 %v832, %v2953
      %2955 = vmatmul.bf16.gmra.mxu0 %v2143
      %v2956 = vpop.f32.mrf.mxu0
      %v2957 = vadd.f32 %v832, %v2956
      %v2958 = vpop.f32.mrf.mxu0
      %v2959 = vadd.f32 %v832, %v2958
      %2960 = vmatmul.bf16.gmra.mxu0 %v2144
      %v2961 = vpop.f32.mrf.mxu0
      %v2962 = vadd.f32 %v832, %v2961
      %v2963 = vpop.f32.mrf.mxu0
      %v2964 = vadd.f32 %v832, %v2963
      %2965 = vmatmul.bf16.gmra.mxu0 %v2145
      %v2966 = vpop.f32.mrf.mxu0
      %v2967 = vadd.f32 %v832, %v2966
      %v2968 = vpop.f32.mrf.mxu0
      %v2969 = vadd.f32 %v832, %v2968
      %2970 = vmatmul.bf16.gmra.mxu0 %v2146
      %v2971 = vpop.f32.mrf.mxu0
      %v2972 = vadd.f32 %v832, %v2971
      %v2973 = vpop.f32.mrf.mxu0
      %v2974 = vadd.f32 %v832, %v2973
      %2975 = vmatmul.bf16.gmra.mxu0 %v2147
      %v2976 = vpop.f32.mrf.mxu0
      %v2977 = vadd.f32 %v832, %v2976
      %v2978 = vpop.f32.mrf.mxu0
      %v2979 = vadd.f32 %v832, %v2978
      %2980 = vmatmul.bf16.gmra.mxu0 %v2148
      %v2981 = vpop.f32.mrf.mxu0
      %v2982 = vadd.f32 %v832, %v2981
      %v2983 = vpop.f32.mrf.mxu0
      %v2984 = vadd.f32 %v832, %v2983
      %2985 = vmatmul.bf16.gmra.mxu0 %v2149
      %v2986 = vpop.f32.mrf.mxu0
      %v2987 = vadd.f32 %v832, %v2986
      %v2988 = vpop.f32.mrf.mxu0
      %v2989 = vadd.f32 %v832, %v2988
      %2990 = vmatmul.bf16.gmra.mxu0 %v2150
      %v2991 = vpop.f32.mrf.mxu0
      %v2992 = vadd.f32 %v832, %v2991
      %v2993 = vpop.f32.mrf.mxu0
      %v2994 = vadd.f32 %v832, %v2993
      %2995 = vmatmul.bf16.gmra.mxu0 %v2151
      %v2996 = vpop.f32.mrf.mxu0
      %v2997 = vadd.f32 %v832, %v2996
      %v2998 = vpop.f32.mrf.mxu0
      %v2999 = vadd.f32 %v832, %v2998
      %3000 = vmatmul.bf16.gmra.mxu0 %v2152
      %v3001 = vpop.f32.mrf.mxu0
      %v3002 = vadd.f32 %v832, %v3001
      %v3003 = vpop.f32.mrf.mxu0
      %v3004 = vadd.f32 %v832, %v3003
      %3005 = vmatmul.bf16.gmra.mxu0 %v2153
      %v3006 = vpop.f32.mrf.mxu0
      %v3007 = vadd.f32 %v832, %v3006
      %v3008 = vpop.f32.mrf.mxu0
      %v3009 = vadd.f32 %v832, %v3008
      %3010 = vmatmul.bf16.gmra.mxu0 %v2154
      %v3011 = vpop.f32.mrf.mxu0
      %v3012 = vadd.f32 %v832, %v3011
      %v3013 = vpop.f32.mrf.mxu0
      %v3014 = vadd.f32 %v832, %v3013
      %3015 = vmatmul.bf16.gmra.mxu0 %v2155
      %v3016 = vpop.f32.mrf.mxu0
      %v3017 = vadd.f32 %v832, %v3016
      %v3018 = vpop.f32.mrf.mxu0
      %v3019 = vadd.f32 %v832, %v3018
      %3020 = vmatmul.bf16.gmra.mxu0 %v2156
      %v3021 = vpop.f32.mrf.mxu0
      %v3022 = vadd.f32 %v832, %v3021
      %v3023 = vpop.f32.mrf.mxu0
      %v3024 = vadd.f32 %v832, %v3023
      %3025 = vmatmul.bf16.gmra.mxu0 %v2157
      %v3026 = vpop.f32.mrf.mxu0
      %v3027 = vadd.f32 %v832, %v3026
      %v3028 = vpop.f32.mrf.mxu0
      %v3029 = vadd.f32 %v832, %v3028
      %3030 = vmatmul.bf16.gmra.mxu0 %v2158
      %v3031 = vpop.f32.mrf.mxu0
      %v3032 = vadd.f32 %v832, %v3031
      %v3033 = vpop.f32.mrf.mxu0
      %v3034 = vadd.f32 %v832, %v3033
      %3035 = vmatmul.bf16.gmra.mxu0 %v2159
      %v3036 = vpop.f32.mrf.mxu0
      %v3037 = vadd.f32 %v832, %v3036
      %v3038 = vpop.f32.mrf.mxu0
      %v3039 = vadd.f32 %v832, %v3038
      %3040 = vmatmul.bf16.gmra.mxu0 %v2160
      %v3041 = vpop.f32.mrf.mxu0
      %v3042 = vadd.f32 %v832, %v3041
      %v3043 = vpop.f32.mrf.mxu0
      %v3044 = vadd.f32 %v832, %v3043
      %3045 = vmatmul.bf16.gmra.mxu0 %v2161
      %v3046 = vpop.f32.mrf.mxu0
      %v3047 = vadd.f32 %v832, %v3046
      %v3048 = vpop.f32.mrf.mxu0
      %v3049 = vadd.f32 %v832, %v3048
      %3050 = vmatmul.bf16.gmra.mxu0 %v2162
      %v3051 = vpop.f32.mrf.mxu0
      %v3052 = vadd.f32 %v832, %v3051
      %v3053 = vpop.f32.mrf.mxu0
      %v3054 = vadd.f32 %v832, %v3053
      %3055 = vmatmul.bf16.gmra.mxu0 %v2163
      %v3056 = vpop.f32.mrf.mxu0
      %v3057 = vadd.f32 %v832, %v3056
      %v3058 = vpop.f32.mrf.mxu0
      %v3059 = vadd.f32 %v832, %v3058
      %3060 = vmatmul.bf16.gmra.mxu0 %v2164
      %v3061 = vpop.f32.mrf.mxu0
      %v3062 = vadd.f32 %v832, %v3061
      %v3063 = vpop.f32.mrf.mxu0
      %v3064 = vadd.f32 %v832, %v3063
      %3065 = vmatmul.bf16.gmra.mxu0 %v2165
      %v3066 = vpop.f32.mrf.mxu0
      %v3067 = vadd.f32 %v832, %v3066
      %v3068 = vpop.f32.mrf.mxu0
      %v3069 = vadd.f32 %v832, %v3068
      %3070 = vmatmul.bf16.gmra.mxu0 %v2166
      %v3071 = vpop.f32.mrf.mxu0
      %v3072 = vadd.f32 %v832, %v3071
      %v3073 = vpop.f32.mrf.mxu0
      %v3074 = vadd.f32 %v832, %v3073
      %3075 = vmatmul.bf16.gmra.mxu0 %v2167
      %v3076 = vpop.f32.mrf.mxu0
      %v3077 = vadd.f32 %v832, %v3076
      %v3078 = vpop.f32.mrf.mxu0
      %v3079 = vadd.f32 %v832, %v3078
      %3080 = vmatmul.bf16.gmra.mxu0 %v2168
      %v3081 = vpop.f32.mrf.mxu0
      %v3082 = vadd.f32 %v832, %v3081
      %v3083 = vpop.f32.mrf.mxu0
      %v3084 = vadd.f32 %v832, %v3083
      %3085 = vmatmul.bf16.gmra.mxu0 %v2169
      %v3086 = vpop.f32.mrf.mxu0
      %v3087 = vadd.f32 %v832, %v3086
      %v3088 = vpop.f32.mrf.mxu0
      %v3089 = vadd.f32 %v832, %v3088
      %3090 = vmatmul.bf16.gmra.mxu0 %v2170
      %v3091 = vpop.f32.mrf.mxu0
      %v3092 = vadd.f32 %v832, %v3091
      %v3093 = vpop.f32.mrf.mxu0
      %v3094 = vadd.f32 %v832, %v3093
      %3095 = vmatmul.bf16.gmra.mxu0 %v2171
      %v3096 = vpop.f32.mrf.mxu0
      %v3097 = vadd.f32 %v832, %v3096
      %v3098 = vpop.f32.mrf.mxu0
      %v3099 = vadd.f32 %v832, %v3098
      %3100 = vmatmul.bf16.gmra.mxu0 %v2172
      %v3101 = vpop.f32.mrf.mxu0
      %v3102 = vadd.f32 %v832, %v3101
      %v3103 = vpop.f32.mrf.mxu0
      %v3104 = vadd.f32 %v832, %v3103
      %3105 = vmatmul.bf16.gmra.mxu0 %v2173
      %v3106 = vpop.f32.mrf.mxu0
      %v3107 = vadd.f32 %v832, %v3106
      %v3108 = vpop.f32.mrf.mxu0
      %v3109 = vadd.f32 %v832, %v3108
      %3110 = vmatmul.bf16.gmra.mxu0 %v2174
      %v3111 = vpop.f32.mrf.mxu0
      %v3112 = vadd.f32 %v832, %v3111
      %v3113 = vpop.f32.mrf.mxu0
      %v3114 = vadd.f32 %v832, %v3113
      %3115 = vmatmul.bf16.gmra.mxu0 %v2175
      %v3116 = vpop.f32.mrf.mxu0
      %v3117 = vadd.f32 %v832, %v3116
      %v3118 = vpop.f32.mrf.mxu0
      %v3119 = vadd.f32 %v832, %v3118
      %3120 = vmatmul.bf16.gmra.mxu0 %v2176
      %v3121 = vpop.f32.mrf.mxu0
      %v3122 = vadd.f32 %v832, %v3121
      %v3123 = vpop.f32.mrf.mxu0
      %v3124 = vadd.f32 %v832, %v3123
      %3125 = vmatmul.bf16.gmra.mxu0 %v2177
      %v3126 = vpop.f32.mrf.mxu0
      %v3127 = vadd.f32 %v832, %v3126
      %v3128 = vpop.f32.mrf.mxu0
      %v3129 = vadd.f32 %v832, %v3128
      %3130 = vmatmul.bf16.gmra.mxu0 %v2178
      %v3131 = vpop.f32.mrf.mxu0
      %v3132 = vadd.f32 %v832, %v3131
      %v3133 = vpop.f32.mrf.mxu0
      %v3134 = vadd.f32 %v832, %v3133
      %3135 = vmatmul.bf16.gmra.mxu0 %v2179
      %v3136 = vpop.f32.mrf.mxu0
      %v3137 = vadd.f32 %v832, %v3136
      %v3138 = vpop.f32.mrf.mxu0
      %v3139 = vadd.f32 %v832, %v3138
      %3140 = vmatmul.bf16.gmra.mxu0 %v2180
      %v3141 = vpop.f32.mrf.mxu0
      %v3142 = vadd.f32 %v832, %v3141
      %v3143 = vpop.f32.mrf.mxu0
      %v3144 = vadd.f32 %v832, %v3143
      %3145 = vmatmul.bf16.gmra.mxu0 %v2181
      %v3146 = vpop.f32.mrf.mxu0
      %v3147 = vadd.f32 %v832, %v3146
      %v3148 = vpop.f32.mrf.mxu0
      %v3149 = vadd.f32 %v832, %v3148
      %3150 = vmatmul.bf16.gmra.mxu0 %v2182
      %v3151 = vpop.f32.mrf.mxu0
      %v3152 = vadd.f32 %v832, %v3151
      %v3153 = vpop.f32.mrf.mxu0
      %v3154 = vadd.f32 %v832, %v3153
      %3155 = vmatmul.bf16.gmra.mxu0 %v2183
      %v3156 = vpop.f32.mrf.mxu0
      %v3157 = vadd.f32 %v832, %v3156
      %v3158 = vpop.f32.mrf.mxu0
      %v3159 = vadd.f32 %v832, %v3158
      %3160 = vmatmul.bf16.gmra.mxu0 %v2184
      %v3161 = vpop.f32.mrf.mxu0
      %v3162 = vadd.f32 %v832, %v3161
      %v3163 = vpop.f32.mrf.mxu0
      %v3164 = vadd.f32 %v832, %v3163
      %3165 = vmatmul.bf16.gmra.mxu0 %v2185
      %v3166 = vpop.f32.mrf.mxu0
      %v3167 = vadd.f32 %v832, %v3166
      %v3168 = vpop.f32.mrf.mxu0
      %v3169 = vadd.f32 %v832, %v3168
      %3170 = vmatmul.bf16.gmra.mxu0 %v2186
      %v3171 = vpop.f32.mrf.mxu0
      %v3172 = vadd.f32 %v832, %v3171
      %v3173 = vpop.f32.mrf.mxu0
      %v3174 = vadd.f32 %v832, %v3173
      %3175 = vmatmul.bf16.gmra.mxu0 %v2187
      %v3176 = vpop.f32.mrf.mxu0
      %v3177 = vadd.f32 %v832, %v3176
      %v3178 = vpop.f32.mrf.mxu0
      %v3179 = vadd.f32 %v832, %v3178
      %3180 = vmatmul.bf16.gmra.mxu0 %v2188
      %v3181 = vpop.f32.mrf.mxu0
      %v3182 = vadd.f32 %v832, %v3181
      %v3183 = vpop.f32.mrf.mxu0
      %v3184 = vadd.f32 %v832, %v3183
      %3185 = vmatmul.bf16.gmra.mxu0 %v2189
      %v3186 = vpop.f32.mrf.mxu0
      %v3187 = vadd.f32 %v832, %v3186
      %v3188 = vpop.f32.mrf.mxu0
      %v3189 = vadd.f32 %v832, %v3188
      %3190 = vmatmul.bf16.gmra.mxu0 %v2190
      %v3191 = vpop.f32.mrf.mxu0
      %v3192 = vadd.f32 %v832, %v3191
      %v3193 = vpop.f32.mrf.mxu0
      %v3194 = vadd.f32 %v832, %v3193
      %3195 = vmatmul.bf16.gmra.mxu0 %v2191
      %v3196 = vpop.f32.mrf.mxu0
      %v3197 = vadd.f32 %v832, %v3196
      %v3198 = vpop.f32.mrf.mxu0
      %v3199 = vadd.f32 %v832, %v3198
      %3200 = vmatmul.bf16.gmra.mxu0 %v2192
      %v3201 = vpop.f32.mrf.mxu0
      %v3202 = vadd.f32 %v832, %v3201
      %v3203 = vpop.f32.mrf.mxu0
      %v3204 = vadd.f32 %v832, %v3203
      %3205 = vmatmul.bf16.gmra.mxu0 %v2193
      %v3206 = vpop.f32.mrf.mxu0
      %v3207 = vadd.f32 %v832, %v3206
      %v3208 = vpop.f32.mrf.mxu0
      %v3209 = vadd.f32 %v832, %v3208
      %3210 = vmatmul.bf16.gmra.mxu0 %v2194
      %v3211 = vpop.f32.mrf.mxu0
      %v3212 = vadd.f32 %v832, %v3211
      %v3213 = vpop.f32.mrf.mxu0
      %v3214 = vadd.f32 %v832, %v3213
      %3215 = vmatmul.bf16.gmra.mxu0 %v2195
      %v3216 = vpop.f32.mrf.mxu0
      %v3217 = vadd.f32 %v832, %v3216
      %v3218 = vpop.f32.mrf.mxu0
      %v3219 = vadd.f32 %v832, %v3218
      %3220 = vmatmul.bf16.gmra.mxu0 %v2196
      %v3221 = vpop.f32.mrf.mxu0
      %v3222 = vadd.f32 %v832, %v3221
      %v3223 = vpop.f32.mrf.mxu0
      %v3224 = vadd.f32 %v832, %v3223
      %3225 = vmatmul.bf16.gmra.mxu0 %v2197
      %v3226 = vpop.f32.mrf.mxu0
      %v3227 = vadd.f32 %v832, %v3226
      %v3228 = vpop.f32.mrf.mxu0
      %v3229 = vadd.f32 %v832, %v3228
      %3230 = vmatmul.bf16.gmra.mxu0 %v2198
      %v3231 = vpop.f32.mrf.mxu0
      %v3232 = vadd.f32 %v832, %v3231
      %v3233 = vpop.f32.mrf.mxu0
      %v3234 = vadd.f32 %v832, %v3233
      %3235 = vmatmul.bf16.gmra.mxu0 %v2199
      %v3236 = vpop.f32.mrf.mxu0
      %v3237 = vadd.f32 %v832, %v3236
      %v3238 = vpop.f32.mrf.mxu0
      %v3239 = vadd.f32 %v832, %v3238
      %3240 = vmatmul.bf16.gmra.mxu0 %v2200
      %v3241 = vpop.f32.mrf.mxu0
      %v3242 = vadd.f32 %v832, %v3241
      %v3243 = vpop.f32.mrf.mxu0
      %v3244 = vadd.f32 %v832, %v3243
      %3245 = vmatmul.bf16.gmra.mxu0 %v2201
      %v3246 = vpop.f32.mrf.mxu0
      %v3247 = vadd.f32 %v832, %v3246
      %v3248 = vpop.f32.mrf.mxu0
      %v3249 = vadd.f32 %v832, %v3248
      %3250 = vmatmul.bf16.gmra.mxu0 %v2202
      %v3251 = vpop.f32.mrf.mxu0
      %v3252 = vadd.f32 %v832, %v3251
      %v3253 = vpop.f32.mrf.mxu0
      %v3254 = vadd.f32 %v832, %v3253
      %3255 = vmatmul.bf16.gmra.mxu0 %v2203
      %v3256 = vpop.f32.mrf.mxu0
      %v3257 = vadd.f32 %v832, %v3256
      %v3258 = vpop.f32.mrf.mxu0
      %v3259 = vadd.f32 %v832, %v3258
      %3260 = vmatmul.bf16.gmra.mxu0 %v2204
      %v3261 = vpop.f32.mrf.mxu0
      %v3262 = vadd.f32 %v832, %v3261
      %v3263 = vpop.f32.mrf.mxu0
      %v3264 = vadd.f32 %v832, %v3263
      %3265 = vmatmul.bf16.gmra.mxu0 %v2205
      %v3266 = vpop.f32.mrf.mxu0
      %v3267 = vadd.f32 %v832, %v3266
      %v3268 = vpop.f32.mrf.mxu0
      %v3269 = vadd.f32 %v832, %v3268
      %3270 = vmatmul.bf16.gmra.mxu0 %v2206
      %v3271 = vpop.f32.mrf.mxu0
      %v3272 = vadd.f32 %v832, %v3271
      %v3273 = vpop.f32.mrf.mxu0
      %v3274 = vadd.f32 %v832, %v3273
      %3275 = vmatmul.bf16.gmra.mxu0 %v2207
      %v3276 = vpop.f32.mrf.mxu0
      %v3277 = vadd.f32 %v832, %v3276
      %v3278 = vpop.f32.mrf.mxu0
      %v3279 = vadd.f32 %v832, %v3278
      %3280 = vmatmul.bf16.gmra.mxu0 %v2208
      %v3281 = vpop.f32.mrf.mxu0
      %v3282 = vadd.f32 %v832, %v3281
      %v3283 = vpop.f32.mrf.mxu0
      %v3284 = vadd.f32 %v832, %v3283
      %3285 = vmatmul.bf16.gmra.mxu0 %v2209
      %v3286 = vpop.f32.mrf.mxu0
      %v3287 = vadd.f32 %v832, %v3286
      %v3288 = vpop.f32.mrf.mxu0
      %v3289 = vadd.f32 %v832, %v3288
      %3290 = vmatmul.bf16.gmra.mxu0 %v2210
      %v3291 = vpop.f32.mrf.mxu0
      %v3292 = vadd.f32 %v832, %v3291
      %v3293 = vpop.f32.mrf.mxu0
      %v3294 = vadd.f32 %v832, %v3293
      %3295 = vmatmul.bf16.gmra.mxu0 %v2211
      %v3296 = vpop.f32.mrf.mxu0
      %v3297 = vadd.f32 %v832, %v3296
      %v3298 = vpop.f32.mrf.mxu0
      %v3299 = vadd.f32 %v832, %v3298
      %3300 = vmatmul.bf16.gmra.mxu0 %v2212
      %v3301 = vpop.f32.mrf.mxu0
      %v3302 = vadd.f32 %v832, %v3301
      %v3303 = vpop.f32.mrf.mxu0
      %v3304 = vadd.f32 %v832, %v3303
      %3305 = vmatmul.bf16.gmra.mxu0 %v2213
      %v3306 = vpop.f32.mrf.mxu0
      %v3307 = vadd.f32 %v832, %v3306
      %v3308 = vpop.f32.mrf.mxu0
      %v3309 = vadd.f32 %v832, %v3308
      %3310 = vmatmul.bf16.gmra.mxu0 %v2214
      %v3311 = vpop.f32.mrf.mxu0
      %v3312 = vadd.f32 %v832, %v3311
      %v3313 = vpop.f32.mrf.mxu0
      %v3314 = vadd.f32 %v832, %v3313
      %3315 = vmatmul.bf16.gmra.mxu0 %v2215
      %v3316 = vpop.f32.mrf.mxu0
      %v3317 = vadd.f32 %v832, %v3316
      %v3318 = vpop.f32.mrf.mxu0
      %v3319 = vadd.f32 %v832, %v3318
      %3320 = vmatmul.bf16.gmra.mxu0 %v2216
      %v3321 = vpop.f32.mrf.mxu0
      %v3322 = vadd.f32 %v832, %v3321
      %v3323 = vpop.f32.mrf.mxu0
      %v3324 = vadd.f32 %v832, %v3323
      %3325 = vmatmul.bf16.gmra.mxu0 %v2217
      %v3326 = vpop.f32.mrf.mxu0
      %v3327 = vadd.f32 %v832, %v3326
      %v3328 = vpop.f32.mrf.mxu0
      %v3329 = vadd.f32 %v832, %v3328
      %3330 = vmatmul.bf16.gmra.mxu0 %v2218
      %v3331 = vpop.f32.mrf.mxu0
      %v3332 = vadd.f32 %v832, %v3331
      %v3333 = vpop.f32.mrf.mxu0
      %v3334 = vadd.f32 %v832, %v3333
      %3335 = vmatmul.bf16.gmra.mxu0 %v2219
      %v3336 = vpop.f32.mrf.mxu0
      %v3337 = vadd.f32 %v832, %v3336
      %v3338 = vpop.f32.mrf.mxu0
      %v3339 = vadd.f32 %v832, %v3338
      %3340 = vmatmul.bf16.gmra.mxu0 %v2220
      %v3341 = vpop.f32.mrf.mxu0
      %v3342 = vadd.f32 %v832, %v3341
      %v3343 = vpop.f32.mrf.mxu0
      %v3344 = vadd.f32 %v832, %v3343
      %3345 = vmatmul.bf16.gmra.mxu0 %v2221
      %v3346 = vpop.f32.mrf.mxu0
      %v3347 = vadd.f32 %v832, %v3346
      %v3348 = vpop.f32.mrf.mxu0
      %v3349 = vadd.f32 %v832, %v3348
      %3350 = vmatmul.bf16.gmra.mxu0 %v2222
      %v3351 = vpop.f32.mrf.mxu0
      %v3352 = vadd.f32 %v832, %v3351
      %v3353 = vpop.f32.mrf.mxu0
      %v3354 = vadd.f32 %v832, %v3353
      %3355 = vmatmul.bf16.gmra.mxu0 %v2223
      %v3356 = vpop.f32.mrf.mxu0
      %v3357 = vadd.f32 %v832, %v3356
      %v3358 = vpop.f32.mrf.mxu0
      %v3359 = vadd.f32 %v832, %v3358
      %3360 = vmatmul.bf16.gmra.mxu0 %v2224
      %v3361 = vpop.f32.mrf.mxu0
      %v3362 = vadd.f32 %v832, %v3361
      %v3363 = vpop.f32.mrf.mxu0
      %v3364 = vadd.f32 %v832, %v3363
      %3365 = vmatmul.bf16.gmra.mxu0 %v2225
      %v3366 = vpop.f32.mrf.mxu0
      %v3367 = vadd.f32 %v832, %v3366
      %v3368 = vpop.f32.mrf.mxu0
      %v3369 = vadd.f32 %v832, %v3368
      %3370 = vmatmul.bf16.gmra.mxu0 %v2226
      %v3371 = vpop.f32.mrf.mxu0
      %v3372 = vadd.f32 %v832, %v3371
      %v3373 = vpop.f32.mrf.mxu0
      %v3374 = vadd.f32 %v832, %v3373
      %3375 = vmatmul.bf16.gmra.mxu0 %v2227
      %v3376 = vpop.f32.mrf.mxu0
      %v3377 = vadd.f32 %v832, %v3376
      %v3378 = vpop.f32.mrf.mxu0
      %v3379 = vadd.f32 %v832, %v3378
      %3380 = vmatmul.bf16.gmra.mxu0 %v2228
      %v3381 = vpop.f32.mrf.mxu0
      %v3382 = vadd.f32 %v832, %v3381
      %v3383 = vpop.f32.mrf.mxu0
      %v3384 = vadd.f32 %v832, %v3383
      %3385 = vmatmul.bf16.gmra.mxu0 %v2229
      %v3386 = vpop.f32.mrf.mxu0
      %v3387 = vadd.f32 %v832, %v3386
      %v3388 = vpop.f32.mrf.mxu0
      %v3389 = vadd.f32 %v832, %v3388
      %3390 = vmatmul.bf16.gmra.mxu0 %v2230
      %v3391 = vpop.f32.mrf.mxu0
      %v3392 = vadd.f32 %v832, %v3391
      %v3393 = vpop.f32.mrf.mxu0
      %v3394 = vadd.f32 %v832, %v3393
      %3395 = vmatmul.bf16.gmra.mxu0 %v2231
      %v3396 = vpop.f32.mrf.mxu0
      %v3397 = vadd.f32 %v832, %v3396
      %v3398 = vpop.f32.mrf.mxu0
      %v3399 = vadd.f32 %v832, %v3398
      %3400 = vmatmul.bf16.gmra.mxu0 %v2232
      %v3401 = vpop.f32.mrf.mxu0
      %v3402 = vadd.f32 %v832, %v3401
      %v3403 = vpop.f32.mrf.mxu0
      %v3404 = vadd.f32 %v832, %v3403
      %3405 = vmatmul.bf16.gmra.mxu0 %v2233
      %v3406 = vpop.f32.mrf.mxu0
      %v3407 = vadd.f32 %v832, %v3406
      %v3408 = vpop.f32.mrf.mxu0
      %v3409 = vadd.f32 %v832, %v3408
      %3410 = vmatmul.bf16.gmra.mxu0 %v2234
      %v3411 = vpop.f32.mrf.mxu0
      %v3412 = vadd.f32 %v832, %v3411
      %v3413 = vpop.f32.mrf.mxu0
      %v3414 = vadd.f32 %v832, %v3413
      %3415 = vmatmul.bf16.gmra.mxu0 %v2235
      %v3416 = vpop.f32.mrf.mxu0
      %v3417 = vadd.f32 %v832, %v3416
      %v3418 = vpop.f32.mrf.mxu0
      %v3419 = vadd.f32 %v832, %v3418
      %3420 = vmatmul.bf16.gmra.mxu0 %v2236
      %v3421 = vpop.f32.mrf.mxu0
      %v3422 = vadd.f32 %v832, %v3421
      %v3423 = vpop.f32.mrf.mxu0
      %v3424 = vadd.f32 %v832, %v3423
      %3425 = vmatmul.bf16.gmra.mxu0 %v2237
      %v3426 = vpop.f32.mrf.mxu0
      %v3427 = vadd.f32 %v832, %v3426
      %v3428 = vpop.f32.mrf.mxu0
      %v3429 = vadd.f32 %v832, %v3428
      %3430 = vmatmul.bf16.gmra.mxu0 %v2238
      %v3431 = vpop.f32.mrf.mxu0
      %v3432 = vadd.f32 %v832, %v3431
      %v3433 = vpop.f32.mrf.mxu0
      %v3434 = vadd.f32 %v832, %v3433
      %3435 = vmatmul.bf16.gmra.mxu0 %v2239
      %v3436 = vpop.f32.mrf.mxu0
      %v3437 = vadd.f32 %v832, %v3436
      %v3438 = vpop.f32.mrf.mxu0
      %v3439 = vadd.f32 %v832, %v3438
      %3440 = vmatmul.bf16.gmra.mxu0 %v2240
      %v3441 = vpop.f32.mrf.mxu0
      %v3442 = vadd.f32 %v832, %v3441
      %v3443 = vpop.f32.mrf.mxu0
      %v3444 = vadd.f32 %v832, %v3443
      %3445 = vmatmul.bf16.gmra.mxu0 %v2241
      %v3446 = vpop.f32.mrf.mxu0
      %v3447 = vadd.f32 %v832, %v3446
      %v3448 = vpop.f32.mrf.mxu0
      %v3449 = vadd.f32 %v832, %v3448
      %3450 = vmatmul.bf16.gmra.mxu0 %v2242
      %v3451 = vpop.f32.mrf.mxu0
      %v3452 = vadd.f32 %v832, %v3451
      %v3453 = vpop.f32.mrf.mxu0
      %v3454 = vadd.f32 %v832, %v3453
      %3455 = vmatmul.bf16.gmra.mxu0 %v2243
      %v3456 = vpop.f32.mrf.mxu0
      %v3457 = vadd.f32 %v832, %v3456
      %v3458 = vpop.f32.mrf.mxu0
      %v3459 = vadd.f32 %v832, %v3458
      %3460 = vmatmul.bf16.gmra.mxu0 %v2244
      %v3461 = vpop.f32.mrf.mxu0
      %v3462 = vadd.f32 %v832, %v3461
      %v3463 = vpop.f32.mrf.mxu0
      %v3464 = vadd.f32 %v832, %v3463
      %3465 = vmatmul.bf16.gmra.mxu0 %v2245
      %v3466 = vpop.f32.mrf.mxu0
      %v3467 = vadd.f32 %v832, %v3466
      %v3468 = vpop.f32.mrf.mxu0
      %v3469 = vadd.f32 %v832, %v3468
      %3470 = vmatmul.bf16.gmra.mxu0 %v2246
      %v3471 = vpop.f32.mrf.mxu0
      %v3472 = vadd.f32 %v832, %v3471
      %v3473 = vpop.f32.mrf.mxu0
      %v3474 = vadd.f32 %v832, %v3473
      %3475 = vmatmul.bf16.gmra.mxu0 %v2247
      %v3476 = vpop.f32.mrf.mxu0
      %v3477 = vadd.f32 %v832, %v3476
      %v3478 = vpop.f32.mrf.mxu0
      %v3479 = vadd.f32 %v832, %v3478
      %3480 = vmatmul.bf16.gmra.mxu0 %v2248
      %v3481 = vpop.f32.mrf.mxu0
      %v3482 = vadd.f32 %v832, %v3481
      %v3483 = vpop.f32.mrf.mxu0
      %v3484 = vadd.f32 %v832, %v3483
      %3485 = vmatmul.bf16.gmra.mxu0 %v2249
      %v3486 = vpop.f32.mrf.mxu0
      %v3487 = vadd.f32 %v832, %v3486
      %v3488 = vpop.f32.mrf.mxu0
      %v3489 = vadd.f32 %v832, %v3488
      %3490 = vmatmul.bf16.gmra.mxu0 %v2250
      %v3491 = vpop.f32.mrf.mxu0
      %v3492 = vadd.f32 %v832, %v3491
      %v3493 = vpop.f32.mrf.mxu0
      %v3494 = vadd.f32 %v832, %v3493
      %3495 = vmatmul.bf16.gmra.mxu0 %v2251
      %v3496 = vpop.f32.mrf.mxu0
      %v3497 = vadd.f32 %v832, %v3496
      %v3498 = vpop.f32.mrf.mxu0
      %v3499 = vadd.f32 %v832, %v3498
      %3500 = vmatmul.bf16.gmra.mxu0 %v2252
      %v3501 = vpop.f32.mrf.mxu0
      %v3502 = vadd.f32 %v832, %v3501
      %v3503 = vpop.f32.mrf.mxu0
      %v3504 = vadd.f32 %v832, %v3503
      %3505 = vmatmul.bf16.gmra.mxu0 %v2253
      %v3506 = vpop.f32.mrf.mxu0
      %v3507 = vadd.f32 %v832, %v3506
      %v3508 = vpop.f32.mrf.mxu0
      %v3509 = vadd.f32 %v832, %v3508
      %3510 = vmatmul.bf16.gmra.mxu0 %v2254
      %v3511 = vpop.f32.mrf.mxu0
      %v3512 = vadd.f32 %v832, %v3511
      %v3513 = vpop.f32.mrf.mxu0
      %v3514 = vadd.f32 %v832, %v3513
      %3515 = vmatmul.bf16.gmra.mxu0 %v2255
      %v3516 = vpop.f32.mrf.mxu0
      %v3517 = vadd.f32 %v832, %v3516
      %v3518 = vpop.f32.mrf.mxu0
      %v3519 = vadd.f32 %v832, %v3518
      %3520 = vmatmul.bf16.gmra.mxu0 %v2256
      %v3521 = vpop.f32.mrf.mxu0
      %v3522 = vadd.f32 %v832, %v3521
      %v3523 = vpop.f32.mrf.mxu0
      %v3524 = vadd.f32 %v832, %v3523
      %3525 = vmatmul.bf16.gmra.mxu0 %v2257
      %v3526 = vpop.f32.mrf.mxu0
      %v3527 = vadd.f32 %v832, %v3526
      %v3528 = vpop.f32.mrf.mxu0
      %v3529 = vadd.f32 %v832, %v3528
      %3530 = vmatmul.bf16.gmra.mxu0 %v2258
      %v3531 = vpop.f32.mrf.mxu0
      %v3532 = vadd.f32 %v832, %v3531
      %v3533 = vpop.f32.mrf.mxu0
      %v3534 = vadd.f32 %v832, %v3533
      %3535 = vmatmul.bf16.gmra.mxu0 %v2259
      %v3536 = vpop.f32.mrf.mxu0
      %v3537 = vadd.f32 %v832, %v3536
      %v3538 = vpop.f32.mrf.mxu0
      %v3539 = vadd.f32 %v832, %v3538
      %3540 = vmatmul.bf16.gmra.mxu0 %v2260
      %v3541 = vpop.f32.mrf.mxu0
      %v3542 = vadd.f32 %v832, %v3541
      %v3543 = vpop.f32.mrf.mxu0
      %v3544 = vadd.f32 %v832, %v3543
      %3545 = vmatmul.bf16.gmra.mxu0 %v2261
      %v3546 = vpop.f32.mrf.mxu0
      %v3547 = vadd.f32 %v832, %v3546
      %v3548 = vpop.f32.mrf.mxu0
      %v3549 = vadd.f32 %v832, %v3548
      %3550 = vmatmul.bf16.gmra.mxu0 %v2262
      %v3551 = vpop.f32.mrf.mxu0
      %v3552 = vadd.f32 %v832, %v3551
      %v3553 = vpop.f32.mrf.mxu0
      %v3554 = vadd.f32 %v832, %v3553
      %3555 = vmatmul.bf16.gmra.mxu0 %v2263
      %v3556 = vpop.f32.mrf.mxu0
      %v3557 = vadd.f32 %v832, %v3556
      %v3558 = vpop.f32.mrf.mxu0
      %v3559 = vadd.f32 %v832, %v3558
      %3560 = vmatmul.bf16.gmra.mxu0 %v2264
      %v3561 = vpop.f32.mrf.mxu0
      %v3562 = vadd.f32 %v832, %v3561
      %v3563 = vpop.f32.mrf.mxu0
      %v3564 = vadd.f32 %v832, %v3563
      %3565 = vmatmul.bf16.gmra.mxu0 %v2265
      %v3566 = vpop.f32.mrf.mxu0
      %v3567 = vadd.f32 %v832, %v3566
      %v3568 = vpop.f32.mrf.mxu0
      %v3569 = vadd.f32 %v832, %v3568
      %3570 = vmatmul.bf16.gmra.mxu0 %v2266
      %v3571 = vpop.f32.mrf.mxu0
      %v3572 = vadd.f32 %v832, %v3571
      %v3573 = vpop.f32.mrf.mxu0
      %v3574 = vadd.f32 %v832, %v3573
      %3575 = vmatmul.bf16.gmra.mxu0 %v2267
      %v3576 = vpop.f32.mrf.mxu0
      %v3577 = vadd.f32 %v832, %v3576
      %v3578 = vpop.f32.mrf.mxu0
      %v3579 = vadd.f32 %v832, %v3578
      %3580 = vmatmul.bf16.gmra.mxu0 %v2268
      %v3581 = vpop.f32.mrf.mxu0
      %v3582 = vadd.f32 %v832, %v3581
      %v3583 = vpop.f32.mrf.mxu0
      %v3584 = vadd.f32 %v832, %v3583
      %3585 = vmatmul.bf16.gmra.mxu0 %v2269
      %v3586 = vpop.f32.mrf.mxu0
      %v3587 = vadd.f32 %v832, %v3586
      %v3588 = vpop.f32.mrf.mxu0
      %v3589 = vadd.f32 %v832, %v3588
      %3590 = vmatmul.bf16.gmra.mxu0 %v2270
      %v3591 = vpop.f32.mrf.mxu0
      %v3592 = vadd.f32 %v832, %v3591
      %v3593 = vpop.f32.mrf.mxu0
      %v3594 = vadd.f32 %v832, %v3593
      %3595 = vmatmul.bf16.gmra.mxu0 %v2271
      %v3596 = vpop.f32.mrf.mxu0
      %v3597 = vadd.f32 %v832, %v3596
      %v3598 = vpop.f32.mrf.mxu0
      %v3599 = vadd.f32 %v832, %v3598
      %3600 = vmatmul.bf16.gmra.mxu0 %v2272
      %v3601 = vpop.f32.mrf.mxu0
      %v3602 = vadd.f32 %v832, %v3601
      %v3603 = vpop.f32.mrf.mxu0
      %v3604 = vadd.f32 %v832, %v3603
      %3605 = vmatmul.bf16.gmra.mxu0 %v2273
      %v3606 = vpop.f32.mrf.mxu0
      %v3607 = vadd.f32 %v832, %v3606
      %v3608 = vpop.f32.mrf.mxu0
      %v3609 = vadd.f32 %v832, %v3608
      %3610 = vmatmul.bf16.gmra.mxu0 %v2274
      %v3611 = vpop.f32.mrf.mxu0
      %v3612 = vadd.f32 %v832, %v3611
      %v3613 = vpop.f32.mrf.mxu0
      %v3614 = vadd.f32 %v832, %v3613
      %3615 = vmatmul.bf16.gmra.mxu0 %v2275
      %v3616 = vpop.f32.mrf.mxu0
      %v3617 = vadd.f32 %v832, %v3616
      %v3618 = vpop.f32.mrf.mxu0
      %v3619 = vadd.f32 %v832, %v3618
      %3620 = vmatmul.bf16.gmra.mxu0 %v2276
      %v3621 = vpop.f32.mrf.mxu0
      %v3622 = vadd.f32 %v832, %v3621
      %v3623 = vpop.f32.mrf.mxu0
      %v3624 = vadd.f32 %v832, %v3623
      %3625 = vmatmul.bf16.gmra.mxu0 %v2277
      %v3626 = vpop.f32.mrf.mxu0
      %v3627 = vadd.f32 %v832, %v3626
      %v3628 = vpop.f32.mrf.mxu0
      %v3629 = vadd.f32 %v832, %v3628
      %3630 = vmatmul.bf16.gmra.mxu0 %v2278
      %v3631 = vpop.f32.mrf.mxu0
      %v3632 = vadd.f32 %v832, %v3631
      %v3633 = vpop.f32.mrf.mxu0
      %v3634 = vadd.f32 %v832, %v3633
      %3635 = vmatmul.bf16.gmra.mxu0 %v2279
      %v3636 = vpop.f32.mrf.mxu0
      %v3637 = vadd.f32 %v832, %v3636
      %v3638 = vpop.f32.mrf.mxu0
      %v3639 = vadd.f32 %v832, %v3638
      %3640 = vmatmul.bf16.gmra.mxu0 %v2280
      %v3641 = vpop.f32.mrf.mxu0
      %v3642 = vadd.f32 %v832, %v3641
      %v3643 = vpop.f32.mrf.mxu0
      %v3644 = vadd.f32 %v832, %v3643
      %3645 = vmatmul.bf16.gmra.mxu0 %v2281
      %v3646 = vpop.f32.mrf.mxu0
      %v3647 = vadd.f32 %v832, %v3646
      %v3648 = vpop.f32.mrf.mxu0
      %v3649 = vadd.f32 %v832, %v3648
      %3650 = vmatmul.bf16.gmra.mxu0 %v2282
      %v3651 = vpop.f32.mrf.mxu0
      %v3652 = vadd.f32 %v832, %v3651
      %v3653 = vpop.f32.mrf.mxu0
      %v3654 = vadd.f32 %v832, %v3653
      %3655 = vmatmul.bf16.gmra.mxu0 %v2283
      %v3656 = vpop.f32.mrf.mxu0
      %v3657 = vadd.f32 %v832, %v3656
      %v3658 = vpop.f32.mrf.mxu0
      %v3659 = vadd.f32 %v832, %v3658
      %3660 = vmatmul.bf16.gmra.mxu0 %v2284
      %v3661 = vpop.f32.mrf.mxu0
      %v3662 = vadd.f32 %v832, %v3661
      %v3663 = vpop.f32.mrf.mxu0
      %v3664 = vadd.f32 %v832, %v3663
      %3665 = vmatmul.bf16.gmra.mxu0 %v2285
      %v3666 = vpop.f32.mrf.mxu0
      %v3667 = vadd.f32 %v832, %v3666
      %v3668 = vpop.f32.mrf.mxu0
      %v3669 = vadd.f32 %v832, %v3668
      %3670 = vmatmul.bf16.gmra.mxu0 %v2286
      %v3671 = vpop.f32.mrf.mxu0
      %v3672 = vadd.f32 %v832, %v3671
      %v3673 = vpop.f32.mrf.mxu0
      %v3674 = vadd.f32 %v832, %v3673
      %3675 = vmatmul.bf16.gmra.mxu0 %v2287
      %v3676 = vpop.f32.mrf.mxu0
      %v3677 = vadd.f32 %v832, %v3676
      %v3678 = vpop.f32.mrf.mxu0
      %v3679 = vadd.f32 %v832, %v3678
      %3680 = vmatmul.bf16.gmra.mxu0 %v2288
      %v3681 = vpop.f32.mrf.mxu0
      %v3682 = vadd.f32 %v832, %v3681
      %v3683 = vpop.f32.mrf.mxu0
      %v3684 = vadd.f32 %v832, %v3683
      %3685 = vmatmul.bf16.gmra.mxu0 %v2289
      %v3686 = vpop.f32.mrf.mxu0
      %v3687 = vadd.f32 %v832, %v3686
      %v3688 = vpop.f32.mrf.mxu0
      %v3689 = vadd.f32 %v832, %v3688
      %3690 = vmatmul.bf16.gmra.mxu0 %v2290
      %v3691 = vpop.f32.mrf.mxu0
      %v3692 = vadd.f32 %v832, %v3691
      %v3693 = vpop.f32.mrf.mxu0
      %v3694 = vadd.f32 %v832, %v3693
      %3695 = vmatmul.bf16.gmra.mxu0 %v2291
      %v3696 = vpop.f32.mrf.mxu0
      %v3697 = vadd.f32 %v832, %v3696
      %v3698 = vpop.f32.mrf.mxu0
      %v3699 = vadd.f32 %v832, %v3698
      %3700 = vmatmul.bf16.gmra.mxu0 %v2292
      %v3701 = vpop.f32.mrf.mxu0
      %v3702 = vadd.f32 %v832, %v3701
      %v3703 = vpop.f32.mrf.mxu0
      %v3704 = vadd.f32 %v832, %v3703
      %3705 = vmatmul.bf16.gmra.mxu0 %v2293
      %v3706 = vpop.f32.mrf.mxu0
      %v3707 = vadd.f32 %v832, %v3706
      %v3708 = vpop.f32.mrf.mxu0
      %v3709 = vadd.f32 %v832, %v3708
      %3710 = vmatmul.bf16.gmra.mxu0 %v2294
      %v3711 = vpop.f32.mrf.mxu0
      %v3712 = vadd.f32 %v832, %v3711
      %v3713 = vpop.f32.mrf.mxu0
      %v3714 = vadd.f32 %v832, %v3713
      %3715 = vmatmul.bf16.gmra.mxu0 %v2295
      %v3716 = vpop.f32.mrf.mxu0
      %v3717 = vadd.f32 %v832, %v3716
      %v3718 = vpop.f32.mrf.mxu0
      %v3719 = vadd.f32 %v832, %v3718
      %3720 = vmatmul.bf16.gmra.mxu0 %v2296
      %v3721 = vpop.f32.mrf.mxu0
      %v3722 = vadd.f32 %v832, %v3721
      %v3723 = vpop.f32.mrf.mxu0
      %v3724 = vadd.f32 %v832, %v3723
      %3725 = vmatmul.bf16.gmra.mxu0 %v2297
      %v3726 = vpop.f32.mrf.mxu0
      %v3727 = vadd.f32 %v832, %v3726
      %v3728 = vpop.f32.mrf.mxu0
      %v3729 = vadd.f32 %v832, %v3728
      %3730 = vmatmul.bf16.gmra.mxu0 %v2298
      %v3731 = vpop.f32.mrf.mxu0
      %v3732 = vadd.f32 %v832, %v3731
      %v3733 = vpop.f32.mrf.mxu0
      %v3734 = vadd.f32 %v832, %v3733
      %3735 = vmatmul.bf16.gmra.mxu0 %v2299
      %v3736 = vpop.f32.mrf.mxu0
      %v3737 = vadd.f32 %v832, %v3736
      %v3738 = vpop.f32.mrf.mxu0
      %v3739 = vadd.f32 %v832, %v3738
      %3740 = vmatmul.bf16.gmra.mxu0 %v2300
      %v3741 = vpop.f32.mrf.mxu0
      %v3742 = vadd.f32 %v832, %v3741
      %v3743 = vpop.f32.mrf.mxu0
      %v3744 = vadd.f32 %v832, %v3743
      %3745 = vmatmul.bf16.gmra.mxu0 %v2301
      %v3746 = vpop.f32.mrf.mxu0
      %v3747 = vadd.f32 %v832, %v3746
      %v3748 = vpop.f32.mrf.mxu0
      %v3749 = vadd.f32 %v832, %v3748
      %3750 = vmatmul.bf16.gmra.mxu0 %v2302
      %v3751 = vpop.f32.mrf.mxu0
      %v3752 = vadd.f32 %v832, %v3751
      %v3753 = vpop.f32.mrf.mxu0
      %v3754 = vadd.f32 %v832, %v3753
      %3755 = vmatmul.bf16.gmra.mxu0 %v2303
      %v3756 = vpop.f32.mrf.mxu0
      %v3757 = vadd.f32 %v832, %v3756
      %v3758 = vpop.f32.mrf.mxu0
      %v3759 = vadd.f32 %v832, %v3758
      %3760 = vmatmul.bf16.gmra.mxu0 %v2304
      %v3761 = vpop.f32.mrf.mxu0
      %v3762 = vadd.f32 %v832, %v3761
      %v3763 = vpop.f32.mrf.mxu0
      %v3764 = vadd.f32 %v832, %v3763
      %3765 = vmatmul.bf16.gmra.mxu0 %v2305
      %v3766 = vpop.f32.mrf.mxu0
      %v3767 = vadd.f32 %v832, %v3766
      %v3768 = vpop.f32.mrf.mxu0
      %v3769 = vadd.f32 %v832, %v3768
      %3770 = vmatmul.bf16.gmra.mxu0 %v2306
      %v3771 = vpop.f32.mrf.mxu0
      %v3772 = vadd.f32 %v832, %v3771
      %v3773 = vpop.f32.mrf.mxu0
      %v3774 = vadd.f32 %v832, %v3773
      %3775 = vmatmul.bf16.gmra.mxu0 %v2307
      %v3776 = vpop.f32.mrf.mxu0
      %v3777 = vadd.f32 %v832, %v3776
      %v3778 = vpop.f32.mrf.mxu0
      %v3779 = vadd.f32 %v832, %v3778
      %3780 = vmatmul.bf16.gmra.mxu0 %v2308
      %v3781 = vpop.f32.mrf.mxu0
      %v3782 = vadd.f32 %v832, %v3781
      %v3783 = vpop.f32.mrf.mxu0
      %v3784 = vadd.f32 %v832, %v3783
      %3785 = vmatmul.bf16.gmra.mxu0 %v2309
      %v3786 = vpop.f32.mrf.mxu0
      %v3787 = vadd.f32 %v832, %v3786
      %v3788 = vpop.f32.mrf.mxu0
      %v3789 = vadd.f32 %v832, %v3788
      %3790 = vmatmul.bf16.gmra.mxu0 %v2310
      %v3791 = vpop.f32.mrf.mxu0
      %v3792 = vadd.f32 %v832, %v3791
      %v3793 = vpop.f32.mrf.mxu0
      %v3794 = vadd.f32 %v832, %v3793
      %3795 = vmatmul.bf16.gmra.mxu0 %v2311
      %v3796 = vpop.f32.mrf.mxu0
      %v3797 = vadd.f32 %v832, %v3796
      %v3798 = vpop.f32.mrf.mxu0
      %v3799 = vadd.f32 %v832, %v3798
      %3800 = vmatmul.bf16.gmra.mxu0 %v2312
      %v3801 = vpop.f32.mrf.mxu0
      %v3802 = vadd.f32 %v832, %v3801
      %v3803 = vpop.f32.mrf.mxu0
      %v3804 = vadd.f32 %v832, %v3803
      %3805 = vmatmul.bf16.gmra.mxu0 %v2313
      %v3806 = vpop.f32.mrf.mxu0
      %v3807 = vadd.f32 %v832, %v3806
      %v3808 = vpop.f32.mrf.mxu0
      %v3809 = vadd.f32 %v832, %v3808
      %3810 = vmatmul.bf16.gmra.mxu0 %v2314
      %v3811 = vpop.f32.mrf.mxu0
      %v3812 = vadd.f32 %v832, %v3811
      %v3813 = vpop.f32.mrf.mxu0
      %v3814 = vadd.f32 %v832, %v3813
      %3815 = vmatmul.bf16.gmra.mxu0 %v2315
      %v3816 = vpop.f32.mrf.mxu0
      %v3817 = vadd.f32 %v832, %v3816
      %v3818 = vpop.f32.mrf.mxu0
      %v3819 = vadd.f32 %v832, %v3818
      %3820 = vmatmul.bf16.gmra.mxu0 %v2316
      %v3821 = vpop.f32.mrf.mxu0
      %v3822 = vadd.f32 %v832, %v3821
      %v3823 = vpop.f32.mrf.mxu0
      %v3824 = vadd.f32 %v832, %v3823
      %3825 = vmatmul.bf16.gmra.mxu0 %v2317
      %v3826 = vpop.f32.mrf.mxu0
      %v3827 = vadd.f32 %v832, %v3826
      %v3828 = vpop.f32.mrf.mxu0
      %v3829 = vadd.f32 %v832, %v3828
      %3830 = vmatmul.bf16.gmra.mxu0 %v2318
      %v3831 = vpop.f32.mrf.mxu0
      %v3832 = vadd.f32 %v832, %v3831
      %v3833 = vpop.f32.mrf.mxu0
      %v3834 = vadd.f32 %v832, %v3833
      %3835 = vmatmul.bf16.gmra.mxu0 %v2319
      %v3836 = vpop.f32.mrf.mxu0
      %v3837 = vadd.f32 %v832, %v3836
      %v3838 = vpop.f32.mrf.mxu0
      %v3839 = vadd.f32 %v832, %v3838
      %3840 = vmatmul.bf16.gmra.mxu0 %v2320
      %v3841 = vpop.f32.mrf.mxu0
      %v3842 = vadd.f32 %v832, %v3841
      %v3843 = vpop.f32.mrf.mxu0
      %v3844 = vadd.f32 %v832, %v3843
      %3845 = vmatmul.bf16.gmra.mxu0 %v2321
      %v3846 = vpop.f32.mrf.mxu0
      %v3847 = vadd.f32 %v832, %v3846
      %v3848 = vpop.f32.mrf.mxu0
      %v3849 = vadd.f32 %v832, %v3848
      %3850 = vmatmul.bf16.gmra.mxu0 %v2322
      %v3851 = vpop.f32.mrf.mxu0
      %v3852 = vadd.f32 %v832, %v3851
      %v3853 = vpop.f32.mrf.mxu0
      %v3854 = vadd.f32 %v832, %v3853
      %3855 = vmatmul.bf16.gmra.mxu0 %v2323
      %v3856 = vpop.f32.mrf.mxu0
      %v3857 = vadd.f32 %v832, %v3856
      %v3858 = vpop.f32.mrf.mxu0
      %v3859 = vadd.f32 %v832, %v3858
      %3860 = vmatmul.bf16.gmra.mxu0 %v2324
      %v3861 = vpop.f32.mrf.mxu0
      %v3862 = vadd.f32 %v832, %v3861
      %v3863 = vpop.f32.mrf.mxu0
      %v3864 = vadd.f32 %v832, %v3863
      %3865 = vmatmul.bf16.gmra.mxu0 %v2325
      %v3866 = vpop.f32.mrf.mxu0
      %v3867 = vadd.f32 %v832, %v3866
      %v3868 = vpop.f32.mrf.mxu0
      %v3869 = vadd.f32 %v832, %v3868
      %3870 = vmatmul.bf16.gmra.mxu0 %v2326
      %v3871 = vpop.f32.mrf.mxu0
      %v3872 = vadd.f32 %v832, %v3871
      %v3873 = vpop.f32.mrf.mxu0
      %v3874 = vadd.f32 %v832, %v3873
      %3875 = vmatmul.bf16.gmra.mxu0 %v2327
      %v3876 = vpop.f32.mrf.mxu0
      %v3877 = vadd.f32 %v832, %v3876
      %v3878 = vpop.f32.mrf.mxu0
      %v3879 = vadd.f32 %v832, %v3878
      %3880 = vmatmul.bf16.gmra.mxu0 %v2328
      %v3881 = vpop.f32.mrf.mxu0
      %v3882 = vadd.f32 %v832, %v3881
      %v3883 = vpop.f32.mrf.mxu0
      %v3884 = vadd.f32 %v832, %v3883
      %3885 = vmatmul.bf16.gmra.mxu0 %v2329
      %v3886 = vpop.f32.mrf.mxu0
      %v3887 = vadd.f32 %v832, %v3886
      %v3888 = vpop.f32.mrf.mxu0
      %v3889 = vadd.f32 %v832, %v3888
      %3890 = vmatmul.bf16.gmra.mxu0 %v2330
      %v3891 = vpop.f32.mrf.mxu0
      %v3892 = vadd.f32 %v832, %v3891
      %v3893 = vpop.f32.mrf.mxu0
      %v3894 = vadd.f32 %v832, %v3893
      %3895 = vmatmul.bf16.gmra.mxu0 %v2331
      %v3896 = vpop.f32.mrf.mxu0
      %v3897 = vadd.f32 %v832, %v3896
      %v3898 = vpop.f32.mrf.mxu0
      %v3899 = vadd.f32 %v832, %v3898
      %3900 = vmatmul.bf16.gmra.mxu0 %v2332
      %v3901 = vpop.f32.mrf.mxu0
      %v3902 = vadd.f32 %v832, %v3901
      %v3903 = vpop.f32.mrf.mxu0
      %v3904 = vadd.f32 %v832, %v3903
      %3905 = vmatmul.bf16.gmra.mxu0 %v2333
      %v3906 = vpop.f32.mrf.mxu0
      %v3907 = vadd.f32 %v832, %v3906
      %v3908 = vpop.f32.mrf.mxu0
      %v3909 = vadd.f32 %v832, %v3908
      %3910 = vmatmul.bf16.gmra.mxu0 %v2334
      %v3911 = vpop.f32.mrf.mxu0
      %v3912 = vadd.f32 %v832, %v3911
      %v3913 = vpop.f32.mrf.mxu0
      %v3914 = vadd.f32 %v832, %v3913
      %3915 = vmatmul.bf16.gmra.mxu0 %v2335
      %v3916 = vpop.f32.mrf.mxu0
      %v3917 = vadd.f32 %v832, %v3916
      %v3918 = vpop.f32.mrf.mxu0
      %v3919 = vadd.f32 %v832, %v3918
      %3920 = vmatmul.bf16.gmra.mxu0 %v2336
      %v3921 = vpop.f32.mrf.mxu0
      %v3922 = vadd.f32 %v832, %v3921
      %v3923 = vpop.f32.mrf.mxu0
      %v3924 = vadd.f32 %v832, %v3923
      %3925 = vmatmul.bf16.gmra.mxu0 %v2337
      %v3926 = vpop.f32.mrf.mxu0
      %v3927 = vadd.f32 %v832, %v3926
      %v3928 = vpop.f32.mrf.mxu0
      %v3929 = vadd.f32 %v832, %v3928
      %3930 = vmatmul.bf16.gmra.mxu0 %v2338
      %v3931 = vpop.f32.mrf.mxu0
      %v3932 = vadd.f32 %v832, %v3931
      %v3933 = vpop.f32.mrf.mxu0
      %v3934 = vadd.f32 %v832, %v3933
      %3935 = vmatmul.bf16.gmra.mxu0 %v2339
      %v3936 = vpop.f32.mrf.mxu0
      %v3937 = vadd.f32 %v832, %v3936
      %v3938 = vpop.f32.mrf.mxu0
      %v3939 = vadd.f32 %v832, %v3938
      %3940 = vmatmul.bf16.gmra.mxu0 %v2340
      %v3941 = vpop.f32.mrf.mxu0
      %v3942 = vadd.f32 %v832, %v3941
      %v3943 = vpop.f32.mrf.mxu0
      %v3944 = vadd.f32 %v832, %v3943
      %3945 = vmatmul.bf16.gmra.mxu0 %v2341
      %v3946 = vpop.f32.mrf.mxu0
      %v3947 = vadd.f32 %v832, %v3946
      %v3948 = vpop.f32.mrf.mxu0
      %v3949 = vadd.f32 %v832, %v3948
      %3950 = vmatmul.bf16.gmra.mxu0 %v2342
      %v3951 = vpop.f32.mrf.mxu0
      %v3952 = vadd.f32 %v832, %v3951
      %v3953 = vpop.f32.mrf.mxu0
      %v3954 = vadd.f32 %v832, %v3953
      %3955 = vmatmul.bf16.gmra.mxu0 %v2343
      %v3956 = vpop.f32.mrf.mxu0
      %v3957 = vadd.f32 %v832, %v3956
      %v3958 = vpop.f32.mrf.mxu0
      %v3959 = vadd.f32 %v832, %v3958
      %3960 = vmatmul.bf16.gmra.mxu0 %v2344
      %v3961 = vpop.f32.mrf.mxu0
      %v3962 = vadd.f32 %v832, %v3961
      %v3963 = vpop.f32.mrf.mxu0
      %v3964 = vadd.f32 %v832, %v3963
      %3965 = vmatmul.bf16.gmra.mxu0 %v2345
      %v3966 = vpop.f32.mrf.mxu0
      %v3967 = vadd.f32 %v832, %v3966
      %v3968 = vpop.f32.mrf.mxu0
      %v3969 = vadd.f32 %v832, %v3968
      %3970 = vmatmul.bf16.gmra.mxu0 %v2346
      %v3971 = vpop.f32.mrf.mxu0
      %v3972 = vadd.f32 %v832, %v3971
      %v3973 = vpop.f32.mrf.mxu0
      %v3974 = vadd.f32 %v832, %v3973
      %3975 = vmatmul.bf16.gmra.mxu0 %v2347
      %v3976 = vpop.f32.mrf.mxu0
      %v3977 = vadd.f32 %v832, %v3976
      %v3978 = vpop.f32.mrf.mxu0
      %v3979 = vadd.f32 %v832, %v3978
      %3980 = vmatmul.bf16.gmra.mxu0 %v2348
      %v3981 = vpop.f32.mrf.mxu0
      %v3982 = vadd.f32 %v832, %v3981
      %v3983 = vpop.f32.mrf.mxu0
      %v3984 = vadd.f32 %v832, %v3983
      %3985 = vmatmul.bf16.gmra.mxu0 %v2349
      %v3986 = vpop.f32.mrf.mxu0
      %v3987 = vadd.f32 %v832, %v3986
      %v3988 = vpop.f32.mrf.mxu0
      %v3989 = vadd.f32 %v832, %v3988
      %3990 = vmatmul.bf16.gmra.mxu0 %v2350
      %v3991 = vpop.f32.mrf.mxu0
      %v3992 = vadd.f32 %v832, %v3991
      %v3993 = vpop.f32.mrf.mxu0
      %v3994 = vadd.f32 %v832, %v3993
      %3995 = vmatmul.bf16.gmra.mxu0 %v2351
      %v3996 = vpop.f32.mrf.mxu0
      %v3997 = vadd.f32 %v832, %v3996
      %v3998 = vpop.f32.mrf.mxu0
      %v3999 = vadd.f32 %v832, %v3998
      %4000 = vmatmul.bf16.gmra.mxu0 %v2352
      %v4001 = vpop.f32.mrf.mxu0
      %v4002 = vadd.f32 %v832, %v4001
      %v4003 = vpop.f32.mrf.mxu0
      %v4004 = vadd.f32 %v832, %v4003
      %4005 = vmatmul.bf16.gmra.mxu0 %v2353
      %v4006 = vpop.f32.mrf.mxu0
      %v4007 = vadd.f32 %v832, %v4006
      %v4008 = vpop.f32.mrf.mxu0
      %v4009 = vadd.f32 %v832, %v4008
      %4010 = vmatmul.bf16.gmra.mxu0 %v2354
      %v4011 = vpop.f32.mrf.mxu0
      %v4012 = vadd.f32 %v832, %v4011
      %v4013 = vpop.f32.mrf.mxu0
      %v4014 = vadd.f32 %v832, %v4013
      %4015 = vmatmul.bf16.gmra.mxu0 %v2355
      %v4016 = vpop.f32.mrf.mxu0
      %v4017 = vadd.f32 %v832, %v4016
      %v4018 = vpop.f32.mrf.mxu0
      %v4019 = vadd.f32 %v832, %v4018
      %4020 = vmatmul.bf16.gmra.mxu0 %v2356
      %v4021 = vpop.f32.mrf.mxu0
      %v4022 = vadd.f32 %v832, %v4021
      %v4023 = vpop.f32.mrf.mxu0
      %v4024 = vadd.f32 %v832, %v4023
      %4025 = vmatmul.bf16.gmra.mxu0 %v2357
      %v4026 = vpop.f32.mrf.mxu0
      %v4027 = vadd.f32 %v832, %v4026
      %v4028 = vpop.f32.mrf.mxu0
      %v4029 = vadd.f32 %v832, %v4028
      %4030 = vmatmul.bf16.gmra.mxu0 %v2358
      %v4031 = vpop.f32.mrf.mxu0
      %v4032 = vadd.f32 %v832, %v4031
      %v4033 = vpop.f32.mrf.mxu0
      %v4034 = vadd.f32 %v832, %v4033
      %4035 = vmatmul.bf16.gmra.mxu0 %v2359
      %v4036 = vpop.f32.mrf.mxu0
      %v4037 = vadd.f32 %v832, %v4036
      %v4038 = vpop.f32.mrf.mxu0
      %v4039 = vadd.f32 %v832, %v4038
      %4040 = vmatmul.bf16.gmra.mxu0 %v2360
      %v4041 = vpop.f32.mrf.mxu0
      %v4042 = vadd.f32 %v832, %v4041
      %v4043 = vpop.f32.mrf.mxu0
      %v4044 = vadd.f32 %v832, %v4043
      %4045 = vmatmul.bf16.gmra.mxu0 %v2361
      %v4046 = vpop.f32.mrf.mxu0
      %v4047 = vadd.f32 %v832, %v4046
      %v4048 = vpop.f32.mrf.mxu0
      %v4049 = vadd.f32 %v832, %v4048
      %4050 = vmatmul.bf16.gmra.mxu0 %v2362
      %v4051 = vpop.f32.mrf.mxu0
      %v4052 = vadd.f32 %v832, %v4051
      %v4053 = vpop.f32.mrf.mxu0
      %v4054 = vadd.f32 %v832, %v4053
      %4055 = vmatmul.bf16.gmra.mxu0 %v2363
      %v4056 = vpop.f32.mrf.mxu0
      %v4057 = vadd.f32 %v832, %v4056
      %v4058 = vpop.f32.mrf.mxu0
      %v4059 = vadd.f32 %v832, %v4058
      %4060 = vmatmul.bf16.gmra.mxu0 %v2364
      %v4061 = vpop.f32.mrf.mxu0
      %v4062 = vadd.f32 %v832, %v4061
      %v4063 = vpop.f32.mrf.mxu0
      %v4064 = vadd.f32 %v832, %v4063
      %4065 = vmatmul.bf16.gmra.mxu0 %v2365
      %v4066 = vpop.f32.mrf.mxu0
      %v4067 = vadd.f32 %v832, %v4066
      %v4068 = vpop.f32.mrf.mxu0
      %v4069 = vadd.f32 %v832, %v4068
      %4070 = vmatmul.bf16.gmra.mxu0 %v2366
      %v4071 = vpop.f32.mrf.mxu0
      %v4072 = vadd.f32 %v832, %v4071
      %v4073 = vpop.f32.mrf.mxu0
      %v4074 = vadd.f32 %v832, %v4073
      %4075 = vmatmul.bf16.gmra.mxu0 %v2367
      %v4076 = vpop.f32.mrf.mxu0
      %v4077 = vadd.f32 %v832, %v4076
      %v4078 = vpop.f32.mrf.mxu0
      %v4079 = vadd.f32 %v832, %v4078
      %4080 = vmatmul.bf16.gmra.mxu0 %v2368
      %v4081 = vpop.f32.mrf.mxu0
      %v4082 = vadd.f32 %v832, %v4081
      %v4083 = vpop.f32.mrf.mxu0
      %v4084 = vadd.f32 %v832, %v4083
      %4085 = vmatmul.bf16.gmra.mxu0 %v2369
      %v4086 = vpop.f32.mrf.mxu0
      %v4087 = vadd.f32 %v832, %v4086
      %v4088 = vpop.f32.mrf.mxu0
      %v4089 = vadd.f32 %v832, %v4088
      %4090 = vmatmul.bf16.gmra.mxu0 %v2370
      %v4091 = vpop.f32.mrf.mxu0
      %v4092 = vadd.f32 %v832, %v4091
      %v4093 = vpop.f32.mrf.mxu0
      %v4094 = vadd.f32 %v832, %v4093
      %4095 = vmatmul.bf16.gmra.mxu0 %v2371
      %v4096 = vpop.f32.mrf.mxu0
      %v4097 = vadd.f32 %v832, %v4096
      %v4098 = vpop.f32.mrf.mxu0
      %v4099 = vadd.f32 %v832, %v4098
      %4100 = vmatmul.bf16.gmra.mxu0 %v2372
      %v4101 = vpop.f32.mrf.mxu0
      %v4102 = vadd.f32 %v832, %v4101
      %v4103 = vpop.f32.mrf.mxu0
      %v4104 = vadd.f32 %v832, %v4103
      %4105 = vmatmul.bf16.gmra.mxu0 %v2373
      %v4106 = vpop.f32.mrf.mxu0
      %v4107 = vadd.f32 %v832, %v4106
      %v4108 = vpop.f32.mrf.mxu0
      %v4109 = vadd.f32 %v832, %v4108
      %4110 = vmatmul.bf16.gmra.mxu0 %v2374
      %v4111 = vpop.f32.mrf.mxu0
      %v4112 = vadd.f32 %v832, %v4111
      %v4113 = vpop.f32.mrf.mxu0
      %v4114 = vadd.f32 %v832, %v4113
      %4115 = vmatmul.bf16.gmra.mxu0 %v2375
      %v4116 = vpop.f32.mrf.mxu0
      %v4117 = vadd.f32 %v832, %v4116
      %v4118 = vpop.f32.mrf.mxu0
      %v4119 = vadd.f32 %v832, %v4118
      %4120 = vmatmul.bf16.gmra.mxu0 %v2376
      %v4121 = vpop.f32.mrf.mxu0
      %v4122 = vadd.f32 %v832, %v4121
      %v4123 = vpop.f32.mrf.mxu0
      %v4124 = vadd.f32 %v832, %v4123
      %4125 = vmatmul.bf16.gmra.mxu0 %v2377
      %v4126 = vpop.f32.mrf.mxu0
      %v4127 = vadd.f32 %v832, %v4126
      %v4128 = vpop.f32.mrf.mxu0
      %v4129 = vadd.f32 %v832, %v4128
      %4130 = vmatmul.bf16.gmra.mxu0 %v2378
      %v4131 = vpop.f32.mrf.mxu0
      %v4132 = vadd.f32 %v832, %v4131
      %v4133 = vpop.f32.mrf.mxu0
      %v4134 = vadd.f32 %v832, %v4133
      %4135 = vmatmul.bf16.gmra.mxu0 %v2379
      %v4136 = vpop.f32.mrf.mxu0
      %v4137 = vadd.f32 %v832, %v4136
      %v4138 = vpop.f32.mrf.mxu0
      %v4139 = vadd.f32 %v832, %v4138
      %4140 = vmatmul.bf16.gmra.mxu0 %v2380
      %v4141 = vpop.f32.mrf.mxu0
      %v4142 = vadd.f32 %v832, %v4141
      %v4143 = vpop.f32.mrf.mxu0
      %v4144 = vadd.f32 %v832, %v4143
      %4145 = vmatmul.bf16.gmra.mxu0 %v2381
      %v4146 = vpop.f32.mrf.mxu0
      %v4147 = vadd.f32 %v832, %v4146
      %v4148 = vpop.f32.mrf.mxu0
      %v4149 = vadd.f32 %v832, %v4148
      %4150 = vmatmul.bf16.gmra.mxu0 %v2382
      %v4151 = vpop.f32.mrf.mxu0
      %v4152 = vadd.f32 %v832, %v4151
      %v4153 = vpop.f32.mrf.mxu0
      %v4154 = vadd.f32 %v832, %v4153
      %4155 = vmatmul.bf16.gmra.mxu0 %v2383
      %v4156 = vpop.f32.mrf.mxu0
      %v4157 = vadd.f32 %v832, %v4156
      %v4158 = vpop.f32.mrf.mxu0
      %v4159 = vadd.f32 %v832, %v4158
      %4160 = vmatmul.bf16.gmra.mxu0 %v2384
      %v4161 = vpop.f32.mrf.mxu0
      %v4162 = vadd.f32 %v832, %v4161
      %v4163 = vpop.f32.mrf.mxu0
      %v4164 = vadd.f32 %v832, %v4163
      %4165 = vmatmul.bf16.gmra.mxu0 %v2385
      %v4166 = vpop.f32.mrf.mxu0
      %v4167 = vadd.f32 %v832, %v4166
      %v4168 = vpop.f32.mrf.mxu0
      %v4169 = vadd.f32 %v832, %v4168
      %4170 = vmatmul.bf16.gmra.mxu0 %v2386
      %v4171 = vpop.f32.mrf.mxu0
      %v4172 = vadd.f32 %v832, %v4171
      %v4173 = vpop.f32.mrf.mxu0
      %v4174 = vadd.f32 %v832, %v4173
      %4175 = vmatmul.bf16.gmra.mxu0 %v2387
      %v4176 = vpop.f32.mrf.mxu0
      %v4177 = vadd.f32 %v832, %v4176
      %v4178 = vpop.f32.mrf.mxu0
      %v4179 = vadd.f32 %v832, %v4178
      %4180 = vmatmul.bf16.gmra.mxu0 %v2388
      %v4181 = vpop.f32.mrf.mxu0
      %v4182 = vadd.f32 %v832, %v4181
      %v4183 = vpop.f32.mrf.mxu0
      %v4184 = vadd.f32 %v832, %v4183
      %4185 = vmatmul.bf16.gmra.mxu0 %v2389
      %v4186 = vpop.f32.mrf.mxu0
      %v4187 = vadd.f32 %v832, %v4186
      %v4188 = vpop.f32.mrf.mxu0
      %v4189 = vadd.f32 %v832, %v4188
      %4190 = vmatmul.bf16.gmra.mxu0 %v2390
      %v4191 = vpop.f32.mrf.mxu0
      %v4192 = vadd.f32 %v832, %v4191
      %v4193 = vpop.f32.mrf.mxu0
      %v4194 = vadd.f32 %v832, %v4193
      %4195 = vmatmul.bf16.gmra.mxu0 %v2391
      %v4196 = vpop.f32.mrf.mxu0
      %v4197 = vadd.f32 %v832, %v4196
      %v4198 = vpop.f32.mrf.mxu0
      %v4199 = vadd.f32 %v832, %v4198
      %4200 = vmatmul.bf16.gmra.mxu0 %v2392
      %v4201 = vpop.f32.mrf.mxu0
      %v4202 = vadd.f32 %v832, %v4201
      %v4203 = vpop.f32.mrf.mxu0
      %v4204 = vadd.f32 %v832, %v4203
      %4205 = vmatmul.bf16.gmra.mxu0 %v2393
      %v4206 = vpop.f32.mrf.mxu0
      %v4207 = vadd.f32 %v832, %v4206
      %v4208 = vpop.f32.mrf.mxu0
      %v4209 = vadd.f32 %v832, %v4208
      %4210 = vmatmul.bf16.gmra.mxu0 %v2394
      %v4211 = vpop.f32.mrf.mxu0
      %v4212 = vadd.f32 %v832, %v4211
      %v4213 = vpop.f32.mrf.mxu0
      %v4214 = vadd.f32 %v832, %v4213
      %4215 = vmatmul.bf16.gmra.mxu0 %v2395
      %v4216 = vpop.f32.mrf.mxu0
      %v4217 = vadd.f32 %v832, %v4216
      %v4218 = vpop.f32.mrf.mxu0
      %v4219 = vadd.f32 %v832, %v4218
      %4220 = vmatmul.bf16.gmra.mxu0 %v2396
      %v4221 = vpop.f32.mrf.mxu0
      %v4222 = vadd.f32 %v832, %v4221
      %v4223 = vpop.f32.mrf.mxu0
      %v4224 = vadd.f32 %v832, %v4223
      %4225 = vmatmul.bf16.gmra.mxu0 %v2397
      %v4226 = vpop.f32.mrf.mxu0
      %v4227 = vadd.f32 %v832, %v4226
      %v4228 = vpop.f32.mrf.mxu0
      %v4229 = vadd.f32 %v832, %v4228
      %4230 = vmatmul.bf16.gmra.mxu0 %v2398
      %v4231 = vpop.f32.mrf.mxu0
      %v4232 = vadd.f32 %v832, %v4231
      %v4233 = vpop.f32.mrf.mxu0
      %v4234 = vadd.f32 %v832, %v4233
      %4235 = vmatmul.bf16.gmra.mxu0 %v2399
      %v4236 = vpop.f32.mrf.mxu0
      %v4237 = vadd.f32 %v832, %v4236
      %v4238 = vpop.f32.mrf.mxu0
      %v4239 = vadd.f32 %v832, %v4238
      %4240 = vmatmul.bf16.gmra.mxu0 %v2400
      %v4241 = vpop.f32.mrf.mxu0
      %v4242 = vadd.f32 %v832, %v4241
      %v4243 = vpop.f32.mrf.mxu0
      %v4244 = vadd.f32 %v832, %v4243
      %4245 = vmatmul.bf16.gmra.mxu0 %v2401
      %v4246 = vpop.f32.mrf.mxu0
      %v4247 = vadd.f32 %v832, %v4246
      %v4248 = vpop.f32.mrf.mxu0
      %v4249 = vadd.f32 %v832, %v4248
      %4250 = vmatmul.bf16.gmra.mxu0 %v2402
      %v4251 = vpop.f32.mrf.mxu0
      %v4252 = vadd.f32 %v832, %v4251
      %v4253 = vpop.f32.mrf.mxu0
      %v4254 = vadd.f32 %v832, %v4253
      %4255 = vmatmul.bf16.gmra.mxu0 %v2403
      %v4256 = vpop.f32.mrf.mxu0
      %v4257 = vadd.f32 %v832, %v4256
      %v4258 = vpop.f32.mrf.mxu0
      %v4259 = vadd.f32 %v832, %v4258
      %4260 = vmatmul.bf16.gmra.mxu0 %v2404
      %v4261 = vpop.f32.mrf.mxu0
      %v4262 = vadd.f32 %v832, %v4261
      %v4263 = vpop.f32.mrf.mxu0
      %v4264 = vadd.f32 %v832, %v4263
      %4265 = vmatmul.bf16.gmra.mxu0 %v2405
      %v4266 = vpop.f32.mrf.mxu0
      %v4267 = vadd.f32 %v832, %v4266
      %v4268 = vpop.f32.mrf.mxu0
      %v4269 = vadd.f32 %v832, %v4268
      %4270 = vmatmul.bf16.gmra.mxu0 %v2406
      %v4271 = vpop.f32.mrf.mxu0
      %v4272 = vadd.f32 %v832, %v4271
      %v4273 = vpop.f32.mrf.mxu0
      %v4274 = vadd.f32 %v832, %v4273
      %4275 = vmatmul.bf16.gmra.mxu0 %v2407
      %v4276 = vpop.f32.mrf.mxu0
      %v4277 = vadd.f32 %v832, %v4276
      %v4278 = vpop.f32.mrf.mxu0
      %v4279 = vadd.f32 %v832, %v4278
      %4280 = vmatmul.bf16.gmra.mxu0 %v2408
      %v4281 = vpop.f32.mrf.mxu0
      %v4282 = vadd.f32 %v832, %v4281
      %v4283 = vpop.f32.mrf.mxu0
      %v4284 = vadd.f32 %v832, %v4283
      %4285 = vmatmul.bf16.gmra.mxu0 %v2409
      %v4286 = vpop.f32.mrf.mxu0
      %v4287 = vadd.f32 %v832, %v4286
      %v4288 = vpop.f32.mrf.mxu0
      %v4289 = vadd.f32 %v832, %v4288
      %4290 = vmatmul.bf16.gmra.mxu0 %v2410
      %v4291 = vpop.f32.mrf.mxu0
      %v4292 = vadd.f32 %v832, %v4291
      %v4293 = vpop.f32.mrf.mxu0
      %v4294 = vadd.f32 %v832, %v4293
      %4295 = vmatmul.bf16.gmra.mxu0 %v2411
      %v4296 = vpop.f32.mrf.mxu0
      %v4297 = vadd.f32 %v832, %v4296
      %v4298 = vpop.f32.mrf.mxu0
      %v4299 = vadd.f32 %v832, %v4298
      %4300 = vmatmul.bf16.gmra.mxu0 %v2412
      %v4301 = vpop.f32.mrf.mxu0
      %v4302 = vadd.f32 %v832, %v4301
      %v4303 = vpop.f32.mrf.mxu0
      %v4304 = vadd.f32 %v832, %v4303
      %4305 = vmatmul.bf16.gmra.mxu0 %v2413
      %v4306 = vpop.f32.mrf.mxu0
      %v4307 = vadd.f32 %v832, %v4306
      %v4308 = vpop.f32.mrf.mxu0
      %v4309 = vadd.f32 %v832, %v4308
      %4310 = vmatmul.bf16.gmra.mxu0 %v2414
      %v4311 = vpop.f32.mrf.mxu0
      %v4312 = vadd.f32 %v832, %v4311
      %v4313 = vpop.f32.mrf.mxu0
      %v4314 = vadd.f32 %v832, %v4313
      %4315 = vmatmul.bf16.gmra.mxu0 %v2415
      %v4316 = vpop.f32.mrf.mxu0
      %v4317 = vadd.f32 %v832, %v4316
      %v4318 = vpop.f32.mrf.mxu0
      %v4319 = vadd.f32 %v832, %v4318
      %4320 = vmatmul.bf16.gmra.mxu0 %v2416
      %v4321 = vpop.f32.mrf.mxu0
      %v4322 = vadd.f32 %v832, %v4321
      %v4323 = vpop.f32.mrf.mxu0
      %v4324 = vadd.f32 %v832, %v4323
      %4325 = vmatmul.bf16.gmra.mxu0 %v2417
      %v4326 = vpop.f32.mrf.mxu0
      %v4327 = vadd.f32 %v832, %v4326
      %v4328 = vpop.f32.mrf.mxu0
      %v4329 = vadd.f32 %v832, %v4328
      %4330 = vmatmul.bf16.gmra.mxu0 %v2418
      %v4331 = vpop.f32.mrf.mxu0
      %v4332 = vadd.f32 %v832, %v4331
      %v4333 = vpop.f32.mrf.mxu0
      %v4334 = vadd.f32 %v832, %v4333
      %4335 = vmatmul.bf16.gmra.mxu0 %v2419
      %v4336 = vpop.f32.mrf.mxu0
      %v4337 = vadd.f32 %v832, %v4336
      %v4338 = vpop.f32.mrf.mxu0
      %v4339 = vadd.f32 %v832, %v4338
      %4340 = vmatmul.bf16.gmra.mxu0 %v2420
      %v4341 = vpop.f32.mrf.mxu0
      %v4342 = vadd.f32 %v832, %v4341
      %v4343 = vpop.f32.mrf.mxu0
      %v4344 = vadd.f32 %v832, %v4343
      %4345 = vmatmul.bf16.gmra.mxu0 %v2421
      %v4346 = vpop.f32.mrf.mxu0
      %v4347 = vadd.f32 %v832, %v4346
      %v4348 = vpop.f32.mrf.mxu0
      %v4349 = vadd.f32 %v832, %v4348
      %4350 = vmatmul.bf16.gmra.mxu0 %v2422
      %v4351 = vpop.f32.mrf.mxu0
      %v4352 = vadd.f32 %v832, %v4351
      %v4353 = vpop.f32.mrf.mxu0
      %v4354 = vadd.f32 %v832, %v4353
      %4355 = vmatmul.bf16.gmra.mxu0 %v2423
      %v4356 = vpop.f32.mrf.mxu0
      %v4357 = vadd.f32 %v832, %v4356
      %v4358 = vpop.f32.mrf.mxu0
      %v4359 = vadd.f32 %v832, %v4358
      %4360 = vmatmul.bf16.gmra.mxu0 %v2424
      %v4361 = vpop.f32.mrf.mxu0
      %v4362 = vadd.f32 %v832, %v4361
      %v4363 = vpop.f32.mrf.mxu0
      %v4364 = vadd.f32 %v832, %v4363
      %4365 = vmatmul.bf16.gmra.mxu0 %v2425
      %v4366 = vpop.f32.mrf.mxu0
      %v4367 = vadd.f32 %v832, %v4366
      %v4368 = vpop.f32.mrf.mxu0
      %v4369 = vadd.f32 %v832, %v4368
      %4370 = vmatmul.bf16.gmra.mxu0 %v2426
      %v4371 = vpop.f32.mrf.mxu0
      %v4372 = vadd.f32 %v832, %v4371
      %v4373 = vpop.f32.mrf.mxu0
      %v4374 = vadd.f32 %v832, %v4373
      %4375 = vmatmul.bf16.gmra.mxu0 %v2427
      %v4376 = vpop.f32.mrf.mxu0
      %v4377 = vadd.f32 %v832, %v4376
      %v4378 = vpop.f32.mrf.mxu0
      %v4379 = vadd.f32 %v832, %v4378
      %4380 = vmatmul.bf16.gmra.mxu0 %v2428
      %v4381 = vpop.f32.mrf.mxu0
      %v4382 = vadd.f32 %v832, %v4381
      %v4383 = vpop.f32.mrf.mxu0
      %v4384 = vadd.f32 %v832, %v4383
      %4385 = vmatmul.bf16.gmra.mxu0 %v2429
      %v4386 = vpop.f32.mrf.mxu0
      %v4387 = vadd.f32 %v832, %v4386
      %v4388 = vpop.f32.mrf.mxu0
      %v4389 = vadd.f32 %v832, %v4388
      %4390 = vmatmul.bf16.gmra.mxu0 %v2430
      %v4391 = vpop.f32.mrf.mxu0
      %v4392 = vadd.f32 %v832, %v4391
      %v4393 = vpop.f32.mrf.mxu0
      %v4394 = vadd.f32 %v832, %v4393
      %4395 = vmatmul.bf16.gmra.mxu0 %v2431
      %v4396 = vpop.f32.mrf.mxu0
      %v4397 = vadd.f32 %v832, %v4396
      %v4398 = vpop.f32.mrf.mxu0
      %v4399 = vadd.f32 %v832, %v4398
      %4400 = vmatmul.bf16.gmra.mxu0 %v2432
      %v4401 = vpop.f32.mrf.mxu0
      %v4402 = vadd.f32 %v832, %v4401
      %v4403 = vpop.f32.mrf.mxu0
      %v4404 = vadd.f32 %v832, %v4403
      %4405 = vmatmul.bf16.gmra.mxu0 %v2433
      %v4406 = vpop.f32.mrf.mxu0
      %v4407 = vadd.f32 %v832, %v4406
      %v4408 = vpop.f32.mrf.mxu0
      %v4409 = vadd.f32 %v832, %v4408
      %4410 = vdwg.mxu0
      %v4411 = vmax.f32 %v2812, 0.0
      %v4412 = vmax.f32 %v2814, 0.0
      %v4413 = vmax.f32 %v2817, 0.0
      %v4414 = vmax.f32 %v2819, 0.0
      %v4415 = vmax.f32 %v2822, 0.0
      %v4416 = vmax.f32 %v2824, 0.0
      %v4417 = vmax.f32 %v2827, 0.0
      %v4418 = vmax.f32 %v2829, 0.0
      %v4419 = vmax.f32 %v2832, 0.0
      %v4420 = vmax.f32 %v2834, 0.0
      %v4421 = vmax.f32 %v2837, 0.0
      %v4422 = vmax.f32 %v2839, 0.0
      %v4423 = vmax.f32 %v2842, 0.0
      %v4424 = vmax.f32 %v2844, 0.0
      %v4425 = vmax.f32 %v2847, 0.0
      %v4426 = vmax.f32 %v2849, 0.0
      %v4427 = vmax.f32 %v2852, 0.0
      %v4428 = vmax.f32 %v2854, 0.0
      %v4429 = vmax.f32 %v2857, 0.0
      %v4430 = vmax.f32 %v2859, 0.0
      %v4431 = vmax.f32 %v2862, 0.0
      %v4432 = vmax.f32 %v2864, 0.0
      %v4433 = vmax.f32 %v2867, 0.0
      %v4434 = vmax.f32 %v2869, 0.0
      %v4435 = vmax.f32 %v2872, 0.0
      %v4436 = vmax.f32 %v2874, 0.0
      %v4437 = vmax.f32 %v2877, 0.0
      %v4438 = vmax.f32 %v2879, 0.0
      %v4439 = vmax.f32 %v2882, 0.0
      %v4440 = vmax.f32 %v2884, 0.0
      %v4441 = vmax.f32 %v2887, 0.0
      %v4442 = vmax.f32 %v2889, 0.0
      %v4443 = vmax.f32 %v2892, 0.0
      %v4444 = vmax.f32 %v2894, 0.0
      %v4445 = vmax.f32 %v2897, 0.0
      %v4446 = vmax.f32 %v2899, 0.0
      %v4447 = vmax.f32 %v2902, 0.0
      %v4448 = vmax.f32 %v2904, 0.0
      %v4449 = vmax.f32 %v2907, 0.0
      %v4450 = vmax.f32 %v2909, 0.0
      %v4451 = vmax.f32 %v2912, 0.0
      %v4452 = vmax.f32 %v2914, 0.0
      %v4453 = vmax.f32 %v2917, 0.0
      %v4454 = vmax.f32 %v2919, 0.0
      %v4455 = vmax.f32 %v2922, 0.0
      %v4456 = vmax.f32 %v2924, 0.0
      %v4457 = vmax.f32 %v2927, 0.0
      %v4458 = vmax.f32 %v2929, 0.0
      %v4459 = vmax.f32 %v2932, 0.0
      %v4460 = vmax.f32 %v2934, 0.0
      %v4461 = vmax.f32 %v2937, 0.0
      %v4462 = vmax.f32 %v2939, 0.0
      %v4463 = vmax.f32 %v2942, 0.0
      %v4464 = vmax.f32 %v2944, 0.0
      %v4465 = vmax.f32 %v2947, 0.0
      %v4466 = vmax.f32 %v2949, 0.0
      %v4467 = vmax.f32 %v2952, 0.0
      %v4468 = vmax.f32 %v2954, 0.0
      %v4469 = vmax.f32 %v2957, 0.0
      %v4470 = vmax.f32 %v2959, 0.0
      %v4471 = vmax.f32 %v2962, 0.0
      %v4472 = vmax.f32 %v2964, 0.0
      %v4473 = vmax.f32 %v2967, 0.0
      %v4474 = vmax.f32 %v2969, 0.0
      %v4475 = vmax.f32 %v2972, 0.0
      %v4476 = vmax.f32 %v2974, 0.0
      %v4477 = vmax.f32 %v2977, 0.0
      %v4478 = vmax.f32 %v2979, 0.0
      %v4479 = vmax.f32 %v2982, 0.0
      %v4480 = vmax.f32 %v2984, 0.0
      %v4481 = vmax.f32 %v2987, 0.0
      %v4482 = vmax.f32 %v2989, 0.0
      %v4483 = vmax.f32 %v2992, 0.0
      %v4484 = vmax.f32 %v2994, 0.0
      %v4485 = vmax.f32 %v2997, 0.0
      %v4486 = vmax.f32 %v2999, 0.0
      %v4487 = vmax.f32 %v3002, 0.0
      %v4488 = vmax.f32 %v3004, 0.0
      %v4489 = vmax.f32 %v3007, 0.0
      %v4490 = vmax.f32 %v3009, 0.0
      %v4491 = vmax.f32 %v3012, 0.0
      %v4492 = vmax.f32 %v3014, 0.0
      %v4493 = vmax.f32 %v3017, 0.0
      %v4494 = vmax.f32 %v3019, 0.0
      %v4495 = vmax.f32 %v3022, 0.0
      %v4496 = vmax.f32 %v3024, 0.0
      %v4497 = vmax.f32 %v3027, 0.0
      %v4498 = vmax.f32 %v3029, 0.0
      %v4499 = vmax.f32 %v3032, 0.0
      %v4500 = vmax.f32 %v3034, 0.0
      %v4501 = vmax.f32 %v3037, 0.0
      %v4502 = vmax.f32 %v3039, 0.0
      %v4503 = vmax.f32 %v3042, 0.0
      %v4504 = vmax.f32 %v3044, 0.0
      %v4505 = vmax.f32 %v3047, 0.0
      %v4506 = vmax.f32 %v3049, 0.0
      %v4507 = vmax.f32 %v3052, 0.0
      %v4508 = vmax.f32 %v3054, 0.0
      %v4509 = vmax.f32 %v3057, 0.0
      %v4510 = vmax.f32 %v3059, 0.0
      %v4511 = vmax.f32 %v3062, 0.0
      %v4512 = vmax.f32 %v3064, 0.0
      %v4513 = vmax.f32 %v3067, 0.0
      %v4514 = vmax.f32 %v3069, 0.0
      %v4515 = vmax.f32 %v3072, 0.0
      %v4516 = vmax.f32 %v3074, 0.0
      %v4517 = vmax.f32 %v3077, 0.0
      %v4518 = vmax.f32 %v3079, 0.0
      %v4519 = vmax.f32 %v3082, 0.0
      %v4520 = vmax.f32 %v3084, 0.0
      %v4521 = vmax.f32 %v3087, 0.0
      %v4522 = vmax.f32 %v3089, 0.0
      %v4523 = vmax.f32 %v3092, 0.0
      %v4524 = vmax.f32 %v3094, 0.0
      %v4525 = vmax.f32 %v3097, 0.0
      %v4526 = vmax.f32 %v3099, 0.0
      %v4527 = vmax.f32 %v3102, 0.0
      %v4528 = vmax.f32 %v3104, 0.0
      %v4529 = vmax.f32 %v3107, 0.0
      %v4530 = vmax.f32 %v3109, 0.0
      %v4531 = vmax.f32 %v3112, 0.0
      %v4532 = vmax.f32 %v3114, 0.0
      %v4533 = vmax.f32 %v3117, 0.0
      %v4534 = vmax.f32 %v3119, 0.0
      %v4535 = vmax.f32 %v3122, 0.0
      %v4536 = vmax.f32 %v3124, 0.0
      %v4537 = vmax.f32 %v3127, 0.0
      %v4538 = vmax.f32 %v3129, 0.0
      %v4539 = vmax.f32 %v3132, 0.0
      %v4540 = vmax.f32 %v3134, 0.0
      %v4541 = vmax.f32 %v3137, 0.0
      %v4542 = vmax.f32 %v3139, 0.0
      %v4543 = vmax.f32 %v3142, 0.0
      %v4544 = vmax.f32 %v3144, 0.0
      %v4545 = vmax.f32 %v3147, 0.0
      %v4546 = vmax.f32 %v3149, 0.0
      %v4547 = vmax.f32 %v3152, 0.0
      %v4548 = vmax.f32 %v3154, 0.0
      %v4549 = vmax.f32 %v3157, 0.0
      %v4550 = vmax.f32 %v3159, 0.0
      %v4551 = vmax.f32 %v3162, 0.0
      %v4552 = vmax.f32 %v3164, 0.0
      %v4553 = vmax.f32 %v3167, 0.0
      %v4554 = vmax.f32 %v3169, 0.0
      %v4555 = vmax.f32 %v3172, 0.0
      %v4556 = vmax.f32 %v3174, 0.0
      %v4557 = vmax.f32 %v3177, 0.0
      %v4558 = vmax.f32 %v3179, 0.0
      %v4559 = vmax.f32 %v3182, 0.0
      %v4560 = vmax.f32 %v3184, 0.0
      %v4561 = vmax.f32 %v3187, 0.0
      %v4562 = vmax.f32 %v3189, 0.0
      %v4563 = vmax.f32 %v3192, 0.0
      %v4564 = vmax.f32 %v3194, 0.0
      %v4565 = vmax.f32 %v3197, 0.0
      %v4566 = vmax.f32 %v3199, 0.0
      %v4567 = vmax.f32 %v3202, 0.0
      %v4568 = vmax.f32 %v3204, 0.0
      %v4569 = vmax.f32 %v3207, 0.0
      %v4570 = vmax.f32 %v3209, 0.0
      %v4571 = vmax.f32 %v3212, 0.0
      %v4572 = vmax.f32 %v3214, 0.0
      %v4573 = vmax.f32 %v3217, 0.0
      %v4574 = vmax.f32 %v3219, 0.0
      %v4575 = vmax.f32 %v3222, 0.0
      %v4576 = vmax.f32 %v3224, 0.0
      %v4577 = vmax.f32 %v3227, 0.0
      %v4578 = vmax.f32 %v3229, 0.0
      %v4579 = vmax.f32 %v3232, 0.0
      %v4580 = vmax.f32 %v3234, 0.0
      %v4581 = vmax.f32 %v3237, 0.0
      %v4582 = vmax.f32 %v3239, 0.0
      %v4583 = vmax.f32 %v3242, 0.0
      %v4584 = vmax.f32 %v3244, 0.0
      %v4585 = vmax.f32 %v3247, 0.0
      %v4586 = vmax.f32 %v3249, 0.0
      %v4587 = vmax.f32 %v3252, 0.0
      %v4588 = vmax.f32 %v3254, 0.0
      %v4589 = vmax.f32 %v3257, 0.0
      %v4590 = vmax.f32 %v3259, 0.0
      %v4591 = vmax.f32 %v3262, 0.0
      %v4592 = vmax.f32 %v3264, 0.0
      %v4593 = vmax.f32 %v3267, 0.0
      %v4594 = vmax.f32 %v3269, 0.0
      %v4595 = vmax.f32 %v3272, 0.0
      %v4596 = vmax.f32 %v3274, 0.0
      %v4597 = vmax.f32 %v3277, 0.0
      %v4598 = vmax.f32 %v3279, 0.0
      %v4599 = vmax.f32 %v3282, 0.0
      %v4600 = vmax.f32 %v3284, 0.0
      %v4601 = vmax.f32 %v3287, 0.0
      %v4602 = vmax.f32 %v3289, 0.0
      %v4603 = vmax.f32 %v3292, 0.0
      %v4604 = vmax.f32 %v3294, 0.0
      %v4605 = vmax.f32 %v3297, 0.0
      %v4606 = vmax.f32 %v3299, 0.0
      %v4607 = vmax.f32 %v3302, 0.0
      %v4608 = vmax.f32 %v3304, 0.0
      %v4609 = vmax.f32 %v3307, 0.0
      %v4610 = vmax.f32 %v3309, 0.0
      %v4611 = vmax.f32 %v3312, 0.0
      %v4612 = vmax.f32 %v3314, 0.0
      %v4613 = vmax.f32 %v3317, 0.0
      %v4614 = vmax.f32 %v3319, 0.0
      %v4615 = vmax.f32 %v3322, 0.0
      %v4616 = vmax.f32 %v3324, 0.0
      %v4617 = vmax.f32 %v3327, 0.0
      %v4618 = vmax.f32 %v3329, 0.0
      %v4619 = vmax.f32 %v3332, 0.0
      %v4620 = vmax.f32 %v3334, 0.0
      %v4621 = vmax.f32 %v3337, 0.0
      %v4622 = vmax.f32 %v3339, 0.0
      %v4623 = vmax.f32 %v3342, 0.0
      %v4624 = vmax.f32 %v3344, 0.0
      %v4625 = vmax.f32 %v3347, 0.0
      %v4626 = vmax.f32 %v3349, 0.0
      %v4627 = vmax.f32 %v3352, 0.0
      %v4628 = vmax.f32 %v3354, 0.0
      %v4629 = vmax.f32 %v3357, 0.0
      %v4630 = vmax.f32 %v3359, 0.0
      %v4631 = vmax.f32 %v3362, 0.0
      %v4632 = vmax.f32 %v3364, 0.0
      %v4633 = vmax.f32 %v3367, 0.0
      %v4634 = vmax.f32 %v3369, 0.0
      %v4635 = vmax.f32 %v3372, 0.0
      %v4636 = vmax.f32 %v3374, 0.0
      %v4637 = vmax.f32 %v3377, 0.0
      %v4638 = vmax.f32 %v3379, 0.0
      %v4639 = vmax.f32 %v3382, 0.0
      %v4640 = vmax.f32 %v3384, 0.0
      %v4641 = vmax.f32 %v3387, 0.0
      %v4642 = vmax.f32 %v3389, 0.0
      %v4643 = vmax.f32 %v3392, 0.0
      %v4644 = vmax.f32 %v3394, 0.0
      %v4645 = vmax.f32 %v3397, 0.0
      %v4646 = vmax.f32 %v3399, 0.0
      %v4647 = vmax.f32 %v3402, 0.0
      %v4648 = vmax.f32 %v3404, 0.0
      %v4649 = vmax.f32 %v3407, 0.0
      %v4650 = vmax.f32 %v3409, 0.0
      %v4651 = vmax.f32 %v3412, 0.0
      %v4652 = vmax.f32 %v3414, 0.0
      %v4653 = vmax.f32 %v3417, 0.0
      %v4654 = vmax.f32 %v3419, 0.0
      %v4655 = vmax.f32 %v3422, 0.0
      %v4656 = vmax.f32 %v3424, 0.0
      %v4657 = vmax.f32 %v3427, 0.0
      %v4658 = vmax.f32 %v3429, 0.0
      %v4659 = vmax.f32 %v3432, 0.0
      %v4660 = vmax.f32 %v3434, 0.0
      %v4661 = vmax.f32 %v3437, 0.0
      %v4662 = vmax.f32 %v3439, 0.0
      %v4663 = vmax.f32 %v3442, 0.0
      %v4664 = vmax.f32 %v3444, 0.0
      %v4665 = vmax.f32 %v3447, 0.0
      %v4666 = vmax.f32 %v3449, 0.0
      %v4667 = vmax.f32 %v3452, 0.0
      %v4668 = vmax.f32 %v3454, 0.0
      %v4669 = vmax.f32 %v3457, 0.0
      %v4670 = vmax.f32 %v3459, 0.0
      %v4671 = vmax.f32 %v3462, 0.0
      %v4672 = vmax.f32 %v3464, 0.0
      %v4673 = vmax.f32 %v3467, 0.0
      %v4674 = vmax.f32 %v3469, 0.0
      %v4675 = vmax.f32 %v3472, 0.0
      %v4676 = vmax.f32 %v3474, 0.0
      %v4677 = vmax.f32 %v3477, 0.0
      %v4678 = vmax.f32 %v3479, 0.0
      %v4679 = vmax.f32 %v3482, 0.0
      %v4680 = vmax.f32 %v3484, 0.0
      %v4681 = vmax.f32 %v3487, 0.0
      %v4682 = vmax.f32 %v3489, 0.0
      %v4683 = vmax.f32 %v3492, 0.0
      %v4684 = vmax.f32 %v3494, 0.0
      %v4685 = vmax.f32 %v3497, 0.0
      %v4686 = vmax.f32 %v3499, 0.0
      %v4687 = vmax.f32 %v3502, 0.0
      %v4688 = vmax.f32 %v3504, 0.0
      %v4689 = vmax.f32 %v3507, 0.0
      %v4690 = vmax.f32 %v3509, 0.0
      %v4691 = vmax.f32 %v3512, 0.0
      %v4692 = vmax.f32 %v3514, 0.0
      %v4693 = vmax.f32 %v3517, 0.0
      %v4694 = vmax.f32 %v3519, 0.0
      %v4695 = vmax.f32 %v3522, 0.0
      %v4696 = vmax.f32 %v3524, 0.0
      %v4697 = vmax.f32 %v3527, 0.0
      %v4698 = vmax.f32 %v3529, 0.0
      %v4699 = vmax.f32 %v3532, 0.0
      %v4700 = vmax.f32 %v3534, 0.0
      %v4701 = vmax.f32 %v3537, 0.0
      %v4702 = vmax.f32 %v3539, 0.0
      %v4703 = vmax.f32 %v3542, 0.0
      %v4704 = vmax.f32 %v3544, 0.0
      %v4705 = vmax.f32 %v3547, 0.0
      %v4706 = vmax.f32 %v3549, 0.0
      %v4707 = vmax.f32 %v3552, 0.0
      %v4708 = vmax.f32 %v3554, 0.0
      %v4709 = vmax.f32 %v3557, 0.0
      %v4710 = vmax.f32 %v3559, 0.0
      %v4711 = vmax.f32 %v3562, 0.0
      %v4712 = vmax.f32 %v3564, 0.0
      %v4713 = vmax.f32 %v3567, 0.0
      %v4714 = vmax.f32 %v3569, 0.0
      %v4715 = vmax.f32 %v3572, 0.0
      %v4716 = vmax.f32 %v3574, 0.0
      %v4717 = vmax.f32 %v3577, 0.0
      %v4718 = vmax.f32 %v3579, 0.0
      %v4719 = vmax.f32 %v3582, 0.0
      %v4720 = vmax.f32 %v3584, 0.0
      %v4721 = vmax.f32 %v3587, 0.0
      %v4722 = vmax.f32 %v3589, 0.0
      %v4723 = vmax.f32 %v3592, 0.0
      %v4724 = vmax.f32 %v3594, 0.0
      %v4725 = vmax.f32 %v3597, 0.0
      %v4726 = vmax.f32 %v3599, 0.0
      %v4727 = vmax.f32 %v3602, 0.0
      %v4728 = vmax.f32 %v3604, 0.0
      %v4729 = vmax.f32 %v3607, 0.0
      %v4730 = vmax.f32 %v3609, 0.0
      %v4731 = vmax.f32 %v3612, 0.0
      %v4732 = vmax.f32 %v3614, 0.0
      %v4733 = vmax.f32 %v3617, 0.0
      %v4734 = vmax.f32 %v3619, 0.0
      %v4735 = vmax.f32 %v3622, 0.0
      %v4736 = vmax.f32 %v3624, 0.0
      %v4737 = vmax.f32 %v3627, 0.0
      %v4738 = vmax.f32 %v3629, 0.0
      %v4739 = vmax.f32 %v3632, 0.0
      %v4740 = vmax.f32 %v3634, 0.0
      %v4741 = vmax.f32 %v3637, 0.0
      %v4742 = vmax.f32 %v3639, 0.0
      %v4743 = vmax.f32 %v3642, 0.0
      %v4744 = vmax.f32 %v3644, 0.0
      %v4745 = vmax.f32 %v3647, 0.0
      %v4746 = vmax.f32 %v3649, 0.0
      %v4747 = vmax.f32 %v3652, 0.0
      %v4748 = vmax.f32 %v3654, 0.0
      %v4749 = vmax.f32 %v3657, 0.0
      %v4750 = vmax.f32 %v3659, 0.0
      %v4751 = vmax.f32 %v3662, 0.0
      %v4752 = vmax.f32 %v3664, 0.0
      %v4753 = vmax.f32 %v3667, 0.0
      %v4754 = vmax.f32 %v3669, 0.0
      %v4755 = vmax.f32 %v3672, 0.0
      %v4756 = vmax.f32 %v3674, 0.0
      %v4757 = vmax.f32 %v3677, 0.0
      %v4758 = vmax.f32 %v3679, 0.0
      %v4759 = vmax.f32 %v3682, 0.0
      %v4760 = vmax.f32 %v3684, 0.0
      %v4761 = vmax.f32 %v3687, 0.0
      %v4762 = vmax.f32 %v3689, 0.0
      %v4763 = vmax.f32 %v3692, 0.0
      %v4764 = vmax.f32 %v3694, 0.0
      %v4765 = vmax.f32 %v3697, 0.0
      %v4766 = vmax.f32 %v3699, 0.0
      %v4767 = vmax.f32 %v3702, 0.0
      %v4768 = vmax.f32 %v3704, 0.0
      %v4769 = vmax.f32 %v3707, 0.0
      %v4770 = vmax.f32 %v3709, 0.0
      %v4771 = vmax.f32 %v3712, 0.0
      %v4772 = vmax.f32 %v3714, 0.0
      %v4773 = vmax.f32 %v3717, 0.0
      %v4774 = vmax.f32 %v3719, 0.0
      %v4775 = vmax.f32 %v3722, 0.0
      %v4776 = vmax.f32 %v3724, 0.0
      %v4777 = vmax.f32 %v3727, 0.0
      %v4778 = vmax.f32 %v3729, 0.0
      %v4779 = vmax.f32 %v3732, 0.0
      %v4780 = vmax.f32 %v3734, 0.0
      %v4781 = vmax.f32 %v3737, 0.0
      %v4782 = vmax.f32 %v3739, 0.0
      %v4783 = vmax.f32 %v3742, 0.0
      %v4784 = vmax.f32 %v3744, 0.0
      %v4785 = vmax.f32 %v3747, 0.0
      %v4786 = vmax.f32 %v3749, 0.0
      %v4787 = vmax.f32 %v3752, 0.0
      %v4788 = vmax.f32 %v3754, 0.0
      %v4789 = vmax.f32 %v3757, 0.0
      %v4790 = vmax.f32 %v3759, 0.0
      %v4791 = vmax.f32 %v3762, 0.0
      %v4792 = vmax.f32 %v3764, 0.0
      %v4793 = vmax.f32 %v3767, 0.0
      %v4794 = vmax.f32 %v3769, 0.0
      %v4795 = vmax.f32 %v3772, 0.0
      %v4796 = vmax.f32 %v3774, 0.0
      %v4797 = vmax.f32 %v3777, 0.0
      %v4798 = vmax.f32 %v3779, 0.0
      %v4799 = vmax.f32 %v3782, 0.0
      %v4800 = vmax.f32 %v3784, 0.0
      %v4801 = vmax.f32 %v3787, 0.0
      %v4802 = vmax.f32 %v3789, 0.0
      %v4803 = vmax.f32 %v3792, 0.0
      %v4804 = vmax.f32 %v3794, 0.0
      %v4805 = vmax.f32 %v3797, 0.0
      %v4806 = vmax.f32 %v3799, 0.0
      %v4807 = vmax.f32 %v3802, 0.0
      %v4808 = vmax.f32 %v3804, 0.0
      %v4809 = vmax.f32 %v3807, 0.0
      %v4810 = vmax.f32 %v3809, 0.0
      %v4811 = vmax.f32 %v3812, 0.0
      %v4812 = vmax.f32 %v3814, 0.0
      %v4813 = vmax.f32 %v3817, 0.0
      %v4814 = vmax.f32 %v3819, 0.0
      %v4815 = vmax.f32 %v3822, 0.0
      %v4816 = vmax.f32 %v3824, 0.0
      %v4817 = vmax.f32 %v3827, 0.0
      %v4818 = vmax.f32 %v3829, 0.0
      %v4819 = vmax.f32 %v3832, 0.0
      %v4820 = vmax.f32 %v3834, 0.0
      %v4821 = vmax.f32 %v3837, 0.0
      %v4822 = vmax.f32 %v3839, 0.0
      %v4823 = vmax.f32 %v3842, 0.0
      %v4824 = vmax.f32 %v3844, 0.0
      %v4825 = vmax.f32 %v3847, 0.0
      %v4826 = vmax.f32 %v3849, 0.0
      %v4827 = vmax.f32 %v3852, 0.0
      %v4828 = vmax.f32 %v3854, 0.0
      %v4829 = vmax.f32 %v3857, 0.0
      %v4830 = vmax.f32 %v3859, 0.0
      %v4831 = vmax.f32 %v3862, 0.0
      %v4832 = vmax.f32 %v3864, 0.0
      %v4833 = vmax.f32 %v3867, 0.0
      %v4834 = vmax.f32 %v3869, 0.0
      %v4835 = vmax.f32 %v3872, 0.0
      %v4836 = vmax.f32 %v3874, 0.0
      %v4837 = vmax.f32 %v3877, 0.0
      %v4838 = vmax.f32 %v3879, 0.0
      %v4839 = vmax.f32 %v3882, 0.0
      %v4840 = vmax.f32 %v3884, 0.0
      %v4841 = vmax.f32 %v3887, 0.0
      %v4842 = vmax.f32 %v3889, 0.0
      %v4843 = vmax.f32 %v3892, 0.0
      %v4844 = vmax.f32 %v3894, 0.0
      %v4845 = vmax.f32 %v3897, 0.0
      %v4846 = vmax.f32 %v3899, 0.0
      %v4847 = vmax.f32 %v3902, 0.0
      %v4848 = vmax.f32 %v3904, 0.0
      %v4849 = vmax.f32 %v3907, 0.0
      %v4850 = vmax.f32 %v3909, 0.0
      %v4851 = vmax.f32 %v3912, 0.0
      %v4852 = vmax.f32 %v3914, 0.0
      %v4853 = vmax.f32 %v3917, 0.0
      %v4854 = vmax.f32 %v3919, 0.0
      %v4855 = vmax.f32 %v3922, 0.0
      %v4856 = vmax.f32 %v3924, 0.0
      %v4857 = vmax.f32 %v3927, 0.0
      %v4858 = vmax.f32 %v3929, 0.0
      %v4859 = vmax.f32 %v3932, 0.0
      %v4860 = vmax.f32 %v3934, 0.0
      %v4861 = vmax.f32 %v3937, 0.0
      %v4862 = vmax.f32 %v3939, 0.0
      %v4863 = vmax.f32 %v3942, 0.0
      %v4864 = vmax.f32 %v3944, 0.0
      %v4865 = vmax.f32 %v3947, 0.0
      %v4866 = vmax.f32 %v3949, 0.0
      %v4867 = vmax.f32 %v3952, 0.0
      %v4868 = vmax.f32 %v3954, 0.0
      %v4869 = vmax.f32 %v3957, 0.0
      %v4870 = vmax.f32 %v3959, 0.0
      %v4871 = vmax.f32 %v3962, 0.0
      %v4872 = vmax.f32 %v3964, 0.0
      %v4873 = vmax.f32 %v3967, 0.0
      %v4874 = vmax.f32 %v3969, 0.0
      %v4875 = vmax.f32 %v3972, 0.0
      %v4876 = vmax.f32 %v3974, 0.0
      %v4877 = vmax.f32 %v3977, 0.0
      %v4878 = vmax.f32 %v3979, 0.0
      %v4879 = vmax.f32 %v3982, 0.0
      %v4880 = vmax.f32 %v3984, 0.0
      %v4881 = vmax.f32 %v3987, 0.0
      %v4882 = vmax.f32 %v3989, 0.0
      %v4883 = vmax.f32 %v3992, 0.0
      %v4884 = vmax.f32 %v3994, 0.0
      %v4885 = vmax.f32 %v3997, 0.0
      %v4886 = vmax.f32 %v3999, 0.0
      %v4887 = vmax.f32 %v4002, 0.0
      %v4888 = vmax.f32 %v4004, 0.0
      %v4889 = vmax.f32 %v4007, 0.0
      %v4890 = vmax.f32 %v4009, 0.0
      %v4891 = vmax.f32 %v4012, 0.0
      %v4892 = vmax.f32 %v4014, 0.0
      %v4893 = vmax.f32 %v4017, 0.0
      %v4894 = vmax.f32 %v4019, 0.0
      %v4895 = vmax.f32 %v4022, 0.0
      %v4896 = vmax.f32 %v4024, 0.0
      %v4897 = vmax.f32 %v4027, 0.0
      %v4898 = vmax.f32 %v4029, 0.0
      %v4899 = vmax.f32 %v4032, 0.0
      %v4900 = vmax.f32 %v4034, 0.0
      %v4901 = vmax.f32 %v4037, 0.0
      %v4902 = vmax.f32 %v4039, 0.0
      %v4903 = vmax.f32 %v4042, 0.0
      %v4904 = vmax.f32 %v4044, 0.0
      %v4905 = vmax.f32 %v4047, 0.0
      %v4906 = vmax.f32 %v4049, 0.0
      %v4907 = vmax.f32 %v4052, 0.0
      %v4908 = vmax.f32 %v4054, 0.0
      %v4909 = vmax.f32 %v4057, 0.0
      %v4910 = vmax.f32 %v4059, 0.0
      %v4911 = vmax.f32 %v4062, 0.0
      %v4912 = vmax.f32 %v4064, 0.0
      %v4913 = vmax.f32 %v4067, 0.0
      %v4914 = vmax.f32 %v4069, 0.0
      %v4915 = vmax.f32 %v4072, 0.0
      %v4916 = vmax.f32 %v4074, 0.0
      %v4917 = vmax.f32 %v4077, 0.0
      %v4918 = vmax.f32 %v4079, 0.0
      %v4919 = vmax.f32 %v4082, 0.0
      %v4920 = vmax.f32 %v4084, 0.0
      %v4921 = vmax.f32 %v4087, 0.0
      %v4922 = vmax.f32 %v4089, 0.0
      %v4923 = vmax.f32 %v4092, 0.0
      %v4924 = vmax.f32 %v4094, 0.0
      %v4925 = vmax.f32 %v4097, 0.0
      %v4926 = vmax.f32 %v4099, 0.0
      %v4927 = vmax.f32 %v4102, 0.0
      %v4928 = vmax.f32 %v4104, 0.0
      %v4929 = vmax.f32 %v4107, 0.0
      %v4930 = vmax.f32 %v4109, 0.0
      %v4931 = vmax.f32 %v4112, 0.0
      %v4932 = vmax.f32 %v4114, 0.0
      %v4933 = vmax.f32 %v4117, 0.0
      %v4934 = vmax.f32 %v4119, 0.0
      %v4935 = vmax.f32 %v4122, 0.0
      %v4936 = vmax.f32 %v4124, 0.0
      %v4937 = vmax.f32 %v4127, 0.0
      %v4938 = vmax.f32 %v4129, 0.0
      %v4939 = vmax.f32 %v4132, 0.0
      %v4940 = vmax.f32 %v4134, 0.0
      %v4941 = vmax.f32 %v4137, 0.0
      %v4942 = vmax.f32 %v4139, 0.0
      %v4943 = vmax.f32 %v4142, 0.0
      %v4944 = vmax.f32 %v4144, 0.0
      %v4945 = vmax.f32 %v4147, 0.0
      %v4946 = vmax.f32 %v4149, 0.0
      %v4947 = vmax.f32 %v4152, 0.0
      %v4948 = vmax.f32 %v4154, 0.0
      %v4949 = vmax.f32 %v4157, 0.0
      %v4950 = vmax.f32 %v4159, 0.0
      %v4951 = vmax.f32 %v4162, 0.0
      %v4952 = vmax.f32 %v4164, 0.0
      %v4953 = vmax.f32 %v4167, 0.0
      %v4954 = vmax.f32 %v4169, 0.0
      %v4955 = vmax.f32 %v4172, 0.0
      %v4956 = vmax.f32 %v4174, 0.0
      %v4957 = vmax.f32 %v4177, 0.0
      %v4958 = vmax.f32 %v4179, 0.0
      %v4959 = vmax.f32 %v4182, 0.0
      %v4960 = vmax.f32 %v4184, 0.0
      %v4961 = vmax.f32 %v4187, 0.0
      %v4962 = vmax.f32 %v4189, 0.0
      %v4963 = vmax.f32 %v4192, 0.0
      %v4964 = vmax.f32 %v4194, 0.0
      %v4965 = vmax.f32 %v4197, 0.0
      %v4966 = vmax.f32 %v4199, 0.0
      %v4967 = vmax.f32 %v4202, 0.0
      %v4968 = vmax.f32 %v4204, 0.0
      %v4969 = vmax.f32 %v4207, 0.0
      %v4970 = vmax.f32 %v4209, 0.0
      %v4971 = vmax.f32 %v4212, 0.0
      %v4972 = vmax.f32 %v4214, 0.0
      %v4973 = vmax.f32 %v4217, 0.0
      %v4974 = vmax.f32 %v4219, 0.0
      %v4975 = vmax.f32 %v4222, 0.0
      %v4976 = vmax.f32 %v4224, 0.0
      %v4977 = vmax.f32 %v4227, 0.0
      %v4978 = vmax.f32 %v4229, 0.0
      %v4979 = vmax.f32 %v4232, 0.0
      %v4980 = vmax.f32 %v4234, 0.0
      %v4981 = vmax.f32 %v4237, 0.0
      %v4982 = vmax.f32 %v4239, 0.0
      %v4983 = vmax.f32 %v4242, 0.0
      %v4984 = vmax.f32 %v4244, 0.0
      %v4985 = vmax.f32 %v4247, 0.0
      %v4986 = vmax.f32 %v4249, 0.0
      %v4987 = vmax.f32 %v4252, 0.0
      %v4988 = vmax.f32 %v4254, 0.0
      %v4989 = vmax.f32 %v4257, 0.0
      %v4990 = vmax.f32 %v4259, 0.0
      %v4991 = vmax.f32 %v4262, 0.0
      %v4992 = vmax.f32 %v4264, 0.0
      %v4993 = vmax.f32 %v4267, 0.0
      %v4994 = vmax.f32 %v4269, 0.0
      %v4995 = vmax.f32 %v4272, 0.0
      %v4996 = vmax.f32 %v4274, 0.0
      %v4997 = vmax.f32 %v4277, 0.0
      %v4998 = vmax.f32 %v4279, 0.0
      %v4999 = vmax.f32 %v4282, 0.0
      %v5000 = vmax.f32 %v4284, 0.0
      %v5001 = vmax.f32 %v4287, 0.0
      %v5002 = vmax.f32 %v4289, 0.0
      %v5003 = vmax.f32 %v4292, 0.0
      %v5004 = vmax.f32 %v4294, 0.0
      %v5005 = vmax.f32 %v4297, 0.0
      %v5006 = vmax.f32 %v4299, 0.0
      %v5007 = vmax.f32 %v4302, 0.0
      %v5008 = vmax.f32 %v4304, 0.0
      %v5009 = vmax.f32 %v4307, 0.0
      %v5010 = vmax.f32 %v4309, 0.0
      %v5011 = vmax.f32 %v4312, 0.0
      %v5012 = vmax.f32 %v4314, 0.0
      %v5013 = vmax.f32 %v4317, 0.0
      %v5014 = vmax.f32 %v4319, 0.0
      %v5015 = vmax.f32 %v4322, 0.0
      %v5016 = vmax.f32 %v4324, 0.0
      %v5017 = vmax.f32 %v4327, 0.0
      %v5018 = vmax.f32 %v4329, 0.0
      %v5019 = vmax.f32 %v4332, 0.0
      %v5020 = vmax.f32 %v4334, 0.0
      %v5021 = vmax.f32 %v4337, 0.0
      %v5022 = vmax.f32 %v4339, 0.0
      %v5023 = vmax.f32 %v4342, 0.0
      %v5024 = vmax.f32 %v4344, 0.0
      %v5025 = vmax.f32 %v4347, 0.0
      %v5026 = vmax.f32 %v4349, 0.0
      %v5027 = vmax.f32 %v4352, 0.0
      %v5028 = vmax.f32 %v4354, 0.0
      %v5029 = vmax.f32 %v4357, 0.0
      %v5030 = vmax.f32 %v4359, 0.0
      %v5031 = vmax.f32 %v4362, 0.0
      %v5032 = vmax.f32 %v4364, 0.0
      %v5033 = vmax.f32 %v4367, 0.0
      %v5034 = vmax.f32 %v4369, 0.0
      %v5035 = vmax.f32 %v4372, 0.0
      %v5036 = vmax.f32 %v4374, 0.0
      %v5037 = vmax.f32 %v4377, 0.0
      %v5038 = vmax.f32 %v4379, 0.0
      %v5039 = vmax.f32 %v4382, 0.0
      %v5040 = vmax.f32 %v4384, 0.0
      %v5041 = vmax.f32 %v4387, 0.0
      %v5042 = vmax.f32 %v4389, 0.0
      %v5043 = vmax.f32 %v4392, 0.0
      %v5044 = vmax.f32 %v4394, 0.0
      %v5045 = vmax.f32 %v4397, 0.0
      %v5046 = vmax.f32 %v4399, 0.0
      %v5047 = vmax.f32 %v4402, 0.0
      %v5048 = vmax.f32 %v4404, 0.0
      %v5049 = vmax.f32 %v4407, 0.0
      %v5050 = vmax.f32 %v4409, 0.0
      %v5051 = vpack.c.bf16 %v4411, %v4411
      %v5052 = vpack.c.bf16 %v4412, %v4412
      %v5053 = vpack.c.bf16 %v4413, %v4413
      %v5054 = vpack.c.bf16 %v4414, %v4414
      %v5055 = vpack.c.bf16 %v4415, %v4415
      %v5056 = vpack.c.bf16 %v4416, %v4416
      %v5057 = vpack.c.bf16 %v4417, %v4417
      %v5058 = vpack.c.bf16 %v4418, %v4418
      %v5059 = vpack.c.bf16 %v4419, %v4419
      %v5060 = vpack.c.bf16 %v4420, %v4420
      %v5061 = vpack.c.bf16 %v4421, %v4421
      %v5062 = vpack.c.bf16 %v4422, %v4422
      %v5063 = vpack.c.bf16 %v4423, %v4423
      %v5064 = vpack.c.bf16 %v4424, %v4424
      %v5065 = vpack.c.bf16 %v4425, %v4425
      %v5066 = vpack.c.bf16 %v4426, %v4426
      %v5067 = vpack.c.bf16 %v4427, %v4427
      %v5068 = vpack.c.bf16 %v4428, %v4428
      %v5069 = vpack.c.bf16 %v4429, %v4429
      %v5070 = vpack.c.bf16 %v4430, %v4430
      %v5071 = vpack.c.bf16 %v4431, %v4431
      %v5072 = vpack.c.bf16 %v4432, %v4432
      %v5073 = vpack.c.bf16 %v4433, %v4433
      %v5074 = vpack.c.bf16 %v4434, %v4434
      %v5075 = vpack.c.bf16 %v4435, %v4435
      %v5076 = vpack.c.bf16 %v4436, %v4436
      %v5077 = vpack.c.bf16 %v4437, %v4437
      %v5078 = vpack.c.bf16 %v4438, %v4438
      %v5079 = vpack.c.bf16 %v4439, %v4439
      %v5080 = vpack.c.bf16 %v4440, %v4440
      %v5081 = vpack.c.bf16 %v4441, %v4441
      %v5082 = vpack.c.bf16 %v4442, %v4442
      %v5083 = vpack.c.bf16 %v4443, %v4443
      %v5084 = vpack.c.bf16 %v4444, %v4444
      %v5085 = vpack.c.bf16 %v4445, %v4445
      %v5086 = vpack.c.bf16 %v4446, %v4446
      %v5087 = vpack.c.bf16 %v4447, %v4447
      %v5088 = vpack.c.bf16 %v4448, %v4448
      %v5089 = vpack.c.bf16 %v4449, %v4449
      %v5090 = vpack.c.bf16 %v4450, %v4450
      %v5091 = vpack.c.bf16 %v4451, %v4451
      %v5092 = vpack.c.bf16 %v4452, %v4452
      %v5093 = vpack.c.bf16 %v4453, %v4453
      %v5094 = vpack.c.bf16 %v4454, %v4454
      %v5095 = vpack.c.bf16 %v4455, %v4455
      %v5096 = vpack.c.bf16 %v4456, %v4456
      %v5097 = vpack.c.bf16 %v4457, %v4457
      %v5098 = vpack.c.bf16 %v4458, %v4458
      %v5099 = vpack.c.bf16 %v4459, %v4459
      %v5100 = vpack.c.bf16 %v4460, %v4460
      %v5101 = vpack.c.bf16 %v4461, %v4461
      %v5102 = vpack.c.bf16 %v4462, %v4462
      %v5103 = vpack.c.bf16 %v4463, %v4463
      %v5104 = vpack.c.bf16 %v4464, %v4464
      %v5105 = vpack.c.bf16 %v4465, %v4465
      %v5106 = vpack.c.bf16 %v4466, %v4466
      %v5107 = vpack.c.bf16 %v4467, %v4467
      %v5108 = vpack.c.bf16 %v4468, %v4468
      %v5109 = vpack.c.bf16 %v4469, %v4469
      %v5110 = vpack.c.bf16 %v4470, %v4470
      %v5111 = vpack.c.bf16 %v4471, %v4471
      %v5112 = vpack.c.bf16 %v4472, %v4472
      %v5113 = vpack.c.bf16 %v4473, %v4473
      %v5114 = vpack.c.bf16 %v4474, %v4474
      %v5115 = vpack.c.bf16 %v4475, %v4475
      %v5116 = vpack.c.bf16 %v4476, %v4476
      %v5117 = vpack.c.bf16 %v4477, %v4477
      %v5118 = vpack.c.bf16 %v4478, %v4478
      %v5119 = vpack.c.bf16 %v4479, %v4479
      %v5120 = vpack.c.bf16 %v4480, %v4480
      %v5121 = vpack.c.bf16 %v4481, %v4481
      %v5122 = vpack.c.bf16 %v4482, %v4482
      %v5123 = vpack.c.bf16 %v4483, %v4483
      %v5124 = vpack.c.bf16 %v4484, %v4484
      %v5125 = vpack.c.bf16 %v4485, %v4485
      %v5126 = vpack.c.bf16 %v4486, %v4486
      %v5127 = vpack.c.bf16 %v4487, %v4487
      %v5128 = vpack.c.bf16 %v4488, %v4488
      %v5129 = vpack.c.bf16 %v4489, %v4489
      %v5130 = vpack.c.bf16 %v4490, %v4490
      %v5131 = vpack.c.bf16 %v4491, %v4491
      %v5132 = vpack.c.bf16 %v4492, %v4492
      %v5133 = vpack.c.bf16 %v4493, %v4493
      %v5134 = vpack.c.bf16 %v4494, %v4494
      %v5135 = vpack.c.bf16 %v4495, %v4495
      %v5136 = vpack.c.bf16 %v4496, %v4496
      %v5137 = vpack.c.bf16 %v4497, %v4497
      %v5138 = vpack.c.bf16 %v4498, %v4498
      %v5139 = vpack.c.bf16 %v4499, %v4499
      %v5140 = vpack.c.bf16 %v4500, %v4500
      %v5141 = vpack.c.bf16 %v4501, %v4501
      %v5142 = vpack.c.bf16 %v4502, %v4502
      %v5143 = vpack.c.bf16 %v4503, %v4503
      %v5144 = vpack.c.bf16 %v4504, %v4504
      %v5145 = vpack.c.bf16 %v4505, %v4505
      %v5146 = vpack.c.bf16 %v4506, %v4506
      %v5147 = vpack.c.bf16 %v4507, %v4507
      %v5148 = vpack.c.bf16 %v4508, %v4508
      %v5149 = vpack.c.bf16 %v4509, %v4509
      %v5150 = vpack.c.bf16 %v4510, %v4510
      %v5151 = vpack.c.bf16 %v4511, %v4511
      %v5152 = vpack.c.bf16 %v4512, %v4512
      %v5153 = vpack.c.bf16 %v4513, %v4513
      %v5154 = vpack.c.bf16 %v4514, %v4514
      %v5155 = vpack.c.bf16 %v4515, %v4515
      %v5156 = vpack.c.bf16 %v4516, %v4516
      %v5157 = vpack.c.bf16 %v4517, %v4517
      %v5158 = vpack.c.bf16 %v4518, %v4518
      %v5159 = vpack.c.bf16 %v4519, %v4519
      %v5160 = vpack.c.bf16 %v4520, %v4520
      %v5161 = vpack.c.bf16 %v4521, %v4521
      %v5162 = vpack.c.bf16 %v4522, %v4522
      %v5163 = vpack.c.bf16 %v4523, %v4523
      %v5164 = vpack.c.bf16 %v4524, %v4524
      %v5165 = vpack.c.bf16 %v4525, %v4525
      %v5166 = vpack.c.bf16 %v4526, %v4526
      %v5167 = vpack.c.bf16 %v4527, %v4527
      %v5168 = vpack.c.bf16 %v4528, %v4528
      %v5169 = vpack.c.bf16 %v4529, %v4529
      %v5170 = vpack.c.bf16 %v4530, %v4530
      %v5171 = vpack.c.bf16 %v4531, %v4531
      %v5172 = vpack.c.bf16 %v4532, %v4532
      %v5173 = vpack.c.bf16 %v4533, %v4533
      %v5174 = vpack.c.bf16 %v4534, %v4534
      %v5175 = vpack.c.bf16 %v4535, %v4535
      %v5176 = vpack.c.bf16 %v4536, %v4536
      %v5177 = vpack.c.bf16 %v4537, %v4537
      %v5178 = vpack.c.bf16 %v4538, %v4538
      %v5179 = vpack.c.bf16 %v4539, %v4539
      %v5180 = vpack.c.bf16 %v4540, %v4540
      %v5181 = vpack.c.bf16 %v4541, %v4541
      %v5182 = vpack.c.bf16 %v4542, %v4542
      %v5183 = vpack.c.bf16 %v4543, %v4543
      %v5184 = vpack.c.bf16 %v4544, %v4544
      %v5185 = vpack.c.bf16 %v4545, %v4545
      %v5186 = vpack.c.bf16 %v4546, %v4546
      %v5187 = vpack.c.bf16 %v4547, %v4547
      %v5188 = vpack.c.bf16 %v4548, %v4548
      %v5189 = vpack.c.bf16 %v4549, %v4549
      %v5190 = vpack.c.bf16 %v4550, %v4550
      %v5191 = vpack.c.bf16 %v4551, %v4551
      %v5192 = vpack.c.bf16 %v4552, %v4552
      %v5193 = vpack.c.bf16 %v4553, %v4553
      %v5194 = vpack.c.bf16 %v4554, %v4554
      %v5195 = vpack.c.bf16 %v4555, %v4555
      %v5196 = vpack.c.bf16 %v4556, %v4556
      %v5197 = vpack.c.bf16 %v4557, %v4557
      %v5198 = vpack.c.bf16 %v4558, %v4558
      %v5199 = vpack.c.bf16 %v4559, %v4559
      %v5200 = vpack.c.bf16 %v4560, %v4560
      %v5201 = vpack.c.bf16 %v4561, %v4561
      %v5202 = vpack.c.bf16 %v4562, %v4562
      %v5203 = vpack.c.bf16 %v4563, %v4563
      %v5204 = vpack.c.bf16 %v4564, %v4564
      %v5205 = vpack.c.bf16 %v4565, %v4565
      %v5206 = vpack.c.bf16 %v4566, %v4566
      %v5207 = vpack.c.bf16 %v4567, %v4567
      %v5208 = vpack.c.bf16 %v4568, %v4568
      %v5209 = vpack.c.bf16 %v4569, %v4569
      %v5210 = vpack.c.bf16 %v4570, %v4570
      %v5211 = vpack.c.bf16 %v4571, %v4571
      %v5212 = vpack.c.bf16 %v4572, %v4572
      %v5213 = vpack.c.bf16 %v4573, %v4573
      %v5214 = vpack.c.bf16 %v4574, %v4574
      %v5215 = vpack.c.bf16 %v4575, %v4575
      %v5216 = vpack.c.bf16 %v4576, %v4576
      %v5217 = vpack.c.bf16 %v4577, %v4577
      %v5218 = vpack.c.bf16 %v4578, %v4578
      %v5219 = vpack.c.bf16 %v4579, %v4579
      %v5220 = vpack.c.bf16 %v4580, %v4580
      %v5221 = vpack.c.bf16 %v4581, %v4581
      %v5222 = vpack.c.bf16 %v4582, %v4582
      %v5223 = vpack.c.bf16 %v4583, %v4583
      %v5224 = vpack.c.bf16 %v4584, %v4584
      %v5225 = vpack.c.bf16 %v4585, %v4585
      %v5226 = vpack.c.bf16 %v4586, %v4586
      %v5227 = vpack.c.bf16 %v4587, %v4587
      %v5228 = vpack.c.bf16 %v4588, %v4588
      %v5229 = vpack.c.bf16 %v4589, %v4589
      %v5230 = vpack.c.bf16 %v4590, %v4590
      %v5231 = vpack.c.bf16 %v4591, %v4591
      %v5232 = vpack.c.bf16 %v4592, %v4592
      %v5233 = vpack.c.bf16 %v4593, %v4593
      %v5234 = vpack.c.bf16 %v4594, %v4594
      %v5235 = vpack.c.bf16 %v4595, %v4595
      %v5236 = vpack.c.bf16 %v4596, %v4596
      %v5237 = vpack.c.bf16 %v4597, %v4597
      %v5238 = vpack.c.bf16 %v4598, %v4598
      %v5239 = vpack.c.bf16 %v4599, %v4599
      %v5240 = vpack.c.bf16 %v4600, %v4600
      %v5241 = vpack.c.bf16 %v4601, %v4601
      %v5242 = vpack.c.bf16 %v4602, %v4602
      %v5243 = vpack.c.bf16 %v4603, %v4603
      %v5244 = vpack.c.bf16 %v4604, %v4604
      %v5245 = vpack.c.bf16 %v4605, %v4605
      %v5246 = vpack.c.bf16 %v4606, %v4606
      %v5247 = vpack.c.bf16 %v4607, %v4607
      %v5248 = vpack.c.bf16 %v4608, %v4608
      %v5249 = vpack.c.bf16 %v4609, %v4609
      %v5250 = vpack.c.bf16 %v4610, %v4610
      %v5251 = vpack.c.bf16 %v4611, %v4611
      %v5252 = vpack.c.bf16 %v4612, %v4612
      %v5253 = vpack.c.bf16 %v4613, %v4613
      %v5254 = vpack.c.bf16 %v4614, %v4614
      %v5255 = vpack.c.bf16 %v4615, %v4615
      %v5256 = vpack.c.bf16 %v4616, %v4616
      %v5257 = vpack.c.bf16 %v4617, %v4617
      %v5258 = vpack.c.bf16 %v4618, %v4618
      %v5259 = vpack.c.bf16 %v4619, %v4619
      %v5260 = vpack.c.bf16 %v4620, %v4620
      %v5261 = vpack.c.bf16 %v4621, %v4621
      %v5262 = vpack.c.bf16 %v4622, %v4622
      %v5263 = vpack.c.bf16 %v4623, %v4623
      %v5264 = vpack.c.bf16 %v4624, %v4624
      %v5265 = vpack.c.bf16 %v4625, %v4625
      %v5266 = vpack.c.bf16 %v4626, %v4626
      %v5267 = vpack.c.bf16 %v4627, %v4627
      %v5268 = vpack.c.bf16 %v4628, %v4628
      %v5269 = vpack.c.bf16 %v4629, %v4629
      %v5270 = vpack.c.bf16 %v4630, %v4630
      %v5271 = vpack.c.bf16 %v4631, %v4631
      %v5272 = vpack.c.bf16 %v4632, %v4632
      %v5273 = vpack.c.bf16 %v4633, %v4633
      %v5274 = vpack.c.bf16 %v4634, %v4634
      %v5275 = vpack.c.bf16 %v4635, %v4635
      %v5276 = vpack.c.bf16 %v4636, %v4636
      %v5277 = vpack.c.bf16 %v4637, %v4637
      %v5278 = vpack.c.bf16 %v4638, %v4638
      %v5279 = vpack.c.bf16 %v4639, %v4639
      %v5280 = vpack.c.bf16 %v4640, %v4640
      %v5281 = vpack.c.bf16 %v4641, %v4641
      %v5282 = vpack.c.bf16 %v4642, %v4642
      %v5283 = vpack.c.bf16 %v4643, %v4643
      %v5284 = vpack.c.bf16 %v4644, %v4644
      %v5285 = vpack.c.bf16 %v4645, %v4645
      %v5286 = vpack.c.bf16 %v4646, %v4646
      %v5287 = vpack.c.bf16 %v4647, %v4647
      %v5288 = vpack.c.bf16 %v4648, %v4648
      %v5289 = vpack.c.bf16 %v4649, %v4649
      %v5290 = vpack.c.bf16 %v4650, %v4650
      %v5291 = vpack.c.bf16 %v4651, %v4651
      %v5292 = vpack.c.bf16 %v4652, %v4652
      %v5293 = vpack.c.bf16 %v4653, %v4653
      %v5294 = vpack.c.bf16 %v4654, %v4654
      %v5295 = vpack.c.bf16 %v4655, %v4655
      %v5296 = vpack.c.bf16 %v4656, %v4656
      %v5297 = vpack.c.bf16 %v4657, %v4657
      %v5298 = vpack.c.bf16 %v4658, %v4658
      %v5299 = vpack.c.bf16 %v4659, %v4659
      %v5300 = vpack.c.bf16 %v4660, %v4660
      %v5301 = vpack.c.bf16 %v4661, %v4661
      %v5302 = vpack.c.bf16 %v4662, %v4662
      %v5303 = vpack.c.bf16 %v4663, %v4663
      %v5304 = vpack.c.bf16 %v4664, %v4664
      %v5305 = vpack.c.bf16 %v4665, %v4665
      %v5306 = vpack.c.bf16 %v4666, %v4666
      %v5307 = vpack.c.bf16 %v4667, %v4667
      %v5308 = vpack.c.bf16 %v4668, %v4668
      %v5309 = vpack.c.bf16 %v4669, %v4669
      %v5310 = vpack.c.bf16 %v4670, %v4670
      %v5311 = vpack.c.bf16 %v4671, %v4671
      %v5312 = vpack.c.bf16 %v4672, %v4672
      %v5313 = vpack.c.bf16 %v4673, %v4673
      %v5314 = vpack.c.bf16 %v4674, %v4674
      %v5315 = vpack.c.bf16 %v4675, %v4675
      %v5316 = vpack.c.bf16 %v4676, %v4676
      %v5317 = vpack.c.bf16 %v4677, %v4677
      %v5318 = vpack.c.bf16 %v4678, %v4678
      %v5319 = vpack.c.bf16 %v4679, %v4679
      %v5320 = vpack.c.bf16 %v4680, %v4680
      %v5321 = vpack.c.bf16 %v4681, %v4681
      %v5322 = vpack.c.bf16 %v4682, %v4682
      %v5323 = vpack.c.bf16 %v4683, %v4683
      %v5324 = vpack.c.bf16 %v4684, %v4684
      %v5325 = vpack.c.bf16 %v4685, %v4685
      %v5326 = vpack.c.bf16 %v4686, %v4686
      %v5327 = vpack.c.bf16 %v4687, %v4687
      %v5328 = vpack.c.bf16 %v4688, %v4688
      %v5329 = vpack.c.bf16 %v4689, %v4689
      %v5330 = vpack.c.bf16 %v4690, %v4690
      %v5331 = vpack.c.bf16 %v4691, %v4691
      %v5332 = vpack.c.bf16 %v4692, %v4692
      %v5333 = vpack.c.bf16 %v4693, %v4693
      %v5334 = vpack.c.bf16 %v4694, %v4694
      %v5335 = vpack.c.bf16 %v4695, %v4695
      %v5336 = vpack.c.bf16 %v4696, %v4696
      %v5337 = vpack.c.bf16 %v4697, %v4697
      %v5338 = vpack.c.bf16 %v4698, %v4698
      %v5339 = vpack.c.bf16 %v4699, %v4699
      %v5340 = vpack.c.bf16 %v4700, %v4700
      %v5341 = vpack.c.bf16 %v4701, %v4701
      %v5342 = vpack.c.bf16 %v4702, %v4702
      %v5343 = vpack.c.bf16 %v4703, %v4703
      %v5344 = vpack.c.bf16 %v4704, %v4704
      %v5345 = vpack.c.bf16 %v4705, %v4705
      %v5346 = vpack.c.bf16 %v4706, %v4706
      %v5347 = vpack.c.bf16 %v4707, %v4707
      %v5348 = vpack.c.bf16 %v4708, %v4708
      %v5349 = vpack.c.bf16 %v4709, %v4709
      %v5350 = vpack.c.bf16 %v4710, %v4710
      %v5351 = vpack.c.bf16 %v4711, %v4711
      %v5352 = vpack.c.bf16 %v4712, %v4712
      %v5353 = vpack.c.bf16 %v4713, %v4713
      %v5354 = vpack.c.bf16 %v4714, %v4714
      %v5355 = vpack.c.bf16 %v4715, %v4715
      %v5356 = vpack.c.bf16 %v4716, %v4716
      %v5357 = vpack.c.bf16 %v4717, %v4717
      %v5358 = vpack.c.bf16 %v4718, %v4718
      %v5359 = vpack.c.bf16 %v4719, %v4719
      %v5360 = vpack.c.bf16 %v4720, %v4720
      %v5361 = vpack.c.bf16 %v4721, %v4721
      %v5362 = vpack.c.bf16 %v4722, %v4722
      %v5363 = vpack.c.bf16 %v4723, %v4723
      %v5364 = vpack.c.bf16 %v4724, %v4724
      %v5365 = vpack.c.bf16 %v4725, %v4725
      %v5366 = vpack.c.bf16 %v4726, %v4726
      %v5367 = vpack.c.bf16 %v4727, %v4727
      %v5368 = vpack.c.bf16 %v4728, %v4728
      %v5369 = vpack.c.bf16 %v4729, %v4729
      %v5370 = vpack.c.bf16 %v4730, %v4730
      %v5371 = vpack.c.bf16 %v4731, %v4731
      %v5372 = vpack.c.bf16 %v4732, %v4732
      %v5373 = vpack.c.bf16 %v4733, %v4733
      %v5374 = vpack.c.bf16 %v4734, %v4734
      %v5375 = vpack.c.bf16 %v4735, %v4735
      %v5376 = vpack.c.bf16 %v4736, %v4736
      %v5377 = vpack.c.bf16 %v4737, %v4737
      %v5378 = vpack.c.bf16 %v4738, %v4738
      %v5379 = vpack.c.bf16 %v4739, %v4739
      %v5380 = vpack.c.bf16 %v4740, %v4740
      %v5381 = vpack.c.bf16 %v4741, %v4741
      %v5382 = vpack.c.bf16 %v4742, %v4742
      %v5383 = vpack.c.bf16 %v4743, %v4743
      %v5384 = vpack.c.bf16 %v4744, %v4744
      %v5385 = vpack.c.bf16 %v4745, %v4745
      %v5386 = vpack.c.bf16 %v4746, %v4746
      %v5387 = vpack.c.bf16 %v4747, %v4747
      %v5388 = vpack.c.bf16 %v4748, %v4748
      %v5389 = vpack.c.bf16 %v4749, %v4749
      %v5390 = vpack.c.bf16 %v4750, %v4750
      %v5391 = vpack.c.bf16 %v4751, %v4751
      %v5392 = vpack.c.bf16 %v4752, %v4752
      %v5393 = vpack.c.bf16 %v4753, %v4753
      %v5394 = vpack.c.bf16 %v4754, %v4754
      %v5395 = vpack.c.bf16 %v4755, %v4755
      %v5396 = vpack.c.bf16 %v4756, %v4756
      %v5397 = vpack.c.bf16 %v4757, %v4757
      %v5398 = vpack.c.bf16 %v4758, %v4758
      %v5399 = vpack.c.bf16 %v4759, %v4759
      %v5400 = vpack.c.bf16 %v4760, %v4760
      %v5401 = vpack.c.bf16 %v4761, %v4761
      %v5402 = vpack.c.bf16 %v4762, %v4762
      %v5403 = vpack.c.bf16 %v4763, %v4763
      %v5404 = vpack.c.bf16 %v4764, %v4764
      %v5405 = vpack.c.bf16 %v4765, %v4765
      %v5406 = vpack.c.bf16 %v4766, %v4766
      %v5407 = vpack.c.bf16 %v4767, %v4767
      %v5408 = vpack.c.bf16 %v4768, %v4768
      %v5409 = vpack.c.bf16 %v4769, %v4769
      %v5410 = vpack.c.bf16 %v4770, %v4770
      %v5411 = vpack.c.bf16 %v4771, %v4771
      %v5412 = vpack.c.bf16 %v4772, %v4772
      %v5413 = vpack.c.bf16 %v4773, %v4773
      %v5414 = vpack.c.bf16 %v4774, %v4774
      %v5415 = vpack.c.bf16 %v4775, %v4775
      %v5416 = vpack.c.bf16 %v4776, %v4776
      %v5417 = vpack.c.bf16 %v4777, %v4777
      %v5418 = vpack.c.bf16 %v4778, %v4778
      %v5419 = vpack.c.bf16 %v4779, %v4779
      %v5420 = vpack.c.bf16 %v4780, %v4780
      %v5421 = vpack.c.bf16 %v4781, %v4781
      %v5422 = vpack.c.bf16 %v4782, %v4782
      %v5423 = vpack.c.bf16 %v4783, %v4783
      %v5424 = vpack.c.bf16 %v4784, %v4784
      %v5425 = vpack.c.bf16 %v4785, %v4785
      %v5426 = vpack.c.bf16 %v4786, %v4786
      %v5427 = vpack.c.bf16 %v4787, %v4787
      %v5428 = vpack.c.bf16 %v4788, %v4788
      %v5429 = vpack.c.bf16 %v4789, %v4789
      %v5430 = vpack.c.bf16 %v4790, %v4790
      %v5431 = vpack.c.bf16 %v4791, %v4791
      %v5432 = vpack.c.bf16 %v4792, %v4792
      %v5433 = vpack.c.bf16 %v4793, %v4793
      %v5434 = vpack.c.bf16 %v4794, %v4794
      %v5435 = vpack.c.bf16 %v4795, %v4795
      %v5436 = vpack.c.bf16 %v4796, %v4796
      %v5437 = vpack.c.bf16 %v4797, %v4797
      %v5438 = vpack.c.bf16 %v4798, %v4798
      %v5439 = vpack.c.bf16 %v4799, %v4799
      %v5440 = vpack.c.bf16 %v4800, %v4800
      %v5441 = vpack.c.bf16 %v4801, %v4801
      %v5442 = vpack.c.bf16 %v4802, %v4802
      %v5443 = vpack.c.bf16 %v4803, %v4803
      %v5444 = vpack.c.bf16 %v4804, %v4804
      %v5445 = vpack.c.bf16 %v4805, %v4805
      %v5446 = vpack.c.bf16 %v4806, %v4806
      %v5447 = vpack.c.bf16 %v4807, %v4807
      %v5448 = vpack.c.bf16 %v4808, %v4808
      %v5449 = vpack.c.bf16 %v4809, %v4809
      %v5450 = vpack.c.bf16 %v4810, %v4810
      %v5451 = vpack.c.bf16 %v4811, %v4811
      %v5452 = vpack.c.bf16 %v4812, %v4812
      %v5453 = vpack.c.bf16 %v4813, %v4813
      %v5454 = vpack.c.bf16 %v4814, %v4814
      %v5455 = vpack.c.bf16 %v4815, %v4815
      %v5456 = vpack.c.bf16 %v4816, %v4816
      %v5457 = vpack.c.bf16 %v4817, %v4817
      %v5458 = vpack.c.bf16 %v4818, %v4818
      %v5459 = vpack.c.bf16 %v4819, %v4819
      %v5460 = vpack.c.bf16 %v4820, %v4820
      %v5461 = vpack.c.bf16 %v4821, %v4821
      %v5462 = vpack.c.bf16 %v4822, %v4822
      %v5463 = vpack.c.bf16 %v4823, %v4823
      %v5464 = vpack.c.bf16 %v4824, %v4824
      %v5465 = vpack.c.bf16 %v4825, %v4825
      %v5466 = vpack.c.bf16 %v4826, %v4826
      %v5467 = vpack.c.bf16 %v4827, %v4827
      %v5468 = vpack.c.bf16 %v4828, %v4828
      %v5469 = vpack.c.bf16 %v4829, %v4829
      %v5470 = vpack.c.bf16 %v4830, %v4830
      %v5471 = vpack.c.bf16 %v4831, %v4831
      %v5472 = vpack.c.bf16 %v4832, %v4832
      %v5473 = vpack.c.bf16 %v4833, %v4833
      %v5474 = vpack.c.bf16 %v4834, %v4834
      %v5475 = vpack.c.bf16 %v4835, %v4835
      %v5476 = vpack.c.bf16 %v4836, %v4836
      %v5477 = vpack.c.bf16 %v4837, %v4837
      %v5478 = vpack.c.bf16 %v4838, %v4838
      %v5479 = vpack.c.bf16 %v4839, %v4839
      %v5480 = vpack.c.bf16 %v4840, %v4840
      %v5481 = vpack.c.bf16 %v4841, %v4841
      %v5482 = vpack.c.bf16 %v4842, %v4842
      %v5483 = vpack.c.bf16 %v4843, %v4843
      %v5484 = vpack.c.bf16 %v4844, %v4844
      %v5485 = vpack.c.bf16 %v4845, %v4845
      %v5486 = vpack.c.bf16 %v4846, %v4846
      %v5487 = vpack.c.bf16 %v4847, %v4847
      %v5488 = vpack.c.bf16 %v4848, %v4848
      %v5489 = vpack.c.bf16 %v4849, %v4849
      %v5490 = vpack.c.bf16 %v4850, %v4850
      %v5491 = vpack.c.bf16 %v4851, %v4851
      %v5492 = vpack.c.bf16 %v4852, %v4852
      %v5493 = vpack.c.bf16 %v4853, %v4853
      %v5494 = vpack.c.bf16 %v4854, %v4854
      %v5495 = vpack.c.bf16 %v4855, %v4855
      %v5496 = vpack.c.bf16 %v4856, %v4856
      %v5497 = vpack.c.bf16 %v4857, %v4857
      %v5498 = vpack.c.bf16 %v4858, %v4858
      %v5499 = vpack.c.bf16 %v4859, %v4859
      %v5500 = vpack.c.bf16 %v4860, %v4860
      %v5501 = vpack.c.bf16 %v4861, %v4861
      %v5502 = vpack.c.bf16 %v4862, %v4862
      %v5503 = vpack.c.bf16 %v4863, %v4863
      %v5504 = vpack.c.bf16 %v4864, %v4864
      %v5505 = vpack.c.bf16 %v4865, %v4865
      %v5506 = vpack.c.bf16 %v4866, %v4866
      %v5507 = vpack.c.bf16 %v4867, %v4867
      %v5508 = vpack.c.bf16 %v4868, %v4868
      %v5509 = vpack.c.bf16 %v4869, %v4869
      %v5510 = vpack.c.bf16 %v4870, %v4870
      %v5511 = vpack.c.bf16 %v4871, %v4871
      %v5512 = vpack.c.bf16 %v4872, %v4872
      %v5513 = vpack.c.bf16 %v4873, %v4873
      %v5514 = vpack.c.bf16 %v4874, %v4874
      %v5515 = vpack.c.bf16 %v4875, %v4875
      %v5516 = vpack.c.bf16 %v4876, %v4876
      %v5517 = vpack.c.bf16 %v4877, %v4877
      %v5518 = vpack.c.bf16 %v4878, %v4878
      %v5519 = vpack.c.bf16 %v4879, %v4879
      %v5520 = vpack.c.bf16 %v4880, %v4880
      %v5521 = vpack.c.bf16 %v4881, %v4881
      %v5522 = vpack.c.bf16 %v4882, %v4882
      %v5523 = vpack.c.bf16 %v4883, %v4883
      %v5524 = vpack.c.bf16 %v4884, %v4884
      %v5525 = vpack.c.bf16 %v4885, %v4885
      %v5526 = vpack.c.bf16 %v4886, %v4886
      %v5527 = vpack.c.bf16 %v4887, %v4887
      %v5528 = vpack.c.bf16 %v4888, %v4888
      %v5529 = vpack.c.bf16 %v4889, %v4889
      %v5530 = vpack.c.bf16 %v4890, %v4890
      %v5531 = vpack.c.bf16 %v4891, %v4891
      %v5532 = vpack.c.bf16 %v4892, %v4892
      %v5533 = vpack.c.bf16 %v4893, %v4893
      %v5534 = vpack.c.bf16 %v4894, %v4894
      %v5535 = vpack.c.bf16 %v4895, %v4895
      %v5536 = vpack.c.bf16 %v4896, %v4896
      %v5537 = vpack.c.bf16 %v4897, %v4897
      %v5538 = vpack.c.bf16 %v4898, %v4898
      %v5539 = vpack.c.bf16 %v4899, %v4899
      %v5540 = vpack.c.bf16 %v4900, %v4900
      %v5541 = vpack.c.bf16 %v4901, %v4901
      %v5542 = vpack.c.bf16 %v4902, %v4902
      %v5543 = vpack.c.bf16 %v4903, %v4903
      %v5544 = vpack.c.bf16 %v4904, %v4904
      %v5545 = vpack.c.bf16 %v4905, %v4905
      %v5546 = vpack.c.bf16 %v4906, %v4906
      %v5547 = vpack.c.bf16 %v4907, %v4907
      %v5548 = vpack.c.bf16 %v4908, %v4908
      %v5549 = vpack.c.bf16 %v4909, %v4909
      %v5550 = vpack.c.bf16 %v4910, %v4910
      %v5551 = vpack.c.bf16 %v4911, %v4911
      %v5552 = vpack.c.bf16 %v4912, %v4912
      %v5553 = vpack.c.bf16 %v4913, %v4913
      %v5554 = vpack.c.bf16 %v4914, %v4914
      %v5555 = vpack.c.bf16 %v4915, %v4915
      %v5556 = vpack.c.bf16 %v4916, %v4916
      %v5557 = vpack.c.bf16 %v4917, %v4917
      %v5558 = vpack.c.bf16 %v4918, %v4918
      %v5559 = vpack.c.bf16 %v4919, %v4919
      %v5560 = vpack.c.bf16 %v4920, %v4920
      %v5561 = vpack.c.bf16 %v4921, %v4921
      %v5562 = vpack.c.bf16 %v4922, %v4922
      %v5563 = vpack.c.bf16 %v4923, %v4923
      %v5564 = vpack.c.bf16 %v4924, %v4924
      %v5565 = vpack.c.bf16 %v4925, %v4925
      %v5566 = vpack.c.bf16 %v4926, %v4926
      %v5567 = vpack.c.bf16 %v4927, %v4927
      %v5568 = vpack.c.bf16 %v4928, %v4928
      %v5569 = vpack.c.bf16 %v4929, %v4929
      %v5570 = vpack.c.bf16 %v4930, %v4930
      %v5571 = vpack.c.bf16 %v4931, %v4931
      %v5572 = vpack.c.bf16 %v4932, %v4932
      %v5573 = vpack.c.bf16 %v4933, %v4933
      %v5574 = vpack.c.bf16 %v4934, %v4934
      %v5575 = vpack.c.bf16 %v4935, %v4935
      %v5576 = vpack.c.bf16 %v4936, %v4936
      %v5577 = vpack.c.bf16 %v4937, %v4937
      %v5578 = vpack.c.bf16 %v4938, %v4938
      %v5579 = vpack.c.bf16 %v4939, %v4939
      %v5580 = vpack.c.bf16 %v4940, %v4940
      %v5581 = vpack.c.bf16 %v4941, %v4941
      %v5582 = vpack.c.bf16 %v4942, %v4942
      %v5583 = vpack.c.bf16 %v4943, %v4943
      %v5584 = vpack.c.bf16 %v4944, %v4944
      %v5585 = vpack.c.bf16 %v4945, %v4945
      %v5586 = vpack.c.bf16 %v4946, %v4946
      %v5587 = vpack.c.bf16 %v4947, %v4947
      %v5588 = vpack.c.bf16 %v4948, %v4948
      %v5589 = vpack.c.bf16 %v4949, %v4949
      %v5590 = vpack.c.bf16 %v4950, %v4950
      %v5591 = vpack.c.bf16 %v4951, %v4951
      %v5592 = vpack.c.bf16 %v4952, %v4952
      %v5593 = vpack.c.bf16 %v4953, %v4953
      %v5594 = vpack.c.bf16 %v4954, %v4954
      %v5595 = vpack.c.bf16 %v4955, %v4955
      %v5596 = vpack.c.bf16 %v4956, %v4956
      %v5597 = vpack.c.bf16 %v4957, %v4957
      %v5598 = vpack.c.bf16 %v4958, %v4958
      %v5599 = vpack.c.bf16 %v4959, %v4959
      %v5600 = vpack.c.bf16 %v4960, %v4960
      %v5601 = vpack.c.bf16 %v4961, %v4961
      %v5602 = vpack.c.bf16 %v4962, %v4962
      %v5603 = vpack.c.bf16 %v4963, %v4963
      %v5604 = vpack.c.bf16 %v4964, %v4964
      %v5605 = vpack.c.bf16 %v4965, %v4965
      %v5606 = vpack.c.bf16 %v4966, %v4966
      %v5607 = vpack.c.bf16 %v4967, %v4967
      %v5608 = vpack.c.bf16 %v4968, %v4968
      %v5609 = vpack.c.bf16 %v4969, %v4969
      %v5610 = vpack.c.bf16 %v4970, %v4970
      %v5611 = vpack.c.bf16 %v4971, %v4971
      %v5612 = vpack.c.bf16 %v4972, %v4972
      %v5613 = vpack.c.bf16 %v4973, %v4973
      %v5614 = vpack.c.bf16 %v4974, %v4974
      %v5615 = vpack.c.bf16 %v4975, %v4975
      %v5616 = vpack.c.bf16 %v4976, %v4976
      %v5617 = vpack.c.bf16 %v4977, %v4977
      %v5618 = vpack.c.bf16 %v4978, %v4978
      %v5619 = vpack.c.bf16 %v4979, %v4979
      %v5620 = vpack.c.bf16 %v4980, %v4980
      %v5621 = vpack.c.bf16 %v4981, %v4981
      %v5622 = vpack.c.bf16 %v4982, %v4982
      %v5623 = vpack.c.bf16 %v4983, %v4983
      %v5624 = vpack.c.bf16 %v4984, %v4984
      %v5625 = vpack.c.bf16 %v4985, %v4985
      %v5626 = vpack.c.bf16 %v4986, %v4986
      %v5627 = vpack.c.bf16 %v4987, %v4987
      %v5628 = vpack.c.bf16 %v4988, %v4988
      %v5629 = vpack.c.bf16 %v4989, %v4989
      %v5630 = vpack.c.bf16 %v4990, %v4990
      %v5631 = vpack.c.bf16 %v4991, %v4991
      %v5632 = vpack.c.bf16 %v4992, %v4992
      %v5633 = vpack.c.bf16 %v4993, %v4993
      %v5634 = vpack.c.bf16 %v4994, %v4994
      %v5635 = vpack.c.bf16 %v4995, %v4995
      %v5636 = vpack.c.bf16 %v4996, %v4996
      %v5637 = vpack.c.bf16 %v4997, %v4997
      %v5638 = vpack.c.bf16 %v4998, %v4998
      %v5639 = vpack.c.bf16 %v4999, %v4999
      %v5640 = vpack.c.bf16 %v5000, %v5000
      %v5641 = vpack.c.bf16 %v5001, %v5001
      %v5642 = vpack.c.bf16 %v5002, %v5002
      %v5643 = vpack.c.bf16 %v5003, %v5003
      %v5644 = vpack.c.bf16 %v5004, %v5004
      %v5645 = vpack.c.bf16 %v5005, %v5005
      %v5646 = vpack.c.bf16 %v5006, %v5006
      %v5647 = vpack.c.bf16 %v5007, %v5007
      %v5648 = vpack.c.bf16 %v5008, %v5008
      %v5649 = vpack.c.bf16 %v5009, %v5009
      %v5650 = vpack.c.bf16 %v5010, %v5010
      %v5651 = vpack.c.bf16 %v5011, %v5011
      %v5652 = vpack.c.bf16 %v5012, %v5012
      %v5653 = vpack.c.bf16 %v5013, %v5013
      %v5654 = vpack.c.bf16 %v5014, %v5014
      %v5655 = vpack.c.bf16 %v5015, %v5015
      %v5656 = vpack.c.bf16 %v5016, %v5016
      %v5657 = vpack.c.bf16 %v5017, %v5017
      %v5658 = vpack.c.bf16 %v5018, %v5018
      %v5659 = vpack.c.bf16 %v5019, %v5019
      %v5660 = vpack.c.bf16 %v5020, %v5020
      %v5661 = vpack.c.bf16 %v5021, %v5021
      %v5662 = vpack.c.bf16 %v5022, %v5022
      %v5663 = vpack.c.bf16 %v5023, %v5023
      %v5664 = vpack.c.bf16 %v5024, %v5024
      %v5665 = vpack.c.bf16 %v5025, %v5025
      %v5666 = vpack.c.bf16 %v5026, %v5026
      %v5667 = vpack.c.bf16 %v5027, %v5027
      %v5668 = vpack.c.bf16 %v5028, %v5028
      %v5669 = vpack.c.bf16 %v5029, %v5029
      %v5670 = vpack.c.bf16 %v5030, %v5030
      %v5671 = vpack.c.bf16 %v5031, %v5031
      %v5672 = vpack.c.bf16 %v5032, %v5032
      %v5673 = vpack.c.bf16 %v5033, %v5033
      %v5674 = vpack.c.bf16 %v5034, %v5034
      %v5675 = vpack.c.bf16 %v5035, %v5035
      %v5676 = vpack.c.bf16 %v5036, %v5036
      %v5677 = vpack.c.bf16 %v5037, %v5037
      %v5678 = vpack.c.bf16 %v5038, %v5038
      %v5679 = vpack.c.bf16 %v5039, %v5039
      %v5680 = vpack.c.bf16 %v5040, %v5040
      %v5681 = vpack.c.bf16 %v5041, %v5041
      %v5682 = vpack.c.bf16 %v5042, %v5042
      %v5683 = vpack.c.bf16 %v5043, %v5043
      %v5684 = vpack.c.bf16 %v5044, %v5044
      %v5685 = vpack.c.bf16 %v5045, %v5045
      %v5686 = vpack.c.bf16 %v5046, %v5046
      %v5687 = vpack.c.bf16 %v5047, %v5047
      %v5688 = vpack.c.bf16 %v5048, %v5048
      %v5689 = vpack.c.bf16 %v5049, %v5049
      %v5690 = vpack.c.bf16 %v5050, %v5050
      %5691 = vst [vmem:[%s172] sm:$0xf] %v5051
      %5692 = vst [vmem:[%s172 + $0x4] sm:$0xf] %v5052
      %5693 = vst [vmem:[%s172 + $0x8] sm:$0xf] %v5053
      %5694 = vst [vmem:[%s172 + $0xc] sm:$0xf] %v5054
      %5695 = vst [vmem:[%s172 + $0x10] sm:$0xf] %v5055
      %5696 = vst [vmem:[%s172 + $0x14] sm:$0xf] %v5056
      %5697 = vst [vmem:[%s172 + $0x18] sm:$0xf] %v5057
      %5698 = vst [vmem:[%s172 + $0x1c] sm:$0xf] %v5058
      %5699 = vst [vmem:[%s172 + $0x20] sm:$0xf] %v5059
      %5700 = vst [vmem:[%s172 + $0x24] sm:$0xf] %v5060
      %5701 = vst [vmem:[%s172 + $0x28] sm:$0xf] %v5061
      %5702 = vst [vmem:[%s172 + $0x2c] sm:$0xf] %v5062
      %5703 = vst [vmem:[%s172 + $0x30] sm:$0xf] %v5063
      %5704 = vst [vmem:[%s172 + $0x34] sm:$0xf] %v5064
      %5705 = vst [vmem:[%s172 + $0x38] sm:$0xf] %v5065
      %5706 = vst [vmem:[%s172 + $0x3c] sm:$0xf] %v5066
      %5707 = vst [vmem:[%s172 + $0x40] sm:$0xf] %v5067
      %5708 = vst [vmem:[%s172 + $0x44] sm:$0xf] %v5068
      %5709 = vst [vmem:[%s172 + $0x48] sm:$0xf] %v5069
      %5710 = vst [vmem:[%s172 + $0x4c] sm:$0xf] %v5070
      %5711 = vst [vmem:[%s172 + $0x50] sm:$0xf] %v5071
      %5712 = vst [vmem:[%s172 + $0x54] sm:$0xf] %v5072
      %5713 = vst [vmem:[%s172 + $0x58] sm:$0xf] %v5073
      %5714 = vst [vmem:[%s172 + $0x5c] sm:$0xf] %v5074
      %5715 = vst [vmem:[%s172 + $0x60] sm:$0xf] %v5075
      %5716 = vst [vmem:[%s172 + $0x64] sm:$0xf] %v5076
      %5717 = vst [vmem:[%s172 + $0x68] sm:$0xf] %v5077
      %5718 = vst [vmem:[%s172 + $0x6c] sm:$0xf] %v5078
      %5719 = vst [vmem:[%s172 + $0x70] sm:$0xf] %v5079
      %5720 = vst [vmem:[%s172 + $0x74] sm:$0xf] %v5080
      %5721 = vst [vmem:[%s172 + $0x78] sm:$0xf] %v5081
      %5722 = vst [vmem:[%s172 + $0x7c] sm:$0xf] %v5082
      %5723 = vst [vmem:[%s172 + $0x80] sm:$0xf] %v5083
      %5724 = vst [vmem:[%s172 + $0x84] sm:$0xf] %v5084
      %5725 = vst [vmem:[%s172 + $0x88] sm:$0xf] %v5085
      %5726 = vst [vmem:[%s172 + $0x8c] sm:$0xf] %v5086
      %5727 = vst [vmem:[%s172 + $0x90] sm:$0xf] %v5087
      %5728 = vst [vmem:[%s172 + $0x94] sm:$0xf] %v5088
      %5729 = vst [vmem:[%s172 + $0x98] sm:$0xf] %v5089
      %5730 = vst [vmem:[%s172 + $0x9c] sm:$0xf] %v5090
      %5731 = vst [vmem:[%s172 + $0xa0] sm:$0xf] %v5091
      %5732 = vst [vmem:[%s172 + $0xa4] sm:$0xf] %v5092
      %5733 = vst [vmem:[%s172 + $0xa8] sm:$0xf] %v5093
      %5734 = vst [vmem:[%s172 + $0xac] sm:$0xf] %v5094
      %5735 = vst [vmem:[%s172 + $0xb0] sm:$0xf] %v5095
      %5736 = vst [vmem:[%s172 + $0xb4] sm:$0xf] %v5096
      %5737 = vst [vmem:[%s172 + $0xb8] sm:$0xf] %v5097
      %5738 = vst [vmem:[%s172 + $0xbc] sm:$0xf] %v5098
      %5739 = vst [vmem:[%s172 + $0xc0] sm:$0xf] %v5099
      %5740 = vst [vmem:[%s172 + $0xc4] sm:$0xf] %v5100
      %5741 = vst [vmem:[%s172 + $0xc8] sm:$0xf] %v5101
      %5742 = vst [vmem:[%s172 + $0xcc] sm:$0xf] %v5102
      %5743 = vst [vmem:[%s172 + $0xd0] sm:$0xf] %v5103
      %5744 = vst [vmem:[%s172 + $0xd4] sm:$0xf] %v5104
      %5745 = vst [vmem:[%s172 + $0xd8] sm:$0xf] %v5105
      %5746 = vst [vmem:[%s172 + $0xdc] sm:$0xf] %v5106
      %5747 = vst [vmem:[%s172 + $0xe0] sm:$0xf] %v5107
      %5748 = vst [vmem:[%s172 + $0xe4] sm:$0xf] %v5108
      %5749 = vst [vmem:[%s172 + $0xe8] sm:$0xf] %v5109
      %5750 = vst [vmem:[%s172 + $0xec] sm:$0xf] %v5110
      %5751 = vst [vmem:[%s172 + $0xf0] sm:$0xf] %v5111
      %5752 = vst [vmem:[%s172 + $0xf4] sm:$0xf] %v5112
      %5753 = vst [vmem:[%s172 + $0xf8] sm:$0xf] %v5113
      %5754 = vst [vmem:[%s172 + $0xfc] sm:$0xf] %v5114
      %5755 = vst [vmem:[%s172 + $0x100] sm:$0xf] %v5115
      %5756 = vst [vmem:[%s172 + $0x104] sm:$0xf] %v5116
      %5757 = vst [vmem:[%s172 + $0x108] sm:$0xf] %v5117
      %5758 = vst [vmem:[%s172 + $0x10c] sm:$0xf] %v5118
      %5759 = vst [vmem:[%s172 + $0x110] sm:$0xf] %v5119
      %5760 = vst [vmem:[%s172 + $0x114] sm:$0xf] %v5120
      %5761 = vst [vmem:[%s172 + $0x118] sm:$0xf] %v5121
      %5762 = vst [vmem:[%s172 + $0x11c] sm:$0xf] %v5122
      %5763 = vst [vmem:[%s172 + $0x120] sm:$0xf] %v5123
      %5764 = vst [vmem:[%s172 + $0x124] sm:$0xf] %v5124
      %5765 = vst [vmem:[%s172 + $0x128] sm:$0xf] %v5125
      %5766 = vst [vmem:[%s172 + $0x12c] sm:$0xf] %v5126
      %5767 = vst [vmem:[%s172 + $0x130] sm:$0xf] %v5127
      %5768 = vst [vmem:[%s172 + $0x134] sm:$0xf] %v5128
      %5769 = vst [vmem:[%s172 + $0x138] sm:$0xf] %v5129
      %5770 = vst [vmem:[%s172 + $0x13c] sm:$0xf] %v5130
      %5771 = vst [vmem:[%s172 + $0x140] sm:$0xf] %v5131
      %5772 = vst [vmem:[%s172 + $0x144] sm:$0xf] %v5132
      %5773 = vst [vmem:[%s172 + $0x148] sm:$0xf] %v5133
      %5774 = vst [vmem:[%s172 + $0x14c] sm:$0xf] %v5134
      %5775 = vst [vmem:[%s172 + $0x150] sm:$0xf] %v5135
      %5776 = vst [vmem:[%s172 + $0x154] sm:$0xf] %v5136
      %5777 = vst [vmem:[%s172 + $0x158] sm:$0xf] %v5137
      %5778 = vst [vmem:[%s172 + $0x15c] sm:$0xf] %v5138
      %5779 = vst [vmem:[%s172 + $0x160] sm:$0xf] %v5139
      %5780 = vst [vmem:[%s172 + $0x164] sm:$0xf] %v5140
      %5781 = vst [vmem:[%s172 + $0x168] sm:$0xf] %v5141
      %5782 = vst [vmem:[%s172 + $0x16c] sm:$0xf] %v5142
      %5783 = vst [vmem:[%s172 + $0x170] sm:$0xf] %v5143
      %5784 = vst [vmem:[%s172 + $0x174] sm:$0xf] %v5144
      %5785 = vst [vmem:[%s172 + $0x178] sm:$0xf] %v5145
      %5786 = vst [vmem:[%s172 + $0x17c] sm:$0xf] %v5146
      %5787 = vst [vmem:[%s172 + $0x180] sm:$0xf] %v5147
      %5788 = vst [vmem:[%s172 + $0x184] sm:$0xf] %v5148
      %5789 = vst [vmem:[%s172 + $0x188] sm:$0xf] %v5149
      %5790 = vst [vmem:[%s172 + $0x18c] sm:$0xf] %v5150
      %5791 = vst [vmem:[%s172 + $0x190] sm:$0xf] %v5151
      %5792 = vst [vmem:[%s172 + $0x194] sm:$0xf] %v5152
      %5793 = vst [vmem:[%s172 + $0x198] sm:$0xf] %v5153
      %5794 = vst [vmem:[%s172 + $0x19c] sm:$0xf] %v5154
      %5795 = vst [vmem:[%s172 + $0x1a0] sm:$0xf] %v5155
      %5796 = vst [vmem:[%s172 + $0x1a4] sm:$0xf] %v5156
      %5797 = vst [vmem:[%s172 + $0x1a8] sm:$0xf] %v5157
      %5798 = vst [vmem:[%s172 + $0x1ac] sm:$0xf] %v5158
      %5799 = vst [vmem:[%s172 + $0x1b0] sm:$0xf] %v5159
      %5800 = vst [vmem:[%s172 + $0x1b4] sm:$0xf] %v5160
      %5801 = vst [vmem:[%s172 + $0x1b8] sm:$0xf] %v5161
      %5802 = vst [vmem:[%s172 + $0x1bc] sm:$0xf] %v5162
      %5803 = vst [vmem:[%s172 + $0x1c0] sm:$0xf] %v5163
      %5804 = vst [vmem:[%s172 + $0x1c4] sm:$0xf] %v5164
      %5805 = vst [vmem:[%s172 + $0x1c8] sm:$0xf] %v5165
      %5806 = vst [vmem:[%s172 + $0x1cc] sm:$0xf] %v5166
      %5807 = vst [vmem:[%s172 + $0x1d0] sm:$0xf] %v5167
      %5808 = vst [vmem:[%s172 + $0x1d4] sm:$0xf] %v5168
      %5809 = vst [vmem:[%s172 + $0x1d8] sm:$0xf] %v5169
      %5810 = vst [vmem:[%s172 + $0x1dc] sm:$0xf] %v5170
      %5811 = vst [vmem:[%s172 + $0x1e0] sm:$0xf] %v5171
      %5812 = vst [vmem:[%s172 + $0x1e4] sm:$0xf] %v5172
      %5813 = vst [vmem:[%s172 + $0x1e8] sm:$0xf] %v5173
      %5814 = vst [vmem:[%s172 + $0x1ec] sm:$0xf] %v5174
      %5815 = vst [vmem:[%s172 + $0x1f0] sm:$0xf] %v5175
      %5816 = vst [vmem:[%s172 + $0x1f4] sm:$0xf] %v5176
      %5817 = vst [vmem:[%s172 + $0x1f8] sm:$0xf] %v5177
      %5818 = vst [vmem:[%s172 + $0x1fc] sm:$0xf] %v5178
      %5819 = vst [vmem:[%s172 + $0x200] sm:$0xf] %v5179
      %5820 = vst [vmem:[%s172 + $0x204] sm:$0xf] %v5180
      %5821 = vst [vmem:[%s172 + $0x208] sm:$0xf] %v5181
      %5822 = vst [vmem:[%s172 + $0x20c] sm:$0xf] %v5182
      %5823 = vst [vmem:[%s172 + $0x210] sm:$0xf] %v5183
      %5824 = vst [vmem:[%s172 + $0x214] sm:$0xf] %v5184
      %5825 = vst [vmem:[%s172 + $0x218] sm:$0xf] %v5185
      %5826 = vst [vmem:[%s172 + $0x21c] sm:$0xf] %v5186
      %5827 = vst [vmem:[%s172 + $0x220] sm:$0xf] %v5187
      %5828 = vst [vmem:[%s172 + $0x224] sm:$0xf] %v5188
      %5829 = vst [vmem:[%s172 + $0x228] sm:$0xf] %v5189
      %5830 = vst [vmem:[%s172 + $0x22c] sm:$0xf] %v5190
      %5831 = vst [vmem:[%s172 + $0x230] sm:$0xf] %v5191
      %5832 = vst [vmem:[%s172 + $0x234] sm:$0xf] %v5192
      %5833 = vst [vmem:[%s172 + $0x238] sm:$0xf] %v5193
      %5834 = vst [vmem:[%s172 + $0x23c] sm:$0xf] %v5194
      %5835 = vst [vmem:[%s172 + $0x240] sm:$0xf] %v5195
      %5836 = vst [vmem:[%s172 + $0x244] sm:$0xf] %v5196
      %5837 = vst [vmem:[%s172 + $0x248] sm:$0xf] %v5197
      %5838 = vst [vmem:[%s172 + $0x24c] sm:$0xf] %v5198
      %5839 = vst [vmem:[%s172 + $0x250] sm:$0xf] %v5199
      %5840 = vst [vmem:[%s172 + $0x254] sm:$0xf] %v5200
      %5841 = vst [vmem:[%s172 + $0x258] sm:$0xf] %v5201
      %5842 = vst [vmem:[%s172 + $0x25c] sm:$0xf] %v5202
      %5843 = vst [vmem:[%s172 + $0x260] sm:$0xf] %v5203
      %5844 = vst [vmem:[%s172 + $0x264] sm:$0xf] %v5204
      %5845 = vst [vmem:[%s172 + $0x268] sm:$0xf] %v5205
      %5846 = vst [vmem:[%s172 + $0x26c] sm:$0xf] %v5206
      %5847 = vst [vmem:[%s172 + $0x270] sm:$0xf] %v5207
      %5848 = vst [vmem:[%s172 + $0x274] sm:$0xf] %v5208
      %5849 = vst [vmem:[%s172 + $0x278] sm:$0xf] %v5209
      %5850 = vst [vmem:[%s172 + $0x27c] sm:$0xf] %v5210
      %5851 = vst [vmem:[%s172 + $0x280] sm:$0xf] %v5211
      %5852 = vst [vmem:[%s172 + $0x284] sm:$0xf] %v5212
      %5853 = vst [vmem:[%s172 + $0x288] sm:$0xf] %v5213
      %5854 = vst [vmem:[%s172 + $0x28c] sm:$0xf] %v5214
      %5855 = vst [vmem:[%s172 + $0x290] sm:$0xf] %v5215
      %5856 = vst [vmem:[%s172 + $0x294] sm:$0xf] %v5216
      %5857 = vst [vmem:[%s172 + $0x298] sm:$0xf] %v5217
      %5858 = vst [vmem:[%s172 + $0x29c] sm:$0xf] %v5218
      %5859 = vst [vmem:[%s172 + $0x2a0] sm:$0xf] %v5219
      %5860 = vst [vmem:[%s172 + $0x2a4] sm:$0xf] %v5220
      %5861 = vst [vmem:[%s172 + $0x2a8] sm:$0xf] %v5221
      %5862 = vst [vmem:[%s172 + $0x2ac] sm:$0xf] %v5222
      %5863 = vst [vmem:[%s172 + $0x2b0] sm:$0xf] %v5223
      %5864 = vst [vmem:[%s172 + $0x2b4] sm:$0xf] %v5224
      %5865 = vst [vmem:[%s172 + $0x2b8] sm:$0xf] %v5225
      %5866 = vst [vmem:[%s172 + $0x2bc] sm:$0xf] %v5226
      %5867 = vst [vmem:[%s172 + $0x2c0] sm:$0xf] %v5227
      %5868 = vst [vmem:[%s172 + $0x2c4] sm:$0xf] %v5228
      %5869 = vst [vmem:[%s172 + $0x2c8] sm:$0xf] %v5229
      %5870 = vst [vmem:[%s172 + $0x2cc] sm:$0xf] %v5230
      %5871 = vst [vmem:[%s172 + $0x2d0] sm:$0xf] %v5231
      %5872 = vst [vmem:[%s172 + $0x2d4] sm:$0xf] %v5232
      %5873 = vst [vmem:[%s172 + $0x2d8] sm:$0xf] %v5233
      %5874 = vst [vmem:[%s172 + $0x2dc] sm:$0xf] %v5234
      %5875 = vst [vmem:[%s172 + $0x2e0] sm:$0xf] %v5235
      %5876 = vst [vmem:[%s172 + $0x2e4] sm:$0xf] %v5236
      %5877 = vst [vmem:[%s172 + $0x2e8] sm:$0xf] %v5237
      %5878 = vst [vmem:[%s172 + $0x2ec] sm:$0xf] %v5238
      %5879 = vst [vmem:[%s172 + $0x2f0] sm:$0xf] %v5239
      %5880 = vst [vmem:[%s172 + $0x2f4] sm:$0xf] %v5240
      %5881 = vst [vmem:[%s172 + $0x2f8] sm:$0xf] %v5241
      %5882 = vst [vmem:[%s172 + $0x2fc] sm:$0xf] %v5242
      %5883 = vst [vmem:[%s172 + $0x300] sm:$0xf] %v5243
      %5884 = vst [vmem:[%s172 + $0x304] sm:$0xf] %v5244
      %5885 = vst [vmem:[%s172 + $0x308] sm:$0xf] %v5245
      %5886 = vst [vmem:[%s172 + $0x30c] sm:$0xf] %v5246
      %5887 = vst [vmem:[%s172 + $0x310] sm:$0xf] %v5247
      %5888 = vst [vmem:[%s172 + $0x314] sm:$0xf] %v5248
      %5889 = vst [vmem:[%s172 + $0x318] sm:$0xf] %v5249
      %5890 = vst [vmem:[%s172 + $0x31c] sm:$0xf] %v5250
      %5891 = vst [vmem:[%s172 + $0x320] sm:$0xf] %v5251
      %5892 = vst [vmem:[%s172 + $0x324] sm:$0xf] %v5252
      %5893 = vst [vmem:[%s172 + $0x328] sm:$0xf] %v5253
      %5894 = vst [vmem:[%s172 + $0x32c] sm:$0xf] %v5254
      %5895 = vst [vmem:[%s172 + $0x330] sm:$0xf] %v5255
      %5896 = vst [vmem:[%s172 + $0x334] sm:$0xf] %v5256
      %5897 = vst [vmem:[%s172 + $0x338] sm:$0xf] %v5257
      %5898 = vst [vmem:[%s172 + $0x33c] sm:$0xf] %v5258
      %5899 = vst [vmem:[%s172 + $0x340] sm:$0xf] %v5259
      %5900 = vst [vmem:[%s172 + $0x344] sm:$0xf] %v5260
      %5901 = vst [vmem:[%s172 + $0x348] sm:$0xf] %v5261
      %5902 = vst [vmem:[%s172 + $0x34c] sm:$0xf] %v5262
      %5903 = vst [vmem:[%s172 + $0x350] sm:$0xf] %v5263
      %5904 = vst [vmem:[%s172 + $0x354] sm:$0xf] %v5264
      %5905 = vst [vmem:[%s172 + $0x358] sm:$0xf] %v5265
      %5906 = vst [vmem:[%s172 + $0x35c] sm:$0xf] %v5266
      %5907 = vst [vmem:[%s172 + $0x360] sm:$0xf] %v5267
      %5908 = vst [vmem:[%s172 + $0x364] sm:$0xf] %v5268
      %5909 = vst [vmem:[%s172 + $0x368] sm:$0xf] %v5269
      %5910 = vst [vmem:[%s172 + $0x36c] sm:$0xf] %v5270
      %5911 = vst [vmem:[%s172 + $0x370] sm:$0xf] %v5271
      %5912 = vst [vmem:[%s172 + $0x374] sm:$0xf] %v5272
      %5913 = vst [vmem:[%s172 + $0x378] sm:$0xf] %v5273
      %5914 = vst [vmem:[%s172 + $0x37c] sm:$0xf] %v5274
      %5915 = vst [vmem:[%s172 + $0x380] sm:$0xf] %v5275
      %5916 = vst [vmem:[%s172 + $0x384] sm:$0xf] %v5276
      %5917 = vst [vmem:[%s172 + $0x388] sm:$0xf] %v5277
      %5918 = vst [vmem:[%s172 + $0x38c] sm:$0xf] %v5278
      %5919 = vst [vmem:[%s172 + $0x390] sm:$0xf] %v5279
      %5920 = vst [vmem:[%s172 + $0x394] sm:$0xf] %v5280
      %5921 = vst [vmem:[%s172 + $0x398] sm:$0xf] %v5281
      %5922 = vst [vmem:[%s172 + $0x39c] sm:$0xf] %v5282
      %5923 = vst [vmem:[%s172 + $0x3a0] sm:$0xf] %v5283
      %5924 = vst [vmem:[%s172 + $0x3a4] sm:$0xf] %v5284
      %5925 = vst [vmem:[%s172 + $0x3a8] sm:$0xf] %v5285
      %5926 = vst [vmem:[%s172 + $0x3ac] sm:$0xf] %v5286
      %5927 = vst [vmem:[%s172 + $0x3b0] sm:$0xf] %v5287
      %5928 = vst [vmem:[%s172 + $0x3b4] sm:$0xf] %v5288
      %5929 = vst [vmem:[%s172 + $0x3b8] sm:$0xf] %v5289
      %5930 = vst [vmem:[%s172 + $0x3bc] sm:$0xf] %v5290
      %5931 = vst [vmem:[%s172 + $0x3c0] sm:$0xf] %v5291
      %5932 = vst [vmem:[%s172 + $0x3c4] sm:$0xf] %v5292
      %5933 = vst [vmem:[%s172 + $0x3c8] sm:$0xf] %v5293
      %5934 = vst [vmem:[%s172 + $0x3cc] sm:$0xf] %v5294
      %5935 = vst [vmem:[%s172 + $0x3d0] sm:$0xf] %v5295
      %5936 = vst [vmem:[%s172 + $0x3d4] sm:$0xf] %v5296
      %5937 = vst [vmem:[%s172 + $0x3d8] sm:$0xf] %v5297
      %5938 = vst [vmem:[%s172 + $0x3dc] sm:$0xf] %v5298
      %5939 = vst [vmem:[%s172 + $0x3e0] sm:$0xf] %v5299
      %5940 = vst [vmem:[%s172 + $0x3e4] sm:$0xf] %v5300
      %5941 = vst [vmem:[%s172 + $0x3e8] sm:$0xf] %v5301
      %5942 = vst [vmem:[%s172 + $0x3ec] sm:$0xf] %v5302
      %5943 = vst [vmem:[%s172 + $0x3f0] sm:$0xf] %v5303
      %5944 = vst [vmem:[%s172 + $0x3f4] sm:$0xf] %v5304
      %5945 = vst [vmem:[%s172 + $0x3f8] sm:$0xf] %v5305
      %5946 = vst [vmem:[%s172 + $0x3fc] sm:$0xf] %v5306
      %5947 = vst [vmem:[%s172 + $0x400] sm:$0xf] %v5307
      %5948 = vst [vmem:[%s172 + $0x404] sm:$0xf] %v5308
      %5949 = vst [vmem:[%s172 + $0x408] sm:$0xf] %v5309
      %5950 = vst [vmem:[%s172 + $0x40c] sm:$0xf] %v5310
      %5951 = vst [vmem:[%s172 + $0x410] sm:$0xf] %v5311
      %5952 = vst [vmem:[%s172 + $0x414] sm:$0xf] %v5312
      %5953 = vst [vmem:[%s172 + $0x418] sm:$0xf] %v5313
      %5954 = vst [vmem:[%s172 + $0x41c] sm:$0xf] %v5314
      %5955 = vst [vmem:[%s172 + $0x420] sm:$0xf] %v5315
      %5956 = vst [vmem:[%s172 + $0x424] sm:$0xf] %v5316
      %5957 = vst [vmem:[%s172 + $0x428] sm:$0xf] %v5317
      %5958 = vst [vmem:[%s172 + $0x42c] sm:$0xf] %v5318
      %5959 = vst [vmem:[%s172 + $0x430] sm:$0xf] %v5319
      %5960 = vst [vmem:[%s172 + $0x434] sm:$0xf] %v5320
      %5961 = vst [vmem:[%s172 + $0x438] sm:$0xf] %v5321
      %5962 = vst [vmem:[%s172 + $0x43c] sm:$0xf] %v5322
      %5963 = vst [vmem:[%s172 + $0x440] sm:$0xf] %v5323
      %5964 = vst [vmem:[%s172 + $0x444] sm:$0xf] %v5324
      %5965 = vst [vmem:[%s172 + $0x448] sm:$0xf] %v5325
      %5966 = vst [vmem:[%s172 + $0x44c] sm:$0xf] %v5326
      %5967 = vst [vmem:[%s172 + $0x450] sm:$0xf] %v5327
      %5968 = vst [vmem:[%s172 + $0x454] sm:$0xf] %v5328
      %5969 = vst [vmem:[%s172 + $0x458] sm:$0xf] %v5329
      %5970 = vst [vmem:[%s172 + $0x45c] sm:$0xf] %v5330
      %5971 = vst [vmem:[%s172 + $0x460] sm:$0xf] %v5331
      %5972 = vst [vmem:[%s172 + $0x464] sm:$0xf] %v5332
      %5973 = vst [vmem:[%s172 + $0x468] sm:$0xf] %v5333
      %5974 = vst [vmem:[%s172 + $0x46c] sm:$0xf] %v5334
      %5975 = vst [vmem:[%s172 + $0x470] sm:$0xf] %v5335
      %5976 = vst [vmem:[%s172 + $0x474] sm:$0xf] %v5336
      %5977 = vst [vmem:[%s172 + $0x478] sm:$0xf] %v5337
      %5978 = vst [vmem:[%s172 + $0x47c] sm:$0xf] %v5338
      %5979 = vst [vmem:[%s172 + $0x480] sm:$0xf] %v5339
      %5980 = vst [vmem:[%s172 + $0x484] sm:$0xf] %v5340
      %5981 = vst [vmem:[%s172 + $0x488] sm:$0xf] %v5341
      %5982 = vst [vmem:[%s172 + $0x48c] sm:$0xf] %v5342
      %5983 = vst [vmem:[%s172 + $0x490] sm:$0xf] %v5343
      %5984 = vst [vmem:[%s172 + $0x494] sm:$0xf] %v5344
      %5985 = vst [vmem:[%s172 + $0x498] sm:$0xf] %v5345
      %5986 = vst [vmem:[%s172 + $0x49c] sm:$0xf] %v5346
      %5987 = vst [vmem:[%s172 + $0x4a0] sm:$0xf] %v5347
      %5988 = vst [vmem:[%s172 + $0x4a4] sm:$0xf] %v5348
      %5989 = vst [vmem:[%s172 + $0x4a8] sm:$0xf] %v5349
      %5990 = vst [vmem:[%s172 + $0x4ac] sm:$0xf] %v5350
      %5991 = vst [vmem:[%s172 + $0x4b0] sm:$0xf] %v5351
      %5992 = vst [vmem:[%s172 + $0x4b4] sm:$0xf] %v5352
      %5993 = vst [vmem:[%s172 + $0x4b8] sm:$0xf] %v5353
      %5994 = vst [vmem:[%s172 + $0x4bc] sm:$0xf] %v5354
      %5995 = vst [vmem:[%s172 + $0x4c0] sm:$0xf] %v5355
      %5996 = vst [vmem:[%s172 + $0x4c4] sm:$0xf] %v5356
      %5997 = vst [vmem:[%s172 + $0x4c8] sm:$0xf] %v5357
      %5998 = vst [vmem:[%s172 + $0x4cc] sm:$0xf] %v5358
      %5999 = vst [vmem:[%s172 + $0x4d0] sm:$0xf] %v5359
      %6000 = vst [vmem:[%s172 + $0x4d4] sm:$0xf] %v5360
      %6001 = vst [vmem:[%s172 + $0x4d8] sm:$0xf] %v5361
      %6002 = vst [vmem:[%s172 + $0x4dc] sm:$0xf] %v5362
      %6003 = vst [vmem:[%s172 + $0x4e0] sm:$0xf] %v5363
      %6004 = vst [vmem:[%s172 + $0x4e4] sm:$0xf] %v5364
      %6005 = vst [vmem:[%s172 + $0x4e8] sm:$0xf] %v5365
      %6006 = vst [vmem:[%s172 + $0x4ec] sm:$0xf] %v5366
      %6007 = vst [vmem:[%s172 + $0x4f0] sm:$0xf] %v5367
      %6008 = vst [vmem:[%s172 + $0x4f4] sm:$0xf] %v5368
      %6009 = vst [vmem:[%s172 + $0x4f8] sm:$0xf] %v5369
      %6010 = vst [vmem:[%s172 + $0x4fc] sm:$0xf] %v5370
      %6011 = vst [vmem:[%s172 + $0x500] sm:$0xf] %v5371
      %6012 = vst [vmem:[%s172 + $0x504] sm:$0xf] %v5372
      %6013 = vst [vmem:[%s172 + $0x508] sm:$0xf] %v5373
      %6014 = vst [vmem:[%s172 + $0x50c] sm:$0xf] %v5374
      %6015 = vst [vmem:[%s172 + $0x510] sm:$0xf] %v5375
      %6016 = vst [vmem:[%s172 + $0x514] sm:$0xf] %v5376
      %6017 = vst [vmem:[%s172 + $0x518] sm:$0xf] %v5377
      %6018 = vst [vmem:[%s172 + $0x51c] sm:$0xf] %v5378
      %6019 = vst [vmem:[%s172 + $0x520] sm:$0xf] %v5379
      %6020 = vst [vmem:[%s172 + $0x524] sm:$0xf] %v5380
      %6021 = vst [vmem:[%s172 + $0x528] sm:$0xf] %v5381
      %6022 = vst [vmem:[%s172 + $0x52c] sm:$0xf] %v5382
      %6023 = vst [vmem:[%s172 + $0x530] sm:$0xf] %v5383
      %6024 = vst [vmem:[%s172 + $0x534] sm:$0xf] %v5384
      %6025 = vst [vmem:[%s172 + $0x538] sm:$0xf] %v5385
      %6026 = vst [vmem:[%s172 + $0x53c] sm:$0xf] %v5386
      %6027 = vst [vmem:[%s172 + $0x540] sm:$0xf] %v5387
      %6028 = vst [vmem:[%s172 + $0x544] sm:$0xf] %v5388
      %6029 = vst [vmem:[%s172 + $0x548] sm:$0xf] %v5389
      %6030 = vst [vmem:[%s172 + $0x54c] sm:$0xf] %v5390
      %6031 = vst [vmem:[%s172 + $0x550] sm:$0xf] %v5391
      %6032 = vst [vmem:[%s172 + $0x554] sm:$0xf] %v5392
      %6033 = vst [vmem:[%s172 + $0x558] sm:$0xf] %v5393
      %6034 = vst [vmem:[%s172 + $0x55c] sm:$0xf] %v5394
      %6035 = vst [vmem:[%s172 + $0x560] sm:$0xf] %v5395
      %6036 = vst [vmem:[%s172 + $0x564] sm:$0xf] %v5396
      %6037 = vst [vmem:[%s172 + $0x568] sm:$0xf] %v5397
      %6038 = vst [vmem:[%s172 + $0x56c] sm:$0xf] %v5398
      %6039 = vst [vmem:[%s172 + $0x570] sm:$0xf] %v5399
      %6040 = vst [vmem:[%s172 + $0x574] sm:$0xf] %v5400
      %6041 = vst [vmem:[%s172 + $0x578] sm:$0xf] %v5401
      %6042 = vst [vmem:[%s172 + $0x57c] sm:$0xf] %v5402
      %6043 = vst [vmem:[%s172 + $0x580] sm:$0xf] %v5403
      %6044 = vst [vmem:[%s172 + $0x584] sm:$0xf] %v5404
      %6045 = vst [vmem:[%s172 + $0x588] sm:$0xf] %v5405
      %6046 = vst [vmem:[%s172 + $0x58c] sm:$0xf] %v5406
      %6047 = vst [vmem:[%s172 + $0x590] sm:$0xf] %v5407
      %6048 = vst [vmem:[%s172 + $0x594] sm:$0xf] %v5408
      %6049 = vst [vmem:[%s172 + $0x598] sm:$0xf] %v5409
      %6050 = vst [vmem:[%s172 + $0x59c] sm:$0xf] %v5410
      %6051 = vst [vmem:[%s172 + $0x5a0] sm:$0xf] %v5411
      %6052 = vst [vmem:[%s172 + $0x5a4] sm:$0xf] %v5412
      %6053 = vst [vmem:[%s172 + $0x5a8] sm:$0xf] %v5413
      %6054 = vst [vmem:[%s172 + $0x5ac] sm:$0xf] %v5414
      %6055 = vst [vmem:[%s172 + $0x5b0] sm:$0xf] %v5415
      %6056 = vst [vmem:[%s172 + $0x5b4] sm:$0xf] %v5416
      %6057 = vst [vmem:[%s172 + $0x5b8] sm:$0xf] %v5417
      %6058 = vst [vmem:[%s172 + $0x5bc] sm:$0xf] %v5418
      %6059 = vst [vmem:[%s172 + $0x5c0] sm:$0xf] %v5419
      %6060 = vst [vmem:[%s172 + $0x5c4] sm:$0xf] %v5420
      %6061 = vst [vmem:[%s172 + $0x5c8] sm:$0xf] %v5421
      %6062 = vst [vmem:[%s172 + $0x5cc] sm:$0xf] %v5422
      %6063 = vst [vmem:[%s172 + $0x5d0] sm:$0xf] %v5423
      %6064 = vst [vmem:[%s172 + $0x5d4] sm:$0xf] %v5424
      %6065 = vst [vmem:[%s172 + $0x5d8] sm:$0xf] %v5425
      %6066 = vst [vmem:[%s172 + $0x5dc] sm:$0xf] %v5426
      %6067 = vst [vmem:[%s172 + $0x5e0] sm:$0xf] %v5427
      %6068 = vst [vmem:[%s172 + $0x5e4] sm:$0xf] %v5428
      %6069 = vst [vmem:[%s172 + $0x5e8] sm:$0xf] %v5429
      %6070 = vst [vmem:[%s172 + $0x5ec] sm:$0xf] %v5430
      %6071 = vst [vmem:[%s172 + $0x5f0] sm:$0xf] %v5431
      %6072 = vst [vmem:[%s172 + $0x5f4] sm:$0xf] %v5432
      %6073 = vst [vmem:[%s172 + $0x5f8] sm:$0xf] %v5433
      %6074 = vst [vmem:[%s172 + $0x5fc] sm:$0xf] %v5434
      %6075 = vst [vmem:[%s172 + $0x600] sm:$0xf] %v5435
      %6076 = vst [vmem:[%s172 + $0x604] sm:$0xf] %v5436
      %6077 = vst [vmem:[%s172 + $0x608] sm:$0xf] %v5437
      %6078 = vst [vmem:[%s172 + $0x60c] sm:$0xf] %v5438
      %6079 = vst [vmem:[%s172 + $0x610] sm:$0xf] %v5439
      %6080 = vst [vmem:[%s172 + $0x614] sm:$0xf] %v5440
      %6081 = vst [vmem:[%s172 + $0x618] sm:$0xf] %v5441
      %6082 = vst [vmem:[%s172 + $0x61c] sm:$0xf] %v5442
      %6083 = vst [vmem:[%s172 + $0x620] sm:$0xf] %v5443
      %6084 = vst [vmem:[%s172 + $0x624] sm:$0xf] %v5444
      %6085 = vst [vmem:[%s172 + $0x628] sm:$0xf] %v5445
      %6086 = vst [vmem:[%s172 + $0x62c] sm:$0xf] %v5446
      %6087 = vst [vmem:[%s172 + $0x630] sm:$0xf] %v5447
      %6088 = vst [vmem:[%s172 + $0x634] sm:$0xf] %v5448
      %6089 = vst [vmem:[%s172 + $0x638] sm:$0xf] %v5449
      %6090 = vst [vmem:[%s172 + $0x63c] sm:$0xf] %v5450
      %6091 = vst [vmem:[%s172 + $0x640] sm:$0xf] %v5451
      %6092 = vst [vmem:[%s172 + $0x644] sm:$0xf] %v5452
      %6093 = vst [vmem:[%s172 + $0x648] sm:$0xf] %v5453
      %6094 = vst [vmem:[%s172 + $0x64c] sm:$0xf] %v5454
      %6095 = vst [vmem:[%s172 + $0x650] sm:$0xf] %v5455
      %6096 = vst [vmem:[%s172 + $0x654] sm:$0xf] %v5456
      %6097 = vst [vmem:[%s172 + $0x658] sm:$0xf] %v5457
      %6098 = vst [vmem:[%s172 + $0x65c] sm:$0xf] %v5458
      %6099 = vst [vmem:[%s172 + $0x660] sm:$0xf] %v5459
      %6100 = vst [vmem:[%s172 + $0x664] sm:$0xf] %v5460
      %6101 = vst [vmem:[%s172 + $0x668] sm:$0xf] %v5461
      %6102 = vst [vmem:[%s172 + $0x66c] sm:$0xf] %v5462
      %6103 = vst [vmem:[%s172 + $0x670] sm:$0xf] %v5463
      %6104 = vst [vmem:[%s172 + $0x674] sm:$0xf] %v5464
      %6105 = vst [vmem:[%s172 + $0x678] sm:$0xf] %v5465
      %6106 = vst [vmem:[%s172 + $0x67c] sm:$0xf] %v5466
      %6107 = vst [vmem:[%s172 + $0x680] sm:$0xf] %v5467
      %6108 = vst [vmem:[%s172 + $0x684] sm:$0xf] %v5468
      %6109 = vst [vmem:[%s172 + $0x688] sm:$0xf] %v5469
      %6110 = vst [vmem:[%s172 + $0x68c] sm:$0xf] %v5470
      %6111 = vst [vmem:[%s172 + $0x690] sm:$0xf] %v5471
      %6112 = vst [vmem:[%s172 + $0x694] sm:$0xf] %v5472
      %6113 = vst [vmem:[%s172 + $0x698] sm:$0xf] %v5473
      %6114 = vst [vmem:[%s172 + $0x69c] sm:$0xf] %v5474
      %6115 = vst [vmem:[%s172 + $0x6a0] sm:$0xf] %v5475
      %6116 = vst [vmem:[%s172 + $0x6a4] sm:$0xf] %v5476
      %6117 = vst [vmem:[%s172 + $0x6a8] sm:$0xf] %v5477
      %6118 = vst [vmem:[%s172 + $0x6ac] sm:$0xf] %v5478
      %6119 = vst [vmem:[%s172 + $0x6b0] sm:$0xf] %v5479
      %6120 = vst [vmem:[%s172 + $0x6b4] sm:$0xf] %v5480
      %6121 = vst [vmem:[%s172 + $0x6b8] sm:$0xf] %v5481
      %6122 = vst [vmem:[%s172 + $0x6bc] sm:$0xf] %v5482
      %6123 = vst [vmem:[%s172 + $0x6c0] sm:$0xf] %v5483
      %6124 = vst [vmem:[%s172 + $0x6c4] sm:$0xf] %v5484
      %6125 = vst [vmem:[%s172 + $0x6c8] sm:$0xf] %v5485
      %6126 = vst [vmem:[%s172 + $0x6cc] sm:$0xf] %v5486
      %6127 = vst [vmem:[%s172 + $0x6d0] sm:$0xf] %v5487
      %6128 = vst [vmem:[%s172 + $0x6d4] sm:$0xf] %v5488
      %6129 = vst [vmem:[%s172 + $0x6d8] sm:$0xf] %v5489
      %6130 = vst [vmem:[%s172 + $0x6dc] sm:$0xf] %v5490
      %6131 = vst [vmem:[%s172 + $0x6e0] sm:$0xf] %v5491
      %6132 = vst [vmem:[%s172 + $0x6e4] sm:$0xf] %v5492
      %6133 = vst [vmem:[%s172 + $0x6e8] sm:$0xf] %v5493
      %6134 = vst [vmem:[%s172 + $0x6ec] sm:$0xf] %v5494
      %6135 = vst [vmem:[%s172 + $0x6f0] sm:$0xf] %v5495
      %6136 = vst [vmem:[%s172 + $0x6f4] sm:$0xf] %v5496
      %6137 = vst [vmem:[%s172 + $0x6f8] sm:$0xf] %v5497
      %6138 = vst [vmem:[%s172 + $0x6fc] sm:$0xf] %v5498
      %6139 = vst [vmem:[%s172 + $0x700] sm:$0xf] %v5499
      %6140 = vst [vmem:[%s172 + $0x704] sm:$0xf] %v5500
      %6141 = vst [vmem:[%s172 + $0x708] sm:$0xf] %v5501
      %6142 = vst [vmem:[%s172 + $0x70c] sm:$0xf] %v5502
      %6143 = vst [vmem:[%s172 + $0x710] sm:$0xf] %v5503
      %6144 = vst [vmem:[%s172 + $0x714] sm:$0xf] %v5504
      %6145 = vst [vmem:[%s172 + $0x718] sm:$0xf] %v5505
      %6146 = vst [vmem:[%s172 + $0x71c] sm:$0xf] %v5506
      %6147 = vst [vmem:[%s172 + $0x720] sm:$0xf] %v5507
      %6148 = vst [vmem:[%s172 + $0x724] sm:$0xf] %v5508
      %6149 = vst [vmem:[%s172 + $0x728] sm:$0xf] %v5509
      %6150 = vst [vmem:[%s172 + $0x72c] sm:$0xf] %v5510
      %6151 = vst [vmem:[%s172 + $0x730] sm:$0xf] %v5511
      %6152 = vst [vmem:[%s172 + $0x734] sm:$0xf] %v5512
      %6153 = vst [vmem:[%s172 + $0x738] sm:$0xf] %v5513
      %6154 = vst [vmem:[%s172 + $0x73c] sm:$0xf] %v5514
      %6155 = vst [vmem:[%s172 + $0x740] sm:$0xf] %v5515
      %6156 = vst [vmem:[%s172 + $0x744] sm:$0xf] %v5516
      %6157 = vst [vmem:[%s172 + $0x748] sm:$0xf] %v5517
      %6158 = vst [vmem:[%s172 + $0x74c] sm:$0xf] %v5518
      %6159 = vst [vmem:[%s172 + $0x750] sm:$0xf] %v5519
      %6160 = vst [vmem:[%s172 + $0x754] sm:$0xf] %v5520
      %6161 = vst [vmem:[%s172 + $0x758] sm:$0xf] %v5521
      %6162 = vst [vmem:[%s172 + $0x75c] sm:$0xf] %v5522
      %6163 = vst [vmem:[%s172 + $0x760] sm:$0xf] %v5523
      %6164 = vst [vmem:[%s172 + $0x764] sm:$0xf] %v5524
      %6165 = vst [vmem:[%s172 + $0x768] sm:$0xf] %v5525
      %6166 = vst [vmem:[%s172 + $0x76c] sm:$0xf] %v5526
      %6167 = vst [vmem:[%s172 + $0x770] sm:$0xf] %v5527
      %6168 = vst [vmem:[%s172 + $0x774] sm:$0xf] %v5528
      %6169 = vst [vmem:[%s172 + $0x778] sm:$0xf] %v5529
      %6170 = vst [vmem:[%s172 + $0x77c] sm:$0xf] %v5530
      %6171 = vst [vmem:[%s172 + $0x780] sm:$0xf] %v5531
      %6172 = vst [vmem:[%s172 + $0x784] sm:$0xf] %v5532
      %6173 = vst [vmem:[%s172 + $0x788] sm:$0xf] %v5533
      %6174 = vst [vmem:[%s172 + $0x78c] sm:$0xf] %v5534
      %6175 = vst [vmem:[%s172 + $0x790] sm:$0xf] %v5535
      %6176 = vst [vmem:[%s172 + $0x794] sm:$0xf] %v5536
      %6177 = vst [vmem:[%s172 + $0x798] sm:$0xf] %v5537
      %6178 = vst [vmem:[%s172 + $0x79c] sm:$0xf] %v5538
      %6179 = vst [vmem:[%s172 + $0x7a0] sm:$0xf] %v5539
      %6180 = vst [vmem:[%s172 + $0x7a4] sm:$0xf] %v5540
      %6181 = vst [vmem:[%s172 + $0x7a8] sm:$0xf] %v5541
      %6182 = vst [vmem:[%s172 + $0x7ac] sm:$0xf] %v5542
      %6183 = vst [vmem:[%s172 + $0x7b0] sm:$0xf] %v5543
      %6184 = vst [vmem:[%s172 + $0x7b4] sm:$0xf] %v5544
      %6185 = vst [vmem:[%s172 + $0x7b8] sm:$0xf] %v5545
      %6186 = vst [vmem:[%s172 + $0x7bc] sm:$0xf] %v5546
      %6187 = vst [vmem:[%s172 + $0x7c0] sm:$0xf] %v5547
      %6188 = vst [vmem:[%s172 + $0x7c4] sm:$0xf] %v5548
      %6189 = vst [vmem:[%s172 + $0x7c8] sm:$0xf] %v5549
      %6190 = vst [vmem:[%s172 + $0x7cc] sm:$0xf] %v5550
      %6191 = vst [vmem:[%s172 + $0x7d0] sm:$0xf] %v5551
      %6192 = vst [vmem:[%s172 + $0x7d4] sm:$0xf] %v5552
      %6193 = vst [vmem:[%s172 + $0x7d8] sm:$0xf] %v5553
      %6194 = vst [vmem:[%s172 + $0x7dc] sm:$0xf] %v5554
      %6195 = vst [vmem:[%s172 + $0x7e0] sm:$0xf] %v5555
      %6196 = vst [vmem:[%s172 + $0x7e4] sm:$0xf] %v5556
      %6197 = vst [vmem:[%s172 + $0x7e8] sm:$0xf] %v5557
      %6198 = vst [vmem:[%s172 + $0x7ec] sm:$0xf] %v5558
      %6199 = vst [vmem:[%s172 + $0x7f0] sm:$0xf] %v5559
      %6200 = vst [vmem:[%s172 + $0x7f4] sm:$0xf] %v5560
      %6201 = vst [vmem:[%s172 + $0x7f8] sm:$0xf] %v5561
      %6202 = vst [vmem:[%s172 + $0x7fc] sm:$0xf] %v5562
      %6203 = vst [vmem:[%s172 + $0x800] sm:$0xf] %v5563
      %6204 = vst [vmem:[%s172 + $0x804] sm:$0xf] %v5564
      %6205 = vst [vmem:[%s172 + $0x808] sm:$0xf] %v5565
      %6206 = vst [vmem:[%s172 + $0x80c] sm:$0xf] %v5566
      %6207 = vst [vmem:[%s172 + $0x810] sm:$0xf] %v5567
      %6208 = vst [vmem:[%s172 + $0x814] sm:$0xf] %v5568
      %6209 = vst [vmem:[%s172 + $0x818] sm:$0xf] %v5569
      %6210 = vst [vmem:[%s172 + $0x81c] sm:$0xf] %v5570
      %6211 = vst [vmem:[%s172 + $0x820] sm:$0xf] %v5571
      %6212 = vst [vmem:[%s172 + $0x824] sm:$0xf] %v5572
      %6213 = vst [vmem:[%s172 + $0x828] sm:$0xf] %v5573
      %6214 = vst [vmem:[%s172 + $0x82c] sm:$0xf] %v5574
      %6215 = vst [vmem:[%s172 + $0x830] sm:$0xf] %v5575
      %6216 = vst [vmem:[%s172 + $0x834] sm:$0xf] %v5576
      %6217 = vst [vmem:[%s172 + $0x838] sm:$0xf] %v5577
      %6218 = vst [vmem:[%s172 + $0x83c] sm:$0xf] %v5578
      %6219 = vst [vmem:[%s172 + $0x840] sm:$0xf] %v5579
      %6220 = vst [vmem:[%s172 + $0x844] sm:$0xf] %v5580
      %6221 = vst [vmem:[%s172 + $0x848] sm:$0xf] %v5581
      %6222 = vst [vmem:[%s172 + $0x84c] sm:$0xf] %v5582
      %6223 = vst [vmem:[%s172 + $0x850] sm:$0xf] %v5583
      %6224 = vst [vmem:[%s172 + $0x854] sm:$0xf] %v5584
      %6225 = vst [vmem:[%s172 + $0x858] sm:$0xf] %v5585
      %6226 = vst [vmem:[%s172 + $0x85c] sm:$0xf] %v5586
      %6227 = vst [vmem:[%s172 + $0x860] sm:$0xf] %v5587
      %6228 = vst [vmem:[%s172 + $0x864] sm:$0xf] %v5588
      %6229 = vst [vmem:[%s172 + $0x868] sm:$0xf] %v5589
      %6230 = vst [vmem:[%s172 + $0x86c] sm:$0xf] %v5590
      %6231 = vst [vmem:[%s172 + $0x870] sm:$0xf] %v5591
      %6232 = vst [vmem:[%s172 + $0x874] sm:$0xf] %v5592
      %6233 = vst [vmem:[%s172 + $0x878] sm:$0xf] %v5593
      %6234 = vst [vmem:[%s172 + $0x87c] sm:$0xf] %v5594
      %6235 = vst [vmem:[%s172 + $0x880] sm:$0xf] %v5595
      %6236 = vst [vmem:[%s172 + $0x884] sm:$0xf] %v5596
      %6237 = vst [vmem:[%s172 + $0x888] sm:$0xf] %v5597
      %6238 = vst [vmem:[%s172 + $0x88c] sm:$0xf] %v5598
      %6239 = vst [vmem:[%s172 + $0x890] sm:$0xf] %v5599
      %6240 = vst [vmem:[%s172 + $0x894] sm:$0xf] %v5600
      %6241 = vst [vmem:[%s172 + $0x898] sm:$0xf] %v5601
      %6242 = vst [vmem:[%s172 + $0x89c] sm:$0xf] %v5602
      %6243 = vst [vmem:[%s172 + $0x8a0] sm:$0xf] %v5603
      %6244 = vst [vmem:[%s172 + $0x8a4] sm:$0xf] %v5604
      %6245 = vst [vmem:[%s172 + $0x8a8] sm:$0xf] %v5605
      %6246 = vst [vmem:[%s172 + $0x8ac] sm:$0xf] %v5606
      %6247 = vst [vmem:[%s172 + $0x8b0] sm:$0xf] %v5607
      %6248 = vst [vmem:[%s172 + $0x8b4] sm:$0xf] %v5608
      %6249 = vst [vmem:[%s172 + $0x8b8] sm:$0xf] %v5609
      %6250 = vst [vmem:[%s172 + $0x8bc] sm:$0xf] %v5610
      %6251 = vst [vmem:[%s172 + $0x8c0] sm:$0xf] %v5611
      %6252 = vst [vmem:[%s172 + $0x8c4] sm:$0xf] %v5612
      %6253 = vst [vmem:[%s172 + $0x8c8] sm:$0xf] %v5613
      %6254 = vst [vmem:[%s172 + $0x8cc] sm:$0xf] %v5614
      %6255 = vst [vmem:[%s172 + $0x8d0] sm:$0xf] %v5615
      %6256 = vst [vmem:[%s172 + $0x8d4] sm:$0xf] %v5616
      %6257 = vst [vmem:[%s172 + $0x8d8] sm:$0xf] %v5617
      %6258 = vst [vmem:[%s172 + $0x8dc] sm:$0xf] %v5618
      %6259 = vst [vmem:[%s172 + $0x8e0] sm:$0xf] %v5619
      %6260 = vst [vmem:[%s172 + $0x8e4] sm:$0xf] %v5620
      %6261 = vst [vmem:[%s172 + $0x8e8] sm:$0xf] %v5621
      %6262 = vst [vmem:[%s172 + $0x8ec] sm:$0xf] %v5622
      %6263 = vst [vmem:[%s172 + $0x8f0] sm:$0xf] %v5623
      %6264 = vst [vmem:[%s172 + $0x8f4] sm:$0xf] %v5624
      %6265 = vst [vmem:[%s172 + $0x8f8] sm:$0xf] %v5625
      %6266 = vst [vmem:[%s172 + $0x8fc] sm:$0xf] %v5626
      %6267 = vst [vmem:[%s172 + $0x900] sm:$0xf] %v5627
      %6268 = vst [vmem:[%s172 + $0x904] sm:$0xf] %v5628
      %6269 = vst [vmem:[%s172 + $0x908] sm:$0xf] %v5629
      %6270 = vst [vmem:[%s172 + $0x90c] sm:$0xf] %v5630
      %6271 = vst [vmem:[%s172 + $0x910] sm:$0xf] %v5631
      %6272 = vst [vmem:[%s172 + $0x914] sm:$0xf] %v5632
      %6273 = vst [vmem:[%s172 + $0x918] sm:$0xf] %v5633
      %6274 = vst [vmem:[%s172 + $0x91c] sm:$0xf] %v5634
      %6275 = vst [vmem:[%s172 + $0x920] sm:$0xf] %v5635
      %6276 = vst [vmem:[%s172 + $0x924] sm:$0xf] %v5636
      %6277 = vst [vmem:[%s172 + $0x928] sm:$0xf] %v5637
      %6278 = vst [vmem:[%s172 + $0x92c] sm:$0xf] %v5638
      %6279 = vst [vmem:[%s172 + $0x930] sm:$0xf] %v5639
      %6280 = vst [vmem:[%s172 + $0x934] sm:$0xf] %v5640
      %6281 = vst [vmem:[%s172 + $0x938] sm:$0xf] %v5641
      %6282 = vst [vmem:[%s172 + $0x93c] sm:$0xf] %v5642
      %6283 = vst [vmem:[%s172 + $0x940] sm:$0xf] %v5643
      %6284 = vst [vmem:[%s172 + $0x944] sm:$0xf] %v5644
      %6285 = vst [vmem:[%s172 + $0x948] sm:$0xf] %v5645
      %6286 = vst [vmem:[%s172 + $0x94c] sm:$0xf] %v5646
      %6287 = vst [vmem:[%s172 + $0x950] sm:$0xf] %v5647
      %6288 = vst [vmem:[%s172 + $0x954] sm:$0xf] %v5648
      %6289 = vst [vmem:[%s172 + $0x958] sm:$0xf] %v5649
      %6290 = vst [vmem:[%s172 + $0x95c] sm:$0xf] %v5650
      %6291 = vst [vmem:[%s172 + $0x960] sm:$0xf] %v5651
      %6292 = vst [vmem:[%s172 + $0x964] sm:$0xf] %v5652
      %6293 = vst [vmem:[%s172 + $0x968] sm:$0xf] %v5653
      %6294 = vst [vmem:[%s172 + $0x96c] sm:$0xf] %v5654
      %6295 = vst [vmem:[%s172 + $0x970] sm:$0xf] %v5655
      %6296 = vst [vmem:[%s172 + $0x974] sm:$0xf] %v5656
      %6297 = vst [vmem:[%s172 + $0x978] sm:$0xf] %v5657
      %6298 = vst [vmem:[%s172 + $0x97c] sm:$0xf] %v5658
      %6299 = vst [vmem:[%s172 + $0x980] sm:$0xf] %v5659
      %6300 = vst [vmem:[%s172 + $0x984] sm:$0xf] %v5660
      %6301 = vst [vmem:[%s172 + $0x988] sm:$0xf] %v5661
      %6302 = vst [vmem:[%s172 + $0x98c] sm:$0xf] %v5662
      %6303 = vst [vmem:[%s172 + $0x990] sm:$0xf] %v5663
      %6304 = vst [vmem:[%s172 + $0x994] sm:$0xf] %v5664
      %6305 = vst [vmem:[%s172 + $0x998] sm:$0xf] %v5665
      %6306 = vst [vmem:[%s172 + $0x99c] sm:$0xf] %v5666
      %6307 = vst [vmem:[%s172 + $0x9a0] sm:$0xf] %v5667
      %6308 = vst [vmem:[%s172 + $0x9a4] sm:$0xf] %v5668
      %6309 = vst [vmem:[%s172 + $0x9a8] sm:$0xf] %v5669
      %6310 = vst [vmem:[%s172 + $0x9ac] sm:$0xf] %v5670
      %6311 = vst [vmem:[%s172 + $0x9b0] sm:$0xf] %v5671
      %6312 = vst [vmem:[%s172 + $0x9b4] sm:$0xf] %v5672
      %6313 = vst [vmem:[%s172 + $0x9b8] sm:$0xf] %v5673
      %6314 = vst [vmem:[%s172 + $0x9bc] sm:$0xf] %v5674
      %6315 = vst [vmem:[%s172 + $0x9c0] sm:$0xf] %v5675
      %6316 = vst [vmem:[%s172 + $0x9c4] sm:$0xf] %v5676
      %6317 = vst [vmem:[%s172 + $0x9c8] sm:$0xf] %v5677
      %6318 = vst [vmem:[%s172 + $0x9cc] sm:$0xf] %v5678
      %6319 = vst [vmem:[%s172 + $0x9d0] sm:$0xf] %v5679
      %6320 = vst [vmem:[%s172 + $0x9d4] sm:$0xf] %v5680
      %6321 = vst [vmem:[%s172 + $0x9d8] sm:$0xf] %v5681
      %6322 = vst [vmem:[%s172 + $0x9dc] sm:$0xf] %v5682
      %6323 = vst [vmem:[%s172 + $0x9e0] sm:$0xf] %v5683
      %6324 = vst [vmem:[%s172 + $0x9e4] sm:$0xf] %v5684
      %6325 = vst [vmem:[%s172 + $0x9e8] sm:$0xf] %v5685
      %6326 = vst [vmem:[%s172 + $0x9ec] sm:$0xf] %v5686
      %6327 = vst [vmem:[%s172 + $0x9f0] sm:$0xf] %v5687
      %6328 = vst [vmem:[%s172 + $0x9f4] sm:$0xf] %v5688
      %6329 = vst [vmem:[%s172 + $0x9f8] sm:$0xf] %v5689
      %6330 = vst [vmem:[%s172 + $0x9fc] sm:$0xf] %v5690
      %s6331 = smul.u32 640, %s14
      %p6332 = scmp.lt.s32.totalorder %s6331, 1279
      %s6333 = scalar_select %p6332, %s6331, 1279
      %s6334 = smul.addr %s6333, 4
      %s6335 = scalar_lea.vmem %s3, %s6334
      // Predicated region
      $region33: #{_lambda_.5} parent=31 // pred_check
        %p6336 = pneg %p100
      $region34: #{_lambda_.5} parent=31 // pred_check_branch
        %6338 = sbr.rel (%p6336) target = $region36
      $region35: #{_lambda_.5} parent=31 // pred_region
        %s6339 = smul.u32 640, %s14
      $region36: #{_lambda_.5} parent=31 // pred_fallthru
        _
    $region32: #{_lambda_.5} parent=5 // pred_fallthru
      _
    %p6340 = scmp.le.s32.totalorder 2, %s9
    // Predicated region
    $region37: #{_lambda_.5} parent=5 // pred_check
      %p6341 = pneg %p6340
    $region38: #{_lambda_.5} parent=5 // pred_check_branch
      %6343 = sbr.rel (%p6341) target = $region40
    $region39: #{_lambda_.5} parent=5 // pred_region
      %s6344 = ssub.s32 %s9, 2
      // Predicated region
      $region41: #{_lambda_.5} parent=39 // pred_check
        %p6345 = pneg %p106
      $region42: #{_lambda_.5} parent=39 // pred_check_branch
        %6347 = sbr.rel (%p6345) target = $region44
      $region43: #{_lambda_.5} parent=39 // pred_region
        %s6348 = smul.u32 640, %s15
        %p6349 = scmp.lt.s32.totalorder %s6348, 1279
        %s6350 = scalar_select %p6349, %s6348, 1279
        %s6351 = smul.addr %s6350, 4
        %s6352 = scalar_lea.vmem %s3, %s6351
      $region44: #{_lambda_.5} parent=39 // pred_fallthru
        _
    $region40: #{_lambda_.5} parent=5 // pred_fallthru
      _
  $region6: #{_lambda_.5} parent=0 // loop_footer
    %s13 = sadd.s32 1, %s9
  $region7: #{_lambda_.5} parent=0 // loop_footer_branch
    %8 = sbr.rel target = $region3
  $region8: #{_lambda_.5} parent=0 // loop_exit
    _

// kernel: _lambda_.6
$region0: #{_lambda_.6}
  #allocation0 [shape = 'u32[]', space=smem, size = 0x4, offset = 0x4, fixed_abs, tag = 'smem constant byte address 0x4 - core index']
  #allocation1 [shape = 'u32[72,128]{1,0:T(1,128)}', space=vmem, size = 0x9000, scoped, tag = 'internal scratch']
  %s0 = inlined_call_operand.vmem [shape: bf16[432,1408], index: 0, kind: input, shape index: {}]
  %s1 = inlined_call_operand.vmem [shape: bf16[1408,128], index: 1, kind: input, shape index: {}]
  %s2 = inlined_call_operand.vmem [shape: f32[1,128], index: 2, kind: input, shape index: {}]
  %s3 = inlined_call_operand.vmem [shape: bf16[432,128], index: 3, kind: output, shape index: {}]
  %s4 = sld [smem:[#allocation0]]
  $region22: #{_lambda_.6} parent=0
    _
  %s6 = ssub.s32 1, %s4
  %s7 = scalar_select 0, %s6, %s4
  // Predicated region
  $region2: #{_lambda_.6} parent=0 // pred_check
    _
  $region3: #{_lambda_.6} parent=0 // pred_check_branch
    %9 = sbr.rel (0) target = $region5
  $region4: #{_lambda_.6} parent=0 // pred_region
    _
  $region5: #{_lambda_.6} parent=0 // pred_fallthru
    _
  // Predicated region
  $region6: #{_lambda_.6} parent=0 // pred_check
    _
  $region7: #{_lambda_.6} parent=0 // pred_check_branch
    %11 = sbr.rel (0) target = $region9
  $region8: #{_lambda_.6} parent=0 // pred_region
    _
  $region9: #{_lambda_.6} parent=0 // pred_fallthru
    _
  // Predicated region
  $region10: #{_lambda_.6} parent=0 // pred_check
    _
  $region11: #{_lambda_.6} parent=0 // pred_check_branch
    %13 = sbr.rel (0) target = $region13
  $region12: #{_lambda_.6} parent=0 // pred_region
    _
  $region13: #{_lambda_.6} parent=0 // pred_fallthru
    _
  %v14 = vld [vmem:[%s0] sm:$0xff]
  %v15 = vld [vmem:[%s0 + $0x8] sm:$0xff]
  %v16 = vld [vmem:[%s0 + $0x10] sm:$0xff]
  %v17 = vld [vmem:[%s0 + $0x18] sm:$0xff]
  %v18 = vld [vmem:[%s0 + $0x20] sm:$0xff]
  %v19 = vld [vmem:[%s0 + $0x28] sm:$0xf]
  %v20 = vld [vmem:[%s0 + $0x2c] sm:$0xff]
  %v21 = vld [vmem:[%s0 + $0x34] sm:$0xff]
  %v22 = vld [vmem:[%s0 + $0x3c] sm:$0xff]
  %v23 = vld [vmem:[%s0 + $0x44] sm:$0xff]
  %v24 = vld [vmem:[%s0 + $0x4c] sm:$0xff]
  %v25 = vld [vmem:[%s0 + $0x54] sm:$0xf]
  %v26 = vld [vmem:[%s0 + $0x58] sm:$0xff]
  %v27 = vld [vmem:[%s0 + $0x60] sm:$0xff]
  %v28 = vld [vmem:[%s0 + $0x68] sm:$0xff]
  %v29 = vld [vmem:[%s0 + $0x70] sm:$0xff]
  %v30 = vld [vmem:[%s0 + $0x78] sm:$0xff]
  %v31 = vld [vmem:[%s0 + $0x80] sm:$0xf]
  %v32 = vld [vmem:[%s0 + $0x84] sm:$0xff]
  %v33 = vld [vmem:[%s0 + $0x8c] sm:$0xff]
  %v34 = vld [vmem:[%s0 + $0x94] sm:$0xff]
  %v35 = vld [vmem:[%s0 + $0x9c] sm:$0xff]
  %v36 = vld [vmem:[%s0 + $0xa4] sm:$0xff]
  %v37 = vld [vmem:[%s0 + $0xac] sm:$0xf]
  %v38 = vld [vmem:[%s0 + $0xb0] sm:$0xff]
  %v39 = vld [vmem:[%s0 + $0xb8] sm:$0xff]
  %v40 = vld [vmem:[%s0 + $0xc0] sm:$0xff]
  %v41 = vld [vmem:[%s0 + $0xc8] sm:$0xff]
  %v42 = vld [vmem:[%s0 + $0xd0] sm:$0xff]
  %v43 = vld [vmem:[%s0 + $0xd8] sm:$0xf]
  %v44 = vld [vmem:[%s0 + $0xdc] sm:$0xff]
  %v45 = vld [vmem:[%s0 + $0xe4] sm:$0xff]
  %v46 = vld [vmem:[%s0 + $0xec] sm:$0xff]
  %v47 = vld [vmem:[%s0 + $0xf4] sm:$0xff]
  %v48 = vld [vmem:[%s0 + $0xfc] sm:$0xff]
  %v49 = vld [vmem:[%s0 + $0x104] sm:$0xf]
  %v50 = vld [vmem:[%s0 + $0x108] sm:$0xff]
  %v51 = vld [vmem:[%s0 + $0x110] sm:$0xff]
  %v52 = vld [vmem:[%s0 + $0x118] sm:$0xff]
  %v53 = vld [vmem:[%s0 + $0x120] sm:$0xff]
  %v54 = vld [vmem:[%s0 + $0x128] sm:$0xff]
  %v55 = vld [vmem:[%s0 + $0x130] sm:$0xf]
  %v56 = vld [vmem:[%s0 + $0x134] sm:$0xff]
  %v57 = vld [vmem:[%s0 + $0x13c] sm:$0xff]
  %v58 = vld [vmem:[%s0 + $0x144] sm:$0xff]
  %v59 = vld [vmem:[%s0 + $0x14c] sm:$0xff]
  %v60 = vld [vmem:[%s0 + $0x154] sm:$0xff]
  %v61 = vld [vmem:[%s0 + $0x15c] sm:$0xf]
  %v62 = vld [vmem:[%s0 + $0x160] sm:$0xff]
  %v63 = vld [vmem:[%s0 + $0x168] sm:$0xff]
  %v64 = vld [vmem:[%s0 + $0x170] sm:$0xff]
  %v65 = vld [vmem:[%s0 + $0x178] sm:$0xff]
  %v66 = vld [vmem:[%s0 + $0x180] sm:$0xff]
  %v67 = vld [vmem:[%s0 + $0x188] sm:$0xf]
  %v68 = vld [vmem:[%s0 + $0x18c] sm:$0xff]
  %v69 = vld [vmem:[%s0 + $0x194] sm:$0xff]
  %v70 = vld [vmem:[%s0 + $0x19c] sm:$0xff]
  %v71 = vld [vmem:[%s0 + $0x1a4] sm:$0xff]
  %v72 = vld [vmem:[%s0 + $0x1ac] sm:$0xff]
  %v73 = vld [vmem:[%s0 + $0x1b4] sm:$0xf]
  %v74 = vld [vmem:[%s0 + $0x1b8] sm:$0xff]
  %v75 = vld [vmem:[%s0 + $0x1c0] sm:$0xff]
  %v76 = vld [vmem:[%s0 + $0x1c8] sm:$0xff]
  %v77 = vld [vmem:[%s0 + $0x1d0] sm:$0xff]
  %v78 = vld [vmem:[%s0 + $0x1d8] sm:$0xff]
  %v79 = vld [vmem:[%s0 + $0x1e0] sm:$0xf]
  %v80 = vld [vmem:[%s0 + $0x1e4] sm:$0xff]
  %v81 = vld [vmem:[%s0 + $0x1ec] sm:$0xff]
  %v82 = vld [vmem:[%s0 + $0x1f4] sm:$0xff]
  %v83 = vld [vmem:[%s0 + $0x1fc] sm:$0xff]
  %v84 = vld [vmem:[%s0 + $0x204] sm:$0xff]
  %v85 = vld [vmem:[%s0 + $0x20c] sm:$0xf]
  %v86 = vld [vmem:[%s0 + $0x210] sm:$0xff]
  %v87 = vld [vmem:[%s0 + $0x218] sm:$0xff]
  %v88 = vld [vmem:[%s0 + $0x220] sm:$0xff]
  %v89 = vld [vmem:[%s0 + $0x228] sm:$0xff]
  %v90 = vld [vmem:[%s0 + $0x230] sm:$0xff]
  %v91 = vld [vmem:[%s0 + $0x238] sm:$0xf]
  %v92 = vld [vmem:[%s0 + $0x23c] sm:$0xff]
  %v93 = vld [vmem:[%s0 + $0x244] sm:$0xff]
  %v94 = vld [vmem:[%s0 + $0x24c] sm:$0xff]
  %v95 = vld [vmem:[%s0 + $0x254] sm:$0xff]
  %v96 = vld [vmem:[%s0 + $0x25c] sm:$0xff]
  %v97 = vld [vmem:[%s0 + $0x264] sm:$0xf]
  %v98 = vld [vmem:[%s0 + $0x268] sm:$0xff]
  %v99 = vld [vmem:[%s0 + $0x270] sm:$0xff]
  %v100 = vld [vmem:[%s0 + $0x278] sm:$0xff]
  %v101 = vld [vmem:[%s0 + $0x280] sm:$0xff]
  %v102 = vld [vmem:[%s0 + $0x288] sm:$0xff]
  %v103 = vld [vmem:[%s0 + $0x290] sm:$0xf]
  %v104 = vld [vmem:[%s0 + $0x294] sm:$0xff]
  %v105 = vld [vmem:[%s0 + $0x29c] sm:$0xff]
  %v106 = vld [vmem:[%s0 + $0x2a4] sm:$0xff]
  %v107 = vld [vmem:[%s0 + $0x2ac] sm:$0xff]
  %v108 = vld [vmem:[%s0 + $0x2b4] sm:$0xff]
  %v109 = vld [vmem:[%s0 + $0x2bc] sm:$0xf]
  %v110 = vld [vmem:[%s0 + $0x2c0] sm:$0xff]
  %v111 = vld [vmem:[%s0 + $0x2c8] sm:$0xff]
  %v112 = vld [vmem:[%s0 + $0x2d0] sm:$0xff]
  %v113 = vld [vmem:[%s0 + $0x2d8] sm:$0xff]
  %v114 = vld [vmem:[%s0 + $0x2e0] sm:$0xff]
  %v115 = vld [vmem:[%s0 + $0x2e8] sm:$0xf]
  %v116 = vld [vmem:[%s0 + $0x2ec] sm:$0xff]
  %v117 = vld [vmem:[%s0 + $0x2f4] sm:$0xff]
  %v118 = vld [vmem:[%s0 + $0x2fc] sm:$0xff]
  %v119 = vld [vmem:[%s0 + $0x304] sm:$0xff]
  %v120 = vld [vmem:[%s0 + $0x30c] sm:$0xff]
  %v121 = vld [vmem:[%s0 + $0x314] sm:$0xf]
  %v122 = vld [vmem:[%s0 + $0x318] sm:$0xff]
  %v123 = vld [vmem:[%s0 + $0x320] sm:$0xff]
  %v124 = vld [vmem:[%s0 + $0x328] sm:$0xff]
  %v125 = vld [vmem:[%s0 + $0x330] sm:$0xff]
  %v126 = vld [vmem:[%s0 + $0x338] sm:$0xff]
  %v127 = vld [vmem:[%s0 + $0x340] sm:$0xf]
  %v128 = vld [vmem:[%s0 + $0x344] sm:$0xff]
  %v129 = vld [vmem:[%s0 + $0x34c] sm:$0xff]
  %v130 = vld [vmem:[%s0 + $0x354] sm:$0xff]
  %v131 = vld [vmem:[%s0 + $0x35c] sm:$0xff]
  %v132 = vld [vmem:[%s0 + $0x364] sm:$0xff]
  %v133 = vld [vmem:[%s0 + $0x36c] sm:$0xf]
  %v134 = vld [vmem:[%s0 + $0x370] sm:$0xff]
  %v135 = vld [vmem:[%s0 + $0x378] sm:$0xff]
  %v136 = vld [vmem:[%s0 + $0x380] sm:$0xff]
  %v137 = vld [vmem:[%s0 + $0x388] sm:$0xff]
  %v138 = vld [vmem:[%s0 + $0x390] sm:$0xff]
  %v139 = vld [vmem:[%s0 + $0x398] sm:$0xf]
  %v140 = vld [vmem:[%s0 + $0x39c] sm:$0xff]
  %v141 = vld [vmem:[%s0 + $0x3a4] sm:$0xff]
  %v142 = vld [vmem:[%s0 + $0x3ac] sm:$0xff]
  %v143 = vld [vmem:[%s0 + $0x3b4] sm:$0xff]
  %v144 = vld [vmem:[%s0 + $0x3bc] sm:$0xff]
  %v145 = vld [vmem:[%s0 + $0x3c4] sm:$0xf]
  %v146 = vld [vmem:[%s0 + $0x3c8] sm:$0xff]
  %v147 = vld [vmem:[%s0 + $0x3d0] sm:$0xff]
  %v148 = vld [vmem:[%s0 + $0x3d8] sm:$0xff]
  %v149 = vld [vmem:[%s0 + $0x3e0] sm:$0xff]
  %v150 = vld [vmem:[%s0 + $0x3e8] sm:$0xff]
  %v151 = vld [vmem:[%s0 + $0x3f0] sm:$0xf]
  %v152 = vld [vmem:[%s0 + $0x3f4] sm:$0xff]
  %v153 = vld [vmem:[%s0 + $0x3fc] sm:$0xff]
  %v154 = vld [vmem:[%s0 + $0x404] sm:$0xff]
  %v155 = vld [vmem:[%s0 + $0x40c] sm:$0xff]
  %v156 = vld [vmem:[%s0 + $0x414] sm:$0xff]
  %v157 = vld [vmem:[%s0 + $0x41c] sm:$0xf]
  %v158 = vld [vmem:[%s0 + $0x420] sm:$0xff]
  %v159 = vld [vmem:[%s0 + $0x428] sm:$0xff]
  %v160 = vld [vmem:[%s0 + $0x430] sm:$0xff]
  %v161 = vld [vmem:[%s0 + $0x438] sm:$0xff]
  %v162 = vld [vmem:[%s0 + $0x440] sm:$0xff]
  %v163 = vld [vmem:[%s0 + $0x448] sm:$0xf]
  %v164 = vld [vmem:[%s0 + $0x44c] sm:$0xff]
  %v165 = vld [vmem:[%s0 + $0x454] sm:$0xff]
  %v166 = vld [vmem:[%s0 + $0x45c] sm:$0xff]
  %v167 = vld [vmem:[%s0 + $0x464] sm:$0xff]
  %v168 = vld [vmem:[%s0 + $0x46c] sm:$0xff]
  %v169 = vld [vmem:[%s0 + $0x474] sm:$0xf]
  %v170 = vld [vmem:[%s0 + $0x478] sm:$0xff]
  %v171 = vld [vmem:[%s0 + $0x480] sm:$0xff]
  %v172 = vld [vmem:[%s0 + $0x488] sm:$0xff]
  %v173 = vld [vmem:[%s0 + $0x490] sm:$0xff]
  %v174 = vld [vmem:[%s0 + $0x498] sm:$0xff]
  %v175 = vld [vmem:[%s0 + $0x4a0] sm:$0xf]
  %v176 = vld [vmem:[%s0 + $0x4a4] sm:$0xff]
  %v177 = vld [vmem:[%s0 + $0x4ac] sm:$0xff]
  %v178 = vld [vmem:[%s0 + $0x4b4] sm:$0xff]
  %v179 = vld [vmem:[%s0 + $0x4bc] sm:$0xff]
  %v180 = vld [vmem:[%s0 + $0x4c4] sm:$0xff]
  %v181 = vld [vmem:[%s0 + $0x4cc] sm:$0xf]
  %v182 = vld [vmem:[%s0 + $0x4d0] sm:$0xff]
  %v183 = vld [vmem:[%s0 + $0x4d8] sm:$0xff]
  %v184 = vld [vmem:[%s0 + $0x4e0] sm:$0xff]
  %v185 = vld [vmem:[%s0 + $0x4e8] sm:$0xff]
  %v186 = vld [vmem:[%s0 + $0x4f0] sm:$0xff]
  %v187 = vld [vmem:[%s0 + $0x4f8] sm:$0xf]
  %v188 = vld [vmem:[%s0 + $0x4fc] sm:$0xff]
  %v189 = vld [vmem:[%s0 + $0x504] sm:$0xff]
  %v190 = vld [vmem:[%s0 + $0x50c] sm:$0xff]
  %v191 = vld [vmem:[%s0 + $0x514] sm:$0xff]
  %v192 = vld [vmem:[%s0 + $0x51c] sm:$0xff]
  %v193 = vld [vmem:[%s0 + $0x524] sm:$0xf]
  %v194 = vld [vmem:[%s0 + $0x528] sm:$0xff]
  %v195 = vld [vmem:[%s0 + $0x530] sm:$0xff]
  %v196 = vld [vmem:[%s0 + $0x538] sm:$0xff]
  %v197 = vld [vmem:[%s0 + $0x540] sm:$0xff]
  %v198 = vld [vmem:[%s0 + $0x548] sm:$0xff]
  %v199 = vld [vmem:[%s0 + $0x550] sm:$0xf]
  %v200 = vld [vmem:[%s0 + $0x554] sm:$0xff]
  %v201 = vld [vmem:[%s0 + $0x55c] sm:$0xff]
  %v202 = vld [vmem:[%s0 + $0x564] sm:$0xff]
  %v203 = vld [vmem:[%s0 + $0x56c] sm:$0xff]
  %v204 = vld [vmem:[%s0 + $0x574] sm:$0xff]
  %v205 = vld [vmem:[%s0 + $0x57c] sm:$0xf]
  %v206 = vld [vmem:[%s0 + $0x580] sm:$0xff]
  %v207 = vld [vmem:[%s0 + $0x588] sm:$0xff]
  %v208 = vld [vmem:[%s0 + $0x590] sm:$0xff]
  %v209 = vld [vmem:[%s0 + $0x598] sm:$0xff]
  %v210 = vld [vmem:[%s0 + $0x5a0] sm:$0xff]
  %v211 = vld [vmem:[%s0 + $0x5a8] sm:$0xf]
  %v212 = vld [vmem:[%s0 + $0x5ac] sm:$0xff]
  %v213 = vld [vmem:[%s0 + $0x5b4] sm:$0xff]
  %v214 = vld [vmem:[%s0 + $0x5bc] sm:$0xff]
  %v215 = vld [vmem:[%s0 + $0x5c4] sm:$0xff]
  %v216 = vld [vmem:[%s0 + $0x5cc] sm:$0xff]
  %v217 = vld [vmem:[%s0 + $0x5d4] sm:$0xf]
  %v218 = vld [vmem:[%s0 + $0x5d8] sm:$0xff]
  %v219 = vld [vmem:[%s0 + $0x5e0] sm:$0xff]
  %v220 = vld [vmem:[%s0 + $0x5e8] sm:$0xff]
  %v221 = vld [vmem:[%s0 + $0x5f0] sm:$0xff]
  %v222 = vld [vmem:[%s0 + $0x5f8] sm:$0xff]
  %v223 = vld [vmem:[%s0 + $0x600] sm:$0xf]
  %v224 = vld [vmem:[%s0 + $0x604] sm:$0xff]
  %v225 = vld [vmem:[%s0 + $0x60c] sm:$0xff]
  %v226 = vld [vmem:[%s0 + $0x614] sm:$0xff]
  %v227 = vld [vmem:[%s0 + $0x61c] sm:$0xff]
  %v228 = vld [vmem:[%s0 + $0x624] sm:$0xff]
  %v229 = vld [vmem:[%s0 + $0x62c] sm:$0xf]
  %v230 = vld [vmem:[%s0 + $0x630] sm:$0xff]
  %v231 = vld [vmem:[%s0 + $0x638] sm:$0xff]
  %v232 = vld [vmem:[%s0 + $0x640] sm:$0xff]
  %v233 = vld [vmem:[%s0 + $0x648] sm:$0xff]
  %v234 = vld [vmem:[%s0 + $0x650] sm:$0xff]
  %v235 = vld [vmem:[%s0 + $0x658] sm:$0xf]
  %v236 = vld [vmem:[%s0 + $0x65c] sm:$0xff]
  %v237 = vld [vmem:[%s0 + $0x664] sm:$0xff]
  %v238 = vld [vmem:[%s0 + $0x66c] sm:$0xff]
  %v239 = vld [vmem:[%s0 + $0x674] sm:$0xff]
  %v240 = vld [vmem:[%s0 + $0x67c] sm:$0xff]
  %v241 = vld [vmem:[%s0 + $0x684] sm:$0xf]
  %v242 = vld [vmem:[%s0 + $0x688] sm:$0xff]
  %v243 = vld [vmem:[%s0 + $0x690] sm:$0xff]
  %v244 = vld [vmem:[%s0 + $0x698] sm:$0xff]
  %v245 = vld [vmem:[%s0 + $0x6a0] sm:$0xff]
  %v246 = vld [vmem:[%s0 + $0x6a8] sm:$0xff]
  %v247 = vld [vmem:[%s0 + $0x6b0] sm:$0xf]
  %v248 = vld [vmem:[%s0 + $0x6b4] sm:$0xff]
  %v249 = vld [vmem:[%s0 + $0x6bc] sm:$0xff]
  %v250 = vld [vmem:[%s0 + $0x6c4] sm:$0xff]
  %v251 = vld [vmem:[%s0 + $0x6cc] sm:$0xff]
  %v252 = vld [vmem:[%s0 + $0x6d4] sm:$0xff]
  %v253 = vld [vmem:[%s0 + $0x6dc] sm:$0xf]
  %v254 = vld [vmem:[%s0 + $0x6e0] sm:$0xff]
  %v255 = vld [vmem:[%s0 + $0x6e8] sm:$0xff]
  %v256 = vld [vmem:[%s0 + $0x6f0] sm:$0xff]
  %v257 = vld [vmem:[%s0 + $0x6f8] sm:$0xff]
  %v258 = vld [vmem:[%s0 + $0x700] sm:$0xff]
  %v259 = vld [vmem:[%s0 + $0x708] sm:$0xf]
  %v260 = vld [vmem:[%s0 + $0x70c] sm:$0xff]
  %v261 = vld [vmem:[%s0 + $0x714] sm:$0xff]
  %v262 = vld [vmem:[%s0 + $0x71c] sm:$0xff]
  %v263 = vld [vmem:[%s0 + $0x724] sm:$0xff]
  %v264 = vld [vmem:[%s0 + $0x72c] sm:$0xff]
  %v265 = vld [vmem:[%s0 + $0x734] sm:$0xf]
  %v266 = vld [vmem:[%s0 + $0x738] sm:$0xff]
  %v267 = vld [vmem:[%s0 + $0x740] sm:$0xff]
  %v268 = vld [vmem:[%s0 + $0x748] sm:$0xff]
  %v269 = vld [vmem:[%s0 + $0x750] sm:$0xff]
  %v270 = vld [vmem:[%s0 + $0x758] sm:$0xff]
  %v271 = vld [vmem:[%s0 + $0x760] sm:$0xf]
  %v272 = vld [vmem:[%s0 + $0x764] sm:$0xff]
  %v273 = vld [vmem:[%s0 + $0x76c] sm:$0xff]
  %v274 = vld [vmem:[%s0 + $0x774] sm:$0xff]
  %v275 = vld [vmem:[%s0 + $0x77c] sm:$0xff]
  %v276 = vld [vmem:[%s0 + $0x784] sm:$0xff]
  %v277 = vld [vmem:[%s0 + $0x78c] sm:$0xf]
  %v278 = vld [vmem:[%s0 + $0x790] sm:$0xff]
  %v279 = vld [vmem:[%s0 + $0x798] sm:$0xff]
  %v280 = vld [vmem:[%s0 + $0x7a0] sm:$0xff]
  %v281 = vld [vmem:[%s0 + $0x7a8] sm:$0xff]
  %v282 = vld [vmem:[%s0 + $0x7b0] sm:$0xff]
  %v283 = vld [vmem:[%s0 + $0x7b8] sm:$0xf]
  %v284 = vld [vmem:[%s0 + $0x7bc] sm:$0xff]
  %v285 = vld [vmem:[%s0 + $0x7c4] sm:$0xff]
  %v286 = vld [vmem:[%s0 + $0x7cc] sm:$0xff]
  %v287 = vld [vmem:[%s0 + $0x7d4] sm:$0xff]
  %v288 = vld [vmem:[%s0 + $0x7dc] sm:$0xff]
  %v289 = vld [vmem:[%s0 + $0x7e4] sm:$0xf]
  %v290 = vld [vmem:[%s0 + $0x7e8] sm:$0xff]
  %v291 = vld [vmem:[%s0 + $0x7f0] sm:$0xff]
  %v292 = vld [vmem:[%s0 + $0x7f8] sm:$0xff]
  %v293 = vld [vmem:[%s0 + $0x800] sm:$0xff]
  %v294 = vld [vmem:[%s0 + $0x808] sm:$0xff]
  %v295 = vld [vmem:[%s0 + $0x810] sm:$0xf]
  %v296 = vld [vmem:[%s0 + $0x814] sm:$0xff]
  %v297 = vld [vmem:[%s0 + $0x81c] sm:$0xff]
  %v298 = vld [vmem:[%s0 + $0x824] sm:$0xff]
  %v299 = vld [vmem:[%s0 + $0x82c] sm:$0xff]
  %v300 = vld [vmem:[%s0 + $0x834] sm:$0xff]
  %v301 = vld [vmem:[%s0 + $0x83c] sm:$0xf]
  %v302 = vld [vmem:[%s0 + $0x840] sm:$0xff]
  %v303 = vld [vmem:[%s0 + $0x848] sm:$0xff]
  %v304 = vld [vmem:[%s0 + $0x850] sm:$0xff]
  %v305 = vld [vmem:[%s0 + $0x858] sm:$0xff]
  %v306 = vld [vmem:[%s0 + $0x860] sm:$0xff]
  %v307 = vld [vmem:[%s0 + $0x868] sm:$0xf]
  %v308 = vld [vmem:[%s0 + $0x86c] sm:$0xff]
  %v309 = vld [vmem:[%s0 + $0x874] sm:$0xff]
  %v310 = vld [vmem:[%s0 + $0x87c] sm:$0xff]
  %v311 = vld [vmem:[%s0 + $0x884] sm:$0xff]
  %v312 = vld [vmem:[%s0 + $0x88c] sm:$0xff]
  %v313 = vld [vmem:[%s0 + $0x894] sm:$0xf]
  %v314 = vld [vmem:[%s0 + $0x898] sm:$0xff]
  %v315 = vld [vmem:[%s0 + $0x8a0] sm:$0xff]
  %v316 = vld [vmem:[%s0 + $0x8a8] sm:$0xff]
  %v317 = vld [vmem:[%s0 + $0x8b0] sm:$0xff]
  %v318 = vld [vmem:[%s0 + $0x8b8] sm:$0xff]
  %v319 = vld [vmem:[%s0 + $0x8c0] sm:$0xf]
  %v320 = vld [vmem:[%s0 + $0x8c4] sm:$0xff]
  %v321 = vld [vmem:[%s0 + $0x8cc] sm:$0xff]
  %v322 = vld [vmem:[%s0 + $0x8d4] sm:$0xff]
  %v323 = vld [vmem:[%s0 + $0x8dc] sm:$0xff]
  %v324 = vld [vmem:[%s0 + $0x8e4] sm:$0xff]
  %v325 = vld [vmem:[%s0 + $0x8ec] sm:$0xf]
  %v326 = vld [vmem:[%s0 + $0x8f0] sm:$0xff]
  %v327 = vld [vmem:[%s0 + $0x8f8] sm:$0xff]
  %v328 = vld [vmem:[%s0 + $0x900] sm:$0xff]
  %v329 = vld [vmem:[%s0 + $0x908] sm:$0xff]
  %v330 = vld [vmem:[%s0 + $0x910] sm:$0xff]
  %v331 = vld [vmem:[%s0 + $0x918] sm:$0xf]
  %v332 = vld [vmem:[%s0 + $0x91c] sm:$0xff]
  %v333 = vld [vmem:[%s0 + $0x924] sm:$0xff]
  %v334 = vld [vmem:[%s0 + $0x92c] sm:$0xff]
  %v335 = vld [vmem:[%s0 + $0x934] sm:$0xff]
  %v336 = vld [vmem:[%s0 + $0x93c] sm:$0xff]
  %v337 = vld [vmem:[%s0 + $0x944] sm:$0xf]
  %v338 = vld [vmem:[%s1] sm:$0xf]
  %v339 = vld [vmem:[%s1 + $0x4] sm:$0xf]
  %v340 = vld [vmem:[%s1 + $0x8] sm:$0xf]
  %v341 = vld [vmem:[%s1 + $0xc] sm:$0xf]
  %v342 = vld [vmem:[%s1 + $0x10] sm:$0xf]
  %v343 = vld [vmem:[%s1 + $0x14] sm:$0xf]
  %v344 = vld [vmem:[%s1 + $0x18] sm:$0xf]
  %v345 = vld [vmem:[%s1 + $0x1c] sm:$0xf]
  %v346 = vld [vmem:[%s1 + $0x20] sm:$0xf]
  %v347 = vld [vmem:[%s1 + $0x24] sm:$0xf]
  %v348 = vld [vmem:[%s1 + $0x28] sm:$0xf]
  %v349 = vld [vmem:[%s1 + $0x2c] sm:$0xf]
  %v350 = vld [vmem:[%s1 + $0x30] sm:$0xf]
  %v351 = vld [vmem:[%s1 + $0x34] sm:$0xf]
  %v352 = vld [vmem:[%s1 + $0x38] sm:$0xf]
  %v353 = vld [vmem:[%s1 + $0x3c] sm:$0xf]
  %v354 = vld [vmem:[%s1 + $0x40] sm:$0xf]
  %v355 = vld [vmem:[%s1 + $0x44] sm:$0xf]
  %v356 = vld [vmem:[%s1 + $0x48] sm:$0xf]
  %v357 = vld [vmem:[%s1 + $0x4c] sm:$0xf]
  %v358 = vld [vmem:[%s1 + $0x50] sm:$0xf]
  %v359 = vld [vmem:[%s1 + $0x54] sm:$0xf]
  %v360 = vld [vmem:[%s1 + $0x58] sm:$0xf]
  %v361 = vld [vmem:[%s1 + $0x5c] sm:$0xf]
  %v362 = vld [vmem:[%s1 + $0x60] sm:$0xf]
  %v363 = vld [vmem:[%s1 + $0x64] sm:$0xf]
  %v364 = vld [vmem:[%s1 + $0x68] sm:$0xf]
  %v365 = vld [vmem:[%s1 + $0x6c] sm:$0xf]
  %v366 = vld [vmem:[%s1 + $0x70] sm:$0xf]
  %v367 = vld [vmem:[%s1 + $0x74] sm:$0xf]
  %v368 = vld [vmem:[%s1 + $0x78] sm:$0xf]
  %v369 = vld [vmem:[%s1 + $0x7c] sm:$0xf]
  %v370 = vld [vmem:[%s1 + $0x80] sm:$0xf]
  %v371 = vld [vmem:[%s1 + $0x84] sm:$0xf]
  %v372 = vld [vmem:[%s1 + $0x88] sm:$0xf]
  %v373 = vld [vmem:[%s1 + $0x8c] sm:$0xf]
  %v374 = vld [vmem:[%s1 + $0x90] sm:$0xf]
  %v375 = vld [vmem:[%s1 + $0x94] sm:$0xf]
  %v376 = vld [vmem:[%s1 + $0x98] sm:$0xf]
  %v377 = vld [vmem:[%s1 + $0x9c] sm:$0xf]
  %v378 = vld [vmem:[%s1 + $0xa0] sm:$0xf]
  %v379 = vld [vmem:[%s1 + $0xa4] sm:$0xf]
  %v380 = vld [vmem:[%s1 + $0xa8] sm:$0xf]
  %v381 = vld [vmem:[%s1 + $0xac] sm:$0xf]
  %v382 = vld [vmem:[%s1 + $0xb0] sm:$0xf]
  %v383 = vld [vmem:[%s1 + $0xb4] sm:$0xf]
  %v384 = vld [vmem:[%s1 + $0xb8] sm:$0xf]
  %v385 = vld [vmem:[%s1 + $0xbc] sm:$0xf]
  %v386 = vld [vmem:[%s1 + $0xc0] sm:$0xf]
  %v387 = vld [vmem:[%s1 + $0xc4] sm:$0xf]
  %v388 = vld [vmem:[%s1 + $0xc8] sm:$0xf]
  %v389 = vld [vmem:[%s1 + $0xcc] sm:$0xf]
  %v390 = vld [vmem:[%s1 + $0xd0] sm:$0xf]
  %v391 = vld [vmem:[%s1 + $0xd4] sm:$0xf]
  %v392 = vld [vmem:[%s1 + $0xd8] sm:$0xf]
  %v393 = vld [vmem:[%s1 + $0xdc] sm:$0xf]
  %v394 = vld [vmem:[%s1 + $0xe0] sm:$0xf]
  %v395 = vld [vmem:[%s1 + $0xe4] sm:$0xf]
  %v396 = vld [vmem:[%s1 + $0xe8] sm:$0xf]
  %v397 = vld [vmem:[%s1 + $0xec] sm:$0xf]
  %v398 = vld [vmem:[%s1 + $0xf0] sm:$0xf]
  %v399 = vld [vmem:[%s1 + $0xf4] sm:$0xf]
  %v400 = vld [vmem:[%s1 + $0xf8] sm:$0xf]
  %v401 = vld [vmem:[%s1 + $0xfc] sm:$0xf]
  %v402 = vld [vmem:[%s1 + $0x100] sm:$0xf]
  %v403 = vld [vmem:[%s1 + $0x104] sm:$0xf]
  %v404 = vld [vmem:[%s1 + $0x108] sm:$0xf]
  %v405 = vld [vmem:[%s1 + $0x10c] sm:$0xf]
  %v406 = vld [vmem:[%s1 + $0x110] sm:$0xf]
  %v407 = vld [vmem:[%s1 + $0x114] sm:$0xf]
  %v408 = vld [vmem:[%s1 + $0x118] sm:$0xf]
  %v409 = vld [vmem:[%s1 + $0x11c] sm:$0xf]
  %v410 = vld [vmem:[%s1 + $0x120] sm:$0xf]
  %v411 = vld [vmem:[%s1 + $0x124] sm:$0xf]
  %v412 = vld [vmem:[%s1 + $0x128] sm:$0xf]
  %v413 = vld [vmem:[%s1 + $0x12c] sm:$0xf]
  %v414 = vld [vmem:[%s1 + $0x130] sm:$0xf]
  %v415 = vld [vmem:[%s1 + $0x134] sm:$0xf]
  %v416 = vld [vmem:[%s1 + $0x138] sm:$0xf]
  %v417 = vld [vmem:[%s1 + $0x13c] sm:$0xf]
  %v418 = vld [vmem:[%s1 + $0x140] sm:$0xf]
  %v419 = vld [vmem:[%s1 + $0x144] sm:$0xf]
  %v420 = vld [vmem:[%s1 + $0x148] sm:$0xf]
  %v421 = vld [vmem:[%s1 + $0x14c] sm:$0xf]
  %v422 = vld [vmem:[%s1 + $0x150] sm:$0xf]
  %v423 = vld [vmem:[%s1 + $0x154] sm:$0xf]
  %v424 = vld [vmem:[%s1 + $0x158] sm:$0xf]
  %v425 = vld [vmem:[%s1 + $0x15c] sm:$0xf]
  %v426 = vld [vmem:[%s1 + $0x160] sm:$0xf]
  %v427 = vld [vmem:[%s1 + $0x164] sm:$0xf]
  %v428 = vld [vmem:[%s1 + $0x168] sm:$0xf]
  %v429 = vld [vmem:[%s1 + $0x16c] sm:$0xf]
  %v430 = vld [vmem:[%s1 + $0x170] sm:$0xf]
  %v431 = vld [vmem:[%s1 + $0x174] sm:$0xf]
  %v432 = vld [vmem:[%s1 + $0x178] sm:$0xf]
  %v433 = vld [vmem:[%s1 + $0x17c] sm:$0xf]
  %v434 = vld [vmem:[%s1 + $0x180] sm:$0xf]
  %v435 = vld [vmem:[%s1 + $0x184] sm:$0xf]
  %v436 = vld [vmem:[%s1 + $0x188] sm:$0xf]
  %v437 = vld [vmem:[%s1 + $0x18c] sm:$0xf]
  %v438 = vld [vmem:[%s1 + $0x190] sm:$0xf]
  %v439 = vld [vmem:[%s1 + $0x194] sm:$0xf]
  %v440 = vld [vmem:[%s1 + $0x198] sm:$0xf]
  %v441 = vld [vmem:[%s1 + $0x19c] sm:$0xf]
  %v442 = vld [vmem:[%s1 + $0x1a0] sm:$0xf]
  %v443 = vld [vmem:[%s1 + $0x1a4] sm:$0xf]
  %v444 = vld [vmem:[%s1 + $0x1a8] sm:$0xf]
  %v445 = vld [vmem:[%s1 + $0x1ac] sm:$0xf]
  %v446 = vld [vmem:[%s1 + $0x1b0] sm:$0xf]
  %v447 = vld [vmem:[%s1 + $0x1b4] sm:$0xf]
  %v448 = vld [vmem:[%s1 + $0x1b8] sm:$0xf]
  %v449 = vld [vmem:[%s1 + $0x1bc] sm:$0xf]
  %v450 = vld [vmem:[%s1 + $0x1c0] sm:$0xf]
  %v451 = vld [vmem:[%s1 + $0x1c4] sm:$0xf]
  %v452 = vld [vmem:[%s1 + $0x1c8] sm:$0xf]
  %v453 = vld [vmem:[%s1 + $0x1cc] sm:$0xf]
  %v454 = vld [vmem:[%s1 + $0x1d0] sm:$0xf]
  %v455 = vld [vmem:[%s1 + $0x1d4] sm:$0xf]
  %v456 = vld [vmem:[%s1 + $0x1d8] sm:$0xf]
  %v457 = vld [vmem:[%s1 + $0x1dc] sm:$0xf]
  %v458 = vld [vmem:[%s1 + $0x1e0] sm:$0xf]
  %v459 = vld [vmem:[%s1 + $0x1e4] sm:$0xf]
  %v460 = vld [vmem:[%s1 + $0x1e8] sm:$0xf]
  %v461 = vld [vmem:[%s1 + $0x1ec] sm:$0xf]
  %v462 = vld [vmem:[%s1 + $0x1f0] sm:$0xf]
  %v463 = vld [vmem:[%s1 + $0x1f4] sm:$0xf]
  %v464 = vld [vmem:[%s1 + $0x1f8] sm:$0xf]
  %v465 = vld [vmem:[%s1 + $0x1fc] sm:$0xf]
  %v466 = vld [vmem:[%s1 + $0x200] sm:$0xf]
  %v467 = vld [vmem:[%s1 + $0x204] sm:$0xf]
  %v468 = vld [vmem:[%s1 + $0x208] sm:$0xf]
  %v469 = vld [vmem:[%s1 + $0x20c] sm:$0xf]
  %v470 = vld [vmem:[%s1 + $0x210] sm:$0xf]
  %v471 = vld [vmem:[%s1 + $0x214] sm:$0xf]
  %v472 = vld [vmem:[%s1 + $0x218] sm:$0xf]
  %v473 = vld [vmem:[%s1 + $0x21c] sm:$0xf]
  %v474 = vld [vmem:[%s1 + $0x220] sm:$0xf]
  %v475 = vld [vmem:[%s1 + $0x224] sm:$0xf]
  %v476 = vld [vmem:[%s1 + $0x228] sm:$0xf]
  %v477 = vld [vmem:[%s1 + $0x22c] sm:$0xf]
  %v478 = vld [vmem:[%s1 + $0x230] sm:$0xf]
  %v479 = vld [vmem:[%s1 + $0x234] sm:$0xf]
  %v480 = vld [vmem:[%s1 + $0x238] sm:$0xf]
  %v481 = vld [vmem:[%s1 + $0x23c] sm:$0xf]
  %v482 = vld [vmem:[%s1 + $0x240] sm:$0xf]
  %v483 = vld [vmem:[%s1 + $0x244] sm:$0xf]
  %v484 = vld [vmem:[%s1 + $0x248] sm:$0xf]
  %v485 = vld [vmem:[%s1 + $0x24c] sm:$0xf]
  %v486 = vld [vmem:[%s1 + $0x250] sm:$0xf]
  %v487 = vld [vmem:[%s1 + $0x254] sm:$0xf]
  %v488 = vld [vmem:[%s1 + $0x258] sm:$0xf]
  %v489 = vld [vmem:[%s1 + $0x25c] sm:$0xf]
  %v490 = vld [vmem:[%s1 + $0x260] sm:$0xf]
  %v491 = vld [vmem:[%s1 + $0x264] sm:$0xf]
  %v492 = vld [vmem:[%s1 + $0x268] sm:$0xf]
  %v493 = vld [vmem:[%s1 + $0x26c] sm:$0xf]
  %v494 = vld [vmem:[%s1 + $0x270] sm:$0xf]
  %v495 = vld [vmem:[%s1 + $0x274] sm:$0xf]
  %v496 = vld [vmem:[%s1 + $0x278] sm:$0xf]
  %v497 = vld [vmem:[%s1 + $0x27c] sm:$0xf]
  %v498 = vld [vmem:[%s1 + $0x280] sm:$0xf]
  %v499 = vld [vmem:[%s1 + $0x284] sm:$0xf]
  %v500 = vld [vmem:[%s1 + $0x288] sm:$0xf]
  %v501 = vld [vmem:[%s1 + $0x28c] sm:$0xf]
  %v502 = vld [vmem:[%s1 + $0x290] sm:$0xf]
  %v503 = vld [vmem:[%s1 + $0x294] sm:$0xf]
  %v504 = vld [vmem:[%s1 + $0x298] sm:$0xf]
  %v505 = vld [vmem:[%s1 + $0x29c] sm:$0xf]
  %v506 = vld [vmem:[%s1 + $0x2a0] sm:$0xf]
  %v507 = vld [vmem:[%s1 + $0x2a4] sm:$0xf]
  %v508 = vld [vmem:[%s1 + $0x2a8] sm:$0xf]
  %v509 = vld [vmem:[%s1 + $0x2ac] sm:$0xf]
  %v510 = vld [vmem:[%s1 + $0x2b0] sm:$0xf]
  %v511 = vld [vmem:[%s1 + $0x2b4] sm:$0xf]
  %v512 = vld [vmem:[%s1 + $0x2b8] sm:$0xf]
  %v513 = vld [vmem:[%s1 + $0x2bc] sm:$0xf]
  %v514 = vld [vmem:[%s2] sm:$0x1]
  %v516 = vperm.slane %v514, 0
  %v842 = vunpack.c.l.b16 %v14
  %v843 = vunpack.c.h.b16 %v14
  %v844 = vunpack.c.l.b16 %v15
  %v845 = vunpack.c.h.b16 %v15
  %v846 = vunpack.c.l.b16 %v16
  %v847 = vunpack.c.h.b16 %v16
  %v848 = vunpack.c.l.b16 %v17
  %v849 = vunpack.c.h.b16 %v17
  %v850 = vunpack.c.l.b16 %v18
  %v851 = vunpack.c.h.b16 %v18
  %v852 = vunpack.c.l.b16 %v19
  %v853 = vunpack.c.l.b16 %v20
  %v854 = vunpack.c.h.b16 %v20
  %v855 = vunpack.c.l.b16 %v21
  %v856 = vunpack.c.h.b16 %v21
  %v857 = vunpack.c.l.b16 %v22
  %v858 = vunpack.c.h.b16 %v22
  %v859 = vunpack.c.l.b16 %v23
  %v860 = vunpack.c.h.b16 %v23
  %v861 = vunpack.c.l.b16 %v24
  %v862 = vunpack.c.h.b16 %v24
  %v863 = vunpack.c.l.b16 %v25
  %v864 = vunpack.c.l.b16 %v26
  %v865 = vunpack.c.h.b16 %v26
  %v866 = vunpack.c.l.b16 %v27
  %v867 = vunpack.c.h.b16 %v27
  %v868 = vunpack.c.l.b16 %v28
  %v869 = vunpack.c.h.b16 %v28
  %v870 = vunpack.c.l.b16 %v29
  %v871 = vunpack.c.h.b16 %v29
  %v872 = vunpack.c.l.b16 %v30
  %v873 = vunpack.c.h.b16 %v30
  %v874 = vunpack.c.l.b16 %v31
  %v875 = vunpack.c.l.b16 %v32
  %v876 = vunpack.c.h.b16 %v32
  %v877 = vunpack.c.l.b16 %v33
  %v878 = vunpack.c.h.b16 %v33
  %v879 = vunpack.c.l.b16 %v34
  %v880 = vunpack.c.h.b16 %v34
  %v881 = vunpack.c.l.b16 %v35
  %v882 = vunpack.c.h.b16 %v35
  %v883 = vunpack.c.l.b16 %v36
  %v884 = vunpack.c.h.b16 %v36
  %v885 = vunpack.c.l.b16 %v37
  %v886 = vunpack.c.l.b16 %v38
  %v887 = vunpack.c.h.b16 %v38
  %v888 = vunpack.c.l.b16 %v39
  %v889 = vunpack.c.h.b16 %v39
  %v890 = vunpack.c.l.b16 %v40
  %v891 = vunpack.c.h.b16 %v40
  %v892 = vunpack.c.l.b16 %v41
  %v893 = vunpack.c.h.b16 %v41
  %v894 = vunpack.c.l.b16 %v42
  %v895 = vunpack.c.h.b16 %v42
  %v896 = vunpack.c.l.b16 %v43
  %v897 = vunpack.c.l.b16 %v44
  %v898 = vunpack.c.h.b16 %v44
  %v899 = vunpack.c.l.b16 %v45
  %v900 = vunpack.c.h.b16 %v45
  %v901 = vunpack.c.l.b16 %v46
  %v902 = vunpack.c.h.b16 %v46
  %v903 = vunpack.c.l.b16 %v47
  %v904 = vunpack.c.h.b16 %v47
  %v905 = vunpack.c.l.b16 %v48
  %v906 = vunpack.c.h.b16 %v48
  %v907 = vunpack.c.l.b16 %v49
  %v908 = vunpack.c.l.b16 %v50
  %v909 = vunpack.c.h.b16 %v50
  %v910 = vunpack.c.l.b16 %v51
  %v911 = vunpack.c.h.b16 %v51
  %v912 = vunpack.c.l.b16 %v52
  %v913 = vunpack.c.h.b16 %v52
  %v914 = vunpack.c.l.b16 %v53
  %v915 = vunpack.c.h.b16 %v53
  %v916 = vunpack.c.l.b16 %v54
  %v917 = vunpack.c.h.b16 %v54
  %v918 = vunpack.c.l.b16 %v55
  %v919 = vunpack.c.l.b16 %v56
  %v920 = vunpack.c.h.b16 %v56
  %v921 = vunpack.c.l.b16 %v57
  %v922 = vunpack.c.h.b16 %v57
  %v923 = vunpack.c.l.b16 %v58
  %v924 = vunpack.c.h.b16 %v58
  %v925 = vunpack.c.l.b16 %v59
  %v926 = vunpack.c.h.b16 %v59
  %v927 = vunpack.c.l.b16 %v60
  %v928 = vunpack.c.h.b16 %v60
  %v929 = vunpack.c.l.b16 %v61
  %v930 = vunpack.c.l.b16 %v62
  %v931 = vunpack.c.h.b16 %v62
  %v932 = vunpack.c.l.b16 %v63
  %v933 = vunpack.c.h.b16 %v63
  %v934 = vunpack.c.l.b16 %v64
  %v935 = vunpack.c.h.b16 %v64
  %v936 = vunpack.c.l.b16 %v65
  %v937 = vunpack.c.h.b16 %v65
  %v938 = vunpack.c.l.b16 %v66
  %v939 = vunpack.c.h.b16 %v66
  %v940 = vunpack.c.l.b16 %v67
  %v941 = vunpack.c.l.b16 %v68
  %v942 = vunpack.c.h.b16 %v68
  %v943 = vunpack.c.l.b16 %v69
  %v944 = vunpack.c.h.b16 %v69
  %v945 = vunpack.c.l.b16 %v70
  %v946 = vunpack.c.h.b16 %v70
  %v947 = vunpack.c.l.b16 %v71
  %v948 = vunpack.c.h.b16 %v71
  %v949 = vunpack.c.l.b16 %v72
  %v950 = vunpack.c.h.b16 %v72
  %v951 = vunpack.c.l.b16 %v73
  %v952 = vunpack.c.l.b16 %v74
  %v953 = vunpack.c.h.b16 %v74
  %v954 = vunpack.c.l.b16 %v75
  %v955 = vunpack.c.h.b16 %v75
  %v956 = vunpack.c.l.b16 %v76
  %v957 = vunpack.c.h.b16 %v76
  %v958 = vunpack.c.l.b16 %v77
  %v959 = vunpack.c.h.b16 %v77
  %v960 = vunpack.c.l.b16 %v78
  %v961 = vunpack.c.h.b16 %v78
  %v962 = vunpack.c.l.b16 %v79
  %v963 = vunpack.c.l.b16 %v80
  %v964 = vunpack.c.h.b16 %v80
  %v965 = vunpack.c.l.b16 %v81
  %v966 = vunpack.c.h.b16 %v81
  %v967 = vunpack.c.l.b16 %v82
  %v968 = vunpack.c.h.b16 %v82
  %v969 = vunpack.c.l.b16 %v83
  %v970 = vunpack.c.h.b16 %v83
  %v971 = vunpack.c.l.b16 %v84
  %v972 = vunpack.c.h.b16 %v84
  %v973 = vunpack.c.l.b16 %v85
  %v974 = vunpack.c.l.b16 %v86
  %v975 = vunpack.c.h.b16 %v86
  %v976 = vunpack.c.l.b16 %v87
  %v977 = vunpack.c.h.b16 %v87
  %v978 = vunpack.c.l.b16 %v88
  %v979 = vunpack.c.h.b16 %v88
  %v980 = vunpack.c.l.b16 %v89
  %v981 = vunpack.c.h.b16 %v89
  %v982 = vunpack.c.l.b16 %v90
  %v983 = vunpack.c.h.b16 %v90
  %v984 = vunpack.c.l.b16 %v91
  %v985 = vunpack.c.l.b16 %v92
  %v986 = vunpack.c.h.b16 %v92
  %v987 = vunpack.c.l.b16 %v93
  %v988 = vunpack.c.h.b16 %v93
  %v989 = vunpack.c.l.b16 %v94
  %v990 = vunpack.c.h.b16 %v94
  %v991 = vunpack.c.l.b16 %v95
  %v992 = vunpack.c.h.b16 %v95
  %v993 = vunpack.c.l.b16 %v96
  %v994 = vunpack.c.h.b16 %v96
  %v995 = vunpack.c.l.b16 %v97
  %v996 = vunpack.c.l.b16 %v98
  %v997 = vunpack.c.h.b16 %v98
  %v998 = vunpack.c.l.b16 %v99
  %v999 = vunpack.c.h.b16 %v99
  %v1000 = vunpack.c.l.b16 %v100
  %v1001 = vunpack.c.h.b16 %v100
  %v1002 = vunpack.c.l.b16 %v101
  %v1003 = vunpack.c.h.b16 %v101
  %v1004 = vunpack.c.l.b16 %v102
  %v1005 = vunpack.c.h.b16 %v102
  %v1006 = vunpack.c.l.b16 %v103
  %v1007 = vunpack.c.l.b16 %v104
  %v1008 = vunpack.c.h.b16 %v104
  %v1009 = vunpack.c.l.b16 %v105
  %v1010 = vunpack.c.h.b16 %v105
  %v1011 = vunpack.c.l.b16 %v106
  %v1012 = vunpack.c.h.b16 %v106
  %v1013 = vunpack.c.l.b16 %v107
  %v1014 = vunpack.c.h.b16 %v107
  %v1015 = vunpack.c.l.b16 %v108
  %v1016 = vunpack.c.h.b16 %v108
  %v1017 = vunpack.c.l.b16 %v109
  %v1018 = vunpack.c.l.b16 %v110
  %v1019 = vunpack.c.h.b16 %v110
  %v1020 = vunpack.c.l.b16 %v111
  %v1021 = vunpack.c.h.b16 %v111
  %v1022 = vunpack.c.l.b16 %v112
  %v1023 = vunpack.c.h.b16 %v112
  %v1024 = vunpack.c.l.b16 %v113
  %v1025 = vunpack.c.h.b16 %v113
  %v1026 = vunpack.c.l.b16 %v114
  %v1027 = vunpack.c.h.b16 %v114
  %v1028 = vunpack.c.l.b16 %v115
  %v1029 = vunpack.c.l.b16 %v116
  %v1030 = vunpack.c.h.b16 %v116
  %v1031 = vunpack.c.l.b16 %v117
  %v1032 = vunpack.c.h.b16 %v117
  %v1033 = vunpack.c.l.b16 %v118
  %v1034 = vunpack.c.h.b16 %v118
  %v1035 = vunpack.c.l.b16 %v119
  %v1036 = vunpack.c.h.b16 %v119
  %v1037 = vunpack.c.l.b16 %v120
  %v1038 = vunpack.c.h.b16 %v120
  %v1039 = vunpack.c.l.b16 %v121
  %v1040 = vunpack.c.l.b16 %v122
  %v1041 = vunpack.c.h.b16 %v122
  %v1042 = vunpack.c.l.b16 %v123
  %v1043 = vunpack.c.h.b16 %v123
  %v1044 = vunpack.c.l.b16 %v124
  %v1045 = vunpack.c.h.b16 %v124
  %v1046 = vunpack.c.l.b16 %v125
  %v1047 = vunpack.c.h.b16 %v125
  %v1048 = vunpack.c.l.b16 %v126
  %v1049 = vunpack.c.h.b16 %v126
  %v1050 = vunpack.c.l.b16 %v127
  %v1051 = vunpack.c.l.b16 %v128
  %v1052 = vunpack.c.h.b16 %v128
  %v1053 = vunpack.c.l.b16 %v129
  %v1054 = vunpack.c.h.b16 %v129
  %v1055 = vunpack.c.l.b16 %v130
  %v1056 = vunpack.c.h.b16 %v130
  %v1057 = vunpack.c.l.b16 %v131
  %v1058 = vunpack.c.h.b16 %v131
  %v1059 = vunpack.c.l.b16 %v132
  %v1060 = vunpack.c.h.b16 %v132
  %v1061 = vunpack.c.l.b16 %v133
  %v1062 = vunpack.c.l.b16 %v134
  %v1063 = vunpack.c.h.b16 %v134
  %v1064 = vunpack.c.l.b16 %v135
  %v1065 = vunpack.c.h.b16 %v135
  %v1066 = vunpack.c.l.b16 %v136
  %v1067 = vunpack.c.h.b16 %v136
  %v1068 = vunpack.c.l.b16 %v137
  %v1069 = vunpack.c.h.b16 %v137
  %v1070 = vunpack.c.l.b16 %v138
  %v1071 = vunpack.c.h.b16 %v138
  %v1072 = vunpack.c.l.b16 %v139
  %v1073 = vunpack.c.l.b16 %v140
  %v1074 = vunpack.c.h.b16 %v140
  %v1075 = vunpack.c.l.b16 %v141
  %v1076 = vunpack.c.h.b16 %v141
  %v1077 = vunpack.c.l.b16 %v142
  %v1078 = vunpack.c.h.b16 %v142
  %v1079 = vunpack.c.l.b16 %v143
  %v1080 = vunpack.c.h.b16 %v143
  %v1081 = vunpack.c.l.b16 %v144
  %v1082 = vunpack.c.h.b16 %v144
  %v1083 = vunpack.c.l.b16 %v145
  %v1084 = vunpack.c.l.b16 %v146
  %v1085 = vunpack.c.h.b16 %v146
  %v1086 = vunpack.c.l.b16 %v147
  %v1087 = vunpack.c.h.b16 %v147
  %v1088 = vunpack.c.l.b16 %v148
  %v1089 = vunpack.c.h.b16 %v148
  %v1090 = vunpack.c.l.b16 %v149
  %v1091 = vunpack.c.h.b16 %v149
  %v1092 = vunpack.c.l.b16 %v150
  %v1093 = vunpack.c.h.b16 %v150
  %v1094 = vunpack.c.l.b16 %v151
  %v1095 = vunpack.c.l.b16 %v152
  %v1096 = vunpack.c.h.b16 %v152
  %v1097 = vunpack.c.l.b16 %v153
  %v1098 = vunpack.c.h.b16 %v153
  %v1099 = vunpack.c.l.b16 %v154
  %v1100 = vunpack.c.h.b16 %v154
  %v1101 = vunpack.c.l.b16 %v155
  %v1102 = vunpack.c.h.b16 %v155
  %v1103 = vunpack.c.l.b16 %v156
  %v1104 = vunpack.c.h.b16 %v156
  %v1105 = vunpack.c.l.b16 %v157
  %v1106 = vunpack.c.l.b16 %v158
  %v1107 = vunpack.c.h.b16 %v158
  %v1108 = vunpack.c.l.b16 %v159
  %v1109 = vunpack.c.h.b16 %v159
  %v1110 = vunpack.c.l.b16 %v160
  %v1111 = vunpack.c.h.b16 %v160
  %v1112 = vunpack.c.l.b16 %v161
  %v1113 = vunpack.c.h.b16 %v161
  %v1114 = vunpack.c.l.b16 %v162
  %v1115 = vunpack.c.h.b16 %v162
  %v1116 = vunpack.c.l.b16 %v163
  %v1117 = vunpack.c.l.b16 %v164
  %v1118 = vunpack.c.h.b16 %v164
  %v1119 = vunpack.c.l.b16 %v165
  %v1120 = vunpack.c.h.b16 %v165
  %v1121 = vunpack.c.l.b16 %v166
  %v1122 = vunpack.c.h.b16 %v166
  %v1123 = vunpack.c.l.b16 %v167
  %v1124 = vunpack.c.h.b16 %v167
  %v1125 = vunpack.c.l.b16 %v168
  %v1126 = vunpack.c.h.b16 %v168
  %v1127 = vunpack.c.l.b16 %v169
  %v1128 = vunpack.c.l.b16 %v170
  %v1129 = vunpack.c.h.b16 %v170
  %v1130 = vunpack.c.l.b16 %v171
  %v1131 = vunpack.c.h.b16 %v171
  %v1132 = vunpack.c.l.b16 %v172
  %v1133 = vunpack.c.h.b16 %v172
  %v1134 = vunpack.c.l.b16 %v173
  %v1135 = vunpack.c.h.b16 %v173
  %v1136 = vunpack.c.l.b16 %v174
  %v1137 = vunpack.c.h.b16 %v174
  %v1138 = vunpack.c.l.b16 %v175
  %v1139 = vunpack.c.l.b16 %v176
  %v1140 = vunpack.c.h.b16 %v176
  %v1141 = vunpack.c.l.b16 %v177
  %v1142 = vunpack.c.h.b16 %v177
  %v1143 = vunpack.c.l.b16 %v178
  %v1144 = vunpack.c.h.b16 %v178
  %v1145 = vunpack.c.l.b16 %v179
  %v1146 = vunpack.c.h.b16 %v179
  %v1147 = vunpack.c.l.b16 %v180
  %v1148 = vunpack.c.h.b16 %v180
  %v1149 = vunpack.c.l.b16 %v181
  %v1150 = vunpack.c.l.b16 %v182
  %v1151 = vunpack.c.h.b16 %v182
  %v1152 = vunpack.c.l.b16 %v183
  %v1153 = vunpack.c.h.b16 %v183
  %v1154 = vunpack.c.l.b16 %v184
  %v1155 = vunpack.c.h.b16 %v184
  %v1156 = vunpack.c.l.b16 %v185
  %v1157 = vunpack.c.h.b16 %v185
  %v1158 = vunpack.c.l.b16 %v186
  %v1159 = vunpack.c.h.b16 %v186
  %v1160 = vunpack.c.l.b16 %v187
  %v1161 = vunpack.c.l.b16 %v188
  %v1162 = vunpack.c.h.b16 %v188
  %v1163 = vunpack.c.l.b16 %v189
  %v1164 = vunpack.c.h.b16 %v189
  %v1165 = vunpack.c.l.b16 %v190
  %v1166 = vunpack.c.h.b16 %v190
  %v1167 = vunpack.c.l.b16 %v191
  %v1168 = vunpack.c.h.b16 %v191
  %v1169 = vunpack.c.l.b16 %v192
  %v1170 = vunpack.c.h.b16 %v192
  %v1171 = vunpack.c.l.b16 %v193
  %v1172 = vunpack.c.l.b16 %v194
  %v1173 = vunpack.c.h.b16 %v194
  %v1174 = vunpack.c.l.b16 %v195
  %v1175 = vunpack.c.h.b16 %v195
  %v1176 = vunpack.c.l.b16 %v196
  %v1177 = vunpack.c.h.b16 %v196
  %v1178 = vunpack.c.l.b16 %v197
  %v1179 = vunpack.c.h.b16 %v197
  %v1180 = vunpack.c.l.b16 %v198
  %v1181 = vunpack.c.h.b16 %v198
  %v1182 = vunpack.c.l.b16 %v199
  %v1183 = vunpack.c.l.b16 %v200
  %v1184 = vunpack.c.h.b16 %v200
  %v1185 = vunpack.c.l.b16 %v201
  %v1186 = vunpack.c.h.b16 %v201
  %v1187 = vunpack.c.l.b16 %v202
  %v1188 = vunpack.c.h.b16 %v202
  %v1189 = vunpack.c.l.b16 %v203
  %v1190 = vunpack.c.h.b16 %v203
  %v1191 = vunpack.c.l.b16 %v204
  %v1192 = vunpack.c.h.b16 %v204
  %v1193 = vunpack.c.l.b16 %v205
  %v1194 = vunpack.c.l.b16 %v206
  %v1195 = vunpack.c.h.b16 %v206
  %v1196 = vunpack.c.l.b16 %v207
  %v1197 = vunpack.c.h.b16 %v207
  %v1198 = vunpack.c.l.b16 %v208
  %v1199 = vunpack.c.h.b16 %v208
  %v1200 = vunpack.c.l.b16 %v209
  %v1201 = vunpack.c.h.b16 %v209
  %v1202 = vunpack.c.l.b16 %v210
  %v1203 = vunpack.c.h.b16 %v210
  %v1204 = vunpack.c.l.b16 %v211
  %v1205 = vunpack.c.l.b16 %v212
  %v1206 = vunpack.c.h.b16 %v212
  %v1207 = vunpack.c.l.b16 %v213
  %v1208 = vunpack.c.h.b16 %v213
  %v1209 = vunpack.c.l.b16 %v214
  %v1210 = vunpack.c.h.b16 %v214
  %v1211 = vunpack.c.l.b16 %v215
  %v1212 = vunpack.c.h.b16 %v215
  %v1213 = vunpack.c.l.b16 %v216
  %v1214 = vunpack.c.h.b16 %v216
  %v1215 = vunpack.c.l.b16 %v217
  %v1216 = vunpack.c.l.b16 %v218
  %v1217 = vunpack.c.h.b16 %v218
  %v1218 = vunpack.c.l.b16 %v219
  %v1219 = vunpack.c.h.b16 %v219
  %v1220 = vunpack.c.l.b16 %v220
  %v1221 = vunpack.c.h.b16 %v220
  %v1222 = vunpack.c.l.b16 %v221
  %v1223 = vunpack.c.h.b16 %v221
  %v1224 = vunpack.c.l.b16 %v222
  %v1225 = vunpack.c.h.b16 %v222
  %v1226 = vunpack.c.l.b16 %v223
  %v1227 = vunpack.c.l.b16 %v224
  %v1228 = vunpack.c.h.b16 %v224
  %v1229 = vunpack.c.l.b16 %v225
  %v1230 = vunpack.c.h.b16 %v225
  %v1231 = vunpack.c.l.b16 %v226
  %v1232 = vunpack.c.h.b16 %v226
  %v1233 = vunpack.c.l.b16 %v227
  %v1234 = vunpack.c.h.b16 %v227
  %v1235 = vunpack.c.l.b16 %v228
  %v1236 = vunpack.c.h.b16 %v228
  %v1237 = vunpack.c.l.b16 %v229
  %v1238 = vunpack.c.l.b16 %v230
  %v1239 = vunpack.c.h.b16 %v230
  %v1240 = vunpack.c.l.b16 %v231
  %v1241 = vunpack.c.h.b16 %v231
  %v1242 = vunpack.c.l.b16 %v232
  %v1243 = vunpack.c.h.b16 %v232
  %v1244 = vunpack.c.l.b16 %v233
  %v1245 = vunpack.c.h.b16 %v233
  %v1246 = vunpack.c.l.b16 %v234
  %v1247 = vunpack.c.h.b16 %v234
  %v1248 = vunpack.c.l.b16 %v235
  %v1249 = vunpack.c.l.b16 %v236
  %v1250 = vunpack.c.h.b16 %v236
  %v1251 = vunpack.c.l.b16 %v237
  %v1252 = vunpack.c.h.b16 %v237
  %v1253 = vunpack.c.l.b16 %v238
  %v1254 = vunpack.c.h.b16 %v238
  %v1255 = vunpack.c.l.b16 %v239
  %v1256 = vunpack.c.h.b16 %v239
  %v1257 = vunpack.c.l.b16 %v240
  %v1258 = vunpack.c.h.b16 %v240
  %v1259 = vunpack.c.l.b16 %v241
  %v1260 = vunpack.c.l.b16 %v242
  %v1261 = vunpack.c.h.b16 %v242
  %v1262 = vunpack.c.l.b16 %v243
  %v1263 = vunpack.c.h.b16 %v243
  %v1264 = vunpack.c.l.b16 %v244
  %v1265 = vunpack.c.h.b16 %v244
  %v1266 = vunpack.c.l.b16 %v245
  %v1267 = vunpack.c.h.b16 %v245
  %v1268 = vunpack.c.l.b16 %v246
  %v1269 = vunpack.c.h.b16 %v246
  %v1270 = vunpack.c.l.b16 %v247
  %v1271 = vunpack.c.l.b16 %v248
  %v1272 = vunpack.c.h.b16 %v248
  %v1273 = vunpack.c.l.b16 %v249
  %v1274 = vunpack.c.h.b16 %v249
  %v1275 = vunpack.c.l.b16 %v250
  %v1276 = vunpack.c.h.b16 %v250
  %v1277 = vunpack.c.l.b16 %v251
  %v1278 = vunpack.c.h.b16 %v251
  %v1279 = vunpack.c.l.b16 %v252
  %v1280 = vunpack.c.h.b16 %v252
  %v1281 = vunpack.c.l.b16 %v253
  %v1282 = vunpack.c.l.b16 %v254
  %v1283 = vunpack.c.h.b16 %v254
  %v1284 = vunpack.c.l.b16 %v255
  %v1285 = vunpack.c.h.b16 %v255
  %v1286 = vunpack.c.l.b16 %v256
  %v1287 = vunpack.c.h.b16 %v256
  %v1288 = vunpack.c.l.b16 %v257
  %v1289 = vunpack.c.h.b16 %v257
  %v1290 = vunpack.c.l.b16 %v258
  %v1291 = vunpack.c.h.b16 %v258
  %v1292 = vunpack.c.l.b16 %v259
  %v1293 = vunpack.c.l.b16 %v260
  %v1294 = vunpack.c.h.b16 %v260
  %v1295 = vunpack.c.l.b16 %v261
  %v1296 = vunpack.c.h.b16 %v261
  %v1297 = vunpack.c.l.b16 %v262
  %v1298 = vunpack.c.h.b16 %v262
  %v1299 = vunpack.c.l.b16 %v263
  %v1300 = vunpack.c.h.b16 %v263
  %v1301 = vunpack.c.l.b16 %v264
  %v1302 = vunpack.c.h.b16 %v264
  %v1303 = vunpack.c.l.b16 %v265
  %v1304 = vunpack.c.l.b16 %v266
  %v1305 = vunpack.c.h.b16 %v266
  %v1306 = vunpack.c.l.b16 %v267
  %v1307 = vunpack.c.h.b16 %v267
  %v1308 = vunpack.c.l.b16 %v268
  %v1309 = vunpack.c.h.b16 %v268
  %v1310 = vunpack.c.l.b16 %v269
  %v1311 = vunpack.c.h.b16 %v269
  %v1312 = vunpack.c.l.b16 %v270
  %v1313 = vunpack.c.h.b16 %v270
  %v1314 = vunpack.c.l.b16 %v271
  %v1315 = vunpack.c.l.b16 %v272
  %v1316 = vunpack.c.h.b16 %v272
  %v1317 = vunpack.c.l.b16 %v273
  %v1318 = vunpack.c.h.b16 %v273
  %v1319 = vunpack.c.l.b16 %v274
  %v1320 = vunpack.c.h.b16 %v274
  %v1321 = vunpack.c.l.b16 %v275
  %v1322 = vunpack.c.h.b16 %v275
  %v1323 = vunpack.c.l.b16 %v276
  %v1324 = vunpack.c.h.b16 %v276
  %v1325 = vunpack.c.l.b16 %v277
  %v1326 = vunpack.c.l.b16 %v278
  %v1327 = vunpack.c.h.b16 %v278
  %v1328 = vunpack.c.l.b16 %v279
  %v1329 = vunpack.c.h.b16 %v279
  %v1330 = vunpack.c.l.b16 %v280
  %v1331 = vunpack.c.h.b16 %v280
  %v1332 = vunpack.c.l.b16 %v281
  %v1333 = vunpack.c.h.b16 %v281
  %v1334 = vunpack.c.l.b16 %v282
  %v1335 = vunpack.c.h.b16 %v282
  %v1336 = vunpack.c.l.b16 %v283
  %v1337 = vunpack.c.l.b16 %v284
  %v1338 = vunpack.c.h.b16 %v284
  %v1339 = vunpack.c.l.b16 %v285
  %v1340 = vunpack.c.h.b16 %v285
  %v1341 = vunpack.c.l.b16 %v286
  %v1342 = vunpack.c.h.b16 %v286
  %v1343 = vunpack.c.l.b16 %v287
  %v1344 = vunpack.c.h.b16 %v287
  %v1345 = vunpack.c.l.b16 %v288
  %v1346 = vunpack.c.h.b16 %v288
  %v1347 = vunpack.c.l.b16 %v289
  %v1348 = vunpack.c.l.b16 %v290
  %v1349 = vunpack.c.h.b16 %v290
  %v1350 = vunpack.c.l.b16 %v291
  %v1351 = vunpack.c.h.b16 %v291
  %v1352 = vunpack.c.l.b16 %v292
  %v1353 = vunpack.c.h.b16 %v292
  %v1354 = vunpack.c.l.b16 %v293
  %v1355 = vunpack.c.h.b16 %v293
  %v1356 = vunpack.c.l.b16 %v294
  %v1357 = vunpack.c.h.b16 %v294
  %v1358 = vunpack.c.l.b16 %v295
  %v1359 = vunpack.c.l.b16 %v296
  %v1360 = vunpack.c.h.b16 %v296
  %v1361 = vunpack.c.l.b16 %v297
  %v1362 = vunpack.c.h.b16 %v297
  %v1363 = vunpack.c.l.b16 %v298
  %v1364 = vunpack.c.h.b16 %v298
  %v1365 = vunpack.c.l.b16 %v299
  %v1366 = vunpack.c.h.b16 %v299
  %v1367 = vunpack.c.l.b16 %v300
  %v1368 = vunpack.c.h.b16 %v300
  %v1369 = vunpack.c.l.b16 %v301
  %v1370 = vunpack.c.l.b16 %v302
  %v1371 = vunpack.c.h.b16 %v302
  %v1372 = vunpack.c.l.b16 %v303
  %v1373 = vunpack.c.h.b16 %v303
  %v1374 = vunpack.c.l.b16 %v304
  %v1375 = vunpack.c.h.b16 %v304
  %v1376 = vunpack.c.l.b16 %v305
  %v1377 = vunpack.c.h.b16 %v305
  %v1378 = vunpack.c.l.b16 %v306
  %v1379 = vunpack.c.h.b16 %v306
  %v1380 = vunpack.c.l.b16 %v307
  %v1381 = vunpack.c.l.b16 %v308
  %v1382 = vunpack.c.h.b16 %v308
  %v1383 = vunpack.c.l.b16 %v309
  %v1384 = vunpack.c.h.b16 %v309
  %v1385 = vunpack.c.l.b16 %v310
  %v1386 = vunpack.c.h.b16 %v310
  %v1387 = vunpack.c.l.b16 %v311
  %v1388 = vunpack.c.h.b16 %v311
  %v1389 = vunpack.c.l.b16 %v312
  %v1390 = vunpack.c.h.b16 %v312
  %v1391 = vunpack.c.l.b16 %v313
  %v1392 = vunpack.c.l.b16 %v314
  %v1393 = vunpack.c.h.b16 %v314
  %v1394 = vunpack.c.l.b16 %v315
  %v1395 = vunpack.c.h.b16 %v315
  %v1396 = vunpack.c.l.b16 %v316
  %v1397 = vunpack.c.h.b16 %v316
  %v1398 = vunpack.c.l.b16 %v317
  %v1399 = vunpack.c.h.b16 %v317
  %v1400 = vunpack.c.l.b16 %v318
  %v1401 = vunpack.c.h.b16 %v318
  %v1402 = vunpack.c.l.b16 %v319
  %v1403 = vunpack.c.l.b16 %v320
  %v1404 = vunpack.c.h.b16 %v320
  %v1405 = vunpack.c.l.b16 %v321
  %v1406 = vunpack.c.h.b16 %v321
  %v1407 = vunpack.c.l.b16 %v322
  %v1408 = vunpack.c.h.b16 %v322
  %v1409 = vunpack.c.l.b16 %v323
  %v1410 = vunpack.c.h.b16 %v323
  %v1411 = vunpack.c.l.b16 %v324
  %v1412 = vunpack.c.h.b16 %v324
  %v1413 = vunpack.c.l.b16 %v325
  %v1414 = vunpack.c.l.b16 %v326
  %v1415 = vunpack.c.h.b16 %v326
  %v1416 = vunpack.c.l.b16 %v327
  %v1417 = vunpack.c.h.b16 %v327
  %v1418 = vunpack.c.l.b16 %v328
  %v1419 = vunpack.c.h.b16 %v328
  %v1420 = vunpack.c.l.b16 %v329
  %v1421 = vunpack.c.h.b16 %v329
  %v1422 = vunpack.c.l.b16 %v330
  %v1423 = vunpack.c.h.b16 %v330
  %v1424 = vunpack.c.l.b16 %v331
  %v1425 = vunpack.c.l.b16 %v332
  %v1426 = vunpack.c.h.b16 %v332
  %v1427 = vunpack.c.l.b16 %v333
  %v1428 = vunpack.c.h.b16 %v333
  %v1429 = vunpack.c.l.b16 %v334
  %v1430 = vunpack.c.h.b16 %v334
  %v1431 = vunpack.c.l.b16 %v335
  %v1432 = vunpack.c.h.b16 %v335
  %v1433 = vunpack.c.l.b16 %v336
  %v1434 = vunpack.c.h.b16 %v336
  %v1435 = vunpack.c.l.b16 %v337
  %v1436 = vpack.c.b16 %v853, %v842
  %v1437 = vpack.c.b16 %v854, %v843
  %v1438 = vpack.c.b16 %v855, %v844
  %v1439 = vpack.c.b16 %v856, %v845
  %v1440 = vpack.c.b16 %v857, %v846
  %v1441 = vpack.c.b16 %v858, %v847
  %v1442 = vpack.c.b16 %v859, %v848
  %v1443 = vpack.c.b16 %v860, %v849
  %v1444 = vpack.c.b16 %v861, %v850
  %v1445 = vpack.c.b16 %v862, %v851
  %v1446 = vpack.c.b16 %v863, %v852
  %v1447 = vpack.c.b16 %v875, %v864
  %v1448 = vpack.c.b16 %v876, %v865
  %v1449 = vpack.c.b16 %v877, %v866
  %v1450 = vpack.c.b16 %v878, %v867
  %v1451 = vpack.c.b16 %v879, %v868
  %v1452 = vpack.c.b16 %v880, %v869
  %v1453 = vpack.c.b16 %v881, %v870
  %v1454 = vpack.c.b16 %v882, %v871
  %v1455 = vpack.c.b16 %v883, %v872
  %v1456 = vpack.c.b16 %v884, %v873
  %v1457 = vpack.c.b16 %v885, %v874
  %v1458 = vpack.c.b16 %v897, %v886
  %v1459 = vpack.c.b16 %v898, %v887
  %v1460 = vpack.c.b16 %v899, %v888
  %v1461 = vpack.c.b16 %v900, %v889
  %v1462 = vpack.c.b16 %v901, %v890
  %v1463 = vpack.c.b16 %v902, %v891
  %v1464 = vpack.c.b16 %v903, %v892
  %v1465 = vpack.c.b16 %v904, %v893
  %v1466 = vpack.c.b16 %v905, %v894
  %v1467 = vpack.c.b16 %v906, %v895
  %v1468 = vpack.c.b16 %v907, %v896
  %v1469 = vpack.c.b16 %v919, %v908
  %v1470 = vpack.c.b16 %v920, %v909
  %v1471 = vpack.c.b16 %v921, %v910
  %v1472 = vpack.c.b16 %v922, %v911
  %v1473 = vpack.c.b16 %v923, %v912
  %v1474 = vpack.c.b16 %v924, %v913
  %v1475 = vpack.c.b16 %v925, %v914
  %v1476 = vpack.c.b16 %v926, %v915
  %v1477 = vpack.c.b16 %v927, %v916
  %v1478 = vpack.c.b16 %v928, %v917
  %v1479 = vpack.c.b16 %v929, %v918
  %v1480 = vpack.c.b16 %v941, %v930
  %v1481 = vpack.c.b16 %v942, %v931
  %v1482 = vpack.c.b16 %v943, %v932
  %v1483 = vpack.c.b16 %v944, %v933
  %v1484 = vpack.c.b16 %v945, %v934
  %v1485 = vpack.c.b16 %v946, %v935
  %v1486 = vpack.c.b16 %v947, %v936
  %v1487 = vpack.c.b16 %v948, %v937
  %v1488 = vpack.c.b16 %v949, %v938
  %v1489 = vpack.c.b16 %v950, %v939
  %v1490 = vpack.c.b16 %v951, %v940
  %v1491 = vpack.c.b16 %v963, %v952
  %v1492 = vpack.c.b16 %v964, %v953
  %v1493 = vpack.c.b16 %v965, %v954
  %v1494 = vpack.c.b16 %v966, %v955
  %v1495 = vpack.c.b16 %v967, %v956
  %v1496 = vpack.c.b16 %v968, %v957
  %v1497 = vpack.c.b16 %v969, %v958
  %v1498 = vpack.c.b16 %v970, %v959
  %v1499 = vpack.c.b16 %v971, %v960
  %v1500 = vpack.c.b16 %v972, %v961
  %v1501 = vpack.c.b16 %v973, %v962
  %v1502 = vpack.c.b16 %v985, %v974
  %v1503 = vpack.c.b16 %v986, %v975
  %v1504 = vpack.c.b16 %v987, %v976
  %v1505 = vpack.c.b16 %v988, %v977
  %v1506 = vpack.c.b16 %v989, %v978
  %v1507 = vpack.c.b16 %v990, %v979
  %v1508 = vpack.c.b16 %v991, %v980
  %v1509 = vpack.c.b16 %v992, %v981
  %v1510 = vpack.c.b16 %v993, %v982
  %v1511 = vpack.c.b16 %v994, %v983
  %v1512 = vpack.c.b16 %v995, %v984
  %v1513 = vpack.c.b16 %v1007, %v996
  %v1514 = vpack.c.b16 %v1008, %v997
  %v1515 = vpack.c.b16 %v1009, %v998
  %v1516 = vpack.c.b16 %v1010, %v999
  %v1517 = vpack.c.b16 %v1011, %v1000
  %v1518 = vpack.c.b16 %v1012, %v1001
  %v1519 = vpack.c.b16 %v1013, %v1002
  %v1520 = vpack.c.b16 %v1014, %v1003
  %v1521 = vpack.c.b16 %v1015, %v1004
  %v1522 = vpack.c.b16 %v1016, %v1005
  %v1523 = vpack.c.b16 %v1017, %v1006
  %v1524 = vpack.c.b16 %v1029, %v1018
  %v1525 = vpack.c.b16 %v1030, %v1019
  %v1526 = vpack.c.b16 %v1031, %v1020
  %v1527 = vpack.c.b16 %v1032, %v1021
  %v1528 = vpack.c.b16 %v1033, %v1022
  %v1529 = vpack.c.b16 %v1034, %v1023
  %v1530 = vpack.c.b16 %v1035, %v1024
  %v1531 = vpack.c.b16 %v1036, %v1025
  %v1532 = vpack.c.b16 %v1037, %v1026
  %v1533 = vpack.c.b16 %v1038, %v1027
  %v1534 = vpack.c.b16 %v1039, %v1028
  %v1535 = vpack.c.b16 %v1051, %v1040
  %v1536 = vpack.c.b16 %v1052, %v1041
  %v1537 = vpack.c.b16 %v1053, %v1042
  %v1538 = vpack.c.b16 %v1054, %v1043
  %v1539 = vpack.c.b16 %v1055, %v1044
  %v1540 = vpack.c.b16 %v1056, %v1045
  %v1541 = vpack.c.b16 %v1057, %v1046
  %v1542 = vpack.c.b16 %v1058, %v1047
  %v1543 = vpack.c.b16 %v1059, %v1048
  %v1544 = vpack.c.b16 %v1060, %v1049
  %v1545 = vpack.c.b16 %v1061, %v1050
  %v1546 = vpack.c.b16 %v1073, %v1062
  %v1547 = vpack.c.b16 %v1074, %v1063
  %v1548 = vpack.c.b16 %v1075, %v1064
  %v1549 = vpack.c.b16 %v1076, %v1065
  %v1550 = vpack.c.b16 %v1077, %v1066
  %v1551 = vpack.c.b16 %v1078, %v1067
  %v1552 = vpack.c.b16 %v1079, %v1068
  %v1553 = vpack.c.b16 %v1080, %v1069
  %v1554 = vpack.c.b16 %v1081, %v1070
  %v1555 = vpack.c.b16 %v1082, %v1071
  %v1556 = vpack.c.b16 %v1083, %v1072
  %v1557 = vpack.c.b16 %v1095, %v1084
  %v1558 = vpack.c.b16 %v1096, %v1085
  %v1559 = vpack.c.b16 %v1097, %v1086
  %v1560 = vpack.c.b16 %v1098, %v1087
  %v1561 = vpack.c.b16 %v1099, %v1088
  %v1562 = vpack.c.b16 %v1100, %v1089
  %v1563 = vpack.c.b16 %v1101, %v1090
  %v1564 = vpack.c.b16 %v1102, %v1091
  %v1565 = vpack.c.b16 %v1103, %v1092
  %v1566 = vpack.c.b16 %v1104, %v1093
  %v1567 = vpack.c.b16 %v1105, %v1094
  %v1568 = vpack.c.b16 %v1117, %v1106
  %v1569 = vpack.c.b16 %v1118, %v1107
  %v1570 = vpack.c.b16 %v1119, %v1108
  %v1571 = vpack.c.b16 %v1120, %v1109
  %v1572 = vpack.c.b16 %v1121, %v1110
  %v1573 = vpack.c.b16 %v1122, %v1111
  %v1574 = vpack.c.b16 %v1123, %v1112
  %v1575 = vpack.c.b16 %v1124, %v1113
  %v1576 = vpack.c.b16 %v1125, %v1114
  %v1577 = vpack.c.b16 %v1126, %v1115
  %v1578 = vpack.c.b16 %v1127, %v1116
  %v1579 = vpack.c.b16 %v1139, %v1128
  %v1580 = vpack.c.b16 %v1140, %v1129
  %v1581 = vpack.c.b16 %v1141, %v1130
  %v1582 = vpack.c.b16 %v1142, %v1131
  %v1583 = vpack.c.b16 %v1143, %v1132
  %v1584 = vpack.c.b16 %v1144, %v1133
  %v1585 = vpack.c.b16 %v1145, %v1134
  %v1586 = vpack.c.b16 %v1146, %v1135
  %v1587 = vpack.c.b16 %v1147, %v1136
  %v1588 = vpack.c.b16 %v1148, %v1137
  %v1589 = vpack.c.b16 %v1149, %v1138
  %v1590 = vpack.c.b16 %v1161, %v1150
  %v1591 = vpack.c.b16 %v1162, %v1151
  %v1592 = vpack.c.b16 %v1163, %v1152
  %v1593 = vpack.c.b16 %v1164, %v1153
  %v1594 = vpack.c.b16 %v1165, %v1154
  %v1595 = vpack.c.b16 %v1166, %v1155
  %v1596 = vpack.c.b16 %v1167, %v1156
  %v1597 = vpack.c.b16 %v1168, %v1157
  %v1598 = vpack.c.b16 %v1169, %v1158
  %v1599 = vpack.c.b16 %v1170, %v1159
  %v1600 = vpack.c.b16 %v1171, %v1160
  %v1601 = vpack.c.b16 %v1183, %v1172
  %v1602 = vpack.c.b16 %v1184, %v1173
  %v1603 = vpack.c.b16 %v1185, %v1174
  %v1604 = vpack.c.b16 %v1186, %v1175
  %v1605 = vpack.c.b16 %v1187, %v1176
  %v1606 = vpack.c.b16 %v1188, %v1177
  %v1607 = vpack.c.b16 %v1189, %v1178
  %v1608 = vpack.c.b16 %v1190, %v1179
  %v1609 = vpack.c.b16 %v1191, %v1180
  %v1610 = vpack.c.b16 %v1192, %v1181
  %v1611 = vpack.c.b16 %v1193, %v1182
  %v1612 = vpack.c.b16 %v1205, %v1194
  %v1613 = vpack.c.b16 %v1206, %v1195
  %v1614 = vpack.c.b16 %v1207, %v1196
  %v1615 = vpack.c.b16 %v1208, %v1197
  %v1616 = vpack.c.b16 %v1209, %v1198
  %v1617 = vpack.c.b16 %v1210, %v1199
  %v1618 = vpack.c.b16 %v1211, %v1200
  %v1619 = vpack.c.b16 %v1212, %v1201
  %v1620 = vpack.c.b16 %v1213, %v1202
  %v1621 = vpack.c.b16 %v1214, %v1203
  %v1622 = vpack.c.b16 %v1215, %v1204
  %v1623 = vpack.c.b16 %v1227, %v1216
  %v1624 = vpack.c.b16 %v1228, %v1217
  %v1625 = vpack.c.b16 %v1229, %v1218
  %v1626 = vpack.c.b16 %v1230, %v1219
  %v1627 = vpack.c.b16 %v1231, %v1220
  %v1628 = vpack.c.b16 %v1232, %v1221
  %v1629 = vpack.c.b16 %v1233, %v1222
  %v1630 = vpack.c.b16 %v1234, %v1223
  %v1631 = vpack.c.b16 %v1235, %v1224
  %v1632 = vpack.c.b16 %v1236, %v1225
  %v1633 = vpack.c.b16 %v1237, %v1226
  %v1634 = vpack.c.b16 %v1249, %v1238
  %v1635 = vpack.c.b16 %v1250, %v1239
  %v1636 = vpack.c.b16 %v1251, %v1240
  %v1637 = vpack.c.b16 %v1252, %v1241
  %v1638 = vpack.c.b16 %v1253, %v1242
  %v1639 = vpack.c.b16 %v1254, %v1243
  %v1640 = vpack.c.b16 %v1255, %v1244
  %v1641 = vpack.c.b16 %v1256, %v1245
  %v1642 = vpack.c.b16 %v1257, %v1246
  %v1643 = vpack.c.b16 %v1258, %v1247
  %v1644 = vpack.c.b16 %v1259, %v1248
  %v1645 = vpack.c.b16 %v1271, %v1260
  %v1646 = vpack.c.b16 %v1272, %v1261
  %v1647 = vpack.c.b16 %v1273, %v1262
  %v1648 = vpack.c.b16 %v1274, %v1263
  %v1649 = vpack.c.b16 %v1275, %v1264
  %v1650 = vpack.c.b16 %v1276, %v1265
  %v1651 = vpack.c.b16 %v1277, %v1266
  %v1652 = vpack.c.b16 %v1278, %v1267
  %v1653 = vpack.c.b16 %v1279, %v1268
  %v1654 = vpack.c.b16 %v1280, %v1269
  %v1655 = vpack.c.b16 %v1281, %v1270
  %v1656 = vpack.c.b16 %v1293, %v1282
  %v1657 = vpack.c.b16 %v1294, %v1283
  %v1658 = vpack.c.b16 %v1295, %v1284
  %v1659 = vpack.c.b16 %v1296, %v1285
  %v1660 = vpack.c.b16 %v1297, %v1286
  %v1661 = vpack.c.b16 %v1298, %v1287
  %v1662 = vpack.c.b16 %v1299, %v1288
  %v1663 = vpack.c.b16 %v1300, %v1289
  %v1664 = vpack.c.b16 %v1301, %v1290
  %v1665 = vpack.c.b16 %v1302, %v1291
  %v1666 = vpack.c.b16 %v1303, %v1292
  %v1667 = vpack.c.b16 %v1315, %v1304
  %v1668 = vpack.c.b16 %v1316, %v1305
  %v1669 = vpack.c.b16 %v1317, %v1306
  %v1670 = vpack.c.b16 %v1318, %v1307
  %v1671 = vpack.c.b16 %v1319, %v1308
  %v1672 = vpack.c.b16 %v1320, %v1309
  %v1673 = vpack.c.b16 %v1321, %v1310
  %v1674 = vpack.c.b16 %v1322, %v1311
  %v1675 = vpack.c.b16 %v1323, %v1312
  %v1676 = vpack.c.b16 %v1324, %v1313
  %v1677 = vpack.c.b16 %v1325, %v1314
  %v1678 = vpack.c.b16 %v1337, %v1326
  %v1679 = vpack.c.b16 %v1338, %v1327
  %v1680 = vpack.c.b16 %v1339, %v1328
  %v1681 = vpack.c.b16 %v1340, %v1329
  %v1682 = vpack.c.b16 %v1341, %v1330
  %v1683 = vpack.c.b16 %v1342, %v1331
  %v1684 = vpack.c.b16 %v1343, %v1332
  %v1685 = vpack.c.b16 %v1344, %v1333
  %v1686 = vpack.c.b16 %v1345, %v1334
  %v1687 = vpack.c.b16 %v1346, %v1335
  %v1688 = vpack.c.b16 %v1347, %v1336
  %v1689 = vpack.c.b16 %v1359, %v1348
  %v1690 = vpack.c.b16 %v1360, %v1349
  %v1691 = vpack.c.b16 %v1361, %v1350
  %v1692 = vpack.c.b16 %v1362, %v1351
  %v1693 = vpack.c.b16 %v1363, %v1352
  %v1694 = vpack.c.b16 %v1364, %v1353
  %v1695 = vpack.c.b16 %v1365, %v1354
  %v1696 = vpack.c.b16 %v1366, %v1355
  %v1697 = vpack.c.b16 %v1367, %v1356
  %v1698 = vpack.c.b16 %v1368, %v1357
  %v1699 = vpack.c.b16 %v1369, %v1358
  %v1700 = vpack.c.b16 %v1381, %v1370
  %v1701 = vpack.c.b16 %v1382, %v1371
  %v1702 = vpack.c.b16 %v1383, %v1372
  %v1703 = vpack.c.b16 %v1384, %v1373
  %v1704 = vpack.c.b16 %v1385, %v1374
  %v1705 = vpack.c.b16 %v1386, %v1375
  %v1706 = vpack.c.b16 %v1387, %v1376
  %v1707 = vpack.c.b16 %v1388, %v1377
  %v1708 = vpack.c.b16 %v1389, %v1378
  %v1709 = vpack.c.b16 %v1390, %v1379
  %v1710 = vpack.c.b16 %v1391, %v1380
  %v1711 = vpack.c.b16 %v1403, %v1392
  %v1712 = vpack.c.b16 %v1404, %v1393
  %v1713 = vpack.c.b16 %v1405, %v1394
  %v1714 = vpack.c.b16 %v1406, %v1395
  %v1715 = vpack.c.b16 %v1407, %v1396
  %v1716 = vpack.c.b16 %v1408, %v1397
  %v1717 = vpack.c.b16 %v1409, %v1398
  %v1718 = vpack.c.b16 %v1410, %v1399
  %v1719 = vpack.c.b16 %v1411, %v1400
  %v1720 = vpack.c.b16 %v1412, %v1401
  %v1721 = vpack.c.b16 %v1413, %v1402
  %v1722 = vpack.c.b16 %v1425, %v1414
  %v1723 = vpack.c.b16 %v1426, %v1415
  %v1724 = vpack.c.b16 %v1427, %v1416
  %v1725 = vpack.c.b16 %v1428, %v1417
  %v1726 = vpack.c.b16 %v1429, %v1418
  %v1727 = vpack.c.b16 %v1430, %v1419
  %v1728 = vpack.c.b16 %v1431, %v1420
  %v1729 = vpack.c.b16 %v1432, %v1421
  %v1730 = vpack.c.b16 %v1433, %v1422
  %v1731 = vpack.c.b16 %v1434, %v1423
  %v1732 = vpack.c.b16 %v1435, %v1424
  %v2206 = vunpack.c.l.b16 %v338
  %v2207 = vunpack.c.l.b16 %v339
  %v2208 = vunpack.c.l.b16 %v340
  %v2209 = vunpack.c.l.b16 %v341
  %v2210 = vunpack.c.l.b16 %v342
  %v2211 = vunpack.c.l.b16 %v343
  %v2212 = vunpack.c.l.b16 %v344
  %v2213 = vunpack.c.l.b16 %v345
  %v2214 = vunpack.c.l.b16 %v346
  %v2215 = vunpack.c.l.b16 %v347
  %v2216 = vunpack.c.l.b16 %v348
  %v2217 = vunpack.c.l.b16 %v349
  %v2218 = vunpack.c.l.b16 %v350
  %v2219 = vunpack.c.l.b16 %v351
  %v2220 = vunpack.c.l.b16 %v352
  %v2221 = vunpack.c.l.b16 %v353
  %v2222 = vunpack.c.l.b16 %v354
  %v2223 = vunpack.c.l.b16 %v355
  %v2224 = vunpack.c.l.b16 %v356
  %v2225 = vunpack.c.l.b16 %v357
  %v2226 = vunpack.c.l.b16 %v358
  %v2227 = vunpack.c.l.b16 %v359
  %v2228 = vunpack.c.l.b16 %v360
  %v2229 = vunpack.c.l.b16 %v361
  %v2230 = vunpack.c.l.b16 %v362
  %v2231 = vunpack.c.l.b16 %v363
  %v2232 = vunpack.c.l.b16 %v364
  %v2233 = vunpack.c.l.b16 %v365
  %v2234 = vunpack.c.l.b16 %v366
  %v2235 = vunpack.c.l.b16 %v367
  %v2236 = vunpack.c.l.b16 %v368
  %v2237 = vunpack.c.l.b16 %v369
  %v2238 = vunpack.c.l.b16 %v370
  %v2239 = vunpack.c.l.b16 %v371
  %v2240 = vunpack.c.l.b16 %v372
  %v2241 = vunpack.c.l.b16 %v373
  %v2242 = vunpack.c.l.b16 %v374
  %v2243 = vunpack.c.l.b16 %v375
  %v2244 = vunpack.c.l.b16 %v376
  %v2245 = vunpack.c.l.b16 %v377
  %v2246 = vunpack.c.l.b16 %v378
  %v2247 = vunpack.c.l.b16 %v379
  %v2248 = vunpack.c.l.b16 %v380
  %v2249 = vunpack.c.l.b16 %v381
  %v2250 = vunpack.c.l.b16 %v382
  %v2251 = vunpack.c.l.b16 %v383
  %v2252 = vunpack.c.l.b16 %v384
  %v2253 = vunpack.c.l.b16 %v385
  %v2254 = vunpack.c.l.b16 %v386
  %v2255 = vunpack.c.l.b16 %v387
  %v2256 = vunpack.c.l.b16 %v388
  %v2257 = vunpack.c.l.b16 %v389
  %v2258 = vunpack.c.l.b16 %v390
  %v2259 = vunpack.c.l.b16 %v391
  %v2260 = vunpack.c.l.b16 %v392
  %v2261 = vunpack.c.l.b16 %v393
  %v2262 = vunpack.c.l.b16 %v394
  %v2263 = vunpack.c.l.b16 %v395
  %v2264 = vunpack.c.l.b16 %v396
  %v2265 = vunpack.c.l.b16 %v397
  %v2266 = vunpack.c.l.b16 %v398
  %v2267 = vunpack.c.l.b16 %v399
  %v2268 = vunpack.c.l.b16 %v400
  %v2269 = vunpack.c.l.b16 %v401
  %v2270 = vunpack.c.l.b16 %v402
  %v2271 = vunpack.c.l.b16 %v403
  %v2272 = vunpack.c.l.b16 %v404
  %v2273 = vunpack.c.l.b16 %v405
  %v2274 = vunpack.c.l.b16 %v406
  %v2275 = vunpack.c.l.b16 %v407
  %v2276 = vunpack.c.l.b16 %v408
  %v2277 = vunpack.c.l.b16 %v409
  %v2278 = vunpack.c.l.b16 %v410
  %v2279 = vunpack.c.l.b16 %v411
  %v2280 = vunpack.c.l.b16 %v412
  %v2281 = vunpack.c.l.b16 %v413
  %v2282 = vunpack.c.l.b16 %v414
  %v2283 = vunpack.c.l.b16 %v415
  %v2284 = vunpack.c.l.b16 %v416
  %v2285 = vunpack.c.l.b16 %v417
  %v2286 = vunpack.c.l.b16 %v418
  %v2287 = vunpack.c.l.b16 %v419
  %v2288 = vunpack.c.l.b16 %v420
  %v2289 = vunpack.c.l.b16 %v421
  %v2290 = vunpack.c.l.b16 %v422
  %v2291 = vunpack.c.l.b16 %v423
  %v2292 = vunpack.c.l.b16 %v424
  %v2293 = vunpack.c.l.b16 %v425
  %v2294 = vunpack.c.l.b16 %v426
  %v2295 = vunpack.c.l.b16 %v427
  %v2296 = vunpack.c.l.b16 %v428
  %v2297 = vunpack.c.l.b16 %v429
  %v2298 = vunpack.c.l.b16 %v430
  %v2299 = vunpack.c.l.b16 %v431
  %v2300 = vunpack.c.l.b16 %v432
  %v2301 = vunpack.c.l.b16 %v433
  %v2302 = vunpack.c.l.b16 %v434
  %v2303 = vunpack.c.l.b16 %v435
  %v2304 = vunpack.c.l.b16 %v436
  %v2305 = vunpack.c.l.b16 %v437
  %v2306 = vunpack.c.l.b16 %v438
  %v2307 = vunpack.c.l.b16 %v439
  %v2308 = vunpack.c.l.b16 %v440
  %v2309 = vunpack.c.l.b16 %v441
  %v2310 = vunpack.c.l.b16 %v442
  %v2311 = vunpack.c.l.b16 %v443
  %v2312 = vunpack.c.l.b16 %v444
  %v2313 = vunpack.c.l.b16 %v445
  %v2314 = vunpack.c.l.b16 %v446
  %v2315 = vunpack.c.l.b16 %v447
  %v2316 = vunpack.c.l.b16 %v448
  %v2317 = vunpack.c.l.b16 %v449
  %v2318 = vunpack.c.l.b16 %v450
  %v2319 = vunpack.c.l.b16 %v451
  %v2320 = vunpack.c.l.b16 %v452
  %v2321 = vunpack.c.l.b16 %v453
  %v2322 = vunpack.c.l.b16 %v454
  %v2323 = vunpack.c.l.b16 %v455
  %v2324 = vunpack.c.l.b16 %v456
  %v2325 = vunpack.c.l.b16 %v457
  %v2326 = vunpack.c.l.b16 %v458
  %v2327 = vunpack.c.l.b16 %v459
  %v2328 = vunpack.c.l.b16 %v460
  %v2329 = vunpack.c.l.b16 %v461
  %v2330 = vunpack.c.l.b16 %v462
  %v2331 = vunpack.c.l.b16 %v463
  %v2332 = vunpack.c.l.b16 %v464
  %v2333 = vunpack.c.l.b16 %v465
  %v2334 = vunpack.c.l.b16 %v466
  %v2335 = vunpack.c.l.b16 %v467
  %v2336 = vunpack.c.l.b16 %v468
  %v2337 = vunpack.c.l.b16 %v469
  %v2338 = vunpack.c.l.b16 %v470
  %v2339 = vunpack.c.l.b16 %v471
  %v2340 = vunpack.c.l.b16 %v472
  %v2341 = vunpack.c.l.b16 %v473
  %v2342 = vunpack.c.l.b16 %v474
  %v2343 = vunpack.c.l.b16 %v475
  %v2344 = vunpack.c.l.b16 %v476
  %v2345 = vunpack.c.l.b16 %v477
  %v2346 = vunpack.c.l.b16 %v478
  %v2347 = vunpack.c.l.b16 %v479
  %v2348 = vunpack.c.l.b16 %v480
  %v2349 = vunpack.c.l.b16 %v481
  %v2350 = vunpack.c.l.b16 %v482
  %v2351 = vunpack.c.l.b16 %v483
  %v2352 = vunpack.c.l.b16 %v484
  %v2353 = vunpack.c.l.b16 %v485
  %v2354 = vunpack.c.l.b16 %v486
  %v2355 = vunpack.c.l.b16 %v487
  %v2356 = vunpack.c.l.b16 %v488
  %v2357 = vunpack.c.l.b16 %v489
  %v2358 = vunpack.c.l.b16 %v490
  %v2359 = vunpack.c.l.b16 %v491
  %v2360 = vunpack.c.l.b16 %v492
  %v2361 = vunpack.c.l.b16 %v493
  %v2362 = vunpack.c.l.b16 %v494
  %v2363 = vunpack.c.l.b16 %v495
  %v2364 = vunpack.c.l.b16 %v496
  %v2365 = vunpack.c.l.b16 %v497
  %v2366 = vunpack.c.l.b16 %v498
  %v2367 = vunpack.c.l.b16 %v499
  %v2368 = vunpack.c.l.b16 %v500
  %v2369 = vunpack.c.l.b16 %v501
  %v2370 = vunpack.c.l.b16 %v502
  %v2371 = vunpack.c.l.b16 %v503
  %v2372 = vunpack.c.l.b16 %v504
  %v2373 = vunpack.c.l.b16 %v505
  %v2374 = vunpack.c.l.b16 %v506
  %v2375 = vunpack.c.l.b16 %v507
  %v2376 = vunpack.c.l.b16 %v508
  %v2377 = vunpack.c.l.b16 %v509
  %v2378 = vunpack.c.l.b16 %v510
  %v2379 = vunpack.c.l.b16 %v511
  %v2380 = vunpack.c.l.b16 %v512
  %v2381 = vunpack.c.l.b16 %v513
  %v2382 = vpack.c.b16 %v2207, %v2206
  %v2383 = vpack.c.b16 %v2209, %v2208
  %v2384 = vpack.c.b16 %v2211, %v2210
  %v2385 = vpack.c.b16 %v2213, %v2212
  %v2386 = vpack.c.b16 %v2215, %v2214
  %v2387 = vpack.c.b16 %v2217, %v2216
  %v2388 = vpack.c.b16 %v2219, %v2218
  %v2389 = vpack.c.b16 %v2221, %v2220
  %v2390 = vpack.c.b16 %v2223, %v2222
  %v2391 = vpack.c.b16 %v2225, %v2224
  %v2392 = vpack.c.b16 %v2227, %v2226
  %v2393 = vpack.c.b16 %v2229, %v2228
  %v2394 = vpack.c.b16 %v2231, %v2230
  %v2395 = vpack.c.b16 %v2233, %v2232
  %v2396 = vpack.c.b16 %v2235, %v2234
  %v2397 = vpack.c.b16 %v2237, %v2236
  %v2398 = vpack.c.b16 %v2239, %v2238
  %v2399 = vpack.c.b16 %v2241, %v2240
  %v2400 = vpack.c.b16 %v2243, %v2242
  %v2401 = vpack.c.b16 %v2245, %v2244
  %v2402 = vpack.c.b16 %v2247, %v2246
  %v2403 = vpack.c.b16 %v2249, %v2248
  %v2404 = vpack.c.b16 %v2251, %v2250
  %v2405 = vpack.c.b16 %v2253, %v2252
  %v2406 = vpack.c.b16 %v2255, %v2254
  %v2407 = vpack.c.b16 %v2257, %v2256
  %v2408 = vpack.c.b16 %v2259, %v2258
  %v2409 = vpack.c.b16 %v2261, %v2260
  %v2410 = vpack.c.b16 %v2263, %v2262
  %v2411 = vpack.c.b16 %v2265, %v2264
  %v2412 = vpack.c.b16 %v2267, %v2266
  %v2413 = vpack.c.b16 %v2269, %v2268
  %v2414 = vpack.c.b16 %v2271, %v2270
  %v2415 = vpack.c.b16 %v2273, %v2272
  %v2416 = vpack.c.b16 %v2275, %v2274
  %v2417 = vpack.c.b16 %v2277, %v2276
  %v2418 = vpack.c.b16 %v2279, %v2278
  %v2419 = vpack.c.b16 %v2281, %v2280
  %v2420 = vpack.c.b16 %v2283, %v2282
  %v2421 = vpack.c.b16 %v2285, %v2284
  %v2422 = vpack.c.b16 %v2287, %v2286
  %v2423 = vpack.c.b16 %v2289, %v2288
  %v2424 = vpack.c.b16 %v2291, %v2290
  %v2425 = vpack.c.b16 %v2293, %v2292
  %v2426 = vpack.c.b16 %v2295, %v2294
  %v2427 = vpack.c.b16 %v2297, %v2296
  %v2428 = vpack.c.b16 %v2299, %v2298
  %v2429 = vpack.c.b16 %v2301, %v2300
  %v2430 = vpack.c.b16 %v2303, %v2302
  %v2431 = vpack.c.b16 %v2305, %v2304
  %v2432 = vpack.c.b16 %v2307, %v2306
  %v2433 = vpack.c.b16 %v2309, %v2308
  %v2434 = vpack.c.b16 %v2311, %v2310
  %v2435 = vpack.c.b16 %v2313, %v2312
  %v2436 = vpack.c.b16 %v2315, %v2314
  %v2437 = vpack.c.b16 %v2317, %v2316
  %v2438 = vpack.c.b16 %v2319, %v2318
  %v2439 = vpack.c.b16 %v2321, %v2320
  %v2440 = vpack.c.b16 %v2323, %v2322
  %v2441 = vpack.c.b16 %v2325, %v2324
  %v2442 = vpack.c.b16 %v2327, %v2326
  %v2443 = vpack.c.b16 %v2329, %v2328
  %v2444 = vpack.c.b16 %v2331, %v2330
  %v2445 = vpack.c.b16 %v2333, %v2332
  %v2446 = vpack.c.b16 %v2335, %v2334
  %v2447 = vpack.c.b16 %v2337, %v2336
  %v2448 = vpack.c.b16 %v2339, %v2338
  %v2449 = vpack.c.b16 %v2341, %v2340
  %v2450 = vpack.c.b16 %v2343, %v2342
  %v2451 = vpack.c.b16 %v2345, %v2344
  %v2452 = vpack.c.b16 %v2347, %v2346
  %v2453 = vpack.c.b16 %v2349, %v2348
  %v2454 = vpack.c.b16 %v2351, %v2350
  %v2455 = vpack.c.b16 %v2353, %v2352
  %v2456 = vpack.c.b16 %v2355, %v2354
  %v2457 = vpack.c.b16 %v2357, %v2356
  %v2458 = vpack.c.b16 %v2359, %v2358
  %v2459 = vpack.c.b16 %v2361, %v2360
  %v2460 = vpack.c.b16 %v2363, %v2362
  %v2461 = vpack.c.b16 %v2365, %v2364
  %v2462 = vpack.c.b16 %v2367, %v2366
  %v2463 = vpack.c.b16 %v2369, %v2368
  %v2464 = vpack.c.b16 %v2371, %v2370
  %v2465 = vpack.c.b16 %v2373, %v2372
  %v2466 = vpack.c.b16 %v2375, %v2374
  %v2467 = vpack.c.b16 %v2377, %v2376
  %v2468 = vpack.c.b16 %v2379, %v2378
  %v2469 = vpack.c.b16 %v2381, %v2380
  %2558 = vmatpush.bf16.msra.mxu0 %v2389
  %2559 = vmatpush.bf16.msra.mxu0 %v2388
  %2560 = vmatpush.bf16.msra.mxu0 %v2387
  %2561 = vmatpush.bf16.msra.mxu0 %v2386
  %2562 = vmatpush.bf16.msra.mxu0 %v2385
  %2563 = vmatpush.bf16.msra.mxu0 %v2384
  %2564 = vmatpush.bf16.msra.mxu0 %v2383
  %2565 = vmatpush.bf16.msra.mxu0 %v2382
  %2566 = vmatmul.bf16.gmra.mxu0 %v1436
  %v2567 = vpop.f32.mrf.mxu0
  %v2568 = vadd.f32 %v516, %v2567
  %v2569 = vpop.f32.mrf.mxu0
  %v2570 = vadd.f32 %v516, %v2569
  %2571 = vmatmul.bf16.gmra.mxu0 %v1447
  %v2572 = vpop.f32.mrf.mxu0
  %v2573 = vadd.f32 %v516, %v2572
  %v2574 = vpop.f32.mrf.mxu0
  %v2575 = vadd.f32 %v516, %v2574
  %2576 = vmatmul.bf16.gmra.mxu0 %v1458
  %v2577 = vpop.f32.mrf.mxu0
  %v2578 = vadd.f32 %v516, %v2577
  %v2579 = vpop.f32.mrf.mxu0
  %v2580 = vadd.f32 %v516, %v2579
  %2581 = vmatmul.bf16.gmra.mxu0 %v1469
  %v2582 = vpop.f32.mrf.mxu0
  %v2583 = vadd.f32 %v516, %v2582
  %v2584 = vpop.f32.mrf.mxu0
  %v2585 = vadd.f32 %v516, %v2584
  %2586 = vmatmul.bf16.gmra.mxu0 %v1480
  %v2587 = vpop.f32.mrf.mxu0
  %v2588 = vadd.f32 %v516, %v2587
  %v2589 = vpop.f32.mrf.mxu0
  %v2590 = vadd.f32 %v516, %v2589
  %2591 = vmatmul.bf16.gmra.mxu0 %v1491
  %v2592 = vpop.f32.mrf.mxu0
  %v2593 = vadd.f32 %v516, %v2592
  %v2594 = vpop.f32.mrf.mxu0
  %v2595 = vadd.f32 %v516, %v2594
  %2596 = vmatmul.bf16.gmra.mxu0 %v1502
  %v2597 = vpop.f32.mrf.mxu0
  %v2598 = vadd.f32 %v516, %v2597
  %v2599 = vpop.f32.mrf.mxu0
  %v2600 = vadd.f32 %v516, %v2599
  %2601 = vmatmul.bf16.gmra.mxu0 %v1513
  %v2602 = vpop.f32.mrf.mxu0
  %v2603 = vadd.f32 %v516, %v2602
  %v2604 = vpop.f32.mrf.mxu0
  %v2605 = vadd.f32 %v516, %v2604
  %2606 = vmatmul.bf16.gmra.mxu0 %v1524
  %v2607 = vpop.f32.mrf.mxu0
  %v2608 = vadd.f32 %v516, %v2607
  %v2609 = vpop.f32.mrf.mxu0
  %v2610 = vadd.f32 %v516, %v2609
  %2611 = vmatmul.bf16.gmra.mxu0 %v1535
  %v2612 = vpop.f32.mrf.mxu0
  %v2613 = vadd.f32 %v516, %v2612
  %v2614 = vpop.f32.mrf.mxu0
  %v2615 = vadd.f32 %v516, %v2614
  %2616 = vmatmul.bf16.gmra.mxu0 %v1546
  %v2617 = vpop.f32.mrf.mxu0
  %v2618 = vadd.f32 %v516, %v2617
  %v2619 = vpop.f32.mrf.mxu0
  %v2620 = vadd.f32 %v516, %v2619
  %2621 = vmatmul.bf16.gmra.mxu0 %v1557
  %v2622 = vpop.f32.mrf.mxu0
  %v2623 = vadd.f32 %v516, %v2622
  %v2624 = vpop.f32.mrf.mxu0
  %v2625 = vadd.f32 %v516, %v2624
  %2626 = vmatmul.bf16.gmra.mxu0 %v1568
  %v2627 = vpop.f32.mrf.mxu0
  %v2628 = vadd.f32 %v516, %v2627
  %v2629 = vpop.f32.mrf.mxu0
  %v2630 = vadd.f32 %v516, %v2629
  %2631 = vmatmul.bf16.gmra.mxu0 %v1579
  %v2632 = vpop.f32.mrf.mxu0
  %v2633 = vadd.f32 %v516, %v2632
  %v2634 = vpop.f32.mrf.mxu0
  %v2635 = vadd.f32 %v516, %v2634
  %2636 = vmatmul.bf16.gmra.mxu0 %v1590
  %v2637 = vpop.f32.mrf.mxu0
  %v2638 = vadd.f32 %v516, %v2637
  %v2639 = vpop.f32.mrf.mxu0
  %v2640 = vadd.f32 %v516, %v2639
  %2641 = vmatmul.bf16.gmra.mxu0 %v1601
  %v2642 = vpop.f32.mrf.mxu0
  %v2643 = vadd.f32 %v516, %v2642
  %v2644 = vpop.f32.mrf.mxu0
  %v2645 = vadd.f32 %v516, %v2644
  %2646 = vmatmul.bf16.gmra.mxu0 %v1612
  %v2647 = vpop.f32.mrf.mxu0
  %v2648 = vadd.f32 %v516, %v2647
  %v2649 = vpop.f32.mrf.mxu0
  %v2650 = vadd.f32 %v516, %v2649
  %2651 = vmatmul.bf16.gmra.mxu0 %v1623
  %v2652 = vpop.f32.mrf.mxu0
  %v2653 = vadd.f32 %v516, %v2652
  %v2654 = vpop.f32.mrf.mxu0
  %v2655 = vadd.f32 %v516, %v2654
  %2656 = vmatmul.bf16.gmra.mxu0 %v1634
  %v2657 = vpop.f32.mrf.mxu0
  %v2658 = vadd.f32 %v516, %v2657
  %v2659 = vpop.f32.mrf.mxu0
  %v2660 = vadd.f32 %v516, %v2659
  %2661 = vmatmul.bf16.gmra.mxu0 %v1645
  %v2662 = vpop.f32.mrf.mxu0
  %v2663 = vadd.f32 %v516, %v2662
  %v2664 = vpop.f32.mrf.mxu0
  %v2665 = vadd.f32 %v516, %v2664
  %2666 = vmatmul.bf16.gmra.mxu0 %v1656
  %v2667 = vpop.f32.mrf.mxu0
  %v2668 = vadd.f32 %v516, %v2667
  %v2669 = vpop.f32.mrf.mxu0
  %v2670 = vadd.f32 %v516, %v2669
  %2671 = vmatmul.bf16.gmra.mxu0 %v1667
  %v2672 = vpop.f32.mrf.mxu0
  %v2673 = vadd.f32 %v516, %v2672
  %v2674 = vpop.f32.mrf.mxu0
  %v2675 = vadd.f32 %v516, %v2674
  %2676 = vmatmul.bf16.gmra.mxu0 %v1678
  %v2677 = vpop.f32.mrf.mxu0
  %v2678 = vadd.f32 %v516, %v2677
  %v2679 = vpop.f32.mrf.mxu0
  %v2680 = vadd.f32 %v516, %v2679
  %2681 = vmatmul.bf16.gmra.mxu0 %v1689
  %v2682 = vpop.f32.mrf.mxu0
  %v2683 = vadd.f32 %v516, %v2682
  %v2684 = vpop.f32.mrf.mxu0
  %v2685 = vadd.f32 %v516, %v2684
  %2686 = vmatmul.bf16.gmra.mxu0 %v1700
  %v2687 = vpop.f32.mrf.mxu0
  %v2688 = vadd.f32 %v516, %v2687
  %v2689 = vpop.f32.mrf.mxu0
  %v2690 = vadd.f32 %v516, %v2689
  %2691 = vmatmul.bf16.gmra.mxu0 %v1711
  %v2692 = vpop.f32.mrf.mxu0
  %v2693 = vadd.f32 %v516, %v2692
  %v2694 = vpop.f32.mrf.mxu0
  %v2695 = vadd.f32 %v516, %v2694
  %2696 = vmatmul.bf16.gmra.mxu0 %v1722
  %v2697 = vpop.f32.mrf.mxu0
  %v2698 = vadd.f32 %v516, %v2697
  %v2699 = vpop.f32.mrf.mxu0
  %v2700 = vadd.f32 %v516, %v2699
  %2701 = vdwg.mxu0
  %2702 = vmatpush.bf16.msra.mxu0 %v2397
  %2703 = vmatpush.bf16.msra.mxu0 %v2396
  %2704 = vmatpush.bf16.msra.mxu0 %v2395
  %2705 = vmatpush.bf16.msra.mxu0 %v2394
  %2706 = vmatpush.bf16.msra.mxu0 %v2393
  %2707 = vmatpush.bf16.msra.mxu0 %v2392
  %2708 = vmatpush.bf16.msra.mxu0 %v2391
  %2709 = vmatpush.bf16.msra.mxu0 %v2390
  %2710 = vmatmul.bf16.gmra.mxu0 %v1437
  %v2711 = vpop.f32.mrf.mxu0
  %v2712 = vadd.f32 %v2568, %v2711
  %v2713 = vpop.f32.mrf.mxu0
  %v2714 = vadd.f32 %v2570, %v2713
  %2715 = vmatmul.bf16.gmra.mxu0 %v1448
  %v2716 = vpop.f32.mrf.mxu0
  %v2717 = vadd.f32 %v2573, %v2716
  %v2718 = vpop.f32.mrf.mxu0
  %v2719 = vadd.f32 %v2575, %v2718
  %2720 = vmatmul.bf16.gmra.mxu0 %v1459
  %v2721 = vpop.f32.mrf.mxu0
  %v2722 = vadd.f32 %v2578, %v2721
  %v2723 = vpop.f32.mrf.mxu0
  %v2724 = vadd.f32 %v2580, %v2723
  %2725 = vmatmul.bf16.gmra.mxu0 %v1470
  %v2726 = vpop.f32.mrf.mxu0
  %v2727 = vadd.f32 %v2583, %v2726
  %v2728 = vpop.f32.mrf.mxu0
  %v2729 = vadd.f32 %v2585, %v2728
  %2730 = vmatmul.bf16.gmra.mxu0 %v1481
  %v2731 = vpop.f32.mrf.mxu0
  %v2732 = vadd.f32 %v2588, %v2731
  %v2733 = vpop.f32.mrf.mxu0
  %v2734 = vadd.f32 %v2590, %v2733
  %2735 = vmatmul.bf16.gmra.mxu0 %v1492
  %v2736 = vpop.f32.mrf.mxu0
  %v2737 = vadd.f32 %v2593, %v2736
  %v2738 = vpop.f32.mrf.mxu0
  %v2739 = vadd.f32 %v2595, %v2738
  %2740 = vmatmul.bf16.gmra.mxu0 %v1503
  %v2741 = vpop.f32.mrf.mxu0
  %v2742 = vadd.f32 %v2598, %v2741
  %v2743 = vpop.f32.mrf.mxu0
  %v2744 = vadd.f32 %v2600, %v2743
  %2745 = vmatmul.bf16.gmra.mxu0 %v1514
  %v2746 = vpop.f32.mrf.mxu0
  %v2747 = vadd.f32 %v2603, %v2746
  %v2748 = vpop.f32.mrf.mxu0
  %v2749 = vadd.f32 %v2605, %v2748
  %2750 = vmatmul.bf16.gmra.mxu0 %v1525
  %v2751 = vpop.f32.mrf.mxu0
  %v2752 = vadd.f32 %v2608, %v2751
  %v2753 = vpop.f32.mrf.mxu0
  %v2754 = vadd.f32 %v2610, %v2753
  %2755 = vmatmul.bf16.gmra.mxu0 %v1536
  %v2756 = vpop.f32.mrf.mxu0
  %v2757 = vadd.f32 %v2613, %v2756
  %v2758 = vpop.f32.mrf.mxu0
  %v2759 = vadd.f32 %v2615, %v2758
  %2760 = vmatmul.bf16.gmra.mxu0 %v1547
  %v2761 = vpop.f32.mrf.mxu0
  %v2762 = vadd.f32 %v2618, %v2761
  %v2763 = vpop.f32.mrf.mxu0
  %v2764 = vadd.f32 %v2620, %v2763
  %2765 = vmatmul.bf16.gmra.mxu0 %v1558
  %v2766 = vpop.f32.mrf.mxu0
  %v2767 = vadd.f32 %v2623, %v2766
  %v2768 = vpop.f32.mrf.mxu0
  %v2769 = vadd.f32 %v2625, %v2768
  %2770 = vmatmul.bf16.gmra.mxu0 %v1569
  %v2771 = vpop.f32.mrf.mxu0
  %v2772 = vadd.f32 %v2628, %v2771
  %v2773 = vpop.f32.mrf.mxu0
  %v2774 = vadd.f32 %v2630, %v2773
  %2775 = vmatmul.bf16.gmra.mxu0 %v1580
  %v2776 = vpop.f32.mrf.mxu0
  %v2777 = vadd.f32 %v2633, %v2776
  %v2778 = vpop.f32.mrf.mxu0
  %v2779 = vadd.f32 %v2635, %v2778
  %2780 = vmatmul.bf16.gmra.mxu0 %v1591
  %v2781 = vpop.f32.mrf.mxu0
  %v2782 = vadd.f32 %v2638, %v2781
  %v2783 = vpop.f32.mrf.mxu0
  %v2784 = vadd.f32 %v2640, %v2783
  %2785 = vmatmul.bf16.gmra.mxu0 %v1602
  %v2786 = vpop.f32.mrf.mxu0
  %v2787 = vadd.f32 %v2643, %v2786
  %v2788 = vpop.f32.mrf.mxu0
  %v2789 = vadd.f32 %v2645, %v2788
  %2790 = vmatmul.bf16.gmra.mxu0 %v1613
  %v2791 = vpop.f32.mrf.mxu0
  %v2792 = vadd.f32 %v2648, %v2791
  %v2793 = vpop.f32.mrf.mxu0
  %v2794 = vadd.f32 %v2650, %v2793
  %2795 = vmatmul.bf16.gmra.mxu0 %v1624
  %v2796 = vpop.f32.mrf.mxu0
  %v2797 = vadd.f32 %v2653, %v2796
  %v2798 = vpop.f32.mrf.mxu0
  %v2799 = vadd.f32 %v2655, %v2798
  %2800 = vmatmul.bf16.gmra.mxu0 %v1635
  %v2801 = vpop.f32.mrf.mxu0
  %v2802 = vadd.f32 %v2658, %v2801
  %v2803 = vpop.f32.mrf.mxu0
  %v2804 = vadd.f32 %v2660, %v2803
  %2805 = vmatmul.bf16.gmra.mxu0 %v1646
  %v2806 = vpop.f32.mrf.mxu0
  %v2807 = vadd.f32 %v2663, %v2806
  %v2808 = vpop.f32.mrf.mxu0
  %v2809 = vadd.f32 %v2665, %v2808
  %2810 = vmatmul.bf16.gmra.mxu0 %v1657
  %v2811 = vpop.f32.mrf.mxu0
  %v2812 = vadd.f32 %v2668, %v2811
  %v2813 = vpop.f32.mrf.mxu0
  %v2814 = vadd.f32 %v2670, %v2813
  %2815 = vmatmul.bf16.gmra.mxu0 %v1668
  %v2816 = vpop.f32.mrf.mxu0
  %v2817 = vadd.f32 %v2673, %v2816
  %v2818 = vpop.f32.mrf.mxu0
  %v2819 = vadd.f32 %v2675, %v2818
  %2820 = vmatmul.bf16.gmra.mxu0 %v1679
  %v2821 = vpop.f32.mrf.mxu0
  %v2822 = vadd.f32 %v2678, %v2821
  %v2823 = vpop.f32.mrf.mxu0
  %v2824 = vadd.f32 %v2680, %v2823
  %2825 = vmatmul.bf16.gmra.mxu0 %v1690
  %v2826 = vpop.f32.mrf.mxu0
  %v2827 = vadd.f32 %v2683, %v2826
  %v2828 = vpop.f32.mrf.mxu0
  %v2829 = vadd.f32 %v2685, %v2828
  %2830 = vmatmul.bf16.gmra.mxu0 %v1701
  %v2831 = vpop.f32.mrf.mxu0
  %v2832 = vadd.f32 %v2688, %v2831
  %v2833 = vpop.f32.mrf.mxu0
  %v2834 = vadd.f32 %v2690, %v2833
  %2835 = vmatmul.bf16.gmra.mxu0 %v1712
  %v2836 = vpop.f32.mrf.mxu0
  %v2837 = vadd.f32 %v2693, %v2836
  %v2838 = vpop.f32.mrf.mxu0
  %v2839 = vadd.f32 %v2695, %v2838
  %2840 = vmatmul.bf16.gmra.mxu0 %v1723
  %v2841 = vpop.f32.mrf.mxu0
  %v2842 = vadd.f32 %v2698, %v2841
  %v2843 = vpop.f32.mrf.mxu0
  %v2844 = vadd.f32 %v2700, %v2843
  %2845 = vdwg.mxu0
  %2846 = vmatpush.bf16.msra.mxu0 %v2405
  %2847 = vmatpush.bf16.msra.mxu0 %v2404
  %2848 = vmatpush.bf16.msra.mxu0 %v2403
  %2849 = vmatpush.bf16.msra.mxu0 %v2402
  %2850 = vmatpush.bf16.msra.mxu0 %v2401
  %2851 = vmatpush.bf16.msra.mxu0 %v2400
  %2852 = vmatpush.bf16.msra.mxu0 %v2399
  %2853 = vmatpush.bf16.msra.mxu0 %v2398
  %2854 = vmatmul.bf16.gmra.mxu0 %v1438
  %v2855 = vpop.f32.mrf.mxu0
  %v2856 = vadd.f32 %v2712, %v2855
  %v2857 = vpop.f32.mrf.mxu0
  %v2858 = vadd.f32 %v2714, %v2857
  %2859 = vmatmul.bf16.gmra.mxu0 %v1449
  %v2860 = vpop.f32.mrf.mxu0
  %v2861 = vadd.f32 %v2717, %v2860
  %v2862 = vpop.f32.mrf.mxu0
  %v2863 = vadd.f32 %v2719, %v2862
  %2864 = vmatmul.bf16.gmra.mxu0 %v1460
  %v2865 = vpop.f32.mrf.mxu0
  %v2866 = vadd.f32 %v2722, %v2865
  %v2867 = vpop.f32.mrf.mxu0
  %v2868 = vadd.f32 %v2724, %v2867
  %2869 = vmatmul.bf16.gmra.mxu0 %v1471
  %v2870 = vpop.f32.mrf.mxu0
  %v2871 = vadd.f32 %v2727, %v2870
  %v2872 = vpop.f32.mrf.mxu0
  %v2873 = vadd.f32 %v2729, %v2872
  %2874 = vmatmul.bf16.gmra.mxu0 %v1482
  %v2875 = vpop.f32.mrf.mxu0
  %v2876 = vadd.f32 %v2732, %v2875
  %v2877 = vpop.f32.mrf.mxu0
  %v2878 = vadd.f32 %v2734, %v2877
  %2879 = vmatmul.bf16.gmra.mxu0 %v1493
  %v2880 = vpop.f32.mrf.mxu0
  %v2881 = vadd.f32 %v2737, %v2880
  %v2882 = vpop.f32.mrf.mxu0
  %v2883 = vadd.f32 %v2739, %v2882
  %2884 = vmatmul.bf16.gmra.mxu0 %v1504
  %v2885 = vpop.f32.mrf.mxu0
  %v2886 = vadd.f32 %v2742, %v2885
  %v2887 = vpop.f32.mrf.mxu0
  %v2888 = vadd.f32 %v2744, %v2887
  %2889 = vmatmul.bf16.gmra.mxu0 %v1515
  %v2890 = vpop.f32.mrf.mxu0
  %v2891 = vadd.f32 %v2747, %v2890
  %v2892 = vpop.f32.mrf.mxu0
  %v2893 = vadd.f32 %v2749, %v2892
  %2894 = vmatmul.bf16.gmra.mxu0 %v1526
  %v2895 = vpop.f32.mrf.mxu0
  %v2896 = vadd.f32 %v2752, %v2895
  %v2897 = vpop.f32.mrf.mxu0
  %v2898 = vadd.f32 %v2754, %v2897
  %2899 = vmatmul.bf16.gmra.mxu0 %v1537
  %v2900 = vpop.f32.mrf.mxu0
  %v2901 = vadd.f32 %v2757, %v2900
  %v2902 = vpop.f32.mrf.mxu0
  %v2903 = vadd.f32 %v2759, %v2902
  %2904 = vmatmul.bf16.gmra.mxu0 %v1548
  %v2905 = vpop.f32.mrf.mxu0
  %v2906 = vadd.f32 %v2762, %v2905
  %v2907 = vpop.f32.mrf.mxu0
  %v2908 = vadd.f32 %v2764, %v2907
  %2909 = vmatmul.bf16.gmra.mxu0 %v1559
  %v2910 = vpop.f32.mrf.mxu0
  %v2911 = vadd.f32 %v2767, %v2910
  %v2912 = vpop.f32.mrf.mxu0
  %v2913 = vadd.f32 %v2769, %v2912
  %2914 = vmatmul.bf16.gmra.mxu0 %v1570
  %v2915 = vpop.f32.mrf.mxu0
  %v2916 = vadd.f32 %v2772, %v2915
  %v2917 = vpop.f32.mrf.mxu0
  %v2918 = vadd.f32 %v2774, %v2917
  %2919 = vmatmul.bf16.gmra.mxu0 %v1581
  %v2920 = vpop.f32.mrf.mxu0
  %v2921 = vadd.f32 %v2777, %v2920
  %v2922 = vpop.f32.mrf.mxu0
  %v2923 = vadd.f32 %v2779, %v2922
  %2924 = vmatmul.bf16.gmra.mxu0 %v1592
  %v2925 = vpop.f32.mrf.mxu0
  %v2926 = vadd.f32 %v2782, %v2925
  %v2927 = vpop.f32.mrf.mxu0
  %v2928 = vadd.f32 %v2784, %v2927
  %2929 = vmatmul.bf16.gmra.mxu0 %v1603
  %v2930 = vpop.f32.mrf.mxu0
  %v2931 = vadd.f32 %v2787, %v2930
  %v2932 = vpop.f32.mrf.mxu0
  %v2933 = vadd.f32 %v2789, %v2932
  %2934 = vmatmul.bf16.gmra.mxu0 %v1614
  %v2935 = vpop.f32.mrf.mxu0
  %v2936 = vadd.f32 %v2792, %v2935
  %v2937 = vpop.f32.mrf.mxu0
  %v2938 = vadd.f32 %v2794, %v2937
  %2939 = vmatmul.bf16.gmra.mxu0 %v1625
  %v2940 = vpop.f32.mrf.mxu0
  %v2941 = vadd.f32 %v2797, %v2940
  %v2942 = vpop.f32.mrf.mxu0
  %v2943 = vadd.f32 %v2799, %v2942
  %2944 = vmatmul.bf16.gmra.mxu0 %v1636
  %v2945 = vpop.f32.mrf.mxu0
  %v2946 = vadd.f32 %v2802, %v2945
  %v2947 = vpop.f32.mrf.mxu0
  %v2948 = vadd.f32 %v2804, %v2947
  %2949 = vmatmul.bf16.gmra.mxu0 %v1647
  %v2950 = vpop.f32.mrf.mxu0
  %v2951 = vadd.f32 %v2807, %v2950
  %v2952 = vpop.f32.mrf.mxu0
  %v2953 = vadd.f32 %v2809, %v2952
  %2954 = vmatmul.bf16.gmra.mxu0 %v1658
  %v2955 = vpop.f32.mrf.mxu0
  %v2956 = vadd.f32 %v2812, %v2955
  %v2957 = vpop.f32.mrf.mxu0
  %v2958 = vadd.f32 %v2814, %v2957
  %2959 = vmatmul.bf16.gmra.mxu0 %v1669
  %v2960 = vpop.f32.mrf.mxu0
  %v2961 = vadd.f32 %v2817, %v2960
  %v2962 = vpop.f32.mrf.mxu0
  %v2963 = vadd.f32 %v2819, %v2962
  %2964 = vmatmul.bf16.gmra.mxu0 %v1680
  %v2965 = vpop.f32.mrf.mxu0
  %v2966 = vadd.f32 %v2822, %v2965
  %v2967 = vpop.f32.mrf.mxu0
  %v2968 = vadd.f32 %v2824, %v2967
  %2969 = vmatmul.bf16.gmra.mxu0 %v1691
  %v2970 = vpop.f32.mrf.mxu0
  %v2971 = vadd.f32 %v2827, %v2970
  %v2972 = vpop.f32.mrf.mxu0
  %v2973 = vadd.f32 %v2829, %v2972
  %2974 = vmatmul.bf16.gmra.mxu0 %v1702
  %v2975 = vpop.f32.mrf.mxu0
  %v2976 = vadd.f32 %v2832, %v2975
  %v2977 = vpop.f32.mrf.mxu0
  %v2978 = vadd.f32 %v2834, %v2977
  %2979 = vmatmul.bf16.gmra.mxu0 %v1713
  %v2980 = vpop.f32.mrf.mxu0
  %v2981 = vadd.f32 %v2837, %v2980
  %v2982 = vpop.f32.mrf.mxu0
  %v2983 = vadd.f32 %v2839, %v2982
  %2984 = vmatmul.bf16.gmra.mxu0 %v1724
  %v2985 = vpop.f32.mrf.mxu0
  %v2986 = vadd.f32 %v2842, %v2985
  %v2987 = vpop.f32.mrf.mxu0
  %v2988 = vadd.f32 %v2844, %v2987
  %2989 = vdwg.mxu0
  %2990 = vmatpush.bf16.msra.mxu0 %v2413
  %2991 = vmatpush.bf16.msra.mxu0 %v2412
  %2992 = vmatpush.bf16.msra.mxu0 %v2411
  %2993 = vmatpush.bf16.msra.mxu0 %v2410
  %2994 = vmatpush.bf16.msra.mxu0 %v2409
  %2995 = vmatpush.bf16.msra.mxu0 %v2408
  %2996 = vmatpush.bf16.msra.mxu0 %v2407
  %2997 = vmatpush.bf16.msra.mxu0 %v2406
  %2998 = vmatmul.bf16.gmra.mxu0 %v1439
  %v2999 = vpop.f32.mrf.mxu0
  %v3000 = vadd.f32 %v2856, %v2999
  %v3001 = vpop.f32.mrf.mxu0
  %v3002 = vadd.f32 %v2858, %v3001
  %3003 = vmatmul.bf16.gmra.mxu0 %v1450
  %v3004 = vpop.f32.mrf.mxu0
  %v3005 = vadd.f32 %v2861, %v3004
  %v3006 = vpop.f32.mrf.mxu0
  %v3007 = vadd.f32 %v2863, %v3006
  %3008 = vmatmul.bf16.gmra.mxu0 %v1461
  %v3009 = vpop.f32.mrf.mxu0
  %v3010 = vadd.f32 %v2866, %v3009
  %v3011 = vpop.f32.mrf.mxu0
  %v3012 = vadd.f32 %v2868, %v3011
  %3013 = vmatmul.bf16.gmra.mxu0 %v1472
  %v3014 = vpop.f32.mrf.mxu0
  %v3015 = vadd.f32 %v2871, %v3014
  %v3016 = vpop.f32.mrf.mxu0
  %v3017 = vadd.f32 %v2873, %v3016
  %3018 = vmatmul.bf16.gmra.mxu0 %v1483
  %v3019 = vpop.f32.mrf.mxu0
  %v3020 = vadd.f32 %v2876, %v3019
  %v3021 = vpop.f32.mrf.mxu0
  %v3022 = vadd.f32 %v2878, %v3021
  %3023 = vmatmul.bf16.gmra.mxu0 %v1494
  %v3024 = vpop.f32.mrf.mxu0
  %v3025 = vadd.f32 %v2881, %v3024
  %v3026 = vpop.f32.mrf.mxu0
  %v3027 = vadd.f32 %v2883, %v3026
  %3028 = vmatmul.bf16.gmra.mxu0 %v1505
  %v3029 = vpop.f32.mrf.mxu0
  %v3030 = vadd.f32 %v2886, %v3029
  %v3031 = vpop.f32.mrf.mxu0
  %v3032 = vadd.f32 %v2888, %v3031
  %3033 = vmatmul.bf16.gmra.mxu0 %v1516
  %v3034 = vpop.f32.mrf.mxu0
  %v3035 = vadd.f32 %v2891, %v3034
  %v3036 = vpop.f32.mrf.mxu0
  %v3037 = vadd.f32 %v2893, %v3036
  %3038 = vmatmul.bf16.gmra.mxu0 %v1527
  %v3039 = vpop.f32.mrf.mxu0
  %v3040 = vadd.f32 %v2896, %v3039
  %v3041 = vpop.f32.mrf.mxu0
  %v3042 = vadd.f32 %v2898, %v3041
  %3043 = vmatmul.bf16.gmra.mxu0 %v1538
  %v3044 = vpop.f32.mrf.mxu0
  %v3045 = vadd.f32 %v2901, %v3044
  %v3046 = vpop.f32.mrf.mxu0
  %v3047 = vadd.f32 %v2903, %v3046
  %3048 = vmatmul.bf16.gmra.mxu0 %v1549
  %v3049 = vpop.f32.mrf.mxu0
  %v3050 = vadd.f32 %v2906, %v3049
  %v3051 = vpop.f32.mrf.mxu0
  %v3052 = vadd.f32 %v2908, %v3051
  %3053 = vmatmul.bf16.gmra.mxu0 %v1560
  %v3054 = vpop.f32.mrf.mxu0
  %v3055 = vadd.f32 %v2911, %v3054
  %v3056 = vpop.f32.mrf.mxu0
  %v3057 = vadd.f32 %v2913, %v3056
  %3058 = vmatmul.bf16.gmra.mxu0 %v1571
  %v3059 = vpop.f32.mrf.mxu0
  %v3060 = vadd.f32 %v2916, %v3059
  %v3061 = vpop.f32.mrf.mxu0
  %v3062 = vadd.f32 %v2918, %v3061
  %3063 = vmatmul.bf16.gmra.mxu0 %v1582
  %v3064 = vpop.f32.mrf.mxu0
  %v3065 = vadd.f32 %v2921, %v3064
  %v3066 = vpop.f32.mrf.mxu0
  %v3067 = vadd.f32 %v2923, %v3066
  %3068 = vmatmul.bf16.gmra.mxu0 %v1593
  %v3069 = vpop.f32.mrf.mxu0
  %v3070 = vadd.f32 %v2926, %v3069
  %v3071 = vpop.f32.mrf.mxu0
  %v3072 = vadd.f32 %v2928, %v3071
  %3073 = vmatmul.bf16.gmra.mxu0 %v1604
  %v3074 = vpop.f32.mrf.mxu0
  %v3075 = vadd.f32 %v2931, %v3074
  %v3076 = vpop.f32.mrf.mxu0
  %v3077 = vadd.f32 %v2933, %v3076
  %3078 = vmatmul.bf16.gmra.mxu0 %v1615
  %v3079 = vpop.f32.mrf.mxu0
  %v3080 = vadd.f32 %v2936, %v3079
  %v3081 = vpop.f32.mrf.mxu0
  %v3082 = vadd.f32 %v2938, %v3081
  %3083 = vmatmul.bf16.gmra.mxu0 %v1626
  %v3084 = vpop.f32.mrf.mxu0
  %v3085 = vadd.f32 %v2941, %v3084
  %v3086 = vpop.f32.mrf.mxu0
  %v3087 = vadd.f32 %v2943, %v3086
  %3088 = vmatmul.bf16.gmra.mxu0 %v1637
  %v3089 = vpop.f32.mrf.mxu0
  %v3090 = vadd.f32 %v2946, %v3089
  %v3091 = vpop.f32.mrf.mxu0
  %v3092 = vadd.f32 %v2948, %v3091
  %3093 = vmatmul.bf16.gmra.mxu0 %v1648
  %v3094 = vpop.f32.mrf.mxu0
  %v3095 = vadd.f32 %v2951, %v3094
  %v3096 = vpop.f32.mrf.mxu0
  %v3097 = vadd.f32 %v2953, %v3096
  %3098 = vmatmul.bf16.gmra.mxu0 %v1659
  %v3099 = vpop.f32.mrf.mxu0
  %v3100 = vadd.f32 %v2956, %v3099
  %v3101 = vpop.f32.mrf.mxu0
  %v3102 = vadd.f32 %v2958, %v3101
  %3103 = vmatmul.bf16.gmra.mxu0 %v1670
  %v3104 = vpop.f32.mrf.mxu0
  %v3105 = vadd.f32 %v2961, %v3104
  %v3106 = vpop.f32.mrf.mxu0
  %v3107 = vadd.f32 %v2963, %v3106
  %3108 = vmatmul.bf16.gmra.mxu0 %v1681
  %v3109 = vpop.f32.mrf.mxu0
  %v3110 = vadd.f32 %v2966, %v3109
  %v3111 = vpop.f32.mrf.mxu0
  %v3112 = vadd.f32 %v2968, %v3111
  %3113 = vmatmul.bf16.gmra.mxu0 %v1692
  %v3114 = vpop.f32.mrf.mxu0
  %v3115 = vadd.f32 %v2971, %v3114
  %v3116 = vpop.f32.mrf.mxu0
  %v3117 = vadd.f32 %v2973, %v3116
  %3118 = vmatmul.bf16.gmra.mxu0 %v1703
  %v3119 = vpop.f32.mrf.mxu0
  %v3120 = vadd.f32 %v2976, %v3119
  %v3121 = vpop.f32.mrf.mxu0
  %v3122 = vadd.f32 %v2978, %v3121
  %3123 = vmatmul.bf16.gmra.mxu0 %v1714
  %v3124 = vpop.f32.mrf.mxu0
  %v3125 = vadd.f32 %v2981, %v3124
  %v3126 = vpop.f32.mrf.mxu0
  %v3127 = vadd.f32 %v2983, %v3126
  %3128 = vmatmul.bf16.gmra.mxu0 %v1725
  %v3129 = vpop.f32.mrf.mxu0
  %v3130 = vadd.f32 %v2986, %v3129
  %v3131 = vpop.f32.mrf.mxu0
  %v3132 = vadd.f32 %v2988, %v3131
  %3133 = vdwg.mxu0
  %3134 = vmatpush.bf16.msra.mxu0 %v2421
  %3135 = vmatpush.bf16.msra.mxu0 %v2420
  %3136 = vmatpush.bf16.msra.mxu0 %v2419
  %3137 = vmatpush.bf16.msra.mxu0 %v2418
  %3138 = vmatpush.bf16.msra.mxu0 %v2417
  %3139 = vmatpush.bf16.msra.mxu0 %v2416
  %3140 = vmatpush.bf16.msra.mxu0 %v2415
  %3141 = vmatpush.bf16.msra.mxu0 %v2414
  %3142 = vmatmul.bf16.gmra.mxu0 %v1440
  %v3143 = vpop.f32.mrf.mxu0
  %v3144 = vadd.f32 %v3000, %v3143
  %v3145 = vpop.f32.mrf.mxu0
  %v3146 = vadd.f32 %v3002, %v3145
  %3147 = vmatmul.bf16.gmra.mxu0 %v1451
  %v3148 = vpop.f32.mrf.mxu0
  %v3149 = vadd.f32 %v3005, %v3148
  %v3150 = vpop.f32.mrf.mxu0
  %v3151 = vadd.f32 %v3007, %v3150
  %3152 = vmatmul.bf16.gmra.mxu0 %v1462
  %v3153 = vpop.f32.mrf.mxu0
  %v3154 = vadd.f32 %v3010, %v3153
  %v3155 = vpop.f32.mrf.mxu0
  %v3156 = vadd.f32 %v3012, %v3155
  %3157 = vmatmul.bf16.gmra.mxu0 %v1473
  %v3158 = vpop.f32.mrf.mxu0
  %v3159 = vadd.f32 %v3015, %v3158
  %v3160 = vpop.f32.mrf.mxu0
  %v3161 = vadd.f32 %v3017, %v3160
  %3162 = vmatmul.bf16.gmra.mxu0 %v1484
  %v3163 = vpop.f32.mrf.mxu0
  %v3164 = vadd.f32 %v3020, %v3163
  %v3165 = vpop.f32.mrf.mxu0
  %v3166 = vadd.f32 %v3022, %v3165
  %3167 = vmatmul.bf16.gmra.mxu0 %v1495
  %v3168 = vpop.f32.mrf.mxu0
  %v3169 = vadd.f32 %v3025, %v3168
  %v3170 = vpop.f32.mrf.mxu0
  %v3171 = vadd.f32 %v3027, %v3170
  %3172 = vmatmul.bf16.gmra.mxu0 %v1506
  %v3173 = vpop.f32.mrf.mxu0
  %v3174 = vadd.f32 %v3030, %v3173
  %v3175 = vpop.f32.mrf.mxu0
  %v3176 = vadd.f32 %v3032, %v3175
  %3177 = vmatmul.bf16.gmra.mxu0 %v1517
  %v3178 = vpop.f32.mrf.mxu0
  %v3179 = vadd.f32 %v3035, %v3178
  %v3180 = vpop.f32.mrf.mxu0
  %v3181 = vadd.f32 %v3037, %v3180
  %3182 = vmatmul.bf16.gmra.mxu0 %v1528
  %v3183 = vpop.f32.mrf.mxu0
  %v3184 = vadd.f32 %v3040, %v3183
  %v3185 = vpop.f32.mrf.mxu0
  %v3186 = vadd.f32 %v3042, %v3185
  %3187 = vmatmul.bf16.gmra.mxu0 %v1539
  %v3188 = vpop.f32.mrf.mxu0
  %v3189 = vadd.f32 %v3045, %v3188
  %v3190 = vpop.f32.mrf.mxu0
  %v3191 = vadd.f32 %v3047, %v3190
  %3192 = vmatmul.bf16.gmra.mxu0 %v1550
  %v3193 = vpop.f32.mrf.mxu0
  %v3194 = vadd.f32 %v3050, %v3193
  %v3195 = vpop.f32.mrf.mxu0
  %v3196 = vadd.f32 %v3052, %v3195
  %3197 = vmatmul.bf16.gmra.mxu0 %v1561
  %v3198 = vpop.f32.mrf.mxu0
  %v3199 = vadd.f32 %v3055, %v3198
  %v3200 = vpop.f32.mrf.mxu0
  %v3201 = vadd.f32 %v3057, %v3200
  %3202 = vmatmul.bf16.gmra.mxu0 %v1572
  %v3203 = vpop.f32.mrf.mxu0
  %v3204 = vadd.f32 %v3060, %v3203
  %v3205 = vpop.f32.mrf.mxu0
  %v3206 = vadd.f32 %v3062, %v3205
  %3207 = vmatmul.bf16.gmra.mxu0 %v1583
  %v3208 = vpop.f32.mrf.mxu0
  %v3209 = vadd.f32 %v3065, %v3208
  %v3210 = vpop.f32.mrf.mxu0
  %v3211 = vadd.f32 %v3067, %v3210
  %3212 = vmatmul.bf16.gmra.mxu0 %v1594
  %v3213 = vpop.f32.mrf.mxu0
  %v3214 = vadd.f32 %v3070, %v3213
  %v3215 = vpop.f32.mrf.mxu0
  %v3216 = vadd.f32 %v3072, %v3215
  %3217 = vmatmul.bf16.gmra.mxu0 %v1605
  %v3218 = vpop.f32.mrf.mxu0
  %v3219 = vadd.f32 %v3075, %v3218
  %v3220 = vpop.f32.mrf.mxu0
  %v3221 = vadd.f32 %v3077, %v3220
  %3222 = vmatmul.bf16.gmra.mxu0 %v1616
  %v3223 = vpop.f32.mrf.mxu0
  %v3224 = vadd.f32 %v3080, %v3223
  %v3225 = vpop.f32.mrf.mxu0
  %v3226 = vadd.f32 %v3082, %v3225
  %3227 = vmatmul.bf16.gmra.mxu0 %v1627
  %v3228 = vpop.f32.mrf.mxu0
  %v3229 = vadd.f32 %v3085, %v3228
  %v3230 = vpop.f32.mrf.mxu0
  %v3231 = vadd.f32 %v3087, %v3230
  %3232 = vmatmul.bf16.gmra.mxu0 %v1638
  %v3233 = vpop.f32.mrf.mxu0
  %v3234 = vadd.f32 %v3090, %v3233
  %v3235 = vpop.f32.mrf.mxu0
  %v3236 = vadd.f32 %v3092, %v3235
  %3237 = vmatmul.bf16.gmra.mxu0 %v1649
  %v3238 = vpop.f32.mrf.mxu0
  %v3239 = vadd.f32 %v3095, %v3238
  %v3240 = vpop.f32.mrf.mxu0
  %v3241 = vadd.f32 %v3097, %v3240
  %3242 = vmatmul.bf16.gmra.mxu0 %v1660
  %v3243 = vpop.f32.mrf.mxu0
  %v3244 = vadd.f32 %v3100, %v3243
  %v3245 = vpop.f32.mrf.mxu0
  %v3246 = vadd.f32 %v3102, %v3245
  %3247 = vmatmul.bf16.gmra.mxu0 %v1671
  %v3248 = vpop.f32.mrf.mxu0
  %v3249 = vadd.f32 %v3105, %v3248
  %v3250 = vpop.f32.mrf.mxu0
  %v3251 = vadd.f32 %v3107, %v3250
  %3252 = vmatmul.bf16.gmra.mxu0 %v1682
  %v3253 = vpop.f32.mrf.mxu0
  %v3254 = vadd.f32 %v3110, %v3253
  %v3255 = vpop.f32.mrf.mxu0
  %v3256 = vadd.f32 %v3112, %v3255
  %3257 = vmatmul.bf16.gmra.mxu0 %v1693
  %v3258 = vpop.f32.mrf.mxu0
  %v3259 = vadd.f32 %v3115, %v3258
  %v3260 = vpop.f32.mrf.mxu0
  %v3261 = vadd.f32 %v3117, %v3260
  %3262 = vmatmul.bf16.gmra.mxu0 %v1704
  %v3263 = vpop.f32.mrf.mxu0
  %v3264 = vadd.f32 %v3120, %v3263
  %v3265 = vpop.f32.mrf.mxu0
  %v3266 = vadd.f32 %v3122, %v3265
  %3267 = vmatmul.bf16.gmra.mxu0 %v1715
  %v3268 = vpop.f32.mrf.mxu0
  %v3269 = vadd.f32 %v3125, %v3268
  %v3270 = vpop.f32.mrf.mxu0
  %v3271 = vadd.f32 %v3127, %v3270
  %3272 = vmatmul.bf16.gmra.mxu0 %v1726
  %v3273 = vpop.f32.mrf.mxu0
  %v3274 = vadd.f32 %v3130, %v3273
  %v3275 = vpop.f32.mrf.mxu0
  %v3276 = vadd.f32 %v3132, %v3275
  %3277 = vdwg.mxu0
  %3278 = vmatpush.bf16.msra.mxu0 %v2429
  %3279 = vmatpush.bf16.msra.mxu0 %v2428
  %3280 = vmatpush.bf16.msra.mxu0 %v2427
  %3281 = vmatpush.bf16.msra.mxu0 %v2426
  %3282 = vmatpush.bf16.msra.mxu0 %v2425
  %3283 = vmatpush.bf16.msra.mxu0 %v2424
  %3284 = vmatpush.bf16.msra.mxu0 %v2423
  %3285 = vmatpush.bf16.msra.mxu0 %v2422
  %3286 = vmatmul.bf16.gmra.mxu0 %v1441
  %v3287 = vpop.f32.mrf.mxu0
  %v3288 = vadd.f32 %v3144, %v3287
  %v3289 = vpop.f32.mrf.mxu0
  %v3290 = vadd.f32 %v3146, %v3289
  %3291 = vmatmul.bf16.gmra.mxu0 %v1452
  %v3292 = vpop.f32.mrf.mxu0
  %v3293 = vadd.f32 %v3149, %v3292
  %v3294 = vpop.f32.mrf.mxu0
  %v3295 = vadd.f32 %v3151, %v3294
  %3296 = vmatmul.bf16.gmra.mxu0 %v1463
  %v3297 = vpop.f32.mrf.mxu0
  %v3298 = vadd.f32 %v3154, %v3297
  %v3299 = vpop.f32.mrf.mxu0
  %v3300 = vadd.f32 %v3156, %v3299
  %3301 = vmatmul.bf16.gmra.mxu0 %v1474
  %v3302 = vpop.f32.mrf.mxu0
  %v3303 = vadd.f32 %v3159, %v3302
  %v3304 = vpop.f32.mrf.mxu0
  %v3305 = vadd.f32 %v3161, %v3304
  %3306 = vmatmul.bf16.gmra.mxu0 %v1485
  %v3307 = vpop.f32.mrf.mxu0
  %v3308 = vadd.f32 %v3164, %v3307
  %v3309 = vpop.f32.mrf.mxu0
  %v3310 = vadd.f32 %v3166, %v3309
  %3311 = vmatmul.bf16.gmra.mxu0 %v1496
  %v3312 = vpop.f32.mrf.mxu0
  %v3313 = vadd.f32 %v3169, %v3312
  %v3314 = vpop.f32.mrf.mxu0
  %v3315 = vadd.f32 %v3171, %v3314
  %3316 = vmatmul.bf16.gmra.mxu0 %v1507
  %v3317 = vpop.f32.mrf.mxu0
  %v3318 = vadd.f32 %v3174, %v3317
  %v3319 = vpop.f32.mrf.mxu0
  %v3320 = vadd.f32 %v3176, %v3319
  %3321 = vmatmul.bf16.gmra.mxu0 %v1518
  %v3322 = vpop.f32.mrf.mxu0
  %v3323 = vadd.f32 %v3179, %v3322
  %v3324 = vpop.f32.mrf.mxu0
  %v3325 = vadd.f32 %v3181, %v3324
  %3326 = vmatmul.bf16.gmra.mxu0 %v1529
  %v3327 = vpop.f32.mrf.mxu0
  %v3328 = vadd.f32 %v3184, %v3327
  %v3329 = vpop.f32.mrf.mxu0
  %v3330 = vadd.f32 %v3186, %v3329
  %3331 = vmatmul.bf16.gmra.mxu0 %v1540
  %v3332 = vpop.f32.mrf.mxu0
  %v3333 = vadd.f32 %v3189, %v3332
  %v3334 = vpop.f32.mrf.mxu0
  %v3335 = vadd.f32 %v3191, %v3334
  %3336 = vmatmul.bf16.gmra.mxu0 %v1551
  %v3337 = vpop.f32.mrf.mxu0
  %v3338 = vadd.f32 %v3194, %v3337
  %v3339 = vpop.f32.mrf.mxu0
  %v3340 = vadd.f32 %v3196, %v3339
  %3341 = vmatmul.bf16.gmra.mxu0 %v1562
  %v3342 = vpop.f32.mrf.mxu0
  %v3343 = vadd.f32 %v3199, %v3342
  %v3344 = vpop.f32.mrf.mxu0
  %v3345 = vadd.f32 %v3201, %v3344
  %3346 = vmatmul.bf16.gmra.mxu0 %v1573
  %v3347 = vpop.f32.mrf.mxu0
  %v3348 = vadd.f32 %v3204, %v3347
  %v3349 = vpop.f32.mrf.mxu0
  %v3350 = vadd.f32 %v3206, %v3349
  %3351 = vmatmul.bf16.gmra.mxu0 %v1584
  %v3352 = vpop.f32.mrf.mxu0
  %v3353 = vadd.f32 %v3209, %v3352
  %v3354 = vpop.f32.mrf.mxu0
  %v3355 = vadd.f32 %v3211, %v3354
  %3356 = vmatmul.bf16.gmra.mxu0 %v1595
  %v3357 = vpop.f32.mrf.mxu0
  %v3358 = vadd.f32 %v3214, %v3357
  %v3359 = vpop.f32.mrf.mxu0
  %v3360 = vadd.f32 %v3216, %v3359
  %3361 = vmatmul.bf16.gmra.mxu0 %v1606
  %v3362 = vpop.f32.mrf.mxu0
  %v3363 = vadd.f32 %v3219, %v3362
  %v3364 = vpop.f32.mrf.mxu0
  %v3365 = vadd.f32 %v3221, %v3364
  %3366 = vmatmul.bf16.gmra.mxu0 %v1617
  %v3367 = vpop.f32.mrf.mxu0
  %v3368 = vadd.f32 %v3224, %v3367
  %v3369 = vpop.f32.mrf.mxu0
  %v3370 = vadd.f32 %v3226, %v3369
  %3371 = vmatmul.bf16.gmra.mxu0 %v1628
  %v3372 = vpop.f32.mrf.mxu0
  %v3373 = vadd.f32 %v3229, %v3372
  %v3374 = vpop.f32.mrf.mxu0
  %v3375 = vadd.f32 %v3231, %v3374
  %3376 = vmatmul.bf16.gmra.mxu0 %v1639
  %v3377 = vpop.f32.mrf.mxu0
  %v3378 = vadd.f32 %v3234, %v3377
  %v3379 = vpop.f32.mrf.mxu0
  %v3380 = vadd.f32 %v3236, %v3379
  %3381 = vmatmul.bf16.gmra.mxu0 %v1650
  %v3382 = vpop.f32.mrf.mxu0
  %v3383 = vadd.f32 %v3239, %v3382
  %v3384 = vpop.f32.mrf.mxu0
  %v3385 = vadd.f32 %v3241, %v3384
  %3386 = vmatmul.bf16.gmra.mxu0 %v1661
  %v3387 = vpop.f32.mrf.mxu0
  %v3388 = vadd.f32 %v3244, %v3387
  %v3389 = vpop.f32.mrf.mxu0
  %v3390 = vadd.f32 %v3246, %v3389
  %3391 = vmatmul.bf16.gmra.mxu0 %v1672
  %v3392 = vpop.f32.mrf.mxu0
  %v3393 = vadd.f32 %v3249, %v3392
  %v3394 = vpop.f32.mrf.mxu0
  %v3395 = vadd.f32 %v3251, %v3394
  %3396 = vmatmul.bf16.gmra.mxu0 %v1683
  %v3397 = vpop.f32.mrf.mxu0
  %v3398 = vadd.f32 %v3254, %v3397
  %v3399 = vpop.f32.mrf.mxu0
  %v3400 = vadd.f32 %v3256, %v3399
  %3401 = vmatmul.bf16.gmra.mxu0 %v1694
  %v3402 = vpop.f32.mrf.mxu0
  %v3403 = vadd.f32 %v3259, %v3402
  %v3404 = vpop.f32.mrf.mxu0
  %v3405 = vadd.f32 %v3261, %v3404
  %3406 = vmatmul.bf16.gmra.mxu0 %v1705
  %v3407 = vpop.f32.mrf.mxu0
  %v3408 = vadd.f32 %v3264, %v3407
  %v3409 = vpop.f32.mrf.mxu0
  %v3410 = vadd.f32 %v3266, %v3409
  %3411 = vmatmul.bf16.gmra.mxu0 %v1716
  %v3412 = vpop.f32.mrf.mxu0
  %v3413 = vadd.f32 %v3269, %v3412
  %v3414 = vpop.f32.mrf.mxu0
  %v3415 = vadd.f32 %v3271, %v3414
  %3416 = vmatmul.bf16.gmra.mxu0 %v1727
  %v3417 = vpop.f32.mrf.mxu0
  %v3418 = vadd.f32 %v3274, %v3417
  %v3419 = vpop.f32.mrf.mxu0
  %v3420 = vadd.f32 %v3276, %v3419
  %3421 = vdwg.mxu0
  %3422 = vmatpush.bf16.msra.mxu0 %v2437
  %3423 = vmatpush.bf16.msra.mxu0 %v2436
  %3424 = vmatpush.bf16.msra.mxu0 %v2435
  %3425 = vmatpush.bf16.msra.mxu0 %v2434
  %3426 = vmatpush.bf16.msra.mxu0 %v2433
  %3427 = vmatpush.bf16.msra.mxu0 %v2432
  %3428 = vmatpush.bf16.msra.mxu0 %v2431
  %3429 = vmatpush.bf16.msra.mxu0 %v2430
  %3430 = vmatmul.bf16.gmra.mxu0 %v1442
  %v3431 = vpop.f32.mrf.mxu0
  %v3432 = vadd.f32 %v3288, %v3431
  %v3433 = vpop.f32.mrf.mxu0
  %v3434 = vadd.f32 %v3290, %v3433
  %3435 = vmatmul.bf16.gmra.mxu0 %v1453
  %v3436 = vpop.f32.mrf.mxu0
  %v3437 = vadd.f32 %v3293, %v3436
  %v3438 = vpop.f32.mrf.mxu0
  %v3439 = vadd.f32 %v3295, %v3438
  %3440 = vmatmul.bf16.gmra.mxu0 %v1464
  %v3441 = vpop.f32.mrf.mxu0
  %v3442 = vadd.f32 %v3298, %v3441
  %v3443 = vpop.f32.mrf.mxu0
  %v3444 = vadd.f32 %v3300, %v3443
  %3445 = vmatmul.bf16.gmra.mxu0 %v1475
  %v3446 = vpop.f32.mrf.mxu0
  %v3447 = vadd.f32 %v3303, %v3446
  %v3448 = vpop.f32.mrf.mxu0
  %v3449 = vadd.f32 %v3305, %v3448
  %3450 = vmatmul.bf16.gmra.mxu0 %v1486
  %v3451 = vpop.f32.mrf.mxu0
  %v3452 = vadd.f32 %v3308, %v3451
  %v3453 = vpop.f32.mrf.mxu0
  %v3454 = vadd.f32 %v3310, %v3453
  %3455 = vmatmul.bf16.gmra.mxu0 %v1497
  %v3456 = vpop.f32.mrf.mxu0
  %v3457 = vadd.f32 %v3313, %v3456
  %v3458 = vpop.f32.mrf.mxu0
  %v3459 = vadd.f32 %v3315, %v3458
  %3460 = vmatmul.bf16.gmra.mxu0 %v1508
  %v3461 = vpop.f32.mrf.mxu0
  %v3462 = vadd.f32 %v3318, %v3461
  %v3463 = vpop.f32.mrf.mxu0
  %v3464 = vadd.f32 %v3320, %v3463
  %3465 = vmatmul.bf16.gmra.mxu0 %v1519
  %v3466 = vpop.f32.mrf.mxu0
  %v3467 = vadd.f32 %v3323, %v3466
  %v3468 = vpop.f32.mrf.mxu0
  %v3469 = vadd.f32 %v3325, %v3468
  %3470 = vmatmul.bf16.gmra.mxu0 %v1530
  %v3471 = vpop.f32.mrf.mxu0
  %v3472 = vadd.f32 %v3328, %v3471
  %v3473 = vpop.f32.mrf.mxu0
  %v3474 = vadd.f32 %v3330, %v3473
  %3475 = vmatmul.bf16.gmra.mxu0 %v1541
  %v3476 = vpop.f32.mrf.mxu0
  %v3477 = vadd.f32 %v3333, %v3476
  %v3478 = vpop.f32.mrf.mxu0
  %v3479 = vadd.f32 %v3335, %v3478
  %3480 = vmatmul.bf16.gmra.mxu0 %v1552
  %v3481 = vpop.f32.mrf.mxu0
  %v3482 = vadd.f32 %v3338, %v3481
  %v3483 = vpop.f32.mrf.mxu0
  %v3484 = vadd.f32 %v3340, %v3483
  %3485 = vmatmul.bf16.gmra.mxu0 %v1563
  %v3486 = vpop.f32.mrf.mxu0
  %v3487 = vadd.f32 %v3343, %v3486
  %v3488 = vpop.f32.mrf.mxu0
  %v3489 = vadd.f32 %v3345, %v3488
  %3490 = vmatmul.bf16.gmra.mxu0 %v1574
  %v3491 = vpop.f32.mrf.mxu0
  %v3492 = vadd.f32 %v3348, %v3491
  %v3493 = vpop.f32.mrf.mxu0
  %v3494 = vadd.f32 %v3350, %v3493
  %3495 = vmatmul.bf16.gmra.mxu0 %v1585
  %v3496 = vpop.f32.mrf.mxu0
  %v3497 = vadd.f32 %v3353, %v3496
  %v3498 = vpop.f32.mrf.mxu0
  %v3499 = vadd.f32 %v3355, %v3498
  %3500 = vmatmul.bf16.gmra.mxu0 %v1596
  %v3501 = vpop.f32.mrf.mxu0
  %v3502 = vadd.f32 %v3358, %v3501
  %v3503 = vpop.f32.mrf.mxu0
  %v3504 = vadd.f32 %v3360, %v3503
  %3505 = vmatmul.bf16.gmra.mxu0 %v1607
  %v3506 = vpop.f32.mrf.mxu0
  %v3507 = vadd.f32 %v3363, %v3506
  %v3508 = vpop.f32.mrf.mxu0
  %v3509 = vadd.f32 %v3365, %v3508
  %3510 = vmatmul.bf16.gmra.mxu0 %v1618
  %v3511 = vpop.f32.mrf.mxu0
  %v3512 = vadd.f32 %v3368, %v3511
  %v3513 = vpop.f32.mrf.mxu0
  %v3514 = vadd.f32 %v3370, %v3513
  %3515 = vmatmul.bf16.gmra.mxu0 %v1629
  %v3516 = vpop.f32.mrf.mxu0
  %v3517 = vadd.f32 %v3373, %v3516
  %v3518 = vpop.f32.mrf.mxu0
  %v3519 = vadd.f32 %v3375, %v3518
  %3520 = vmatmul.bf16.gmra.mxu0 %v1640
  %v3521 = vpop.f32.mrf.mxu0
  %v3522 = vadd.f32 %v3378, %v3521
  %v3523 = vpop.f32.mrf.mxu0
  %v3524 = vadd.f32 %v3380, %v3523
  %3525 = vmatmul.bf16.gmra.mxu0 %v1651
  %v3526 = vpop.f32.mrf.mxu0
  %v3527 = vadd.f32 %v3383, %v3526
  %v3528 = vpop.f32.mrf.mxu0
  %v3529 = vadd.f32 %v3385, %v3528
  %3530 = vmatmul.bf16.gmra.mxu0 %v1662
  %v3531 = vpop.f32.mrf.mxu0
  %v3532 = vadd.f32 %v3388, %v3531
  %v3533 = vpop.f32.mrf.mxu0
  %v3534 = vadd.f32 %v3390, %v3533
  %3535 = vmatmul.bf16.gmra.mxu0 %v1673
  %v3536 = vpop.f32.mrf.mxu0
  %v3537 = vadd.f32 %v3393, %v3536
  %v3538 = vpop.f32.mrf.mxu0
  %v3539 = vadd.f32 %v3395, %v3538
  %3540 = vmatmul.bf16.gmra.mxu0 %v1684
  %v3541 = vpop.f32.mrf.mxu0
  %v3542 = vadd.f32 %v3398, %v3541
  %v3543 = vpop.f32.mrf.mxu0
  %v3544 = vadd.f32 %v3400, %v3543
  %3545 = vmatmul.bf16.gmra.mxu0 %v1695
  %v3546 = vpop.f32.mrf.mxu0
  %v3547 = vadd.f32 %v3403, %v3546
  %v3548 = vpop.f32.mrf.mxu0
  %v3549 = vadd.f32 %v3405, %v3548
  %3550 = vmatmul.bf16.gmra.mxu0 %v1706
  %v3551 = vpop.f32.mrf.mxu0
  %v3552 = vadd.f32 %v3408, %v3551
  %v3553 = vpop.f32.mrf.mxu0
  %v3554 = vadd.f32 %v3410, %v3553
  %3555 = vmatmul.bf16.gmra.mxu0 %v1717
  %v3556 = vpop.f32.mrf.mxu0
  %v3557 = vadd.f32 %v3413, %v3556
  %v3558 = vpop.f32.mrf.mxu0
  %v3559 = vadd.f32 %v3415, %v3558
  %3560 = vmatmul.bf16.gmra.mxu0 %v1728
  %v3561 = vpop.f32.mrf.mxu0
  %v3562 = vadd.f32 %v3418, %v3561
  %v3563 = vpop.f32.mrf.mxu0
  %v3564 = vadd.f32 %v3420, %v3563
  %3565 = vdwg.mxu0
  %3566 = vmatpush.bf16.msra.mxu0 %v2445
  %3567 = vmatpush.bf16.msra.mxu0 %v2444
  %3568 = vmatpush.bf16.msra.mxu0 %v2443
  %3569 = vmatpush.bf16.msra.mxu0 %v2442
  %3570 = vmatpush.bf16.msra.mxu0 %v2441
  %3571 = vmatpush.bf16.msra.mxu0 %v2440
  %3572 = vmatpush.bf16.msra.mxu0 %v2439
  %3573 = vmatpush.bf16.msra.mxu0 %v2438
  %3574 = vmatmul.bf16.gmra.mxu0 %v1443
  %v3575 = vpop.f32.mrf.mxu0
  %v3576 = vadd.f32 %v3432, %v3575
  %v3577 = vpop.f32.mrf.mxu0
  %v3578 = vadd.f32 %v3434, %v3577
  %3579 = vmatmul.bf16.gmra.mxu0 %v1454
  %v3580 = vpop.f32.mrf.mxu0
  %v3581 = vadd.f32 %v3437, %v3580
  %v3582 = vpop.f32.mrf.mxu0
  %v3583 = vadd.f32 %v3439, %v3582
  %3584 = vmatmul.bf16.gmra.mxu0 %v1465
  %v3585 = vpop.f32.mrf.mxu0
  %v3586 = vadd.f32 %v3442, %v3585
  %v3587 = vpop.f32.mrf.mxu0
  %v3588 = vadd.f32 %v3444, %v3587
  %3589 = vmatmul.bf16.gmra.mxu0 %v1476
  %v3590 = vpop.f32.mrf.mxu0
  %v3591 = vadd.f32 %v3447, %v3590
  %v3592 = vpop.f32.mrf.mxu0
  %v3593 = vadd.f32 %v3449, %v3592
  %3594 = vmatmul.bf16.gmra.mxu0 %v1487
  %v3595 = vpop.f32.mrf.mxu0
  %v3596 = vadd.f32 %v3452, %v3595
  %v3597 = vpop.f32.mrf.mxu0
  %v3598 = vadd.f32 %v3454, %v3597
  %3599 = vmatmul.bf16.gmra.mxu0 %v1498
  %v3600 = vpop.f32.mrf.mxu0
  %v3601 = vadd.f32 %v3457, %v3600
  %v3602 = vpop.f32.mrf.mxu0
  %v3603 = vadd.f32 %v3459, %v3602
  %3604 = vmatmul.bf16.gmra.mxu0 %v1509
  %v3605 = vpop.f32.mrf.mxu0
  %v3606 = vadd.f32 %v3462, %v3605
  %v3607 = vpop.f32.mrf.mxu0
  %v3608 = vadd.f32 %v3464, %v3607
  %3609 = vmatmul.bf16.gmra.mxu0 %v1520
  %v3610 = vpop.f32.mrf.mxu0
  %v3611 = vadd.f32 %v3467, %v3610
  %v3612 = vpop.f32.mrf.mxu0
  %v3613 = vadd.f32 %v3469, %v3612
  %3614 = vmatmul.bf16.gmra.mxu0 %v1531
  %v3615 = vpop.f32.mrf.mxu0
  %v3616 = vadd.f32 %v3472, %v3615
  %v3617 = vpop.f32.mrf.mxu0
  %v3618 = vadd.f32 %v3474, %v3617
  %3619 = vmatmul.bf16.gmra.mxu0 %v1542
  %v3620 = vpop.f32.mrf.mxu0
  %v3621 = vadd.f32 %v3477, %v3620
  %v3622 = vpop.f32.mrf.mxu0
  %v3623 = vadd.f32 %v3479, %v3622
  %3624 = vmatmul.bf16.gmra.mxu0 %v1553
  %v3625 = vpop.f32.mrf.mxu0
  %v3626 = vadd.f32 %v3482, %v3625
  %v3627 = vpop.f32.mrf.mxu0
  %v3628 = vadd.f32 %v3484, %v3627
  %3629 = vmatmul.bf16.gmra.mxu0 %v1564
  %v3630 = vpop.f32.mrf.mxu0
  %v3631 = vadd.f32 %v3487, %v3630
  %v3632 = vpop.f32.mrf.mxu0
  %v3633 = vadd.f32 %v3489, %v3632
  %3634 = vmatmul.bf16.gmra.mxu0 %v1575
  %v3635 = vpop.f32.mrf.mxu0
  %v3636 = vadd.f32 %v3492, %v3635
  %v3637 = vpop.f32.mrf.mxu0
  %v3638 = vadd.f32 %v3494, %v3637
  %3639 = vmatmul.bf16.gmra.mxu0 %v1586
  %v3640 = vpop.f32.mrf.mxu0
  %v3641 = vadd.f32 %v3497, %v3640
  %v3642 = vpop.f32.mrf.mxu0
  %v3643 = vadd.f32 %v3499, %v3642
  %3644 = vmatmul.bf16.gmra.mxu0 %v1597
  %v3645 = vpop.f32.mrf.mxu0
  %v3646 = vadd.f32 %v3502, %v3645
  %v3647 = vpop.f32.mrf.mxu0
  %v3648 = vadd.f32 %v3504, %v3647
  %3649 = vmatmul.bf16.gmra.mxu0 %v1608
  %v3650 = vpop.f32.mrf.mxu0
  %v3651 = vadd.f32 %v3507, %v3650
  %v3652 = vpop.f32.mrf.mxu0
  %v3653 = vadd.f32 %v3509, %v3652
  %3654 = vmatmul.bf16.gmra.mxu0 %v1619
  %v3655 = vpop.f32.mrf.mxu0
  %v3656 = vadd.f32 %v3512, %v3655
  %v3657 = vpop.f32.mrf.mxu0
  %v3658 = vadd.f32 %v3514, %v3657
  %3659 = vmatmul.bf16.gmra.mxu0 %v1630
  %v3660 = vpop.f32.mrf.mxu0
  %v3661 = vadd.f32 %v3517, %v3660
  %v3662 = vpop.f32.mrf.mxu0
  %v3663 = vadd.f32 %v3519, %v3662
  %3664 = vmatmul.bf16.gmra.mxu0 %v1641
  %v3665 = vpop.f32.mrf.mxu0
  %v3666 = vadd.f32 %v3522, %v3665
  %v3667 = vpop.f32.mrf.mxu0
  %v3668 = vadd.f32 %v3524, %v3667
  %3669 = vmatmul.bf16.gmra.mxu0 %v1652
  %v3670 = vpop.f32.mrf.mxu0
  %v3671 = vadd.f32 %v3527, %v3670
  %v3672 = vpop.f32.mrf.mxu0
  %v3673 = vadd.f32 %v3529, %v3672
  %3674 = vmatmul.bf16.gmra.mxu0 %v1663
  %v3675 = vpop.f32.mrf.mxu0
  %v3676 = vadd.f32 %v3532, %v3675
  %v3677 = vpop.f32.mrf.mxu0
  %v3678 = vadd.f32 %v3534, %v3677
  %3679 = vmatmul.bf16.gmra.mxu0 %v1674
  %v3680 = vpop.f32.mrf.mxu0
  %v3681 = vadd.f32 %v3537, %v3680
  %v3682 = vpop.f32.mrf.mxu0
  %v3683 = vadd.f32 %v3539, %v3682
  %3684 = vmatmul.bf16.gmra.mxu0 %v1685
  %v3685 = vpop.f32.mrf.mxu0
  %v3686 = vadd.f32 %v3542, %v3685
  %v3687 = vpop.f32.mrf.mxu0
  %v3688 = vadd.f32 %v3544, %v3687
  %3689 = vmatmul.bf16.gmra.mxu0 %v1696
  %v3690 = vpop.f32.mrf.mxu0
  %v3691 = vadd.f32 %v3547, %v3690
  %v3692 = vpop.f32.mrf.mxu0
  %v3693 = vadd.f32 %v3549, %v3692
  %3694 = vmatmul.bf16.gmra.mxu0 %v1707
  %v3695 = vpop.f32.mrf.mxu0
  %v3696 = vadd.f32 %v3552, %v3695
  %v3697 = vpop.f32.mrf.mxu0
  %v3698 = vadd.f32 %v3554, %v3697
  %3699 = vmatmul.bf16.gmra.mxu0 %v1718
  %v3700 = vpop.f32.mrf.mxu0
  %v3701 = vadd.f32 %v3557, %v3700
  %v3702 = vpop.f32.mrf.mxu0
  %v3703 = vadd.f32 %v3559, %v3702
  %3704 = vmatmul.bf16.gmra.mxu0 %v1729
  %v3705 = vpop.f32.mrf.mxu0
  %v3706 = vadd.f32 %v3562, %v3705
  %v3707 = vpop.f32.mrf.mxu0
  %v3708 = vadd.f32 %v3564, %v3707
  %3709 = vdwg.mxu0
  %3710 = vmatpush.bf16.msra.mxu0 %v2453
  %3711 = vmatpush.bf16.msra.mxu0 %v2452
  %3712 = vmatpush.bf16.msra.mxu0 %v2451
  %3713 = vmatpush.bf16.msra.mxu0 %v2450
  %3714 = vmatpush.bf16.msra.mxu0 %v2449
  %3715 = vmatpush.bf16.msra.mxu0 %v2448
  %3716 = vmatpush.bf16.msra.mxu0 %v2447
  %3717 = vmatpush.bf16.msra.mxu0 %v2446
  %3718 = vmatmul.bf16.gmra.mxu0 %v1444
  %v3719 = vpop.f32.mrf.mxu0
  %v3720 = vadd.f32 %v3576, %v3719
  %v3721 = vpop.f32.mrf.mxu0
  %v3722 = vadd.f32 %v3578, %v3721
  %3723 = vmatmul.bf16.gmra.mxu0 %v1455
  %v3724 = vpop.f32.mrf.mxu0
  %v3725 = vadd.f32 %v3581, %v3724
  %v3726 = vpop.f32.mrf.mxu0
  %v3727 = vadd.f32 %v3583, %v3726
  %3728 = vmatmul.bf16.gmra.mxu0 %v1466
  %v3729 = vpop.f32.mrf.mxu0
  %v3730 = vadd.f32 %v3586, %v3729
  %v3731 = vpop.f32.mrf.mxu0
  %v3732 = vadd.f32 %v3588, %v3731
  %3733 = vmatmul.bf16.gmra.mxu0 %v1477
  %v3734 = vpop.f32.mrf.mxu0
  %v3735 = vadd.f32 %v3591, %v3734
  %v3736 = vpop.f32.mrf.mxu0
  %v3737 = vadd.f32 %v3593, %v3736
  %3738 = vmatmul.bf16.gmra.mxu0 %v1488
  %v3739 = vpop.f32.mrf.mxu0
  %v3740 = vadd.f32 %v3596, %v3739
  %v3741 = vpop.f32.mrf.mxu0
  %v3742 = vadd.f32 %v3598, %v3741
  %3743 = vmatmul.bf16.gmra.mxu0 %v1499
  %v3744 = vpop.f32.mrf.mxu0
  %v3745 = vadd.f32 %v3601, %v3744
  %v3746 = vpop.f32.mrf.mxu0
  %v3747 = vadd.f32 %v3603, %v3746
  %3748 = vmatmul.bf16.gmra.mxu0 %v1510
  %v3749 = vpop.f32.mrf.mxu0
  %v3750 = vadd.f32 %v3606, %v3749
  %v3751 = vpop.f32.mrf.mxu0
  %v3752 = vadd.f32 %v3608, %v3751
  %3753 = vmatmul.bf16.gmra.mxu0 %v1521
  %v3754 = vpop.f32.mrf.mxu0
  %v3755 = vadd.f32 %v3611, %v3754
  %v3756 = vpop.f32.mrf.mxu0
  %v3757 = vadd.f32 %v3613, %v3756
  %3758 = vmatmul.bf16.gmra.mxu0 %v1532
  %v3759 = vpop.f32.mrf.mxu0
  %v3760 = vadd.f32 %v3616, %v3759
  %v3761 = vpop.f32.mrf.mxu0
  %v3762 = vadd.f32 %v3618, %v3761
  %3763 = vmatmul.bf16.gmra.mxu0 %v1543
  %v3764 = vpop.f32.mrf.mxu0
  %v3765 = vadd.f32 %v3621, %v3764
  %v3766 = vpop.f32.mrf.mxu0
  %v3767 = vadd.f32 %v3623, %v3766
  %3768 = vmatmul.bf16.gmra.mxu0 %v1554
  %v3769 = vpop.f32.mrf.mxu0
  %v3770 = vadd.f32 %v3626, %v3769
  %v3771 = vpop.f32.mrf.mxu0
  %v3772 = vadd.f32 %v3628, %v3771
  %3773 = vmatmul.bf16.gmra.mxu0 %v1565
  %v3774 = vpop.f32.mrf.mxu0
  %v3775 = vadd.f32 %v3631, %v3774
  %v3776 = vpop.f32.mrf.mxu0
  %v3777 = vadd.f32 %v3633, %v3776
  %3778 = vmatmul.bf16.gmra.mxu0 %v1576
  %v3779 = vpop.f32.mrf.mxu0
  %v3780 = vadd.f32 %v3636, %v3779
  %v3781 = vpop.f32.mrf.mxu0
  %v3782 = vadd.f32 %v3638, %v3781
  %3783 = vmatmul.bf16.gmra.mxu0 %v1587
  %v3784 = vpop.f32.mrf.mxu0
  %v3785 = vadd.f32 %v3641, %v3784
  %v3786 = vpop.f32.mrf.mxu0
  %v3787 = vadd.f32 %v3643, %v3786
  %3788 = vmatmul.bf16.gmra.mxu0 %v1598
  %v3789 = vpop.f32.mrf.mxu0
  %v3790 = vadd.f32 %v3646, %v3789
  %v3791 = vpop.f32.mrf.mxu0
  %v3792 = vadd.f32 %v3648, %v3791
  %3793 = vmatmul.bf16.gmra.mxu0 %v1609
  %v3794 = vpop.f32.mrf.mxu0
  %v3795 = vadd.f32 %v3651, %v3794
  %v3796 = vpop.f32.mrf.mxu0
  %v3797 = vadd.f32 %v3653, %v3796
  %3798 = vmatmul.bf16.gmra.mxu0 %v1620
  %v3799 = vpop.f32.mrf.mxu0
  %v3800 = vadd.f32 %v3656, %v3799
  %v3801 = vpop.f32.mrf.mxu0
  %v3802 = vadd.f32 %v3658, %v3801
  %3803 = vmatmul.bf16.gmra.mxu0 %v1631
  %v3804 = vpop.f32.mrf.mxu0
  %v3805 = vadd.f32 %v3661, %v3804
  %v3806 = vpop.f32.mrf.mxu0
  %v3807 = vadd.f32 %v3663, %v3806
  %3808 = vmatmul.bf16.gmra.mxu0 %v1642
  %v3809 = vpop.f32.mrf.mxu0
  %v3810 = vadd.f32 %v3666, %v3809
  %v3811 = vpop.f32.mrf.mxu0
  %v3812 = vadd.f32 %v3668, %v3811
  %3813 = vmatmul.bf16.gmra.mxu0 %v1653
  %v3814 = vpop.f32.mrf.mxu0
  %v3815 = vadd.f32 %v3671, %v3814
  %v3816 = vpop.f32.mrf.mxu0
  %v3817 = vadd.f32 %v3673, %v3816
  %3818 = vmatmul.bf16.gmra.mxu0 %v1664
  %v3819 = vpop.f32.mrf.mxu0
  %v3820 = vadd.f32 %v3676, %v3819
  %v3821 = vpop.f32.mrf.mxu0
  %v3822 = vadd.f32 %v3678, %v3821
  %3823 = vmatmul.bf16.gmra.mxu0 %v1675
  %v3824 = vpop.f32.mrf.mxu0
  %v3825 = vadd.f32 %v3681, %v3824
  %v3826 = vpop.f32.mrf.mxu0
  %v3827 = vadd.f32 %v3683, %v3826
  %3828 = vmatmul.bf16.gmra.mxu0 %v1686
  %v3829 = vpop.f32.mrf.mxu0
  %v3830 = vadd.f32 %v3686, %v3829
  %v3831 = vpop.f32.mrf.mxu0
  %v3832 = vadd.f32 %v3688, %v3831
  %3833 = vmatmul.bf16.gmra.mxu0 %v1697
  %v3834 = vpop.f32.mrf.mxu0
  %v3835 = vadd.f32 %v3691, %v3834
  %v3836 = vpop.f32.mrf.mxu0
  %v3837 = vadd.f32 %v3693, %v3836
  %3838 = vmatmul.bf16.gmra.mxu0 %v1708
  %v3839 = vpop.f32.mrf.mxu0
  %v3840 = vadd.f32 %v3696, %v3839
  %v3841 = vpop.f32.mrf.mxu0
  %v3842 = vadd.f32 %v3698, %v3841
  %3843 = vmatmul.bf16.gmra.mxu0 %v1719
  %v3844 = vpop.f32.mrf.mxu0
  %v3845 = vadd.f32 %v3701, %v3844
  %v3846 = vpop.f32.mrf.mxu0
  %v3847 = vadd.f32 %v3703, %v3846
  %3848 = vmatmul.bf16.gmra.mxu0 %v1730
  %v3849 = vpop.f32.mrf.mxu0
  %v3850 = vadd.f32 %v3706, %v3849
  %v3851 = vpop.f32.mrf.mxu0
  %v3852 = vadd.f32 %v3708, %v3851
  %3853 = vdwg.mxu0
  %3854 = vmatpush.bf16.msra.mxu0 %v2461
  %3855 = vmatpush.bf16.msra.mxu0 %v2460
  %3856 = vmatpush.bf16.msra.mxu0 %v2459
  %3857 = vmatpush.bf16.msra.mxu0 %v2458
  %3858 = vmatpush.bf16.msra.mxu0 %v2457
  %3859 = vmatpush.bf16.msra.mxu0 %v2456
  %3860 = vmatpush.bf16.msra.mxu0 %v2455
  %3861 = vmatpush.bf16.msra.mxu0 %v2454
  %3862 = vmatmul.bf16.gmra.mxu0 %v1445
  %v3863 = vpop.f32.mrf.mxu0
  %v3864 = vadd.f32 %v3720, %v3863
  %v3865 = vpop.f32.mrf.mxu0
  %v3866 = vadd.f32 %v3722, %v3865
  %3867 = vmatmul.bf16.gmra.mxu0 %v1456
  %v3868 = vpop.f32.mrf.mxu0
  %v3869 = vadd.f32 %v3725, %v3868
  %v3870 = vpop.f32.mrf.mxu0
  %v3871 = vadd.f32 %v3727, %v3870
  %3872 = vmatmul.bf16.gmra.mxu0 %v1467
  %v3873 = vpop.f32.mrf.mxu0
  %v3874 = vadd.f32 %v3730, %v3873
  %v3875 = vpop.f32.mrf.mxu0
  %v3876 = vadd.f32 %v3732, %v3875
  %3877 = vmatmul.bf16.gmra.mxu0 %v1478
  %v3878 = vpop.f32.mrf.mxu0
  %v3879 = vadd.f32 %v3735, %v3878
  %v3880 = vpop.f32.mrf.mxu0
  %v3881 = vadd.f32 %v3737, %v3880
  %3882 = vmatmul.bf16.gmra.mxu0 %v1489
  %v3883 = vpop.f32.mrf.mxu0
  %v3884 = vadd.f32 %v3740, %v3883
  %v3885 = vpop.f32.mrf.mxu0
  %v3886 = vadd.f32 %v3742, %v3885
  %3887 = vmatmul.bf16.gmra.mxu0 %v1500
  %v3888 = vpop.f32.mrf.mxu0
  %v3889 = vadd.f32 %v3745, %v3888
  %v3890 = vpop.f32.mrf.mxu0
  %v3891 = vadd.f32 %v3747, %v3890
  %3892 = vmatmul.bf16.gmra.mxu0 %v1511
  %v3893 = vpop.f32.mrf.mxu0
  %v3894 = vadd.f32 %v3750, %v3893
  %v3895 = vpop.f32.mrf.mxu0
  %v3896 = vadd.f32 %v3752, %v3895
  %3897 = vmatmul.bf16.gmra.mxu0 %v1522
  %v3898 = vpop.f32.mrf.mxu0
  %v3899 = vadd.f32 %v3755, %v3898
  %v3900 = vpop.f32.mrf.mxu0
  %v3901 = vadd.f32 %v3757, %v3900
  %3902 = vmatmul.bf16.gmra.mxu0 %v1533
  %v3903 = vpop.f32.mrf.mxu0
  %v3904 = vadd.f32 %v3760, %v3903
  %v3905 = vpop.f32.mrf.mxu0
  %v3906 = vadd.f32 %v3762, %v3905
  %3907 = vmatmul.bf16.gmra.mxu0 %v1544
  %v3908 = vpop.f32.mrf.mxu0
  %v3909 = vadd.f32 %v3765, %v3908
  %v3910 = vpop.f32.mrf.mxu0
  %v3911 = vadd.f32 %v3767, %v3910
  %3912 = vmatmul.bf16.gmra.mxu0 %v1555
  %v3913 = vpop.f32.mrf.mxu0
  %v3914 = vadd.f32 %v3770, %v3913
  %v3915 = vpop.f32.mrf.mxu0
  %v3916 = vadd.f32 %v3772, %v3915
  %3917 = vmatmul.bf16.gmra.mxu0 %v1566
  %v3918 = vpop.f32.mrf.mxu0
  %v3919 = vadd.f32 %v3775, %v3918
  %v3920 = vpop.f32.mrf.mxu0
  %v3921 = vadd.f32 %v3777, %v3920
  %3922 = vmatmul.bf16.gmra.mxu0 %v1577
  %v3923 = vpop.f32.mrf.mxu0
  %v3924 = vadd.f32 %v3780, %v3923
  %v3925 = vpop.f32.mrf.mxu0
  %v3926 = vadd.f32 %v3782, %v3925
  %3927 = vmatmul.bf16.gmra.mxu0 %v1588
  %v3928 = vpop.f32.mrf.mxu0
  %v3929 = vadd.f32 %v3785, %v3928
  %v3930 = vpop.f32.mrf.mxu0
  %v3931 = vadd.f32 %v3787, %v3930
  %3932 = vmatmul.bf16.gmra.mxu0 %v1599
  %v3933 = vpop.f32.mrf.mxu0
  %v3934 = vadd.f32 %v3790, %v3933
  %v3935 = vpop.f32.mrf.mxu0
  %v3936 = vadd.f32 %v3792, %v3935
  %3937 = vmatmul.bf16.gmra.mxu0 %v1610
  %v3938 = vpop.f32.mrf.mxu0
  %v3939 = vadd.f32 %v3795, %v3938
  %v3940 = vpop.f32.mrf.mxu0
  %v3941 = vadd.f32 %v3797, %v3940
  %3942 = vmatmul.bf16.gmra.mxu0 %v1621
  %v3943 = vpop.f32.mrf.mxu0
  %v3944 = vadd.f32 %v3800, %v3943
  %v3945 = vpop.f32.mrf.mxu0
  %v3946 = vadd.f32 %v3802, %v3945
  %3947 = vmatmul.bf16.gmra.mxu0 %v1632
  %v3948 = vpop.f32.mrf.mxu0
  %v3949 = vadd.f32 %v3805, %v3948
  %v3950 = vpop.f32.mrf.mxu0
  %v3951 = vadd.f32 %v3807, %v3950
  %3952 = vmatmul.bf16.gmra.mxu0 %v1643
  %v3953 = vpop.f32.mrf.mxu0
  %v3954 = vadd.f32 %v3810, %v3953
  %v3955 = vpop.f32.mrf.mxu0
  %v3956 = vadd.f32 %v3812, %v3955
  %3957 = vmatmul.bf16.gmra.mxu0 %v1654
  %v3958 = vpop.f32.mrf.mxu0
  %v3959 = vadd.f32 %v3815, %v3958
  %v3960 = vpop.f32.mrf.mxu0
  %v3961 = vadd.f32 %v3817, %v3960
  %3962 = vmatmul.bf16.gmra.mxu0 %v1665
  %v3963 = vpop.f32.mrf.mxu0
  %v3964 = vadd.f32 %v3820, %v3963
  %v3965 = vpop.f32.mrf.mxu0
  %v3966 = vadd.f32 %v3822, %v3965
  %3967 = vmatmul.bf16.gmra.mxu0 %v1676
  %v3968 = vpop.f32.mrf.mxu0
  %v3969 = vadd.f32 %v3825, %v3968
  %v3970 = vpop.f32.mrf.mxu0
  %v3971 = vadd.f32 %v3827, %v3970
  %3972 = vmatmul.bf16.gmra.mxu0 %v1687
  %v3973 = vpop.f32.mrf.mxu0
  %v3974 = vadd.f32 %v3830, %v3973
  %v3975 = vpop.f32.mrf.mxu0
  %v3976 = vadd.f32 %v3832, %v3975
  %3977 = vmatmul.bf16.gmra.mxu0 %v1698
  %v3978 = vpop.f32.mrf.mxu0
  %v3979 = vadd.f32 %v3835, %v3978
  %v3980 = vpop.f32.mrf.mxu0
  %v3981 = vadd.f32 %v3837, %v3980
  %3982 = vmatmul.bf16.gmra.mxu0 %v1709
  %v3983 = vpop.f32.mrf.mxu0
  %v3984 = vadd.f32 %v3840, %v3983
  %v3985 = vpop.f32.mrf.mxu0
  %v3986 = vadd.f32 %v3842, %v3985
  %3987 = vmatmul.bf16.gmra.mxu0 %v1720
  %v3988 = vpop.f32.mrf.mxu0
  %v3989 = vadd.f32 %v3845, %v3988
  %v3990 = vpop.f32.mrf.mxu0
  %v3991 = vadd.f32 %v3847, %v3990
  %3992 = vmatmul.bf16.gmra.mxu0 %v1731
  %v3993 = vpop.f32.mrf.mxu0
  %v3994 = vadd.f32 %v3850, %v3993
  %v3995 = vpop.f32.mrf.mxu0
  %v3996 = vadd.f32 %v3852, %v3995
  %3997 = vdwg.mxu0
  %3998 = vmatpush.bf16.msra.mxu0 %v2469
  %3999 = vmatpush.bf16.msra.mxu0 %v2468
  %4000 = vmatpush.bf16.msra.mxu0 %v2467
  %4001 = vmatpush.bf16.msra.mxu0 %v2466
  %4002 = vmatpush.bf16.msra.mxu0 %v2465
  %4003 = vmatpush.bf16.msra.mxu0 %v2464
  %4004 = vmatpush.bf16.msra.mxu0 %v2463
  %4005 = vmatpush.bf16.msra.mxu0 %v2462
  %4006 = vmatmul.bf16.gmra.mxu0 %v1446
  %v4007 = vpop.f32.mrf.mxu0
  %v4008 = vadd.f32 %v3864, %v4007
  %v4009 = vpop.f32.mrf.mxu0
  %v4010 = vadd.f32 %v3866, %v4009
  %4011 = vmatmul.bf16.gmra.mxu0 %v1457
  %v4012 = vpop.f32.mrf.mxu0
  %v4013 = vadd.f32 %v3869, %v4012
  %v4014 = vpop.f32.mrf.mxu0
  %v4015 = vadd.f32 %v3871, %v4014
  %4016 = vmatmul.bf16.gmra.mxu0 %v1468
  %v4017 = vpop.f32.mrf.mxu0
  %v4018 = vadd.f32 %v3874, %v4017
  %v4019 = vpop.f32.mrf.mxu0
  %v4020 = vadd.f32 %v3876, %v4019
  %4021 = vmatmul.bf16.gmra.mxu0 %v1479
  %v4022 = vpop.f32.mrf.mxu0
  %v4023 = vadd.f32 %v3879, %v4022
  %v4024 = vpop.f32.mrf.mxu0
  %v4025 = vadd.f32 %v3881, %v4024
  %4026 = vmatmul.bf16.gmra.mxu0 %v1490
  %v4027 = vpop.f32.mrf.mxu0
  %v4028 = vadd.f32 %v3884, %v4027
  %v4029 = vpop.f32.mrf.mxu0
  %v4030 = vadd.f32 %v3886, %v4029
  %4031 = vmatmul.bf16.gmra.mxu0 %v1501
  %v4032 = vpop.f32.mrf.mxu0
  %v4033 = vadd.f32 %v3889, %v4032
  %v4034 = vpop.f32.mrf.mxu0
  %v4035 = vadd.f32 %v3891, %v4034
  %4036 = vmatmul.bf16.gmra.mxu0 %v1512
  %v4037 = vpop.f32.mrf.mxu0
  %v4038 = vadd.f32 %v3894, %v4037
  %v4039 = vpop.f32.mrf.mxu0
  %v4040 = vadd.f32 %v3896, %v4039
  %4041 = vmatmul.bf16.gmra.mxu0 %v1523
  %v4042 = vpop.f32.mrf.mxu0
  %v4043 = vadd.f32 %v3899, %v4042
  %v4044 = vpop.f32.mrf.mxu0
  %v4045 = vadd.f32 %v3901, %v4044
  %4046 = vmatmul.bf16.gmra.mxu0 %v1534
  %v4047 = vpop.f32.mrf.mxu0
  %v4048 = vadd.f32 %v3904, %v4047
  %v4049 = vpop.f32.mrf.mxu0
  %v4050 = vadd.f32 %v3906, %v4049
  %4051 = vmatmul.bf16.gmra.mxu0 %v1545
  %v4052 = vpop.f32.mrf.mxu0
  %v4053 = vadd.f32 %v3909, %v4052
  %v4054 = vpop.f32.mrf.mxu0
  %v4055 = vadd.f32 %v3911, %v4054
  %4056 = vmatmul.bf16.gmra.mxu0 %v1556
  %v4057 = vpop.f32.mrf.mxu0
  %v4058 = vadd.f32 %v3914, %v4057
  %v4059 = vpop.f32.mrf.mxu0
  %v4060 = vadd.f32 %v3916, %v4059
  %4061 = vmatmul.bf16.gmra.mxu0 %v1567
  %v4062 = vpop.f32.mrf.mxu0
  %v4063 = vadd.f32 %v3919, %v4062
  %v4064 = vpop.f32.mrf.mxu0
  %v4065 = vadd.f32 %v3921, %v4064
  %4066 = vmatmul.bf16.gmra.mxu0 %v1578
  %v4067 = vpop.f32.mrf.mxu0
  %v4068 = vadd.f32 %v3924, %v4067
  %v4069 = vpop.f32.mrf.mxu0
  %v4070 = vadd.f32 %v3926, %v4069
  %4071 = vmatmul.bf16.gmra.mxu0 %v1589
  %v4072 = vpop.f32.mrf.mxu0
  %v4073 = vadd.f32 %v3929, %v4072
  %v4074 = vpop.f32.mrf.mxu0
  %v4075 = vadd.f32 %v3931, %v4074
  %4076 = vmatmul.bf16.gmra.mxu0 %v1600
  %v4077 = vpop.f32.mrf.mxu0
  %v4078 = vadd.f32 %v3934, %v4077
  %v4079 = vpop.f32.mrf.mxu0
  %v4080 = vadd.f32 %v3936, %v4079
  %4081 = vmatmul.bf16.gmra.mxu0 %v1611
  %v4082 = vpop.f32.mrf.mxu0
  %v4083 = vadd.f32 %v3939, %v4082
  %v4084 = vpop.f32.mrf.mxu0
  %v4085 = vadd.f32 %v3941, %v4084
  %4086 = vmatmul.bf16.gmra.mxu0 %v1622
  %v4087 = vpop.f32.mrf.mxu0
  %v4088 = vadd.f32 %v3944, %v4087
  %v4089 = vpop.f32.mrf.mxu0
  %v4090 = vadd.f32 %v3946, %v4089
  %4091 = vmatmul.bf16.gmra.mxu0 %v1633
  %v4092 = vpop.f32.mrf.mxu0
  %v4093 = vadd.f32 %v3949, %v4092
  %v4094 = vpop.f32.mrf.mxu0
  %v4095 = vadd.f32 %v3951, %v4094
  %4096 = vmatmul.bf16.gmra.mxu0 %v1644
  %v4097 = vpop.f32.mrf.mxu0
  %v4098 = vadd.f32 %v3954, %v4097
  %v4099 = vpop.f32.mrf.mxu0
  %v4100 = vadd.f32 %v3956, %v4099
  %4101 = vmatmul.bf16.gmra.mxu0 %v1655
  %v4102 = vpop.f32.mrf.mxu0
  %v4103 = vadd.f32 %v3959, %v4102
  %v4104 = vpop.f32.mrf.mxu0
  %v4105 = vadd.f32 %v3961, %v4104
  %4106 = vmatmul.bf16.gmra.mxu0 %v1666
  %v4107 = vpop.f32.mrf.mxu0
  %v4108 = vadd.f32 %v3964, %v4107
  %v4109 = vpop.f32.mrf.mxu0
  %v4110 = vadd.f32 %v3966, %v4109
  %4111 = vmatmul.bf16.gmra.mxu0 %v1677
  %v4112 = vpop.f32.mrf.mxu0
  %v4113 = vadd.f32 %v3969, %v4112
  %v4114 = vpop.f32.mrf.mxu0
  %v4115 = vadd.f32 %v3971, %v4114
  %4116 = vmatmul.bf16.gmra.mxu0 %v1688
  %v4117 = vpop.f32.mrf.mxu0
  %v4118 = vadd.f32 %v3974, %v4117
  %v4119 = vpop.f32.mrf.mxu0
  %v4120 = vadd.f32 %v3976, %v4119
  %4121 = vmatmul.bf16.gmra.mxu0 %v1699
  %v4122 = vpop.f32.mrf.mxu0
  %v4123 = vadd.f32 %v3979, %v4122
  %v4124 = vpop.f32.mrf.mxu0
  %v4125 = vadd.f32 %v3981, %v4124
  %4126 = vmatmul.bf16.gmra.mxu0 %v1710
  %v4127 = vpop.f32.mrf.mxu0
  %v4128 = vadd.f32 %v3984, %v4127
  %v4129 = vpop.f32.mrf.mxu0
  %v4130 = vadd.f32 %v3986, %v4129
  %4131 = vmatmul.bf16.gmra.mxu0 %v1721
  %v4132 = vpop.f32.mrf.mxu0
  %v4133 = vadd.f32 %v3989, %v4132
  %v4134 = vpop.f32.mrf.mxu0
  %v4135 = vadd.f32 %v3991, %v4134
  %4136 = vmatmul.bf16.gmra.mxu0 %v1732
  %v4137 = vpop.f32.mrf.mxu0
  %v4138 = vadd.f32 %v3994, %v4137
  %v4139 = vpop.f32.mrf.mxu0
  %v4140 = vadd.f32 %v3996, %v4139
  %4141 = vdwg.mxu0
  %v4142 = vmax.f32 %v4008, 0.0
  %v4143 = vmax.f32 %v4010, 0.0
  %v4144 = vmax.f32 %v4013, 0.0
  %v4145 = vmax.f32 %v4015, 0.0
  %v4146 = vmax.f32 %v4018, 0.0
  %v4147 = vmax.f32 %v4020, 0.0
  %v4148 = vmax.f32 %v4023, 0.0
  %v4149 = vmax.f32 %v4025, 0.0
  %v4150 = vmax.f32 %v4028, 0.0
  %v4151 = vmax.f32 %v4030, 0.0
  %v4152 = vmax.f32 %v4033, 0.0
  %v4153 = vmax.f32 %v4035, 0.0
  %v4154 = vmax.f32 %v4038, 0.0
  %v4155 = vmax.f32 %v4040, 0.0
  %v4156 = vmax.f32 %v4043, 0.0
  %v4157 = vmax.f32 %v4045, 0.0
  %v4158 = vmax.f32 %v4048, 0.0
  %v4159 = vmax.f32 %v4050, 0.0
  %v4160 = vmax.f32 %v4053, 0.0
  %v4161 = vmax.f32 %v4055, 0.0
  %v4162 = vmax.f32 %v4058, 0.0
  %v4163 = vmax.f32 %v4060, 0.0
  %v4164 = vmax.f32 %v4063, 0.0
  %v4165 = vmax.f32 %v4065, 0.0
  %v4166 = vmax.f32 %v4068, 0.0
  %v4167 = vmax.f32 %v4070, 0.0
  %v4168 = vmax.f32 %v4073, 0.0
  %v4169 = vmax.f32 %v4075, 0.0
  %v4170 = vmax.f32 %v4078, 0.0
  %v4171 = vmax.f32 %v4080, 0.0
  %v4172 = vmax.f32 %v4083, 0.0
  %v4173 = vmax.f32 %v4085, 0.0
  %v4174 = vmax.f32 %v4088, 0.0
  %v4175 = vmax.f32 %v4090, 0.0
  %v4176 = vmax.f32 %v4093, 0.0
  %v4177 = vmax.f32 %v4095, 0.0
  %v4178 = vmax.f32 %v4098, 0.0
  %v4179 = vmax.f32 %v4100, 0.0
  %v4180 = vmax.f32 %v4103, 0.0
  %v4181 = vmax.f32 %v4105, 0.0
  %v4182 = vmax.f32 %v4108, 0.0
  %v4183 = vmax.f32 %v4110, 0.0
  %v4184 = vmax.f32 %v4113, 0.0
  %v4185 = vmax.f32 %v4115, 0.0
  %v4186 = vmax.f32 %v4118, 0.0
  %v4187 = vmax.f32 %v4120, 0.0
  %v4188 = vmax.f32 %v4123, 0.0
  %v4189 = vmax.f32 %v4125, 0.0
  %v4190 = vmax.f32 %v4128, 0.0
  %v4191 = vmax.f32 %v4130, 0.0
  %v4192 = vmax.f32 %v4133, 0.0
  %v4193 = vmax.f32 %v4135, 0.0
  %v4194 = vmax.f32 %v4138, 0.0
  %v4195 = vmax.f32 %v4140, 0.0
  %v4196 = vpack.c.bf16 %v4142, %v4142
  %v4197 = vpack.c.bf16 %v4143, %v4143
  %v4198 = vpack.c.bf16 %v4144, %v4144
  %v4199 = vpack.c.bf16 %v4145, %v4145
  %v4200 = vpack.c.bf16 %v4146, %v4146
  %v4201 = vpack.c.bf16 %v4147, %v4147
  %v4202 = vpack.c.bf16 %v4148, %v4148
  %v4203 = vpack.c.bf16 %v4149, %v4149
  %v4204 = vpack.c.bf16 %v4150, %v4150
  %v4205 = vpack.c.bf16 %v4151, %v4151
  %v4206 = vpack.c.bf16 %v4152, %v4152
  %v4207 = vpack.c.bf16 %v4153, %v4153
  %v4208 = vpack.c.bf16 %v4154, %v4154
  %v4209 = vpack.c.bf16 %v4155, %v4155
  %v4210 = vpack.c.bf16 %v4156, %v4156
  %v4211 = vpack.c.bf16 %v4157, %v4157
  %v4212 = vpack.c.bf16 %v4158, %v4158
  %v4213 = vpack.c.bf16 %v4159, %v4159
  %v4214 = vpack.c.bf16 %v4160, %v4160
  %v4215 = vpack.c.bf16 %v4161, %v4161
  %v4216 = vpack.c.bf16 %v4162, %v4162
  %v4217 = vpack.c.bf16 %v4163, %v4163
  %v4218 = vpack.c.bf16 %v4164, %v4164
  %v4219 = vpack.c.bf16 %v4165, %v4165
  %v4220 = vpack.c.bf16 %v4166, %v4166
  %v4221 = vpack.c.bf16 %v4167, %v4167
  %v4222 = vpack.c.bf16 %v4168, %v4168
  %v4223 = vpack.c.bf16 %v4169, %v4169
  %v4224 = vpack.c.bf16 %v4170, %v4170
  %v4225 = vpack.c.bf16 %v4171, %v4171
  %v4226 = vpack.c.bf16 %v4172, %v4172
  %v4227 = vpack.c.bf16 %v4173, %v4173
  %v4228 = vpack.c.bf16 %v4174, %v4174
  %v4229 = vpack.c.bf16 %v4175, %v4175
  %v4230 = vpack.c.bf16 %v4176, %v4176
  %v4231 = vpack.c.bf16 %v4177, %v4177
  %v4232 = vpack.c.bf16 %v4178, %v4178
  %v4233 = vpack.c.bf16 %v4179, %v4179
  %v4234 = vpack.c.bf16 %v4180, %v4180
  %v4235 = vpack.c.bf16 %v4181, %v4181
  %v4236 = vpack.c.bf16 %v4182, %v4182
  %v4237 = vpack.c.bf16 %v4183, %v4183
  %v4238 = vpack.c.bf16 %v4184, %v4184
  %v4239 = vpack.c.bf16 %v4185, %v4185
  %v4240 = vpack.c.bf16 %v4186, %v4186
  %v4241 = vpack.c.bf16 %v4187, %v4187
  %v4242 = vpack.c.bf16 %v4188, %v4188
  %v4243 = vpack.c.bf16 %v4189, %v4189
  %v4244 = vpack.c.bf16 %v4190, %v4190
  %v4245 = vpack.c.bf16 %v4191, %v4191
  %v4246 = vpack.c.bf16 %v4192, %v4192
  %v4247 = vpack.c.bf16 %v4193, %v4193
  %v4248 = vpack.c.bf16 %v4194, %v4194
  %v4249 = vpack.c.bf16 %v4195, %v4195
  %4250 = vst [vmem:[%s3] sm:$0xf] %v4196
  %4251 = vst [vmem:[%s3 + $0x4] sm:$0xf] %v4197
  %4252 = vst [vmem:[%s3 + $0x8] sm:$0xf] %v4198
  %4253 = vst [vmem:[%s3 + $0xc] sm:$0xf] %v4199
  %4254 = vst [vmem:[%s3 + $0x10] sm:$0xf] %v4200
  %4255 = vst [vmem:[%s3 + $0x14] sm:$0xf] %v4201
  %4256 = vst [vmem:[%s3 + $0x18] sm:$0xf] %v4202
  %4257 = vst [vmem:[%s3 + $0x1c] sm:$0xf] %v4203
  %4258 = vst [vmem:[%s3 + $0x20] sm:$0xf] %v4204
  %4259 = vst [vmem:[%s3 + $0x24] sm:$0xf] %v4205
  %4260 = vst [vmem:[%s3 + $0x28] sm:$0xf] %v4206
  %4261 = vst [vmem:[%s3 + $0x2c] sm:$0xf] %v4207
  %4262 = vst [vmem:[%s3 + $0x30] sm:$0xf] %v4208
  %4263 = vst [vmem:[%s3 + $0x34] sm:$0xf] %v4209
  %4264 = vst [vmem:[%s3 + $0x38] sm:$0xf] %v4210
  %4265 = vst [vmem:[%s3 + $0x3c] sm:$0xf] %v4211
  %4266 = vst [vmem:[%s3 + $0x40] sm:$0xf] %v4212
  %4267 = vst [vmem:[%s3 + $0x44] sm:$0xf] %v4213
  %4268 = vst [vmem:[%s3 + $0x48] sm:$0xf] %v4214
  %4269 = vst [vmem:[%s3 + $0x4c] sm:$0xf] %v4215
  %4270 = vst [vmem:[%s3 + $0x50] sm:$0xf] %v4216
  %4271 = vst [vmem:[%s3 + $0x54] sm:$0xf] %v4217
  %4272 = vst [vmem:[%s3 + $0x58] sm:$0xf] %v4218
  %4273 = vst [vmem:[%s3 + $0x5c] sm:$0xf] %v4219
  %4274 = vst [vmem:[%s3 + $0x60] sm:$0xf] %v4220
  %4275 = vst [vmem:[%s3 + $0x64] sm:$0xf] %v4221
  %4276 = vst [vmem:[%s3 + $0x68] sm:$0xf] %v4222
  %4277 = vst [vmem:[%s3 + $0x6c] sm:$0xf] %v4223
  %4278 = vst [vmem:[%s3 + $0x70] sm:$0xf] %v4224
  %4279 = vst [vmem:[%s3 + $0x74] sm:$0xf] %v4225
  %4280 = vst [vmem:[%s3 + $0x78] sm:$0xf] %v4226
  %4281 = vst [vmem:[%s3 + $0x7c] sm:$0xf] %v4227
  %4282 = vst [vmem:[%s3 + $0x80] sm:$0xf] %v4228
  %4283 = vst [vmem:[%s3 + $0x84] sm:$0xf] %v4229
  %4284 = vst [vmem:[%s3 + $0x88] sm:$0xf] %v4230
  %4285 = vst [vmem:[%s3 + $0x8c] sm:$0xf] %v4231
  %4286 = vst [vmem:[%s3 + $0x90] sm:$0xf] %v4232
  %4287 = vst [vmem:[%s3 + $0x94] sm:$0xf] %v4233
  %4288 = vst [vmem:[%s3 + $0x98] sm:$0xf] %v4234
  %4289 = vst [vmem:[%s3 + $0x9c] sm:$0xf] %v4235
  %4290 = vst [vmem:[%s3 + $0xa0] sm:$0xf] %v4236
  %4291 = vst [vmem:[%s3 + $0xa4] sm:$0xf] %v4237
  %4292 = vst [vmem:[%s3 + $0xa8] sm:$0xf] %v4238
  %4293 = vst [vmem:[%s3 + $0xac] sm:$0xf] %v4239
  %4294 = vst [vmem:[%s3 + $0xb0] sm:$0xf] %v4240
  %4295 = vst [vmem:[%s3 + $0xb4] sm:$0xf] %v4241
  %4296 = vst [vmem:[%s3 + $0xb8] sm:$0xf] %v4242
  %4297 = vst [vmem:[%s3 + $0xbc] sm:$0xf] %v4243
  %4298 = vst [vmem:[%s3 + $0xc0] sm:$0xf] %v4244
  %4299 = vst [vmem:[%s3 + $0xc4] sm:$0xf] %v4245
  %4300 = vst [vmem:[%s3 + $0xc8] sm:$0xf] %v4246
  %4301 = vst [vmem:[%s3 + $0xcc] sm:$0xf] %v4247
  %4302 = vst [vmem:[%s3 + $0xd0] sm:$0xf] %v4248
  %4303 = vst [vmem:[%s3 + $0xd4] sm:$0xf] %v4249
  // Predicated region
  $region14: #{_lambda_.6} parent=0 // pred_check
    _
  $region15: #{_lambda_.6} parent=0 // pred_check_branch
    %4305 = sbr.rel (0) target = $region17
  $region16: #{_lambda_.6} parent=0 // pred_region
    _
  $region17: #{_lambda_.6} parent=0 // pred_fallthru
    _
  // Predicated region
  $region18: #{_lambda_.6} parent=0 // pred_check
    _
  $region19: #{_lambda_.6} parent=0 // pred_check_branch
    %4307 = sbr.rel (0) target = $region21
  $region20: #{_lambda_.6} parent=0 // pred_region
    _
  $region21: #{_lambda_.6} parent=0 // pred_fallthru
    _

// kernel: _lambda_.7
$region0: #{_lambda_.7}
  #allocation0 [shape = 'u32[]', space=smem, size = 0x4, offset = 0x4, fixed_abs, tag = 'smem constant byte address 0x4 - core index']
  #allocation1 [shape = 'u32[72,128]{1,0:T(1,128)}', space=vmem, size = 0x9000, scoped, tag = 'internal scratch']
  %s0 = inlined_call_operand.vmem [shape: bf16[16,1408], index: 0, kind: input, shape index: {}]
  %s1 = inlined_call_operand.vmem [shape: bf16[1408,128], index: 1, kind: input, shape index: {}]
  %s2 = inlined_call_operand.vmem [shape: f32[1,128], index: 2, kind: input, shape index: {}]
  %s3 = inlined_call_operand.vmem [shape: bf16[16,128], index: 3, kind: output, shape index: {}]
  %s4 = sld [smem:[#allocation0]]
  $region22: #{_lambda_.7} parent=0
    _
  %s6 = ssub.s32 1, %s4
  %s7 = scalar_select 0, %s6, %s4
  // Predicated region
  $region2: #{_lambda_.7} parent=0 // pred_check
    _
  $region3: #{_lambda_.7} parent=0 // pred_check_branch
    %9 = sbr.rel (0) target = $region5
  $region4: #{_lambda_.7} parent=0 // pred_region
    _
  $region5: #{_lambda_.7} parent=0 // pred_fallthru
    _
  // Predicated region
  $region6: #{_lambda_.7} parent=0 // pred_check
    _
  $region7: #{_lambda_.7} parent=0 // pred_check_branch
    %11 = sbr.rel (0) target = $region9
  $region8: #{_lambda_.7} parent=0 // pred_region
    _
  $region9: #{_lambda_.7} parent=0 // pred_fallthru
    _
  // Predicated region
  $region10: #{_lambda_.7} parent=0 // pred_check
    _
  $region11: #{_lambda_.7} parent=0 // pred_check_branch
    %13 = sbr.rel (0) target = $region13
  $region12: #{_lambda_.7} parent=0 // pred_region
    _
  $region13: #{_lambda_.7} parent=0 // pred_fallthru
    _
  %v14 = vld [vmem:[%s0] sm:$0xff]
  %v15 = vld [vmem:[%s0 + $0x8] sm:$0xff]
  %v16 = vld [vmem:[%s0 + $0x10] sm:$0xff]
  %v17 = vld [vmem:[%s0 + $0x18] sm:$0xff]
  %v18 = vld [vmem:[%s0 + $0x20] sm:$0xff]
  %v19 = vld [vmem:[%s0 + $0x28] sm:$0xf]
  %v20 = vld [vmem:[%s0 + $0x2c] sm:$0xff]
  %v21 = vld [vmem:[%s0 + $0x34] sm:$0xff]
  %v22 = vld [vmem:[%s0 + $0x3c] sm:$0xff]
  %v23 = vld [vmem:[%s0 + $0x44] sm:$0xff]
  %v24 = vld [vmem:[%s0 + $0x4c] sm:$0xff]
  %v25 = vld [vmem:[%s0 + $0x54] sm:$0xf]
  %v26 = vld [vmem:[%s1] sm:$0xf]
  %v27 = vld [vmem:[%s1 + $0x4] sm:$0xf]
  %v28 = vld [vmem:[%s1 + $0x8] sm:$0xf]
  %v29 = vld [vmem:[%s1 + $0xc] sm:$0xf]
  %v30 = vld [vmem:[%s1 + $0x10] sm:$0xf]
  %v31 = vld [vmem:[%s1 + $0x14] sm:$0xf]
  %v32 = vld [vmem:[%s1 + $0x18] sm:$0xf]
  %v33 = vld [vmem:[%s1 + $0x1c] sm:$0xf]
  %v34 = vld [vmem:[%s1 + $0x20] sm:$0xf]
  %v35 = vld [vmem:[%s1 + $0x24] sm:$0xf]
  %v36 = vld [vmem:[%s1 + $0x28] sm:$0xf]
  %v37 = vld [vmem:[%s1 + $0x2c] sm:$0xf]
  %v38 = vld [vmem:[%s1 + $0x30] sm:$0xf]
  %v39 = vld [vmem:[%s1 + $0x34] sm:$0xf]
  %v40 = vld [vmem:[%s1 + $0x38] sm:$0xf]
  %v41 = vld [vmem:[%s1 + $0x3c] sm:$0xf]
  %v42 = vld [vmem:[%s1 + $0x40] sm:$0xf]
  %v43 = vld [vmem:[%s1 + $0x44] sm:$0xf]
  %v44 = vld [vmem:[%s1 + $0x48] sm:$0xf]
  %v45 = vld [vmem:[%s1 + $0x4c] sm:$0xf]
  %v46 = vld [vmem:[%s1 + $0x50] sm:$0xf]
  %v47 = vld [vmem:[%s1 + $0x54] sm:$0xf]
  %v48 = vld [vmem:[%s1 + $0x58] sm:$0xf]
  %v49 = vld [vmem:[%s1 + $0x5c] sm:$0xf]
  %v50 = vld [vmem:[%s1 + $0x60] sm:$0xf]
  %v51 = vld [vmem:[%s1 + $0x64] sm:$0xf]
  %v52 = vld [vmem:[%s1 + $0x68] sm:$0xf]
  %v53 = vld [vmem:[%s1 + $0x6c] sm:$0xf]
  %v54 = vld [vmem:[%s1 + $0x70] sm:$0xf]
  %v55 = vld [vmem:[%s1 + $0x74] sm:$0xf]
  %v56 = vld [vmem:[%s1 + $0x78] sm:$0xf]
  %v57 = vld [vmem:[%s1 + $0x7c] sm:$0xf]
  %v58 = vld [vmem:[%s1 + $0x80] sm:$0xf]
  %v59 = vld [vmem:[%s1 + $0x84] sm:$0xf]
  %v60 = vld [vmem:[%s1 + $0x88] sm:$0xf]
  %v61 = vld [vmem:[%s1 + $0x8c] sm:$0xf]
  %v62 = vld [vmem:[%s1 + $0x90] sm:$0xf]
  %v63 = vld [vmem:[%s1 + $0x94] sm:$0xf]
  %v64 = vld [vmem:[%s1 + $0x98] sm:$0xf]
  %v65 = vld [vmem:[%s1 + $0x9c] sm:$0xf]
  %v66 = vld [vmem:[%s1 + $0xa0] sm:$0xf]
  %v67 = vld [vmem:[%s1 + $0xa4] sm:$0xf]
  %v68 = vld [vmem:[%s1 + $0xa8] sm:$0xf]
  %v69 = vld [vmem:[%s1 + $0xac] sm:$0xf]
  %v70 = vld [vmem:[%s1 + $0xb0] sm:$0xf]
  %v71 = vld [vmem:[%s1 + $0xb4] sm:$0xf]
  %v72 = vld [vmem:[%s1 + $0xb8] sm:$0xf]
  %v73 = vld [vmem:[%s1 + $0xbc] sm:$0xf]
  %v74 = vld [vmem:[%s1 + $0xc0] sm:$0xf]
  %v75 = vld [vmem:[%s1 + $0xc4] sm:$0xf]
  %v76 = vld [vmem:[%s1 + $0xc8] sm:$0xf]
  %v77 = vld [vmem:[%s1 + $0xcc] sm:$0xf]
  %v78 = vld [vmem:[%s1 + $0xd0] sm:$0xf]
  %v79 = vld [vmem:[%s1 + $0xd4] sm:$0xf]
  %v80 = vld [vmem:[%s1 + $0xd8] sm:$0xf]
  %v81 = vld [vmem:[%s1 + $0xdc] sm:$0xf]
  %v82 = vld [vmem:[%s1 + $0xe0] sm:$0xf]
  %v83 = vld [vmem:[%s1 + $0xe4] sm:$0xf]
  %v84 = vld [vmem:[%s1 + $0xe8] sm:$0xf]
  %v85 = vld [vmem:[%s1 + $0xec] sm:$0xf]
  %v86 = vld [vmem:[%s1 + $0xf0] sm:$0xf]
  %v87 = vld [vmem:[%s1 + $0xf4] sm:$0xf]
  %v88 = vld [vmem:[%s1 + $0xf8] sm:$0xf]
  %v89 = vld [vmem:[%s1 + $0xfc] sm:$0xf]
  %v90 = vld [vmem:[%s1 + $0x100] sm:$0xf]
  %v91 = vld [vmem:[%s1 + $0x104] sm:$0xf]
  %v92 = vld [vmem:[%s1 + $0x108] sm:$0xf]
  %v93 = vld [vmem:[%s1 + $0x10c] sm:$0xf]
  %v94 = vld [vmem:[%s1 + $0x110] sm:$0xf]
  %v95 = vld [vmem:[%s1 + $0x114] sm:$0xf]
  %v96 = vld [vmem:[%s1 + $0x118] sm:$0xf]
  %v97 = vld [vmem:[%s1 + $0x11c] sm:$0xf]
  %v98 = vld [vmem:[%s1 + $0x120] sm:$0xf]
  %v99 = vld [vmem:[%s1 + $0x124] sm:$0xf]
  %v100 = vld [vmem:[%s1 + $0x128] sm:$0xf]
  %v101 = vld [vmem:[%s1 + $0x12c] sm:$0xf]
  %v102 = vld [vmem:[%s1 + $0x130] sm:$0xf]
  %v103 = vld [vmem:[%s1 + $0x134] sm:$0xf]
  %v104 = vld [vmem:[%s1 + $0x138] sm:$0xf]
  %v105 = vld [vmem:[%s1 + $0x13c] sm:$0xf]
  %v106 = vld [vmem:[%s1 + $0x140] sm:$0xf]
  %v107 = vld [vmem:[%s1 + $0x144] sm:$0xf]
  %v108 = vld [vmem:[%s1 + $0x148] sm:$0xf]
  %v109 = vld [vmem:[%s1 + $0x14c] sm:$0xf]
  %v110 = vld [vmem:[%s1 + $0x150] sm:$0xf]
  %v111 = vld [vmem:[%s1 + $0x154] sm:$0xf]
  %v112 = vld [vmem:[%s1 + $0x158] sm:$0xf]
  %v113 = vld [vmem:[%s1 + $0x15c] sm:$0xf]
  %v114 = vld [vmem:[%s1 + $0x160] sm:$0xf]
  %v115 = vld [vmem:[%s1 + $0x164] sm:$0xf]
  %v116 = vld [vmem:[%s1 + $0x168] sm:$0xf]
  %v117 = vld [vmem:[%s1 + $0x16c] sm:$0xf]
  %v118 = vld [vmem:[%s1 + $0x170] sm:$0xf]
  %v119 = vld [vmem:[%s1 + $0x174] sm:$0xf]
  %v120 = vld [vmem:[%s1 + $0x178] sm:$0xf]
  %v121 = vld [vmem:[%s1 + $0x17c] sm:$0xf]
  %v122 = vld [vmem:[%s1 + $0x180] sm:$0xf]
  %v123 = vld [vmem:[%s1 + $0x184] sm:$0xf]
  %v124 = vld [vmem:[%s1 + $0x188] sm:$0xf]
  %v125 = vld [vmem:[%s1 + $0x18c] sm:$0xf]
  %v126 = vld [vmem:[%s1 + $0x190] sm:$0xf]
  %v127 = vld [vmem:[%s1 + $0x194] sm:$0xf]
  %v128 = vld [vmem:[%s1 + $0x198] sm:$0xf]
  %v129 = vld [vmem:[%s1 + $0x19c] sm:$0xf]
  %v130 = vld [vmem:[%s1 + $0x1a0] sm:$0xf]
  %v131 = vld [vmem:[%s1 + $0x1a4] sm:$0xf]
  %v132 = vld [vmem:[%s1 + $0x1a8] sm:$0xf]
  %v133 = vld [vmem:[%s1 + $0x1ac] sm:$0xf]
  %v134 = vld [vmem:[%s1 + $0x1b0] sm:$0xf]
  %v135 = vld [vmem:[%s1 + $0x1b4] sm:$0xf]
  %v136 = vld [vmem:[%s1 + $0x1b8] sm:$0xf]
  %v137 = vld [vmem:[%s1 + $0x1bc] sm:$0xf]
  %v138 = vld [vmem:[%s1 + $0x1c0] sm:$0xf]
  %v139 = vld [vmem:[%s1 + $0x1c4] sm:$0xf]
  %v140 = vld [vmem:[%s1 + $0x1c8] sm:$0xf]
  %v141 = vld [vmem:[%s1 + $0x1cc] sm:$0xf]
  %v142 = vld [vmem:[%s1 + $0x1d0] sm:$0xf]
  %v143 = vld [vmem:[%s1 + $0x1d4] sm:$0xf]
  %v144 = vld [vmem:[%s1 + $0x1d8] sm:$0xf]
  %v145 = vld [vmem:[%s1 + $0x1dc] sm:$0xf]
  %v146 = vld [vmem:[%s1 + $0x1e0] sm:$0xf]
  %v147 = vld [vmem:[%s1 + $0x1e4] sm:$0xf]
  %v148 = vld [vmem:[%s1 + $0x1e8] sm:$0xf]
  %v149 = vld [vmem:[%s1 + $0x1ec] sm:$0xf]
  %v150 = vld [vmem:[%s1 + $0x1f0] sm:$0xf]
  %v151 = vld [vmem:[%s1 + $0x1f4] sm:$0xf]
  %v152 = vld [vmem:[%s1 + $0x1f8] sm:$0xf]
  %v153 = vld [vmem:[%s1 + $0x1fc] sm:$0xf]
  %v154 = vld [vmem:[%s1 + $0x200] sm:$0xf]
  %v155 = vld [vmem:[%s1 + $0x204] sm:$0xf]
  %v156 = vld [vmem:[%s1 + $0x208] sm:$0xf]
  %v157 = vld [vmem:[%s1 + $0x20c] sm:$0xf]
  %v158 = vld [vmem:[%s1 + $0x210] sm:$0xf]
  %v159 = vld [vmem:[%s1 + $0x214] sm:$0xf]
  %v160 = vld [vmem:[%s1 + $0x218] sm:$0xf]
  %v161 = vld [vmem:[%s1 + $0x21c] sm:$0xf]
  %v162 = vld [vmem:[%s1 + $0x220] sm:$0xf]
  %v163 = vld [vmem:[%s1 + $0x224] sm:$0xf]
  %v164 = vld [vmem:[%s1 + $0x228] sm:$0xf]
  %v165 = vld [vmem:[%s1 + $0x22c] sm:$0xf]
  %v166 = vld [vmem:[%s1 + $0x230] sm:$0xf]
  %v167 = vld [vmem:[%s1 + $0x234] sm:$0xf]
  %v168 = vld [vmem:[%s1 + $0x238] sm:$0xf]
  %v169 = vld [vmem:[%s1 + $0x23c] sm:$0xf]
  %v170 = vld [vmem:[%s1 + $0x240] sm:$0xf]
  %v171 = vld [vmem:[%s1 + $0x244] sm:$0xf]
  %v172 = vld [vmem:[%s1 + $0x248] sm:$0xf]
  %v173 = vld [vmem:[%s1 + $0x24c] sm:$0xf]
  %v174 = vld [vmem:[%s1 + $0x250] sm:$0xf]
  %v175 = vld [vmem:[%s1 + $0x254] sm:$0xf]
  %v176 = vld [vmem:[%s1 + $0x258] sm:$0xf]
  %v177 = vld [vmem:[%s1 + $0x25c] sm:$0xf]
  %v178 = vld [vmem:[%s1 + $0x260] sm:$0xf]
  %v179 = vld [vmem:[%s1 + $0x264] sm:$0xf]
  %v180 = vld [vmem:[%s1 + $0x268] sm:$0xf]
  %v181 = vld [vmem:[%s1 + $0x26c] sm:$0xf]
  %v182 = vld [vmem:[%s1 + $0x270] sm:$0xf]
  %v183 = vld [vmem:[%s1 + $0x274] sm:$0xf]
  %v184 = vld [vmem:[%s1 + $0x278] sm:$0xf]
  %v185 = vld [vmem:[%s1 + $0x27c] sm:$0xf]
  %v186 = vld [vmem:[%s1 + $0x280] sm:$0xf]
  %v187 = vld [vmem:[%s1 + $0x284] sm:$0xf]
  %v188 = vld [vmem:[%s1 + $0x288] sm:$0xf]
  %v189 = vld [vmem:[%s1 + $0x28c] sm:$0xf]
  %v190 = vld [vmem:[%s1 + $0x290] sm:$0xf]
  %v191 = vld [vmem:[%s1 + $0x294] sm:$0xf]
  %v192 = vld [vmem:[%s1 + $0x298] sm:$0xf]
  %v193 = vld [vmem:[%s1 + $0x29c] sm:$0xf]
  %v194 = vld [vmem:[%s1 + $0x2a0] sm:$0xf]
  %v195 = vld [vmem:[%s1 + $0x2a4] sm:$0xf]
  %v196 = vld [vmem:[%s1 + $0x2a8] sm:$0xf]
  %v197 = vld [vmem:[%s1 + $0x2ac] sm:$0xf]
  %v198 = vld [vmem:[%s1 + $0x2b0] sm:$0xf]
  %v199 = vld [vmem:[%s1 + $0x2b4] sm:$0xf]
  %v200 = vld [vmem:[%s1 + $0x2b8] sm:$0xf]
  %v201 = vld [vmem:[%s1 + $0x2bc] sm:$0xf]
  %v202 = vld [vmem:[%s2] sm:$0x1]
  %v204 = vperm.slane %v202, 0
  %v218 = vunpack.c.l.b16 %v14
  %v219 = vunpack.c.h.b16 %v14
  %v220 = vunpack.c.l.b16 %v15
  %v221 = vunpack.c.h.b16 %v15
  %v222 = vunpack.c.l.b16 %v16
  %v223 = vunpack.c.h.b16 %v16
  %v224 = vunpack.c.l.b16 %v17
  %v225 = vunpack.c.h.b16 %v17
  %v226 = vunpack.c.l.b16 %v18
  %v227 = vunpack.c.h.b16 %v18
  %v228 = vunpack.c.l.b16 %v19
  %v229 = vunpack.c.l.b16 %v20
  %v230 = vunpack.c.h.b16 %v20
  %v231 = vunpack.c.l.b16 %v21
  %v232 = vunpack.c.h.b16 %v21
  %v233 = vunpack.c.l.b16 %v22
  %v234 = vunpack.c.h.b16 %v22
  %v235 = vunpack.c.l.b16 %v23
  %v236 = vunpack.c.h.b16 %v23
  %v237 = vunpack.c.l.b16 %v24
  %v238 = vunpack.c.h.b16 %v24
  %v239 = vunpack.c.l.b16 %v25
  %v240 = vpack.c.b16 %v229, %v218
  %v241 = vpack.c.b16 %v230, %v219
  %v242 = vpack.c.b16 %v231, %v220
  %v243 = vpack.c.b16 %v232, %v221
  %v244 = vpack.c.b16 %v233, %v222
  %v245 = vpack.c.b16 %v234, %v223
  %v246 = vpack.c.b16 %v235, %v224
  %v247 = vpack.c.b16 %v236, %v225
  %v248 = vpack.c.b16 %v237, %v226
  %v249 = vpack.c.b16 %v238, %v227
  %v250 = vpack.c.b16 %v239, %v228
  %v438 = vunpack.c.l.b16 %v26
  %v439 = vunpack.c.l.b16 %v27
  %v440 = vunpack.c.l.b16 %v28
  %v441 = vunpack.c.l.b16 %v29
  %v442 = vunpack.c.l.b16 %v30
  %v443 = vunpack.c.l.b16 %v31
  %v444 = vunpack.c.l.b16 %v32
  %v445 = vunpack.c.l.b16 %v33
  %v446 = vunpack.c.l.b16 %v34
  %v447 = vunpack.c.l.b16 %v35
  %v448 = vunpack.c.l.b16 %v36
  %v449 = vunpack.c.l.b16 %v37
  %v450 = vunpack.c.l.b16 %v38
  %v451 = vunpack.c.l.b16 %v39
  %v452 = vunpack.c.l.b16 %v40
  %v453 = vunpack.c.l.b16 %v41
  %v454 = vunpack.c.l.b16 %v42
  %v455 = vunpack.c.l.b16 %v43
  %v456 = vunpack.c.l.b16 %v44
  %v457 = vunpack.c.l.b16 %v45
  %v458 = vunpack.c.l.b16 %v46
  %v459 = vunpack.c.l.b16 %v47
  %v460 = vunpack.c.l.b16 %v48
  %v461 = vunpack.c.l.b16 %v49
  %v462 = vunpack.c.l.b16 %v50
  %v463 = vunpack.c.l.b16 %v51
  %v464 = vunpack.c.l.b16 %v52
  %v465 = vunpack.c.l.b16 %v53
  %v466 = vunpack.c.l.b16 %v54
  %v467 = vunpack.c.l.b16 %v55
  %v468 = vunpack.c.l.b16 %v56
  %v469 = vunpack.c.l.b16 %v57
  %v470 = vunpack.c.l.b16 %v58
  %v471 = vunpack.c.l.b16 %v59
  %v472 = vunpack.c.l.b16 %v60
  %v473 = vunpack.c.l.b16 %v61
  %v474 = vunpack.c.l.b16 %v62
  %v475 = vunpack.c.l.b16 %v63
  %v476 = vunpack.c.l.b16 %v64
  %v477 = vunpack.c.l.b16 %v65
  %v478 = vunpack.c.l.b16 %v66
  %v479 = vunpack.c.l.b16 %v67
  %v480 = vunpack.c.l.b16 %v68
  %v481 = vunpack.c.l.b16 %v69
  %v482 = vunpack.c.l.b16 %v70
  %v483 = vunpack.c.l.b16 %v71
  %v484 = vunpack.c.l.b16 %v72
  %v485 = vunpack.c.l.b16 %v73
  %v486 = vunpack.c.l.b16 %v74
  %v487 = vunpack.c.l.b16 %v75
  %v488 = vunpack.c.l.b16 %v76
  %v489 = vunpack.c.l.b16 %v77
  %v490 = vunpack.c.l.b16 %v78
  %v491 = vunpack.c.l.b16 %v79
  %v492 = vunpack.c.l.b16 %v80
  %v493 = vunpack.c.l.b16 %v81
  %v494 = vunpack.c.l.b16 %v82
  %v495 = vunpack.c.l.b16 %v83
  %v496 = vunpack.c.l.b16 %v84
  %v497 = vunpack.c.l.b16 %v85
  %v498 = vunpack.c.l.b16 %v86
  %v499 = vunpack.c.l.b16 %v87
  %v500 = vunpack.c.l.b16 %v88
  %v501 = vunpack.c.l.b16 %v89
  %v502 = vunpack.c.l.b16 %v90
  %v503 = vunpack.c.l.b16 %v91
  %v504 = vunpack.c.l.b16 %v92
  %v505 = vunpack.c.l.b16 %v93
  %v506 = vunpack.c.l.b16 %v94
  %v507 = vunpack.c.l.b16 %v95
  %v508 = vunpack.c.l.b16 %v96
  %v509 = vunpack.c.l.b16 %v97
  %v510 = vunpack.c.l.b16 %v98
  %v511 = vunpack.c.l.b16 %v99
  %v512 = vunpack.c.l.b16 %v100
  %v513 = vunpack.c.l.b16 %v101
  %v514 = vunpack.c.l.b16 %v102
  %v515 = vunpack.c.l.b16 %v103
  %v516 = vunpack.c.l.b16 %v104
  %v517 = vunpack.c.l.b16 %v105
  %v518 = vunpack.c.l.b16 %v106
  %v519 = vunpack.c.l.b16 %v107
  %v520 = vunpack.c.l.b16 %v108
  %v521 = vunpack.c.l.b16 %v109
  %v522 = vunpack.c.l.b16 %v110
  %v523 = vunpack.c.l.b16 %v111
  %v524 = vunpack.c.l.b16 %v112
  %v525 = vunpack.c.l.b16 %v113
  %v526 = vunpack.c.l.b16 %v114
  %v527 = vunpack.c.l.b16 %v115
  %v528 = vunpack.c.l.b16 %v116
  %v529 = vunpack.c.l.b16 %v117
  %v530 = vunpack.c.l.b16 %v118
  %v531 = vunpack.c.l.b16 %v119
  %v532 = vunpack.c.l.b16 %v120
  %v533 = vunpack.c.l.b16 %v121
  %v534 = vunpack.c.l.b16 %v122
  %v535 = vunpack.c.l.b16 %v123
  %v536 = vunpack.c.l.b16 %v124
  %v537 = vunpack.c.l.b16 %v125
  %v538 = vunpack.c.l.b16 %v126
  %v539 = vunpack.c.l.b16 %v127
  %v540 = vunpack.c.l.b16 %v128
  %v541 = vunpack.c.l.b16 %v129
  %v542 = vunpack.c.l.b16 %v130
  %v543 = vunpack.c.l.b16 %v131
  %v544 = vunpack.c.l.b16 %v132
  %v545 = vunpack.c.l.b16 %v133
  %v546 = vunpack.c.l.b16 %v134
  %v547 = vunpack.c.l.b16 %v135
  %v548 = vunpack.c.l.b16 %v136
  %v549 = vunpack.c.l.b16 %v137
  %v550 = vunpack.c.l.b16 %v138
  %v551 = vunpack.c.l.b16 %v139
  %v552 = vunpack.c.l.b16 %v140
  %v553 = vunpack.c.l.b16 %v141
  %v554 = vunpack.c.l.b16 %v142
  %v555 = vunpack.c.l.b16 %v143
  %v556 = vunpack.c.l.b16 %v144
  %v557 = vunpack.c.l.b16 %v145
  %v558 = vunpack.c.l.b16 %v146
  %v559 = vunpack.c.l.b16 %v147
  %v560 = vunpack.c.l.b16 %v148
  %v561 = vunpack.c.l.b16 %v149
  %v562 = vunpack.c.l.b16 %v150
  %v563 = vunpack.c.l.b16 %v151
  %v564 = vunpack.c.l.b16 %v152
  %v565 = vunpack.c.l.b16 %v153
  %v566 = vunpack.c.l.b16 %v154
  %v567 = vunpack.c.l.b16 %v155
  %v568 = vunpack.c.l.b16 %v156
  %v569 = vunpack.c.l.b16 %v157
  %v570 = vunpack.c.l.b16 %v158
  %v571 = vunpack.c.l.b16 %v159
  %v572 = vunpack.c.l.b16 %v160
  %v573 = vunpack.c.l.b16 %v161
  %v574 = vunpack.c.l.b16 %v162
  %v575 = vunpack.c.l.b16 %v163
  %v576 = vunpack.c.l.b16 %v164
  %v577 = vunpack.c.l.b16 %v165
  %v578 = vunpack.c.l.b16 %v166
  %v579 = vunpack.c.l.b16 %v167
  %v580 = vunpack.c.l.b16 %v168
  %v581 = vunpack.c.l.b16 %v169
  %v582 = vunpack.c.l.b16 %v170
  %v583 = vunpack.c.l.b16 %v171
  %v584 = vunpack.c.l.b16 %v172
  %v585 = vunpack.c.l.b16 %v173
  %v586 = vunpack.c.l.b16 %v174
  %v587 = vunpack.c.l.b16 %v175
  %v588 = vunpack.c.l.b16 %v176
  %v589 = vunpack.c.l.b16 %v177
  %v590 = vunpack.c.l.b16 %v178
  %v591 = vunpack.c.l.b16 %v179
  %v592 = vunpack.c.l.b16 %v180
  %v593 = vunpack.c.l.b16 %v181
  %v594 = vunpack.c.l.b16 %v182
  %v595 = vunpack.c.l.b16 %v183
  %v596 = vunpack.c.l.b16 %v184
  %v597 = vunpack.c.l.b16 %v185
  %v598 = vunpack.c.l.b16 %v186
  %v599 = vunpack.c.l.b16 %v187
  %v600 = vunpack.c.l.b16 %v188
  %v601 = vunpack.c.l.b16 %v189
  %v602 = vunpack.c.l.b16 %v190
  %v603 = vunpack.c.l.b16 %v191
  %v604 = vunpack.c.l.b16 %v192
  %v605 = vunpack.c.l.b16 %v193
  %v606 = vunpack.c.l.b16 %v194
  %v607 = vunpack.c.l.b16 %v195
  %v608 = vunpack.c.l.b16 %v196
  %v609 = vunpack.c.l.b16 %v197
  %v610 = vunpack.c.l.b16 %v198
  %v611 = vunpack.c.l.b16 %v199
  %v612 = vunpack.c.l.b16 %v200
  %v613 = vunpack.c.l.b16 %v201
  %v614 = vpack.c.b16 %v439, %v438
  %v615 = vpack.c.b16 %v441, %v440
  %v616 = vpack.c.b16 %v443, %v442
  %v617 = vpack.c.b16 %v445, %v444
  %v618 = vpack.c.b16 %v447, %v446
  %v619 = vpack.c.b16 %v449, %v448
  %v620 = vpack.c.b16 %v451, %v450
  %v621 = vpack.c.b16 %v453, %v452
  %v622 = vpack.c.b16 %v455, %v454
  %v623 = vpack.c.b16 %v457, %v456
  %v624 = vpack.c.b16 %v459, %v458
  %v625 = vpack.c.b16 %v461, %v460
  %v626 = vpack.c.b16 %v463, %v462
  %v627 = vpack.c.b16 %v465, %v464
  %v628 = vpack.c.b16 %v467, %v466
  %v629 = vpack.c.b16 %v469, %v468
  %v630 = vpack.c.b16 %v471, %v470
  %v631 = vpack.c.b16 %v473, %v472
  %v632 = vpack.c.b16 %v475, %v474
  %v633 = vpack.c.b16 %v477, %v476
  %v634 = vpack.c.b16 %v479, %v478
  %v635 = vpack.c.b16 %v481, %v480
  %v636 = vpack.c.b16 %v483, %v482
  %v637 = vpack.c.b16 %v485, %v484
  %v638 = vpack.c.b16 %v487, %v486
  %v639 = vpack.c.b16 %v489, %v488
  %v640 = vpack.c.b16 %v491, %v490
  %v641 = vpack.c.b16 %v493, %v492
  %v642 = vpack.c.b16 %v495, %v494
  %v643 = vpack.c.b16 %v497, %v496
  %v644 = vpack.c.b16 %v499, %v498
  %v645 = vpack.c.b16 %v501, %v500
  %v646 = vpack.c.b16 %v503, %v502
  %v647 = vpack.c.b16 %v505, %v504
  %v648 = vpack.c.b16 %v507, %v506
  %v649 = vpack.c.b16 %v509, %v508
  %v650 = vpack.c.b16 %v511, %v510
  %v651 = vpack.c.b16 %v513, %v512
  %v652 = vpack.c.b16 %v515, %v514
  %v653 = vpack.c.b16 %v517, %v516
  %v654 = vpack.c.b16 %v519, %v518
  %v655 = vpack.c.b16 %v521, %v520
  %v656 = vpack.c.b16 %v523, %v522
  %v657 = vpack.c.b16 %v525, %v524
  %v658 = vpack.c.b16 %v527, %v526
  %v659 = vpack.c.b16 %v529, %v528
  %v660 = vpack.c.b16 %v531, %v530
  %v661 = vpack.c.b16 %v533, %v532
  %v662 = vpack.c.b16 %v535, %v534
  %v663 = vpack.c.b16 %v537, %v536
  %v664 = vpack.c.b16 %v539, %v538
  %v665 = vpack.c.b16 %v541, %v540
  %v666 = vpack.c.b16 %v543, %v542
  %v667 = vpack.c.b16 %v545, %v544
  %v668 = vpack.c.b16 %v547, %v546
  %v669 = vpack.c.b16 %v549, %v548
  %v670 = vpack.c.b16 %v551, %v550
  %v671 = vpack.c.b16 %v553, %v552
  %v672 = vpack.c.b16 %v555, %v554
  %v673 = vpack.c.b16 %v557, %v556
  %v674 = vpack.c.b16 %v559, %v558
  %v675 = vpack.c.b16 %v561, %v560
  %v676 = vpack.c.b16 %v563, %v562
  %v677 = vpack.c.b16 %v565, %v564
  %v678 = vpack.c.b16 %v567, %v566
  %v679 = vpack.c.b16 %v569, %v568
  %v680 = vpack.c.b16 %v571, %v570
  %v681 = vpack.c.b16 %v573, %v572
  %v682 = vpack.c.b16 %v575, %v574
  %v683 = vpack.c.b16 %v577, %v576
  %v684 = vpack.c.b16 %v579, %v578
  %v685 = vpack.c.b16 %v581, %v580
  %v686 = vpack.c.b16 %v583, %v582
  %v687 = vpack.c.b16 %v585, %v584
  %v688 = vpack.c.b16 %v587, %v586
  %v689 = vpack.c.b16 %v589, %v588
  %v690 = vpack.c.b16 %v591, %v590
  %v691 = vpack.c.b16 %v593, %v592
  %v692 = vpack.c.b16 %v595, %v594
  %v693 = vpack.c.b16 %v597, %v596
  %v694 = vpack.c.b16 %v599, %v598
  %v695 = vpack.c.b16 %v601, %v600
  %v696 = vpack.c.b16 %v603, %v602
  %v697 = vpack.c.b16 %v605, %v604
  %v698 = vpack.c.b16 %v607, %v606
  %v699 = vpack.c.b16 %v609, %v608
  %v700 = vpack.c.b16 %v611, %v610
  %v701 = vpack.c.b16 %v613, %v612
  %790 = vmatpush.bf16.msra.mxu0 %v621
  %791 = vmatpush.bf16.msra.mxu0 %v620
  %792 = vmatpush.bf16.msra.mxu0 %v619
  %793 = vmatpush.bf16.msra.mxu0 %v618
  %794 = vmatpush.bf16.msra.mxu0 %v617
  %795 = vmatpush.bf16.msra.mxu0 %v616
  %796 = vmatpush.bf16.msra.mxu0 %v615
  %797 = vmatpush.bf16.msra.mxu0 %v614
  %798 = vmatmul.bf16.gmra.mxu0 %v240
  %v799 = vpop.f32.mrf.mxu0
  %v800 = vadd.f32 %v204, %v799
  %v801 = vpop.f32.mrf.mxu0
  %v802 = vadd.f32 %v204, %v801
  %803 = vdwg.mxu0
  %804 = vmatpush.bf16.msra.mxu0 %v629
  %805 = vmatpush.bf16.msra.mxu0 %v628
  %806 = vmatpush.bf16.msra.mxu0 %v627
  %807 = vmatpush.bf16.msra.mxu0 %v626
  %808 = vmatpush.bf16.msra.mxu0 %v625
  %809 = vmatpush.bf16.msra.mxu0 %v624
  %810 = vmatpush.bf16.msra.mxu0 %v623
  %811 = vmatpush.bf16.msra.mxu0 %v622
  %812 = vmatmul.bf16.gmra.mxu0 %v241
  %v813 = vpop.f32.mrf.mxu0
  %v814 = vadd.f32 %v800, %v813
  %v815 = vpop.f32.mrf.mxu0
  %v816 = vadd.f32 %v802, %v815
  %817 = vdwg.mxu0
  %818 = vmatpush.bf16.msra.mxu0 %v637
  %819 = vmatpush.bf16.msra.mxu0 %v636
  %820 = vmatpush.bf16.msra.mxu0 %v635
  %821 = vmatpush.bf16.msra.mxu0 %v634
  %822 = vmatpush.bf16.msra.mxu0 %v633
  %823 = vmatpush.bf16.msra.mxu0 %v632
  %824 = vmatpush.bf16.msra.mxu0 %v631
  %825 = vmatpush.bf16.msra.mxu0 %v630
  %826 = vmatmul.bf16.gmra.mxu0 %v242
  %v827 = vpop.f32.mrf.mxu0
  %v828 = vadd.f32 %v814, %v827
  %v829 = vpop.f32.mrf.mxu0
  %v830 = vadd.f32 %v816, %v829
  %831 = vdwg.mxu0
  %832 = vmatpush.bf16.msra.mxu0 %v645
  %833 = vmatpush.bf16.msra.mxu0 %v644
  %834 = vmatpush.bf16.msra.mxu0 %v643
  %835 = vmatpush.bf16.msra.mxu0 %v642
  %836 = vmatpush.bf16.msra.mxu0 %v641
  %837 = vmatpush.bf16.msra.mxu0 %v640
  %838 = vmatpush.bf16.msra.mxu0 %v639
  %839 = vmatpush.bf16.msra.mxu0 %v638
  %840 = vmatmul.bf16.gmra.mxu0 %v243
  %v841 = vpop.f32.mrf.mxu0
  %v842 = vadd.f32 %v828, %v841
  %v843 = vpop.f32.mrf.mxu0
  %v844 = vadd.f32 %v830, %v843
  %845 = vdwg.mxu0
  %846 = vmatpush.bf16.msra.mxu0 %v653
  %847 = vmatpush.bf16.msra.mxu0 %v652
  %848 = vmatpush.bf16.msra.mxu0 %v651
  %849 = vmatpush.bf16.msra.mxu0 %v650
  %850 = vmatpush.bf16.msra.mxu0 %v649
  %851 = vmatpush.bf16.msra.mxu0 %v648
  %852 = vmatpush.bf16.msra.mxu0 %v647
  %853 = vmatpush.bf16.msra.mxu0 %v646
  %854 = vmatmul.bf16.gmra.mxu0 %v244
  %v855 = vpop.f32.mrf.mxu0
  %v856 = vadd.f32 %v842, %v855
  %v857 = vpop.f32.mrf.mxu0
  %v858 = vadd.f32 %v844, %v857
  %859 = vdwg.mxu0
  %860 = vmatpush.bf16.msra.mxu0 %v661
  %861 = vmatpush.bf16.msra.mxu0 %v660
  %862 = vmatpush.bf16.msra.mxu0 %v659
  %863 = vmatpush.bf16.msra.mxu0 %v658
  %864 = vmatpush.bf16.msra.mxu0 %v657
  %865 = vmatpush.bf16.msra.mxu0 %v656
  %866 = vmatpush.bf16.msra.mxu0 %v655
  %867 = vmatpush.bf16.msra.mxu0 %v654
  %868 = vmatmul.bf16.gmra.mxu0 %v245
  %v869 = vpop.f32.mrf.mxu0
  %v870 = vadd.f32 %v856, %v869
  %v871 = vpop.f32.mrf.mxu0
  %v872 = vadd.f32 %v858, %v871
  %873 = vdwg.mxu0
  %874 = vmatpush.bf16.msra.mxu0 %v669
  %875 = vmatpush.bf16.msra.mxu0 %v668
  %876 = vmatpush.bf16.msra.mxu0 %v667
  %877 = vmatpush.bf16.msra.mxu0 %v666
  %878 = vmatpush.bf16.msra.mxu0 %v665
  %879 = vmatpush.bf16.msra.mxu0 %v664
  %880 = vmatpush.bf16.msra.mxu0 %v663
  %881 = vmatpush.bf16.msra.mxu0 %v662
  %882 = vmatmul.bf16.gmra.mxu0 %v246
  %v883 = vpop.f32.mrf.mxu0
  %v884 = vadd.f32 %v870, %v883
  %v885 = vpop.f32.mrf.mxu0
  %v886 = vadd.f32 %v872, %v885
  %887 = vdwg.mxu0
  %888 = vmatpush.bf16.msra.mxu0 %v677
  %889 = vmatpush.bf16.msra.mxu0 %v676
  %890 = vmatpush.bf16.msra.mxu0 %v675
  %891 = vmatpush.bf16.msra.mxu0 %v674
  %892 = vmatpush.bf16.msra.mxu0 %v673
  %893 = vmatpush.bf16.msra.mxu0 %v672
  %894 = vmatpush.bf16.msra.mxu0 %v671
  %895 = vmatpush.bf16.msra.mxu0 %v670
  %896 = vmatmul.bf16.gmra.mxu0 %v247
  %v897 = vpop.f32.mrf.mxu0
  %v898 = vadd.f32 %v884, %v897
  %v899 = vpop.f32.mrf.mxu0
  %v900 = vadd.f32 %v886, %v899
  %901 = vdwg.mxu0
  %902 = vmatpush.bf16.msra.mxu0 %v685
  %903 = vmatpush.bf16.msra.mxu0 %v684
  %904 = vmatpush.bf16.msra.mxu0 %v683
  %905 = vmatpush.bf16.msra.mxu0 %v682
  %906 = vmatpush.bf16.msra.mxu0 %v681
  %907 = vmatpush.bf16.msra.mxu0 %v680
  %908 = vmatpush.bf16.msra.mxu0 %v679
  %909 = vmatpush.bf16.msra.mxu0 %v678
  %910 = vmatmul.bf16.gmra.mxu0 %v248
  %v911 = vpop.f32.mrf.mxu0
  %v912 = vadd.f32 %v898, %v911
  %v913 = vpop.f32.mrf.mxu0
  %v914 = vadd.f32 %v900, %v913
  %915 = vdwg.mxu0
  %916 = vmatpush.bf16.msra.mxu0 %v693
  %917 = vmatpush.bf16.msra.mxu0 %v692
  %918 = vmatpush.bf16.msra.mxu0 %v691
  %919 = vmatpush.bf16.msra.mxu0 %v690
  %920 = vmatpush.bf16.msra.mxu0 %v689
  %921 = vmatpush.bf16.msra.mxu0 %v688
  %922 = vmatpush.bf16.msra.mxu0 %v687
  %923 = vmatpush.bf16.msra.mxu0 %v686
  %924 = vmatmul.bf16.gmra.mxu0 %v249
  %v925 = vpop.f32.mrf.mxu0
  %v926 = vadd.f32 %v912, %v925
  %v927 = vpop.f32.mrf.mxu0
  %v928 = vadd.f32 %v914, %v927
  %929 = vdwg.mxu0
  %930 = vmatpush.bf16.msra.mxu0 %v701
  %931 = vmatpush.bf16.msra.mxu0 %v700
  %932 = vmatpush.bf16.msra.mxu0 %v699
  %933 = vmatpush.bf16.msra.mxu0 %v698
  %934 = vmatpush.bf16.msra.mxu0 %v697
  %935 = vmatpush.bf16.msra.mxu0 %v696
  %936 = vmatpush.bf16.msra.mxu0 %v695
  %937 = vmatpush.bf16.msra.mxu0 %v694
  %938 = vmatmul.bf16.gmra.mxu0 %v250
  %v939 = vpop.f32.mrf.mxu0
  %v940 = vadd.f32 %v926, %v939
  %v941 = vpop.f32.mrf.mxu0
  %v942 = vadd.f32 %v928, %v941
  %943 = vdwg.mxu0
  %v944 = vmax.f32 %v940, 0.0
  %v945 = vmax.f32 %v942, 0.0
  %v946 = vpack.c.bf16 %v944, %v944
  %v947 = vpack.c.bf16 %v945, %v945
  %948 = vst [vmem:[%s3] sm:$0xf] %v946
  %949 = vst [vmem:[%s3 + $0x4] sm:$0xf] %v947
  // Predicated region
  $region14: #{_lambda_.7} parent=0 // pred_check
    _
  $region15: #{_lambda_.7} parent=0 // pred_check_branch
    %951 = sbr.rel (0) target = $region17
  $region16: #{_lambda_.7} parent=0 // pred_region
    _
  $region17: #{_lambda_.7} parent=0 // pred_fallthru
    _
  // Predicated region
  $region18: #{_lambda_.7} parent=0 // pred_check
    _
  $region19: #{_lambda_.7} parent=0 // pred_check_branch
    %953 = sbr.rel (0) target = $region21
  $region20: #{_lambda_.7} parent=0 // pred_region
    _
  $region21: #{_lambda_.7} parent=0 // pred_fallthru
    _

// kernel: _lambda_.9
$region0: #{_lambda_.9}
  #allocation0 [shape = 'u32[]', space=smem, size = 0x4, offset = 0x4, fixed_abs, tag = 'smem constant byte address 0x4 - core index']
  #allocation1 [shape = 'u32[72,128]{1,0:T(1,128)}', space=vmem, size = 0x9000, scoped, tag = 'internal scratch']
  %s0 = inlined_call_operand.vmem [shape: bf16[16,128], index: 0, kind: input, shape index: {}]
  %s1 = inlined_call_operand.vmem [shape: bf16[128,128], index: 1, kind: input, shape index: {}]
  %s2 = inlined_call_operand.vmem [shape: f32[1,128], index: 2, kind: input, shape index: {}]
  %s3 = inlined_call_operand.vmem [shape: f32[16,128], index: 3, kind: output, shape index: {}]
  %s4 = sld [smem:[#allocation0]]
  $region22: #{_lambda_.9} parent=0
    _
  %s6 = ssub.s32 1, %s4
  %s7 = scalar_select 0, %s6, %s4
  // Predicated region
  $region2: #{_lambda_.9} parent=0 // pred_check
    _
  $region3: #{_lambda_.9} parent=0 // pred_check_branch
    %9 = sbr.rel (0) target = $region5
  $region4: #{_lambda_.9} parent=0 // pred_region
    _
  $region5: #{_lambda_.9} parent=0 // pred_fallthru
    _
  // Predicated region
  $region6: #{_lambda_.9} parent=0 // pred_check
    _
  $region7: #{_lambda_.9} parent=0 // pred_check_branch
    %11 = sbr.rel (0) target = $region9
  $region8: #{_lambda_.9} parent=0 // pred_region
    _
  $region9: #{_lambda_.9} parent=0 // pred_fallthru
    _
  // Predicated region
  $region10: #{_lambda_.9} parent=0 // pred_check
    _
  $region11: #{_lambda_.9} parent=0 // pred_check_branch
    %13 = sbr.rel (0) target = $region13
  $region12: #{_lambda_.9} parent=0 // pred_region
    _
  $region13: #{_lambda_.9} parent=0 // pred_fallthru
    _
  %v14 = vld [vmem:[%s0] sm:$0xf]
  %v15 = vld [vmem:[%s0 + $0x4] sm:$0xf]
  %v16 = vld [vmem:[%s1] sm:$0xf]
  %v17 = vld [vmem:[%s1 + $0x4] sm:$0xf]
  %v18 = vld [vmem:[%s1 + $0x8] sm:$0xf]
  %v19 = vld [vmem:[%s1 + $0xc] sm:$0xf]
  %v20 = vld [vmem:[%s1 + $0x10] sm:$0xf]
  %v21 = vld [vmem:[%s1 + $0x14] sm:$0xf]
  %v22 = vld [vmem:[%s1 + $0x18] sm:$0xf]
  %v23 = vld [vmem:[%s1 + $0x1c] sm:$0xf]
  %v24 = vld [vmem:[%s1 + $0x20] sm:$0xf]
  %v25 = vld [vmem:[%s1 + $0x24] sm:$0xf]
  %v26 = vld [vmem:[%s1 + $0x28] sm:$0xf]
  %v27 = vld [vmem:[%s1 + $0x2c] sm:$0xf]
  %v28 = vld [vmem:[%s1 + $0x30] sm:$0xf]
  %v29 = vld [vmem:[%s1 + $0x34] sm:$0xf]
  %v30 = vld [vmem:[%s1 + $0x38] sm:$0xf]
  %v31 = vld [vmem:[%s1 + $0x3c] sm:$0xf]
  %v32 = vld [vmem:[%s2] sm:$0x1]
  %v34 = vperm.slane %v32, 0
  %v38 = vunpack.c.l.b16 %v14
  %v39 = vunpack.c.l.b16 %v15
  %v40 = vpack.c.b16 %v39, %v38
  %v58 = vunpack.c.l.b16 %v16
  %v59 = vunpack.c.l.b16 %v17
  %v60 = vunpack.c.l.b16 %v18
  %v61 = vunpack.c.l.b16 %v19
  %v62 = vunpack.c.l.b16 %v20
  %v63 = vunpack.c.l.b16 %v21
  %v64 = vunpack.c.l.b16 %v22
  %v65 = vunpack.c.l.b16 %v23
  %v66 = vunpack.c.l.b16 %v24
  %v67 = vunpack.c.l.b16 %v25
  %v68 = vunpack.c.l.b16 %v26
  %v69 = vunpack.c.l.b16 %v27
  %v70 = vunpack.c.l.b16 %v28
  %v71 = vunpack.c.l.b16 %v29
  %v72 = vunpack.c.l.b16 %v30
  %v73 = vunpack.c.l.b16 %v31
  %v74 = vpack.c.b16 %v59, %v58
  %v75 = vpack.c.b16 %v61, %v60
  %v76 = vpack.c.b16 %v63, %v62
  %v77 = vpack.c.b16 %v65, %v64
  %v78 = vpack.c.b16 %v67, %v66
  %v79 = vpack.c.b16 %v69, %v68
  %v80 = vpack.c.b16 %v71, %v70
  %v81 = vpack.c.b16 %v73, %v72
  %90 = vmatpush.bf16.msra.mxu0 %v81
  %91 = vmatpush.bf16.msra.mxu0 %v80
  %92 = vmatpush.bf16.msra.mxu0 %v79
  %93 = vmatpush.bf16.msra.mxu0 %v78
  %94 = vmatpush.bf16.msra.mxu0 %v77
  %95 = vmatpush.bf16.msra.mxu0 %v76
  %96 = vmatpush.bf16.msra.mxu0 %v75
  %97 = vmatpush.bf16.msra.mxu0 %v74
  %98 = vmatmul.bf16.gmra.mxu0 %v40
  %v99 = vpop.f32.mrf.mxu0
  %v100 = vadd.f32 %v34, %v99
  %v101 = vpop.f32.mrf.mxu0
  %v102 = vadd.f32 %v34, %v101
  %103 = vdwg.mxu0
  %104 = vst [vmem:[%s3] sm:$0xff] %v100
  %105 = vst [vmem:[%s3 + $0x8] sm:$0xff] %v102
  // Predicated region
  $region14: #{_lambda_.9} parent=0 // pred_check
    _
  $region15: #{_lambda_.9} parent=0 // pred_check_branch
    %107 = sbr.rel (0) target = $region17
  $region16: #{_lambda_.9} parent=0 // pred_region
    _
  $region17: #{_lambda_.9} parent=0 // pred_fallthru
    _
  // Predicated region
  $region18: #{_lambda_.9} parent=0 // pred_check
    _
  $region19: #{_lambda_.9} parent=0 // pred_check_branch
    %109 = sbr.rel (0) target = $region21
  $region20: #{_lambda_.9} parent=0 // pred_region
    _
  $region21: #{_lambda_.9} parent=0 // pred_fallthru
    _

</llo_original>
